<compile_context>
chip_gen: v7x
topology: tpu7x:2x2x1
jax: 0.10.0
libtpu: 0.0.40
codegen_flags: <defaults>
</compile_context>

<pallas_src>
import functools
import math

import jax
import jax.numpy as jnp
from jax.experimental import pallas as pl
from jax.experimental.pallas import tpu as pltpu

# ----------------------------------------------------------------------------- config
LAYER_NUMS = [1, 1, 1]
LAYER_STRIDES = [2, 2, 2]
NUM_FILTERS = [64, 128, 256]
UPSAMPLE_STRIDES = [1, 2, 4]
NUM_UPSAMPLE_FILTERS = [128, 128, 128]
INPUT_CHANNELS = 64
SHARED_CONV_CHANNEL = 64
NUM_CLASS = 3                       # one class per head
NUM_ANCHORS_PER_LOC = 2             # one size * two rotations
CODE_SIZE = 7
PC_RANGE = (0.0, -8.0, -3.0, 16.0, 8.0, 1.0)
ANCHOR_SIZES = [(3.9, 1.6, 1.56), (0.8, 0.6, 1.73), (1.76, 0.6, 1.73)]
ANCHOR_Z = [-1.0, -0.6, -0.6]
ROTATIONS = (0.0, math.pi / 2.0)
BN_EPS = 1e-3

MAX_TK = 2048       # max K-tile per grid step (few, fat K steps)
MAX_TM = 256        # max M-tile (rows)


def _round_up(x, m):
    return (x + m - 1) // m * m


def _choose_k_tiling(K):
    """Tile K into as few steps as possible with each step <= MAX_TK (128-aligned)."""
    kp128 = _round_up(K, 128)
    n_k = -(-kp128 // MAX_TK)
    tk = _round_up(-(-kp128 // n_k), 128)
    return tk, tk * n_k


# ----------------------------------------------------------------- fused matmul kernel
def _fused_matmul_kernel(a_ref, b_ref, c_ref, o_ref, *, relu):
    k = pl.program_id(1)

    @pl.when(k == 0)
    def _():
        o_ref[...] = jnp.zeros_like(o_ref)

    # bf16 x bf16 on the MXU, f32 accumulation directly in the resident output block.
    o_ref[...] += jnp.dot(a_ref[...], b_ref[...],
                          preferred_element_type=jnp.float32)

    @pl.when(k == pl.num_programs(1) - 1)
    def _():
        r = o_ref[...] + c_ref[...]          # folded BN / conv bias
        if relu:
            r = jnp.maximum(r, 0.0)
        o_ref[...] = r


def prep_weight(w2, scale, bias, **extra):
    """w2: (K, N) f32.  Fold per-column BN scale into the weights, pre-pad to the
    matmul tiling, pre-cast to bf16.  Done ONCE at init (not per forward)."""
    K, N = w2.shape
    Np = _round_up(N, 128)
    tk, Kp = _choose_k_tiling(K)
    wf = (w2 * scale[None, :]).astype(jnp.bfloat16)
    wp = jnp.zeros((Kp, Np), jnp.bfloat16).at[:K, :N].set(wf)
    bp = jnp.zeros((1, Np), jnp.float32).at[0, :N].set(bias.astype(jnp.float32))
    prep = dict(wp=wp, bp=bp, K=K, N=N, Kp=Kp, Np=Np, tk=tk)
    prep.update(extra)
    return prep


def fused_matmul(a, prep, relu=False):
    """(M, K) @ prepped (K, N) weight, + bias, optional ReLU.  bf16 operands / f32 acc."""
    M, K = a.shape
    assert K == prep["K"], (K, prep["K"])
    Kp, Np, tk, N = prep["Kp"], prep["Np"], prep["tk"], prep["N"]
    tm = min(MAX_TM, _round_up(M, 8))
    Mp = _round_up(M, tm)
    a_p = jnp.zeros((Mp, Kp), jnp.bfloat16).at[:M, :K].set(a.astype(jnp.bfloat16))

    out = pl.pallas_call(
        functools.partial(_fused_matmul_kernel, relu=relu),
        out_shape=jax.ShapeDtypeStruct((Mp, Np), jnp.float32),
        grid_spec=pltpu.PrefetchScalarGridSpec(
            num_scalar_prefetch=0,
            grid=(Mp // tm, Kp // tk),
            in_specs=[
                pl.BlockSpec((tm, tk), lambda m, k: (m, k)),
                pl.BlockSpec((tk, Np), lambda m, k: (k, 0)),
                pl.BlockSpec((1, Np), lambda m, k: (0, 0)),
            ],
            out_specs=pl.BlockSpec((tm, Np), lambda m, k: (m, 0)),
        ),
        compiler_params=pltpu.CompilerParams(
            dimension_semantics=("parallel", "arbitrary")),
    )(a_p, prep["wp"], prep["bp"])
    return out[:M, :N]


# ------------------------------------------------------------------ conv / deconv glue
def prep_conv_weight(w, scale, bias):
    """w: (Cout, Cin, kh, kw) PyTorch layout -> prepped (kh*kw*Cin, Cout) matmul weight."""
    Cout, Cin, kh, kw = w.shape
    w2 = jnp.transpose(w, (2, 3, 1, 0)).reshape(kh * kw * Cin, Cout)
    return prep_weight(w2, scale, bias, kh=kh, kw=kw, cout=Cout)


def prep_deconv_weight(w, scale, bias):
    """w: (Cin, Cout, s, s) PyTorch ConvTranspose layout -> prepped (Cin, s*s*Cout)."""
    Cin, Cout, s, _ = w.shape
    w2 = jnp.transpose(w, (0, 2, 3, 1)).reshape(Cin, s * s * Cout)
    return prep_weight(w2, jnp.tile(scale, s * s), jnp.tile(bias, s * s),
                       s=s, cout=Cout)


def conv2d_bn_relu(x, prep, stride=1, pad=1, relu=True):
    """x: (B, H, W, Cin) NHWC."""
    kh, kw, cout = prep["kh"], prep["kw"], prep["cout"]
    xp = jnp.pad(x.astype(jnp.bfloat16), ((0, 0), (pad, pad), (pad, pad), (0, 0)))
    B, Hp, Wp, Cin = xp.shape
    Ho = (Hp - kh) // stride + 1
    Wo = (Wp - kw) // stride + 1
    # TODO(synk): at production BEV sizes, fold these kh*kw taps into the Pallas grid
    #             (tap grid axis with element-offset index_map) instead of materializing
    #             a kh*kw-expanded im2col tensor through XLA/HBM (kept bf16 here).
    cols = [xp[:, i:i + stride * Ho:stride, j:j + stride * Wo:stride, :]
            for i in range(kh) for j in range(kw)]
    patches = jnp.concatenate(cols, axis=-1).reshape(B * Ho * Wo, kh * kw * Cin)
    y = fused_matmul(patches, prep, relu=relu)
    return y.reshape(B, Ho, Wo, cout)


def deconv_bn_relu(x, prep):
    """ConvTranspose2d(kernel=stride, stride=stride) + BN + ReLU."""
    s, cout = prep["s"], prep["cout"]
    B, H, W, Cin = x.shape
    y = fused_matmul(x.reshape(B * H * W, Cin), prep, relu=True)
    y = y.reshape(B, H, W, s, s, cout).transpose(0, 1, 3, 2, 4, 5)
    return y.reshape(B, H * s, W * s, cout)


# --------------------------------------------------------------- box decode (Pallas)
def _decode_kernel(t_ref, a_ref, o_ref):
    t = t_ref[...]                    # (7, tl) residual box preds
    a = a_ref[...]                    # (7, tl) anchors
    diag = jnp.sqrt(a[3:4] * a[3:4] + a[4:5] * a[4:5])
    o_ref[0:1, :] = t[0:1] * diag + a[0:1]
    o_ref[1:2, :] = t[1:2] * diag + a[1:2]
    o_ref[2:3, :] = t[2:3] * a[5:6] + a[2:3]
    o_ref[3:4, :] = jnp.exp(t[3:4]) * a[3:4]
    o_ref[4:5, :] = jnp.exp(t[4:5]) * a[4:5]
    o_ref[5:6, :] = jnp.exp(t[5:6]) * a[5:6]
    o_ref[6:7, :] = t[6:7] + a[6:7]


def decode_boxes(box_preds, anchors, lane_tile=4096):
    """box_preds: (B, N, 7) residuals; anchors: (N, 7) -> decoded (B, N, 7)."""
    B, N, _ = box_preds.shape
    P = B * N
    t = box_preds.reshape(P, CODE_SIZE).T.astype(jnp.float32)    # (7, P), lane-dense
    a = jnp.tile(anchors, (B, 1)).T.astype(jnp.float32)          # (7, P)
    tl = min(lane_tile, _round_up(P, 128))
    Pp = _round_up(P, tl)
    t_p = jnp.zeros((CODE_SIZE, Pp), jnp.float32).at[:, :P].set(t)
    a_p = jnp.zeros((CODE_SIZE, Pp), jnp.float32).at[:, :P].set(a)
    out = pl.pallas_call(
        _decode_kernel,
        out_shape=jax.ShapeDtypeStruct((CODE_SIZE, Pp), jnp.float32),
        grid_spec=pltpu.PrefetchScalarGridSpec(
            num_scalar_prefetch=0,
            grid=(Pp // tl,),
            in_specs=[pl.BlockSpec((CODE_SIZE, tl), lambda i: (0, i)),
                      pl.BlockSpec((CODE_SIZE, tl), lambda i: (0, i))],
            out_specs=pl.BlockSpec((CODE_SIZE, tl), lambda i: (0, i)),
        ),
        compiler_params=pltpu.CompilerParams(dimension_semantics=("parallel",)),
    )(t_p, a_p)
    return out[:, :P].T.reshape(B, N, CODE_SIZE)


# --------------------------------------------------------------------- anchors (glue)
def make_anchors(Hf, Wf, size, z_center):
    xmin, ymin, _, xmax, ymax, _ = PC_RANGE
    xs = xmin + jnp.arange(Wf, dtype=jnp.float32) * ((xmax - xmin) / (Wf - 1))
    ys = ymin + jnp.arange(Hf, dtype=jnp.float32) * ((ymax - ymin) / (Hf - 1))
    yy, xx = jnp.meshgrid(ys, xs, indexing="ij")                 # (Hf, Wf)
    per_rot = []
    for rot in ROTATIONS:                                        # ordering: (rot, y, x)
        a = jnp.stack([xx, yy,
                       jnp.full_like(xx, z_center),
                       jnp.full_like(xx, size[0]),
                       jnp.full_like(xx, size[1]),
                       jnp.full_like(xx, size[2]),
                       jnp.full_like(xx, rot)], axis=-1)
        per_rot.append(a.reshape(-1, CODE_SIZE))
    return jnp.concatenate(per_rot, axis=0)                      # (2*Hf*Wf, 7)


# ---------------------------------------------------------------- parameter creation
def init_params(key, feat_hw):
    keys = iter(jax.random.split(key, 64))

    def conv_w(cout, cin, kh, kw):
        fan_in = cin * kh * kw
        return jax.random.normal(next(keys), (cout, cin, kh, kw),
                                 jnp.float32) * (2.0 / fan_in) ** 0.5

    def bn(c):
        k1, k2, k3, k4 = jax.random.split(next(keys), 4)
        gamma = 1.0 + 0.1 * jax.random.normal(k1, (c,), jnp.float32)
        beta = 0.1 * jax.random.normal(k2, (c,), jnp.float32)
        mean = 0.1 * jax.random.normal(k3, (c,), jnp.float32)
        var = 1.0 + 0.2 * jax.random.uniform(k4, (c,), jnp.float32)
        scale = gamma / jnp.sqrt(var + BN_EPS)
        return scale, beta - mean * scale

    params = {"blocks": [], "deblocks": []}
    c_in = INPUT_CHANNELS
    for i in range(len(LAYER_NUMS)):
        cf = NUM_FILTERS[i]
        convs = []
        w = conv_w(cf, c_in, 3, 3)
        s, b = bn(cf)
        convs.append(dict(prep=prep_conv_weight(w, s, b), stride=LAYER_STRIDES[i]))
        for _ in range(LAYER_NUMS[i]):
            w = conv_w(cf, cf, 3, 3)
            s, b = bn(cf)
            convs.append(dict(prep=prep_conv_weight(w, s, b), stride=1))
        params["blocks"].append(convs)

        us, cu = UPSAMPLE_STRIDES[i], NUM_UPSAMPLE_FILTERS[i]
        wd = jax.random.normal(next(keys), (cf, cu, us, us),
                               jnp.float32) * (2.0 / cf) ** 0.5
        s, b = bn(cu)
        params["deblocks"].append(dict(prep=prep_deconv_weight(wd, s, b)))
        c_in = cf

    # ------------------------------ dense head ------------------------------
    c_shared_in = sum(NUM_UPSAMPLE_FILTERS)                      # 384
    shared_w = conv_w(SHARED_CONV_CHANNEL, c_shared_in, 3, 3)
    shared_cb = 0.1 * jax.random.normal(next(keys), (SHARED_CONV_CHANNEL,), jnp.float32)
    s, b = bn(SHARED_CONV_CHANNEL)
    shared_prep = prep_conv_weight(shared_w, s, b + s * shared_cb)  # conv-bias folded

    Hf, Wf = feat_hw
    A = NUM_ANCHORS_PER_LOC
    w_cols, b_cols, anchors = [], [], []
    for c in range(NUM_CLASS):
        cls_w = jax.random.normal(next(keys), (SHARED_CONV_CHANNEL, A * 1),
                                  jnp.float32) * (1.0 / SHARED_CONV_CHANNEL) ** 0.5
        cls_b = jnp.full((A * 1,), -math.log((1.0 - 0.01) / 0.01), jnp.float32)
        box_w = jax.random.normal(next(keys), (SHARED_CONV_CHANNEL, A * CODE_SIZE),
                                  jnp.float32) * 0.3 * (1.0 / SHARED_CONV_CHANNEL) ** 0.5
        box_b = jnp.zeros((A * CODE_SIZE,), jnp.float32)
        # fused head weight: per-head column block [cls (A) | box (A*7)]
        w_cols += [cls_w, box_w]
        b_cols += [cls_b, box_b]
        anchors.append(make_anchors(Hf, Wf, ANCHOR_SIZES[c], ANCHOR_Z[c]))
    head_w = jnp.concatenate(w_cols, axis=1)                     # (64, 48)
    head_b = jnp.concatenate(b_cols, axis=0)                     # (48,)
    heads_prep = prep_weight(head_w, jnp.ones_like(head_b), head_b)

    params["head"] = dict(shared_prep=shared_prep, heads_prep=heads_prep,
                          anchors=anchors)
    return params


# --------------------------------------------------------------------------- forward
def backbone_forward(spatial_features_nchw, params):
    # (B, 64, H, W) NCHW -> NHWC
    x = jnp.transpose(spatial_features_nchw, (0, 2, 3, 1)).astype(jnp.float32)

    # ---------------- BaseBEVBackbone ----------------
    ups = []
    for i, block in enumerate(params["blocks"]):
        for cv in block:
            x = conv2d_bn_relu(x, cv["prep"], stride=cv["stride"], pad=1, relu=True)
        ups.append(deconv_bn_relu(x, params["deblocks"][i]["prep"]))
    x = jnp.concatenate(ups, axis=-1)                            # (B, Hf, Wf, 384)

    # ---------------- AnchorHeadMulti ----------------
    h = params["head"]
    x = conv2d_bn_relu(x, h["shared_prep"], stride=1, pad=1, relu=True)  # (B,Hf,Wf,64)
    B, Hf, Wf, C = x.shape
    flat = x.reshape(B * Hf * Wf, C)

    # all six per-head 1x1 convs fused into ONE matmul (columns: cls0|box0|cls1|box1|cls2|box2)
    head_out = fused_matmul(flat, h["heads_prep"], relu=False)   # (B*Hf*Wf, 48)

    A = NUM_ANCHORS_PER_LOC
    per_head = A * (1 + CODE_SIZE)                               # 16 columns per head
    cls_list, box_list, anchor_list = [], [], []
    for c in range(NUM_CLASS):
        off = c * per_head
        cls = head_out[:, off:off + A]
        box = head_out[:, off + A:off + per_head]
        # use_multihead ordering: (anchor, y, x) flattened, matching anchor layout
        cls = cls.reshape(B, Hf, Wf, A, 1).transpose(0, 3, 1, 2, 4).reshape(
            B, A * Hf * Wf, 1)
        box = box.reshape(B, Hf, Wf, A, CODE_SIZE).transpose(0, 3, 1, 2, 4).reshape(
            B, A * Hf * Wf, CODE_SIZE)
        cls_list.append(cls)
        box_list.append(box)
        anchor_list.append(h["anchors"][c])

    box_all = jnp.concatenate(box_list, axis=1)                  # (B, N, 7)
    anchors_all = jnp.concatenate(anchor_list, axis=0)           # (N, 7)
    N = box_all.shape[1]

    # TODO(synk): OpenPCDet's SEPARATE_MULTIHEAD returns a list of per-head cls tensors;
    #             here each head's single-class logits are scattered into its class column.
    batch_cls_preds = jnp.zeros((B, N, NUM_CLASS), jnp.float32)
    off = 0
    for ci, c in enumerate(cls_list):
        n = c.shape[1]
        batch_cls_preds = batch_cls_preds.at[:, off:off + n, ci].set(c[:, :, 0])
        off += n

    batch_box_preds = decode_boxes(box_all, anchors_all)         # ResidualCoder.decode
    return batch_cls_preds, batch_box_preds


# ------------------------------------------------------------------------------ main
if __name__ == "__main__":
    key = jax.random.PRNGKey(0)
    pkey, xkey = jax.random.split(key)

    B, C, H, W = 2, INPUT_CHANNELS, 16, 16          # NCHW, like the PyTorch module
    Hf, Wf = H // LAYER_STRIDES[0], W // LAYER_STRIDES[0]        # feature map = 8x8

    params = init_params(pkey, (Hf, Wf))
    spatial_features = jax.random.normal(xkey, (B, C, H, W), jnp.float32)

    fwd = jax.jit(functools.partial(backbone_forward, params=params))
    batch_cls_preds, batch_box_preds = fwd(spatial_features)
    jax.block_until_ready((batch_cls_preds, batch_box_preds))

    n_anchors = NUM_CLASS * NUM_ANCHORS_PER_LOC * Hf * Wf        # 384
    assert batch_cls_preds.shape == (B, n_anchors, NUM_CLASS), batch_cls_preds.shape
    assert batch_box_preds.shape == (B, n_anchors, CODE_SIZE), batch_box_preds.shape
    assert bool(jnp.all(jnp.isfinite(batch_cls_preds)))
    assert bool(jnp.all(jnp.isfinite(batch_box_preds)))
    print("KERNEL_OK")
</pallas_src>

<mosaic_0001>
module attributes {stable_mosaic.version = 11 : i64} {
  func.func @_fused_matmul_kernel(%arg0: i32, %arg1: i32, %arg2: memref<128x640xbf16, #tpu.memory_space<vmem>>, %arg3: memref<640x128xbf16, #tpu.memory_space<vmem>>, %arg4: memref<1x128xf32, #tpu.memory_space<vmem>>, %arg5: memref<128x128xf32, #tpu.memory_space<vmem>>) attributes {dimension_semantics = [#tpu.dimension_semantics<parallel>, #tpu.dimension_semantics<arbitrary>], iteration_bounds = array<i64: 1, 1>, scalar_prefetch = 0 : i64, scratch_operands = 0 : i64, tpu.core_type = #tpu.core_type<tc>, window_params = [{transform_indices = @transform_0, window_bounds = array<i64: 128, 640>}, {transform_indices = @transform_1, window_bounds = array<i64: 640, 128>}, {pipeline_mode = #tpu.pipeline_mode<synchronous>, transform_indices = @transform_2, window_bounds = array<i64: 1, 128>}, {transform_indices = @transform_3, window_bounds = array<i64: 128, 128>}]} {
    %c0_i32 = arith.constant 0 : i32
    %0 = arith.cmpi eq, %arg1, %c0_i32 : i32
    %1 = arith.extui %0 : i1 to i32
    %c0_i32_0 = arith.constant 0 : i32
    %2 = arith.cmpi ne, %1, %c0_i32_0 : i32
    scf.if %2 {
      %cst_10 = arith.constant 0.000000e+00 : f32
      %12 = vector.broadcast %cst_10 : f32 to vector<128x128xf32>
      %c0_11 = arith.constant 0 : index
      %c0_12 = arith.constant 0 : index
      %13 = vector.load %arg5[%c0_11, %c0_12] : memref<128x128xf32, #tpu.memory_space<vmem>>, vector<128x128xf32>
      tpu.vector_store %arg5[%c0_11, %c0_12], %12 {strides = array<i32>} : memref<128x128xf32, #tpu.memory_space<vmem>>, vector<128x128xf32>,
    } else {
    }
    %c0 = arith.constant 0 : index
    %c0_1 = arith.constant 0 : index
    %3 = vector.load %arg5[%c0, %c0_1] : memref<128x128xf32, #tpu.memory_space<vmem>>, vector<128x128xf32>
    %c0_2 = arith.constant 0 : index
    %c0_3 = arith.constant 0 : index
    %4 = vector.load %arg2[%c0_2, %c0_3] : memref<128x640xbf16, #tpu.memory_space<vmem>>, vector<128x640xbf16>
    %c0_4 = arith.constant 0 : index
    %c0_5 = arith.constant 0 : index
    %5 = vector.load %arg3[%c0_4, %c0_5] : memref<640x128xbf16, #tpu.memory_space<vmem>>, vector<640x128xbf16>
    %cst = arith.constant dense<0.000000e+00> : vector<128x128xf32>
    %6 = tpu.matmul %4, %5, %cst {dimension_numbers = #tpu.dot_dimension_numbers<[1], [0], [0], [1], [0, 0, 1, 1], [], []>} : vector<128x640xbf16>, vector<640x128xbf16>, vector<128x128xf32> -> vector<128x128xf32>
    %7 = arith.addf %3, %6 : vector<128x128xf32>
    %c0_6 = arith.constant 0 : index
    %c0_7 = arith.constant 0 : index
    %8 = vector.load %arg5[%c0_6, %c0_7] : memref<128x128xf32, #tpu.memory_space<vmem>>, vector<128x128xf32>
    tpu.vector_store %arg5[%c0_6, %c0_7], %7 {strides = array<i32>} : memref<128x128xf32, #tpu.memory_space<vmem>>, vector<128x128xf32>,
    %c0_i32_8 = arith.constant 0 : i32
    %9 = arith.cmpi eq, %arg1, %c0_i32_8 : i32
    %10 = arith.extui %9 : i1 to i32
    %c0_i32_9 = arith.constant 0 : i32
    %11 = arith.cmpi ne, %10, %c0_i32_9 : i32
    scf.if %11 {
      %c0_10 = arith.constant 0 : index
      %c0_11 = arith.constant 0 : index
      %12 = vector.load %arg5[%c0_10, %c0_11] : memref<128x128xf32, #tpu.memory_space<vmem>>, vector<128x128xf32>
      %c0_12 = arith.constant 0 : index
      %c0_13 = arith.constant 0 : index
      %13 = vector.load %arg4[%c0_12, %c0_13] : memref<1x128xf32, #tpu.memory_space<vmem>>, vector<1x128xf32>
      %14 = vector.broadcast %13 : vector<1x128xf32> to vector<128x128xf32>
      %15 = arith.addf %12, %14 : vector<128x128xf32>
      %cst_14 = arith.constant 0.000000e+00 : f32
      %16 = vector.broadcast %cst_14 : f32 to vector<128x128xf32>
      %17 = arith.maximumf %15, %16 : vector<128x128xf32>
      %c0_15 = arith.constant 0 : index
      %c0_16 = arith.constant 0 : index
      %18 = vector.load %arg5[%c0_15, %c0_16] : memref<128x128xf32, #tpu.memory_space<vmem>>, vector<128x128xf32>
      tpu.vector_store %arg5[%c0_15, %c0_16], %17 {strides = array<i32>} : memref<128x128xf32, #tpu.memory_space<vmem>>, vector<128x128xf32>,
    } else {
    }
    return
  }
  func.func @transform_0(%arg0: i32, %arg1: i32) -> (i32, i32) {
    %c0_i32 = arith.constant 0 : i32
    return %arg0, %arg1 : i32, i32
  }
  func.func @transform_1(%arg0: i32, %arg1: i32) -> (i32, i32) {
    %c0_i32 = arith.constant 0 : i32
    %c0_i32_0 = arith.constant 0 : i32
    return %arg1, %c0_i32 : i32, i32
  }
  func.func @transform_2(%arg0: i32, %arg1: i32) -> (i32, i32) {
    %c0_i32 = arith.constant 0 : i32
    %c0_i32_0 = arith.constant 0 : i32
    %c0_i32_1 = arith.constant 0 : i32
    return %c0_i32, %c0_i32_0 : i32, i32
  }
  func.func @transform_3(%arg0: i32, %arg1: i32) -> (i32, i32) {
    %c0_i32 = arith.constant 0 : i32
    %c0_i32_0 = arith.constant 0 : i32
    return %arg0, %c0_i32 : i32, i32
  }
}

module attributes {stable_mosaic.version = 11 : i64} {
  func.func @_fused_matmul_kernel(%arg0: i32, %arg1: i32, %arg2: memref<32x640xbf16, #tpu.memory_space<vmem>>, %arg3: memref<640x128xbf16, #tpu.memory_space<vmem>>, %arg4: memref<1x128xf32, #tpu.memory_space<vmem>>, %arg5: memref<32x128xf32, #tpu.memory_space<vmem>>) attributes {dimension_semantics = [#tpu.dimension_semantics<parallel>, #tpu.dimension_semantics<arbitrary>], iteration_bounds = array<i64: 1, 1>, scalar_prefetch = 0 : i64, scratch_operands = 0 : i64, tpu.core_type = #tpu.core_type<tc>, window_params = [{transform_indices = @transform_0, window_bounds = array<i64: 32, 640>}, {transform_indices = @transform_1, window_bounds = array<i64: 640, 128>}, {pipeline_mode = #tpu.pipeline_mode<synchronous>, transform_indices = @transform_2, window_bounds = array<i64: 1, 128>}, {transform_indices = @transform_3, window_bounds = array<i64: 32, 128>}]} {
    %c0_i32 = arith.constant 0 : i32
    %0 = arith.cmpi eq, %arg1, %c0_i32 : i32
    %1 = arith.extui %0 : i1 to i32
    %c0_i32_0 = arith.constant 0 : i32
    %2 = arith.cmpi ne, %1, %c0_i32_0 : i32
    scf.if %2 {
      %cst_10 = arith.constant 0.000000e+00 : f32
      %12 = vector.broadcast %cst_10 : f32 to vector<32x128xf32>
      %c0_11 = arith.constant 0 : index
      %c0_12 = arith.constant 0 : index
      %13 = vector.load %arg5[%c0_11, %c0_12] : memref<32x128xf32, #tpu.memory_space<vmem>>, vector<32x128xf32>
      tpu.vector_store %arg5[%c0_11, %c0_12], %12 {strides = array<i32>} : memref<32x128xf32, #tpu.memory_space<vmem>>, vector<32x128xf32>,
    } else {
    }
    %c0 = arith.constant 0 : index
    %c0_1 = arith.constant 0 : index
    %3 = vector.load %arg5[%c0, %c0_1] : memref<32x128xf32, #tpu.memory_space<vmem>>, vector<32x128xf32>
    %c0_2 = arith.constant 0 : index
    %c0_3 = arith.constant 0 : index
    %4 = vector.load %arg2[%c0_2, %c0_3] : memref<32x640xbf16, #tpu.memory_space<vmem>>, vector<32x640xbf16>
    %c0_4 = arith.constant 0 : index
    %c0_5 = arith.constant 0 : index
    %5 = vector.load %arg3[%c0_4, %c0_5] : memref<640x128xbf16, #tpu.memory_space<vmem>>, vector<640x128xbf16>
    %cst = arith.constant dense<0.000000e+00> : vector<32x128xf32>
    %6 = tpu.matmul %4, %5, %cst {dimension_numbers = #tpu.dot_dimension_numbers<[1], [0], [0], [1], [0, 0, 1, 1], [], []>} : vector<32x640xbf16>, vector<640x128xbf16>, vector<32x128xf32> -> vector<32x128xf32>
    %7 = arith.addf %3, %6 : vector<32x128xf32>
    %c0_6 = arith.constant 0 : index
    %c0_7 = arith.constant 0 : index
    %8 = vector.load %arg5[%c0_6, %c0_7] : memref<32x128xf32, #tpu.memory_space<vmem>>, vector<32x128xf32>
    tpu.vector_store %arg5[%c0_6, %c0_7], %7 {strides = array<i32>} : memref<32x128xf32, #tpu.memory_space<vmem>>, vector<32x128xf32>,
    %c0_i32_8 = arith.constant 0 : i32
    %9 = arith.cmpi eq, %arg1, %c0_i32_8 : i32
    %10 = arith.extui %9 : i1 to i32
    %c0_i32_9 = arith.constant 0 : i32
    %11 = arith.cmpi ne, %10, %c0_i32_9 : i32
    scf.if %11 {
      %c0_10 = arith.constant 0 : index
      %c0_11 = arith.constant 0 : index
      %12 = vector.load %arg5[%c0_10, %c0_11] : memref<32x128xf32, #tpu.memory_space<vmem>>, vector<32x128xf32>
      %c0_12 = arith.constant 0 : index
      %c0_13 = arith.constant 0 : index
      %13 = vector.load %arg4[%c0_12, %c0_13] : memref<1x128xf32, #tpu.memory_space<vmem>>, vector<1x128xf32>
      %14 = vector.broadcast %13 : vector<1x128xf32> to vector<32x128xf32>
      %15 = arith.addf %12, %14 : vector<32x128xf32>
      %cst_14 = arith.constant 0.000000e+00 : f32
      %16 = vector.broadcast %cst_14 : f32 to vector<32x128xf32>
      %17 = arith.maximumf %15, %16 : vector<32x128xf32>
      %c0_15 = arith.constant 0 : index
      %c0_16 = arith.constant 0 : index
      %18 = vector.load %arg5[%c0_15, %c0_16] : memref<32x128xf32, #tpu.memory_space<vmem>>, vector<32x128xf32>
      tpu.vector_store %arg5[%c0_15, %c0_16], %17 {strides = array<i32>} : memref<32x128xf32, #tpu.memory_space<vmem>>, vector<32x128xf32>,
    } else {
    }
    return
  }
  func.func @transform_0(%arg0: i32, %arg1: i32) -> (i32, i32) {
    %c0_i32 = arith.constant 0 : i32
    return %arg0, %arg1 : i32, i32
  }
  func.func @transform_1(%arg0: i32, %arg1: i32) -> (i32, i32) {
    %c0_i32 = arith.constant 0 : i32
    %c0_i32_0 = arith.constant 0 : i32
    return %arg1, %c0_i32 : i32, i32
  }
  func.func @transform_2(%arg0: i32, %arg1: i32) -> (i32, i32) {
    %c0_i32 = arith.constant 0 : i32
    %c0_i32_0 = arith.constant 0 : i32
    %c0_i32_1 = arith.constant 0 : i32
    return %c0_i32, %c0_i32_0 : i32, i32
  }
  func.func @transform_3(%arg0: i32, %arg1: i32) -> (i32, i32) {
    %c0_i32 = arith.constant 0 : i32
    %c0_i32_0 = arith.constant 0 : i32
    return %arg0, %c0_i32 : i32, i32
  }
}

module attributes {stable_mosaic.version = 11 : i64} {
  func.func @_fused_matmul_kernel(%arg0: i32, %arg1: i32, %arg2: memref<32x1152xbf16, #tpu.memory_space<vmem>>, %arg3: memref<1152x128xbf16, #tpu.memory_space<vmem>>, %arg4: memref<1x128xf32, #tpu.memory_space<vmem>>, %arg5: memref<32x128xf32, #tpu.memory_space<vmem>>) attributes {dimension_semantics = [#tpu.dimension_semantics<parallel>, #tpu.dimension_semantics<arbitrary>], iteration_bounds = array<i64: 1, 1>, scalar_prefetch = 0 : i64, scratch_operands = 0 : i64, tpu.core_type = #tpu.core_type<tc>, window_params = [{transform_indices = @transform_0, window_bounds = array<i64: 32, 1152>}, {transform_indices = @transform_1, window_bounds = array<i64: 1152, 128>}, {pipeline_mode = #tpu.pipeline_mode<synchronous>, transform_indices = @transform_2, window_bounds = array<i64: 1, 128>}, {transform_indices = @transform_3, window_bounds = array<i64: 32, 128>}]} {
    %c0_i32 = arith.constant 0 : i32
    %0 = arith.cmpi eq, %arg1, %c0_i32 : i32
    %1 = arith.extui %0 : i1 to i32
    %c0_i32_0 = arith.constant 0 : i32
    %2 = arith.cmpi ne, %1, %c0_i32_0 : i32
    scf.if %2 {
      %cst_10 = arith.constant 0.000000e+00 : f32
      %12 = vector.broadcast %cst_10 : f32 to vector<32x128xf32>
      %c0_11 = arith.constant 0 : index
      %c0_12 = arith.constant 0 : index
      %13 = vector.load %arg5[%c0_11, %c0_12] : memref<32x128xf32, #tpu.memory_space<vmem>>, vector<32x128xf32>
      tpu.vector_store %arg5[%c0_11, %c0_12], %12 {strides = array<i32>} : memref<32x128xf32, #tpu.memory_space<vmem>>, vector<32x128xf32>,
    } else {
    }
    %c0 = arith.constant 0 : index
    %c0_1 = arith.constant 0 : index
    %3 = vector.load %arg5[%c0, %c0_1] : memref<32x128xf32, #tpu.memory_space<vmem>>, vector<32x128xf32>
    %c0_2 = arith.constant 0 : index
    %c0_3 = arith.constant 0 : index
    %4 = vector.load %arg2[%c0_2, %c0_3] : memref<32x1152xbf16, #tpu.memory_space<vmem>>, vector<32x1152xbf16>
    %c0_4 = arith.constant 0 : index
    %c0_5 = arith.constant 0 : index
    %5 = vector.load %arg3[%c0_4, %c0_5] : memref<1152x128xbf16, #tpu.memory_space<vmem>>, vector<1152x128xbf16>
    %cst = arith.constant dense<0.000000e+00> : vector<32x128xf32>
    %6 = tpu.matmul %4, %5, %cst {dimension_numbers = #tpu.dot_dimension_numbers<[1], [0], [0], [1], [0, 0, 1, 1], [], []>} : vector<32x1152xbf16>, vector<1152x128xbf16>, vector<32x128xf32> -> vector<32x128xf32>
    %7 = arith.addf %3, %6 : vector<32x128xf32>
    %c0_6 = arith.constant 0 : index
    %c0_7 = arith.constant 0 : index
    %8 = vector.load %arg5[%c0_6, %c0_7] : memref<32x128xf32, #tpu.memory_space<vmem>>, vector<32x128xf32>
    tpu.vector_store %arg5[%c0_6, %c0_7], %7 {strides = array<i32>} : memref<32x128xf32, #tpu.memory_space<vmem>>, vector<32x128xf32>,
    %c0_i32_8 = arith.constant 0 : i32
    %9 = arith.cmpi eq, %arg1, %c0_i32_8 : i32
    %10 = arith.extui %9 : i1 to i32
    %c0_i32_9 = arith.constant 0 : i32
    %11 = arith.cmpi ne, %10, %c0_i32_9 : i32
    scf.if %11 {
      %c0_10 = arith.constant 0 : index
      %c0_11 = arith.constant 0 : index
      %12 = vector.load %arg5[%c0_10, %c0_11] : memref<32x128xf32, #tpu.memory_space<vmem>>, vector<32x128xf32>
      %c0_12 = arith.constant 0 : index
      %c0_13 = arith.constant 0 : index
      %13 = vector.load %arg4[%c0_12, %c0_13] : memref<1x128xf32, #tpu.memory_space<vmem>>, vector<1x128xf32>
      %14 = vector.broadcast %13 : vector<1x128xf32> to vector<32x128xf32>
      %15 = arith.addf %12, %14 : vector<32x128xf32>
      %cst_14 = arith.constant 0.000000e+00 : f32
      %16 = vector.broadcast %cst_14 : f32 to vector<32x128xf32>
      %17 = arith.maximumf %15, %16 : vector<32x128xf32>
      %c0_15 = arith.constant 0 : index
      %c0_16 = arith.constant 0 : index
      %18 = vector.load %arg5[%c0_15, %c0_16] : memref<32x128xf32, #tpu.memory_space<vmem>>, vector<32x128xf32>
      tpu.vector_store %arg5[%c0_15, %c0_16], %17 {strides = array<i32>} : memref<32x128xf32, #tpu.memory_space<vmem>>, vector<32x128xf32>,
    } else {
    }
    return
  }
  func.func @transform_0(%arg0: i32, %arg1: i32) -> (i32, i32) {
    %c0_i32 = arith.constant 0 : i32
    return %arg0, %arg1 : i32, i32
  }
  func.func @transform_1(%arg0: i32, %arg1: i32) -> (i32, i32) {
    %c0_i32 = arith.constant 0 : i32
    %c0_i32_0 = arith.constant 0 : i32
    return %arg1, %c0_i32 : i32, i32
  }
  func.func @transform_2(%arg0: i32, %arg1: i32) -> (i32, i32) {
    %c0_i32 = arith.constant 0 : i32
    %c0_i32_0 = arith.constant 0 : i32
    %c0_i32_1 = arith.constant 0 : i32
    return %c0_i32, %c0_i32_0 : i32, i32
  }
  func.func @transform_3(%arg0: i32, %arg1: i32) -> (i32, i32) {
    %c0_i32 = arith.constant 0 : i32
    %c0_i32_0 = arith.constant 0 : i32
    return %arg0, %c0_i32 : i32, i32
  }
}

module attributes {stable_mosaic.version = 11 : i64} {
  func.func @_fused_matmul_kernel(%arg0: i32, %arg1: i32, %arg2: memref<8x1152xbf16, #tpu.memory_space<vmem>>, %arg3: memref<1152x256xbf16, #tpu.memory_space<vmem>>, %arg4: memref<1x256xf32, #tpu.memory_space<vmem>>, %arg5: memref<8x256xf32, #tpu.memory_space<vmem>>) attributes {dimension_semantics = [#tpu.dimension_semantics<parallel>, #tpu.dimension_semantics<arbitrary>], iteration_bounds = array<i64: 1, 1>, scalar_prefetch = 0 : i64, scratch_operands = 0 : i64, tpu.core_type = #tpu.core_type<tc>, window_params = [{transform_indices = @transform_0, window_bounds = array<i64: 8, 1152>}, {transform_indices = @transform_1, window_bounds = array<i64: 1152, 256>}, {pipeline_mode = #tpu.pipeline_mode<synchronous>, transform_indices = @transform_2, window_bounds = array<i64: 1, 256>}, {transform_indices = @transform_3, window_bounds = array<i64: 8, 256>}]} {
    %c0_i32 = arith.constant 0 : i32
    %0 = arith.cmpi eq, %arg1, %c0_i32 : i32
    %1 = arith.extui %0 : i1 to i32
    %c0_i32_0 = arith.constant 0 : i32
    %2 = arith.cmpi ne, %1, %c0_i32_0 : i32
    scf.if %2 {
      %cst_10 = arith.constant 0.000000e+00 : f32
      %12 = vector.broadcast %cst_10 : f32 to vector<8x256xf32>
      %c0_11 = arith.constant 0 : index
      %c0_12 = arith.constant 0 : index
      %13 = vector.load %arg5[%c0_11, %c0_12] : memref<8x256xf32, #tpu.memory_space<vmem>>, vector<8x256xf32>
      tpu.vector_store %arg5[%c0_11, %c0_12], %12 {strides = array<i32>} : memref<8x256xf32, #tpu.memory_space<vmem>>, vector<8x256xf32>,
    } else {
    }
    %c0 = arith.constant 0 : index
    %c0_1 = arith.constant 0 : index
    %3 = vector.load %arg5[%c0, %c0_1] : memref<8x256xf32, #tpu.memory_space<vmem>>, vector<8x256xf32>
    %c0_2 = arith.constant 0 : index
    %c0_3 = arith.constant 0 : index
    %4 = vector.load %arg2[%c0_2, %c0_3] : memref<8x1152xbf16, #tpu.memory_space<vmem>>, vector<8x1152xbf16>
    %c0_4 = arith.constant 0 : index
    %c0_5 = arith.constant 0 : index
    %5 = vector.load %arg3[%c0_4, %c0_5] : memref<1152x256xbf16, #tpu.memory_space<vmem>>, vector<1152x256xbf16>
    %cst = arith.constant dense<0.000000e+00> : vector<8x256xf32>
    %6 = tpu.matmul %4, %5, %cst {dimension_numbers = #tpu.dot_dimension_numbers<[1], [0], [0], [1], [0, 0, 1, 1], [], []>} : vector<8x1152xbf16>, vector<1152x256xbf16>, vector<8x256xf32> -> vector<8x256xf32>
    %7 = arith.addf %3, %6 : vector<8x256xf32>
    %c0_6 = arith.constant 0 : index
    %c0_7 = arith.constant 0 : index
    %8 = vector.load %arg5[%c0_6, %c0_7] : memref<8x256xf32, #tpu.memory_space<vmem>>, vector<8x256xf32>
    tpu.vector_store %arg5[%c0_6, %c0_7], %7 {strides = array<i32>} : memref<8x256xf32, #tpu.memory_space<vmem>>, vector<8x256xf32>,
    %c0_i32_8 = arith.constant 0 : i32
    %9 = arith.cmpi eq, %arg1, %c0_i32_8 : i32
    %10 = arith.extui %9 : i1 to i32
    %c0_i32_9 = arith.constant 0 : i32
    %11 = arith.cmpi ne, %10, %c0_i32_9 : i32
    scf.if %11 {
      %c0_10 = arith.constant 0 : index
      %c0_11 = arith.constant 0 : index
      %12 = vector.load %arg5[%c0_10, %c0_11] : memref<8x256xf32, #tpu.memory_space<vmem>>, vector<8x256xf32>
      %c0_12 = arith.constant 0 : index
      %c0_13 = arith.constant 0 : index
      %13 = vector.load %arg4[%c0_12, %c0_13] : memref<1x256xf32, #tpu.memory_space<vmem>>, vector<1x256xf32>
      %14 = vector.broadcast %13 : vector<1x256xf32> to vector<8x256xf32>
      %15 = arith.addf %12, %14 : vector<8x256xf32>
      %cst_14 = arith.constant 0.000000e+00 : f32
      %16 = vector.broadcast %cst_14 : f32 to vector<8x256xf32>
      %17 = arith.maximumf %15, %16 : vector<8x256xf32>
      %c0_15 = arith.constant 0 : index
      %c0_16 = arith.constant 0 : index
      %18 = vector.load %arg5[%c0_15, %c0_16] : memref<8x256xf32, #tpu.memory_space<vmem>>, vector<8x256xf32>
      tpu.vector_store %arg5[%c0_15, %c0_16], %17 {strides = array<i32>} : memref<8x256xf32, #tpu.memory_space<vmem>>, vector<8x256xf32>,
    } else {
    }
    return
  }
  func.func @transform_0(%arg0: i32, %arg1: i32) -> (i32, i32) {
    %c0_i32 = arith.constant 0 : i32
    return %arg0, %arg1 : i32, i32
  }
  func.func @transform_1(%arg0: i32, %arg1: i32) -> (i32, i32) {
    %c0_i32 = arith.constant 0 : i32
    %c0_i32_0 = arith.constant 0 : i32
    return %arg1, %c0_i32 : i32, i32
  }
  func.func @transform_2(%arg0: i32, %arg1: i32) -> (i32, i32) {
    %c0_i32 = arith.constant 0 : i32
    %c0_i32_0 = arith.constant 0 : i32
    %c0_i32_1 = arith.constant 0 : i32
    return %c0_i32, %c0_i32_0 : i32, i32
  }
  func.func @transform_3(%arg0: i32, %arg1: i32) -> (i32, i32) {
    %c0_i32 = arith.constant 0 : i32
    %c0_i32_0 = arith.constant 0 : i32
    return %arg0, %c0_i32 : i32, i32
  }
}

module attributes {stable_mosaic.version = 11 : i64} {
  func.func @_fused_matmul_kernel(%arg0: i32, %arg1: i32, %arg2: memref<8x1152xbf16, #tpu.memory_space<vmem>>, %arg3: memref<1152x256xbf16, #tpu.memory_space<vmem>>, %arg4: memref<1x256xf32, #tpu.memory_space<vmem>>, %arg5: memref<8x256xf32, #tpu.memory_space<vmem>>) attributes {dimension_semantics = [#tpu.dimension_semantics<parallel>, #tpu.dimension_semantics<arbitrary>], iteration_bounds = array<i64: 1, 2>, scalar_prefetch = 0 : i64, scratch_operands = 0 : i64, tpu.core_type = #tpu.core_type<tc>, window_params = [{transform_indices = @transform_0, window_bounds = array<i64: 8, 1152>}, {transform_indices = @transform_1, window_bounds = array<i64: 1152, 256>}, {pipeline_mode = #tpu.pipeline_mode<synchronous>, transform_indices = @transform_2, window_bounds = array<i64: 1, 256>}, {transform_indices = @transform_3, window_bounds = array<i64: 8, 256>}]} {
    %c0_i32 = arith.constant 0 : i32
    %0 = arith.cmpi eq, %arg1, %c0_i32 : i32
    %1 = arith.extui %0 : i1 to i32
    %c0_i32_0 = arith.constant 0 : i32
    %2 = arith.cmpi ne, %1, %c0_i32_0 : i32
    scf.if %2 {
      %cst_9 = arith.constant 0.000000e+00 : f32
      %12 = vector.broadcast %cst_9 : f32 to vector<8x256xf32>
      %c0_10 = arith.constant 0 : index
      %c0_11 = arith.constant 0 : index
      %13 = vector.load %arg5[%c0_10, %c0_11] : memref<8x256xf32, #tpu.memory_space<vmem>>, vector<8x256xf32>
      tpu.vector_store %arg5[%c0_10, %c0_11], %12 {strides = array<i32>} : memref<8x256xf32, #tpu.memory_space<vmem>>, vector<8x256xf32>,
    } else {
    }
    %c0 = arith.constant 0 : index
    %c0_1 = arith.constant 0 : index
    %3 = vector.load %arg5[%c0, %c0_1] : memref<8x256xf32, #tpu.memory_space<vmem>>, vector<8x256xf32>
    %c0_2 = arith.constant 0 : index
    %c0_3 = arith.constant 0 : index
    %4 = vector.load %arg2[%c0_2, %c0_3] : memref<8x1152xbf16, #tpu.memory_space<vmem>>, vector<8x1152xbf16>
    %c0_4 = arith.constant 0 : index
    %c0_5 = arith.constant 0 : index
    %5 = vector.load %arg3[%c0_4, %c0_5] : memref<1152x256xbf16, #tpu.memory_space<vmem>>, vector<1152x256xbf16>
    %cst = arith.constant dense<0.000000e+00> : vector<8x256xf32>
    %6 = tpu.matmul %4, %5, %cst {dimension_numbers = #tpu.dot_dimension_numbers<[1], [0], [0], [1], [0, 0, 1, 1], [], []>} : vector<8x1152xbf16>, vector<1152x256xbf16>, vector<8x256xf32> -> vector<8x256xf32>
    %7 = arith.addf %3, %6 : vector<8x256xf32>
    %c0_6 = arith.constant 0 : index
    %c0_7 = arith.constant 0 : index
    %8 = vector.load %arg5[%c0_6, %c0_7] : memref<8x256xf32, #tpu.memory_space<vmem>>, vector<8x256xf32>
    tpu.vector_store %arg5[%c0_6, %c0_7], %7 {strides = array<i32>} : memref<8x256xf32, #tpu.memory_space<vmem>>, vector<8x256xf32>,
    %c1_i32 = arith.constant 1 : i32
    %9 = arith.cmpi eq, %arg1, %c1_i32 : i32
    %10 = arith.extui %9 : i1 to i32
    %c0_i32_8 = arith.constant 0 : i32
    %11 = arith.cmpi ne, %10, %c0_i32_8 : i32
    scf.if %11 {
      %c0_9 = arith.constant 0 : index
      %c0_10 = arith.constant 0 : index
      %12 = vector.load %arg5[%c0_9, %c0_10] : memref<8x256xf32, #tpu.memory_space<vmem>>, vector<8x256xf32>
      %c0_11 = arith.constant 0 : index
      %c0_12 = arith.constant 0 : index
      %13 = vector.load %arg4[%c0_11, %c0_12] : memref<1x256xf32, #tpu.memory_space<vmem>>, vector<1x256xf32>
      %14 = vector.broadcast %13 : vector<1x256xf32> to vector<8x256xf32>
      %15 = arith.addf %12, %14 : vector<8x256xf32>
      %cst_13 = arith.constant 0.000000e+00 : f32
      %16 = vector.broadcast %cst_13 : f32 to vector<8x256xf32>
      %17 = arith.maximumf %15, %16 : vector<8x256xf32>
      %c0_14 = arith.constant 0 : index
      %c0_15 = arith.constant 0 : index
      %18 = vector.load %arg5[%c0_14, %c0_15] : memref<8x256xf32, #tpu.memory_space<vmem>>, vector<8x256xf32>
      tpu.vector_store %arg5[%c0_14, %c0_15], %17 {strides = array<i32>} : memref<8x256xf32, #tpu.memory_space<vmem>>, vector<8x256xf32>,
    } else {
    }
    return
  }
  func.func @transform_0(%arg0: i32, %arg1: i32) -> (i32, i32) {
    %c0_i32 = arith.constant 0 : i32
    return %arg0, %arg1 : i32, i32
  }
  func.func @transform_1(%arg0: i32, %arg1: i32) -> (i32, i32) {
    %c0_i32 = arith.constant 0 : i32
    %c0_i32_0 = arith.constant 0 : i32
    return %arg1, %c0_i32 : i32, i32
  }
  func.func @transform_2(%arg0: i32, %arg1: i32) -> (i32, i32) {
    %c0_i32 = arith.constant 0 : i32
    %c0_i32_0 = arith.constant 0 : i32
    %c0_i32_1 = arith.constant 0 : i32
    return %c0_i32, %c0_i32_0 : i32, i32
  }
  func.func @transform_3(%arg0: i32, %arg1: i32) -> (i32, i32) {
    %c0_i32 = arith.constant 0 : i32
    %c0_i32_0 = arith.constant 0 : i32
    return %arg0, %c0_i32 : i32, i32
  }
}

module attributes {stable_mosaic.version = 11 : i64} {
  func.func @_fused_matmul_kernel(%arg0: i32, %arg1: i32, %arg2: memref<8x256xbf16, #tpu.memory_space<vmem>>, %arg3: memref<256x2048xbf16, #tpu.memory_space<vmem>>, %arg4: memref<1x2048xf32, #tpu.memory_space<vmem>>, %arg5: memref<8x2048xf32, #tpu.memory_space<vmem>>) attributes {dimension_semantics = [#tpu.dimension_semantics<parallel>, #tpu.dimension_semantics<arbitrary>], iteration_bounds = array<i64: 1, 1>, scalar_prefetch = 0 : i64, scratch_operands = 0 : i64, tpu.core_type = #tpu.core_type<tc>, window_params = [{transform_indices = @transform_0, window_bounds = array<i64: 8, 256>}, {transform_indices = @transform_1, window_bounds = array<i64: 256, 2048>}, {pipeline_mode = #tpu.pipeline_mode<synchronous>, transform_indices = @transform_2, window_bounds = array<i64: 1, 2048>}, {transform_indices = @transform_3, window_bounds = array<i64: 8, 2048>}]} {
    %c0_i32 = arith.constant 0 : i32
    %0 = arith.cmpi eq, %arg1, %c0_i32 : i32
    %1 = arith.extui %0 : i1 to i32
    %c0_i32_0 = arith.constant 0 : i32
    %2 = arith.cmpi ne, %1, %c0_i32_0 : i32
    scf.if %2 {
      %cst_10 = arith.constant 0.000000e+00 : f32
      %12 = vector.broadcast %cst_10 : f32 to vector<8x2048xf32>
      %c0_11 = arith.constant 0 : index
      %c0_12 = arith.constant 0 : index
      %13 = vector.load %arg5[%c0_11, %c0_12] : memref<8x2048xf32, #tpu.memory_space<vmem>>, vector<8x2048xf32>
      tpu.vector_store %arg5[%c0_11, %c0_12], %12 {strides = array<i32>} : memref<8x2048xf32, #tpu.memory_space<vmem>>, vector<8x2048xf32>,
    } else {
    }
    %c0 = arith.constant 0 : index
    %c0_1 = arith.constant 0 : index
    %3 = vector.load %arg5[%c0, %c0_1] : memref<8x2048xf32, #tpu.memory_space<vmem>>, vector<8x2048xf32>
    %c0_2 = arith.constant 0 : index
    %c0_3 = arith.constant 0 : index
    %4 = vector.load %arg2[%c0_2, %c0_3] : memref<8x256xbf16, #tpu.memory_space<vmem>>, vector<8x256xbf16>
    %c0_4 = arith.constant 0 : index
    %c0_5 = arith.constant 0 : index
    %5 = vector.load %arg3[%c0_4, %c0_5] : memref<256x2048xbf16, #tpu.memory_space<vmem>>, vector<256x2048xbf16>
    %cst = arith.constant dense<0.000000e+00> : vector<8x2048xf32>
    %6 = tpu.matmul %4, %5, %cst {dimension_numbers = #tpu.dot_dimension_numbers<[1], [0], [0], [1], [0, 0, 1, 1], [], []>} : vector<8x256xbf16>, vector<256x2048xbf16>, vector<8x2048xf32> -> vector<8x2048xf32>
    %7 = arith.addf %3, %6 : vector<8x2048xf32>
    %c0_6 = arith.constant 0 : index
    %c0_7 = arith.constant 0 : index
    %8 = vector.load %arg5[%c0_6, %c0_7] : memref<8x2048xf32, #tpu.memory_space<vmem>>, vector<8x2048xf32>
    tpu.vector_store %arg5[%c0_6, %c0_7], %7 {strides = array<i32>} : memref<8x2048xf32, #tpu.memory_space<vmem>>, vector<8x2048xf32>,
    %c0_i32_8 = arith.constant 0 : i32
    %9 = arith.cmpi eq, %arg1, %c0_i32_8 : i32
    %10 = arith.extui %9 : i1 to i32
    %c0_i32_9 = arith.constant 0 : i32
    %11 = arith.cmpi ne, %10, %c0_i32_9 : i32
    scf.if %11 {
      %c0_10 = arith.constant 0 : index
      %c0_11 = arith.constant 0 : index
      %12 = vector.load %arg5[%c0_10, %c0_11] : memref<8x2048xf32, #tpu.memory_space<vmem>>, vector<8x2048xf32>
      %c0_12 = arith.constant 0 : index
      %c0_13 = arith.constant 0 : index
      %13 = vector.load %arg4[%c0_12, %c0_13] : memref<1x2048xf32, #tpu.memory_space<vmem>>, vector<1x2048xf32>
      %14 = vector.broadcast %13 : vector<1x2048xf32> to vector<8x2048xf32>
      %15 = arith.addf %12, %14 : vector<8x2048xf32>
      %cst_14 = arith.constant 0.000000e+00 : f32
      %16 = vector.broadcast %cst_14 : f32 to vector<8x2048xf32>
      %17 = arith.maximumf %15, %16 : vector<8x2048xf32>
      %c0_15 = arith.constant 0 : index
      %c0_16 = arith.constant 0 : index
      %18 = vector.load %arg5[%c0_15, %c0_16] : memref<8x2048xf32, #tpu.memory_space<vmem>>, vector<8x2048xf32>
      tpu.vector_store %arg5[%c0_15, %c0_16], %17 {strides = array<i32>} : memref<8x2048xf32, #tpu.memory_space<vmem>>, vector<8x2048xf32>,
    } else {
    }
    return
  }
  func.func @transform_0(%arg0: i32, %arg1: i32) -> (i32, i32) {
    %c0_i32 = arith.constant 0 : i32
    return %arg0, %arg1 : i32, i32
  }
  func.func @transform_1(%arg0: i32, %arg1: i32) -> (i32, i32) {
    %c0_i32 = arith.constant 0 : i32
    %c0_i32_0 = arith.constant 0 : i32
    return %arg1, %c0_i32 : i32, i32
  }
  func.func @transform_2(%arg0: i32, %arg1: i32) -> (i32, i32) {
    %c0_i32 = arith.constant 0 : i32
    %c0_i32_0 = arith.constant 0 : i32
    %c0_i32_1 = arith.constant 0 : i32
    return %c0_i32, %c0_i32_0 : i32, i32
  }
  func.func @transform_3(%arg0: i32, %arg1: i32) -> (i32, i32) {
    %c0_i32 = arith.constant 0 : i32
    %c0_i32_0 = arith.constant 0 : i32
    return %arg0, %c0_i32 : i32, i32
  }
}

module attributes {stable_mosaic.version = 11 : i64} {
  func.func @_fused_matmul_kernel(%arg0: i32, %arg1: i32, %arg2: memref<32x128xbf16, #tpu.memory_space<vmem>>, %arg3: memref<128x512xbf16, #tpu.memory_space<vmem>>, %arg4: memref<1x512xf32, #tpu.memory_space<vmem>>, %arg5: memref<32x512xf32, #tpu.memory_space<vmem>>) attributes {dimension_semantics = [#tpu.dimension_semantics<parallel>, #tpu.dimension_semantics<arbitrary>], iteration_bounds = array<i64: 1, 1>, scalar_prefetch = 0 : i64, scratch_operands = 0 : i64, tpu.core_type = #tpu.core_type<tc>, window_params = [{transform_indices = @transform_0, window_bounds = array<i64: 32, 128>}, {transform_indices = @transform_1, window_bounds = array<i64: 128, 512>}, {pipeline_mode = #tpu.pipeline_mode<synchronous>, transform_indices = @transform_2, window_bounds = array<i64: 1, 512>}, {transform_indices = @transform_3, window_bounds = array<i64: 32, 512>}]} {
    %c0_i32 = arith.constant 0 : i32
    %0 = arith.cmpi eq, %arg1, %c0_i32 : i32
    %1 = arith.extui %0 : i1 to i32
    %c0_i32_0 = arith.constant 0 : i32
    %2 = arith.cmpi ne, %1, %c0_i32_0 : i32
    scf.if %2 {
      %cst_10 = arith.constant 0.000000e+00 : f32
      %12 = vector.broadcast %cst_10 : f32 to vector<32x512xf32>
      %c0_11 = arith.constant 0 : index
      %c0_12 = arith.constant 0 : index
      %13 = vector.load %arg5[%c0_11, %c0_12] : memref<32x512xf32, #tpu.memory_space<vmem>>, vector<32x512xf32>
      tpu.vector_store %arg5[%c0_11, %c0_12], %12 {strides = array<i32>} : memref<32x512xf32, #tpu.memory_space<vmem>>, vector<32x512xf32>,
    } else {
    }
    %c0 = arith.constant 0 : index
    %c0_1 = arith.constant 0 : index
    %3 = vector.load %arg5[%c0, %c0_1] : memref<32x512xf32, #tpu.memory_space<vmem>>, vector<32x512xf32>
    %c0_2 = arith.constant 0 : index
    %c0_3 = arith.constant 0 : index
    %4 = vector.load %arg2[%c0_2, %c0_3] : memref<32x128xbf16, #tpu.memory_space<vmem>>, vector<32x128xbf16>
    %c0_4 = arith.constant 0 : index
    %c0_5 = arith.constant 0 : index
    %5 = vector.load %arg3[%c0_4, %c0_5] : memref<128x512xbf16, #tpu.memory_space<vmem>>, vector<128x512xbf16>
    %cst = arith.constant dense<0.000000e+00> : vector<32x512xf32>
    %6 = tpu.matmul %4, %5, %cst {dimension_numbers = #tpu.dot_dimension_numbers<[1], [0], [0], [1], [0, 0, 1, 1], [], []>} : vector<32x128xbf16>, vector<128x512xbf16>, vector<32x512xf32> -> vector<32x512xf32>
    %7 = arith.addf %3, %6 : vector<32x512xf32>
    %c0_6 = arith.constant 0 : index
    %c0_7 = arith.constant 0 : index
    %8 = vector.load %arg5[%c0_6, %c0_7] : memref<32x512xf32, #tpu.memory_space<vmem>>, vector<32x512xf32>
    tpu.vector_store %arg5[%c0_6, %c0_7], %7 {strides = array<i32>} : memref<32x512xf32, #tpu.memory_space<vmem>>, vector<32x512xf32>,
    %c0_i32_8 = arith.constant 0 : i32
    %9 = arith.cmpi eq, %arg1, %c0_i32_8 : i32
    %10 = arith.extui %9 : i1 to i32
    %c0_i32_9 = arith.constant 0 : i32
    %11 = arith.cmpi ne, %10, %c0_i32_9 : i32
    scf.if %11 {
      %c0_10 = arith.constant 0 : index
      %c0_11 = arith.constant 0 : index
      %12 = vector.load %arg5[%c0_10, %c0_11] : memref<32x512xf32, #tpu.memory_space<vmem>>, vector<32x512xf32>
      %c0_12 = arith.constant 0 : index
      %c0_13 = arith.constant 0 : index
      %13 = vector.load %arg4[%c0_12, %c0_13] : memref<1x512xf32, #tpu.memory_space<vmem>>, vector<1x512xf32>
      %14 = vector.broadcast %13 : vector<1x512xf32> to vector<32x512xf32>
      %15 = arith.addf %12, %14 : vector<32x512xf32>
      %cst_14 = arith.constant 0.000000e+00 : f32
      %16 = vector.broadcast %cst_14 : f32 to vector<32x512xf32>
      %17 = arith.maximumf %15, %16 : vector<32x512xf32>
      %c0_15 = arith.constant 0 : index
      %c0_16 = arith.constant 0 : index
      %18 = vector.load %arg5[%c0_15, %c0_16] : memref<32x512xf32, #tpu.memory_space<vmem>>, vector<32x512xf32>
      tpu.vector_store %arg5[%c0_15, %c0_16], %17 {strides = array<i32>} : memref<32x512xf32, #tpu.memory_space<vmem>>, vector<32x512xf32>,
    } else {
    }
    return
  }
  func.func @transform_0(%arg0: i32, %arg1: i32) -> (i32, i32) {
    %c0_i32 = arith.constant 0 : i32
    return %arg0, %arg1 : i32, i32
  }
  func.func @transform_1(%arg0: i32, %arg1: i32) -> (i32, i32) {
    %c0_i32 = arith.constant 0 : i32
    %c0_i32_0 = arith.constant 0 : i32
    return %arg1, %c0_i32 : i32, i32
  }
  func.func @transform_2(%arg0: i32, %arg1: i32) -> (i32, i32) {
    %c0_i32 = arith.constant 0 : i32
    %c0_i32_0 = arith.constant 0 : i32
    %c0_i32_1 = arith.constant 0 : i32
    return %c0_i32, %c0_i32_0 : i32, i32
  }
  func.func @transform_3(%arg0: i32, %arg1: i32) -> (i32, i32) {
    %c0_i32 = arith.constant 0 : i32
    %c0_i32_0 = arith.constant 0 : i32
    return %arg0, %c0_i32 : i32, i32
  }
}

module attributes {stable_mosaic.version = 11 : i64} {
  func.func @_fused_matmul_kernel(%arg0: i32, %arg1: i32, %arg2: memref<128x128xbf16, #tpu.memory_space<vmem>>, %arg3: memref<128x128xbf16, #tpu.memory_space<vmem>>, %arg4: memref<1x128xf32, #tpu.memory_space<vmem>>, %arg5: memref<128x128xf32, #tpu.memory_space<vmem>>) attributes {dimension_semantics = [#tpu.dimension_semantics<parallel>, #tpu.dimension_semantics<arbitrary>], iteration_bounds = array<i64: 1, 1>, scalar_prefetch = 0 : i64, scratch_operands = 0 : i64, tpu.core_type = #tpu.core_type<tc>, window_params = [{transform_indices = @transform_0, window_bounds = array<i64: 128, 128>}, {transform_indices = @transform_1, window_bounds = array<i64: 128, 128>}, {pipeline_mode = #tpu.pipeline_mode<synchronous>, transform_indices = @transform_2, window_bounds = array<i64: 1, 128>}, {transform_indices = @transform_3, window_bounds = array<i64: 128, 128>}]} {
    %c0_i32 = arith.constant 0 : i32
    %0 = arith.cmpi eq, %arg1, %c0_i32 : i32
    %1 = arith.extui %0 : i1 to i32
    %c0_i32_0 = arith.constant 0 : i32
    %2 = arith.cmpi ne, %1, %c0_i32_0 : i32
    scf.if %2 {
      %cst_10 = arith.constant 0.000000e+00 : f32
      %12 = vector.broadcast %cst_10 : f32 to vector<128x128xf32>
      %c0_11 = arith.constant 0 : index
      %c0_12 = arith.constant 0 : index
      %13 = vector.load %arg5[%c0_11, %c0_12] : memref<128x128xf32, #tpu.memory_space<vmem>>, vector<128x128xf32>
      tpu.vector_store %arg5[%c0_11, %c0_12], %12 {strides = array<i32>} : memref<128x128xf32, #tpu.memory_space<vmem>>, vector<128x128xf32>,
    } else {
    }
    %c0 = arith.constant 0 : index
    %c0_1 = arith.constant 0 : index
    %3 = vector.load %arg5[%c0, %c0_1] : memref<128x128xf32, #tpu.memory_space<vmem>>, vector<128x128xf32>
    %c0_2 = arith.constant 0 : index
    %c0_3 = arith.constant 0 : index
    %4 = vector.load %arg2[%c0_2, %c0_3] : memref<128x128xbf16, #tpu.memory_space<vmem>>, vector<128x128xbf16>
    %c0_4 = arith.constant 0 : index
    %c0_5 = arith.constant 0 : index
    %5 = vector.load %arg3[%c0_4, %c0_5] : memref<128x128xbf16, #tpu.memory_space<vmem>>, vector<128x128xbf16>
    %cst = arith.constant dense<0.000000e+00> : vector<128x128xf32>
    %6 = tpu.matmul %4, %5, %cst {dimension_numbers = #tpu.dot_dimension_numbers<[1], [0], [0], [1], [0, 0, 1, 1], [], []>} : vector<128x128xbf16>, vector<128x128xbf16>, vector<128x128xf32> -> vector<128x128xf32>
    %7 = arith.addf %3, %6 : vector<128x128xf32>
    %c0_6 = arith.constant 0 : index
    %c0_7 = arith.constant 0 : index
    %8 = vector.load %arg5[%c0_6, %c0_7] : memref<128x128xf32, #tpu.memory_space<vmem>>, vector<128x128xf32>
    tpu.vector_store %arg5[%c0_6, %c0_7], %7 {strides = array<i32>} : memref<128x128xf32, #tpu.memory_space<vmem>>, vector<128x128xf32>,
    %c0_i32_8 = arith.constant 0 : i32
    %9 = arith.cmpi eq, %arg1, %c0_i32_8 : i32
    %10 = arith.extui %9 : i1 to i32
    %c0_i32_9 = arith.constant 0 : i32
    %11 = arith.cmpi ne, %10, %c0_i32_9 : i32
    scf.if %11 {
      %c0_10 = arith.constant 0 : index
      %c0_11 = arith.constant 0 : index
      %12 = vector.load %arg5[%c0_10, %c0_11] : memref<128x128xf32, #tpu.memory_space<vmem>>, vector<128x128xf32>
      %c0_12 = arith.constant 0 : index
      %c0_13 = arith.constant 0 : index
      %13 = vector.load %arg4[%c0_12, %c0_13] : memref<1x128xf32, #tpu.memory_space<vmem>>, vector<1x128xf32>
      %14 = vector.broadcast %13 : vector<1x128xf32> to vector<128x128xf32>
      %15 = arith.addf %12, %14 : vector<128x128xf32>
      %cst_14 = arith.constant 0.000000e+00 : f32
      %16 = vector.broadcast %cst_14 : f32 to vector<128x128xf32>
      %17 = arith.maximumf %15, %16 : vector<128x128xf32>
      %c0_15 = arith.constant 0 : index
      %c0_16 = arith.constant 0 : index
      %18 = vector.load %arg5[%c0_15, %c0_16] : memref<128x128xf32, #tpu.memory_space<vmem>>, vector<128x128xf32>
      tpu.vector_store %arg5[%c0_15, %c0_16], %17 {strides = array<i32>} : memref<128x128xf32, #tpu.memory_space<vmem>>, vector<128x128xf32>,
    } else {
    }
    return
  }
  func.func @transform_0(%arg0: i32, %arg1: i32) -> (i32, i32) {
    %c0_i32 = arith.constant 0 : i32
    return %arg0, %arg1 : i32, i32
  }
  func.func @transform_1(%arg0: i32, %arg1: i32) -> (i32, i32) {
    %c0_i32 = arith.constant 0 : i32
    %c0_i32_0 = arith.constant 0 : i32
    return %arg1, %c0_i32 : i32, i32
  }
  func.func @transform_2(%arg0: i32, %arg1: i32) -> (i32, i32) {
    %c0_i32 = arith.constant 0 : i32
    %c0_i32_0 = arith.constant 0 : i32
    %c0_i32_1 = arith.constant 0 : i32
    return %c0_i32, %c0_i32_0 : i32, i32
  }
  func.func @transform_3(%arg0: i32, %arg1: i32) -> (i32, i32) {
    %c0_i32 = arith.constant 0 : i32
    %c0_i32_0 = arith.constant 0 : i32
    return %arg0, %c0_i32 : i32, i32
  }
}

module attributes {stable_mosaic.version = 11 : i64} {
  func.func @_fused_matmul_kernel(%arg0: i32, %arg1: i32, %arg2: memref<128x1792xbf16, #tpu.memory_space<vmem>>, %arg3: memref<1792x128xbf16, #tpu.memory_space<vmem>>, %arg4: memref<1x128xf32, #tpu.memory_space<vmem>>, %arg5: memref<128x128xf32, #tpu.memory_space<vmem>>) attributes {dimension_semantics = [#tpu.dimension_semantics<parallel>, #tpu.dimension_semantics<arbitrary>], iteration_bounds = array<i64: 1, 2>, scalar_prefetch = 0 : i64, scratch_operands = 0 : i64, tpu.core_type = #tpu.core_type<tc>, window_params = [{transform_indices = @transform_0, window_bounds = array<i64: 128, 1792>}, {transform_indices = @transform_1, window_bounds = array<i64: 1792, 128>}, {pipeline_mode = #tpu.pipeline_mode<synchronous>, transform_indices = @transform_2, window_bounds = array<i64: 1, 128>}, {transform_indices = @transform_3, window_bounds = array<i64: 128, 128>}]} {
    %c0_i32 = arith.constant 0 : i32
    %0 = arith.cmpi eq, %arg1, %c0_i32 : i32
    %1 = arith.extui %0 : i1 to i32
    %c0_i32_0 = arith.constant 0 : i32
    %2 = arith.cmpi ne, %1, %c0_i32_0 : i32
    scf.if %2 {
      %cst_9 = arith.constant 0.000000e+00 : f32
      %12 = vector.broadcast %cst_9 : f32 to vector<128x128xf32>
      %c0_10 = arith.constant 0 : index
      %c0_11 = arith.constant 0 : index
      %13 = vector.load %arg5[%c0_10, %c0_11] : memref<128x128xf32, #tpu.memory_space<vmem>>, vector<128x128xf32>
      tpu.vector_store %arg5[%c0_10, %c0_11], %12 {strides = array<i32>} : memref<128x128xf32, #tpu.memory_space<vmem>>, vector<128x128xf32>,
    } else {
    }
    %c0 = arith.constant 0 : index
    %c0_1 = arith.constant 0 : index
    %3 = vector.load %arg5[%c0, %c0_1] : memref<128x128xf32, #tpu.memory_space<vmem>>, vector<128x128xf32>
    %c0_2 = arith.constant 0 : index
    %c0_3 = arith.constant 0 : index
    %4 = vector.load %arg2[%c0_2, %c0_3] : memref<128x1792xbf16, #tpu.memory_space<vmem>>, vector<128x1792xbf16>
    %c0_4 = arith.constant 0 : index
    %c0_5 = arith.constant 0 : index
    %5 = vector.load %arg3[%c0_4, %c0_5] : memref<1792x128xbf16, #tpu.memory_space<vmem>>, vector<1792x128xbf16>
    %cst = arith.constant dense<0.000000e+00> : vector<128x128xf32>
    %6 = tpu.matmul %4, %5, %cst {dimension_numbers = #tpu.dot_dimension_numbers<[1], [0], [0], [1], [0, 0, 1, 1], [], []>} : vector<128x1792xbf16>, vector<1792x128xbf16>, vector<128x128xf32> -> vector<128x128xf32>
    %7 = arith.addf %3, %6 : vector<128x128xf32>
    %c0_6 = arith.constant 0 : index
    %c0_7 = arith.constant 0 : index
    %8 = vector.load %arg5[%c0_6, %c0_7] : memref<128x128xf32, #tpu.memory_space<vmem>>, vector<128x128xf32>
    tpu.vector_store %arg5[%c0_6, %c0_7], %7 {strides = array<i32>} : memref<128x128xf32, #tpu.memory_space<vmem>>, vector<128x128xf32>,
    %c1_i32 = arith.constant 1 : i32
    %9 = arith.cmpi eq, %arg1, %c1_i32 : i32
    %10 = arith.extui %9 : i1 to i32
    %c0_i32_8 = arith.constant 0 : i32
    %11 = arith.cmpi ne, %10, %c0_i32_8 : i32
    scf.if %11 {
      %c0_9 = arith.constant 0 : index
      %c0_10 = arith.constant 0 : index
      %12 = vector.load %arg5[%c0_9, %c0_10] : memref<128x128xf32, #tpu.memory_space<vmem>>, vector<128x128xf32>
      %c0_11 = arith.constant 0 : index
      %c0_12 = arith.constant 0 : index
      %13 = vector.load %arg4[%c0_11, %c0_12] : memref<1x128xf32, #tpu.memory_space<vmem>>, vector<1x128xf32>
      %14 = vector.broadcast %13 : vector<1x128xf32> to vector<128x128xf32>
      %15 = arith.addf %12, %14 : vector<128x128xf32>
      %cst_13 = arith.constant 0.000000e+00 : f32
      %16 = vector.broadcast %cst_13 : f32 to vector<128x128xf32>
      %17 = arith.maximumf %15, %16 : vector<128x128xf32>
      %c0_14 = arith.constant 0 : index
      %c0_15 = arith.constant 0 : index
      %18 = vector.load %arg5[%c0_14, %c0_15] : memref<128x128xf32, #tpu.memory_space<vmem>>, vector<128x128xf32>
      tpu.vector_store %arg5[%c0_14, %c0_15], %17 {strides = array<i32>} : memref<128x128xf32, #tpu.memory_space<vmem>>, vector<128x128xf32>,
    } else {
    }
    return
  }
  func.func @transform_0(%arg0: i32, %arg1: i32) -> (i32, i32) {
    %c0_i32 = arith.constant 0 : i32
    return %arg0, %arg1 : i32, i32
  }
  func.func @transform_1(%arg0: i32, %arg1: i32) -> (i32, i32) {
    %c0_i32 = arith.constant 0 : i32
    %c0_i32_0 = arith.constant 0 : i32
    return %arg1, %c0_i32 : i32, i32
  }
  func.func @transform_2(%arg0: i32, %arg1: i32) -> (i32, i32) {
    %c0_i32 = arith.constant 0 : i32
    %c0_i32_0 = arith.constant 0 : i32
    %c0_i32_1 = arith.constant 0 : i32
    return %c0_i32, %c0_i32_0 : i32, i32
  }
  func.func @transform_3(%arg0: i32, %arg1: i32) -> (i32, i32) {
    %c0_i32 = arith.constant 0 : i32
    %c0_i32_0 = arith.constant 0 : i32
    return %arg0, %c0_i32 : i32, i32
  }
}

module attributes {stable_mosaic.version = 11 : i64} {
  func.func @_fused_matmul_kernel(%arg0: i32, %arg1: i32, %arg2: memref<128x128xbf16, #tpu.memory_space<vmem>>, %arg3: memref<128x128xbf16, #tpu.memory_space<vmem>>, %arg4: memref<1x128xf32, #tpu.memory_space<vmem>>, %arg5: memref<128x128xf32, #tpu.memory_space<vmem>>) attributes {dimension_semantics = [#tpu.dimension_semantics<parallel>, #tpu.dimension_semantics<arbitrary>], iteration_bounds = array<i64: 1, 1>, scalar_prefetch = 0 : i64, scratch_operands = 0 : i64, tpu.core_type = #tpu.core_type<tc>, window_params = [{transform_indices = @transform_0, window_bounds = array<i64: 128, 128>}, {transform_indices = @transform_1, window_bounds = array<i64: 128, 128>}, {pipeline_mode = #tpu.pipeline_mode<synchronous>, transform_indices = @transform_2, window_bounds = array<i64: 1, 128>}, {transform_indices = @transform_3, window_bounds = array<i64: 128, 128>}]} {
    %c0_i32 = arith.constant 0 : i32
    %0 = arith.cmpi eq, %arg1, %c0_i32 : i32
    %1 = arith.extui %0 : i1 to i32
    %c0_i32_0 = arith.constant 0 : i32
    %2 = arith.cmpi ne, %1, %c0_i32_0 : i32
    scf.if %2 {
      %cst_10 = arith.constant 0.000000e+00 : f32
      %12 = vector.broadcast %cst_10 : f32 to vector<128x128xf32>
      %c0_11 = arith.constant 0 : index
      %c0_12 = arith.constant 0 : index
      %13 = vector.load %arg5[%c0_11, %c0_12] : memref<128x128xf32, #tpu.memory_space<vmem>>, vector<128x128xf32>
      tpu.vector_store %arg5[%c0_11, %c0_12], %12 {strides = array<i32>} : memref<128x128xf32, #tpu.memory_space<vmem>>, vector<128x128xf32>,
    } else {
    }
    %c0 = arith.constant 0 : index
    %c0_1 = arith.constant 0 : index
    %3 = vector.load %arg5[%c0, %c0_1] : memref<128x128xf32, #tpu.memory_space<vmem>>, vector<128x128xf32>
    %c0_2 = arith.constant 0 : index
    %c0_3 = arith.constant 0 : index
    %4 = vector.load %arg2[%c0_2, %c0_3] : memref<128x128xbf16, #tpu.memory_space<vmem>>, vector<128x128xbf16>
    %c0_4 = arith.constant 0 : index
    %c0_5 = arith.constant 0 : index
    %5 = vector.load %arg3[%c0_4, %c0_5] : memref<128x128xbf16, #tpu.memory_space<vmem>>, vector<128x128xbf16>
    %cst = arith.constant dense<0.000000e+00> : vector<128x128xf32>
    %6 = tpu.matmul %4, %5, %cst {dimension_numbers = #tpu.dot_dimension_numbers<[1], [0], [0], [1], [0, 0, 1, 1], [], []>} : vector<128x128xbf16>, vector<128x128xbf16>, vector<128x128xf32> -> vector<128x128xf32>
    %7 = arith.addf %3, %6 : vector<128x128xf32>
    %c0_6 = arith.constant 0 : index
    %c0_7 = arith.constant 0 : index
    %8 = vector.load %arg5[%c0_6, %c0_7] : memref<128x128xf32, #tpu.memory_space<vmem>>, vector<128x128xf32>
    tpu.vector_store %arg5[%c0_6, %c0_7], %7 {strides = array<i32>} : memref<128x128xf32, #tpu.memory_space<vmem>>, vector<128x128xf32>,
    %c0_i32_8 = arith.constant 0 : i32
    %9 = arith.cmpi eq, %arg1, %c0_i32_8 : i32
    %10 = arith.extui %9 : i1 to i32
    %c0_i32_9 = arith.constant 0 : i32
    %11 = arith.cmpi ne, %10, %c0_i32_9 : i32
    scf.if %11 {
      %c0_10 = arith.constant 0 : index
      %c0_11 = arith.constant 0 : index
      %12 = vector.load %arg5[%c0_10, %c0_11] : memref<128x128xf32, #tpu.memory_space<vmem>>, vector<128x128xf32>
      %c0_12 = arith.constant 0 : index
      %c0_13 = arith.constant 0 : index
      %13 = vector.load %arg4[%c0_12, %c0_13] : memref<1x128xf32, #tpu.memory_space<vmem>>, vector<1x128xf32>
      %14 = vector.broadcast %13 : vector<1x128xf32> to vector<128x128xf32>
      %15 = arith.addf %12, %14 : vector<128x128xf32>
      %c0_14 = arith.constant 0 : index
      %c0_15 = arith.constant 0 : index
      %16 = vector.load %arg5[%c0_14, %c0_15] : memref<128x128xf32, #tpu.memory_space<vmem>>, vector<128x128xf32>
      tpu.vector_store %arg5[%c0_14, %c0_15], %15 {strides = array<i32>} : memref<128x128xf32, #tpu.memory_space<vmem>>, vector<128x128xf32>,
    } else {
    }
    return
  }
  func.func @transform_0(%arg0: i32, %arg1: i32) -> (i32, i32) {
    %c0_i32 = arith.constant 0 : i32
    return %arg0, %arg1 : i32, i32
  }
  func.func @transform_1(%arg0: i32, %arg1: i32) -> (i32, i32) {
    %c0_i32 = arith.constant 0 : i32
    %c0_i32_0 = arith.constant 0 : i32
    return %arg1, %c0_i32 : i32, i32
  }
  func.func @transform_2(%arg0: i32, %arg1: i32) -> (i32, i32) {
    %c0_i32 = arith.constant 0 : i32
    %c0_i32_0 = arith.constant 0 : i32
    %c0_i32_1 = arith.constant 0 : i32
    return %c0_i32, %c0_i32_0 : i32, i32
  }
  func.func @transform_3(%arg0: i32, %arg1: i32) -> (i32, i32) {
    %c0_i32 = arith.constant 0 : i32
    %c0_i32_0 = arith.constant 0 : i32
    return %arg0, %c0_i32 : i32, i32
  }
}

module attributes {stable_mosaic.version = 11 : i64} {
  func.func @_decode_kernel(%arg0: i32, %arg1: memref<7x768xf32, #tpu.memory_space<vmem>>, %arg2: memref<7x768xf32, #tpu.memory_space<vmem>>, %arg3: memref<7x768xf32, #tpu.memory_space<vmem>>) attributes {dimension_semantics = [#tpu.dimension_semantics<parallel>], iteration_bounds = array<i64: 1>, scalar_prefetch = 0 : i64, scratch_operands = 0 : i64, tpu.core_type = #tpu.core_type<tc>, window_params = [{transform_indices = @transform_0, window_bounds = array<i64: 7, 768>}, {transform_indices = @transform_1, window_bounds = array<i64: 7, 768>}, {transform_indices = @transform_2, window_bounds = array<i64: 7, 768>}]} {
    %c0 = arith.constant 0 : index
    %c0_0 = arith.constant 0 : index
    %0 = vector.load %arg1[%c0, %c0_0] : memref<7x768xf32, #tpu.memory_space<vmem>>, vector<7x768xf32>
    %c0_1 = arith.constant 0 : index
    %c0_2 = arith.constant 0 : index
    %1 = vector.load %arg2[%c0_1, %c0_2] : memref<7x768xf32, #tpu.memory_space<vmem>>, vector<7x768xf32>
    %2 = vector.extract_strided_slice %1 {offsets = [3, 0], sizes = [1, 768], strides = [1, 1]} : vector<7x768xf32> to vector<1x768xf32>
    %3 = vector.extract_strided_slice %1 {offsets = [3, 0], sizes = [1, 768], strides = [1, 1]} : vector<7x768xf32> to vector<1x768xf32>
    %4 = arith.mulf %2, %3 : vector<1x768xf32>
    %5 = vector.extract_strided_slice %1 {offsets = [4, 0], sizes = [1, 768], strides = [1, 1]} : vector<7x768xf32> to vector<1x768xf32>
    %6 = vector.extract_strided_slice %1 {offsets = [4, 0], sizes = [1, 768], strides = [1, 1]} : vector<7x768xf32> to vector<1x768xf32>
    %7 = arith.mulf %5, %6 : vector<1x768xf32>
    %8 = arith.addf %4, %7 : vector<1x768xf32>
    %9 = math.sqrt %8 : vector<1x768xf32>
    %10 = vector.extract_strided_slice %0 {offsets = [0, 0], sizes = [1, 768], strides = [1, 1]} : vector<7x768xf32> to vector<1x768xf32>
    %11 = arith.mulf %10, %9 : vector<1x768xf32>
    %12 = vector.extract_strided_slice %1 {offsets = [0, 0], sizes = [1, 768], strides = [1, 1]} : vector<7x768xf32> to vector<1x768xf32>
    %13 = arith.addf %11, %12 : vector<1x768xf32>
    %c0_3 = arith.constant 0 : index
    %c0_4 = arith.constant 0 : index
    %14 = vector.load %arg3[%c0_3, %c0_4] : memref<7x768xf32, #tpu.memory_space<vmem>>, vector<1x768xf32>
    tpu.vector_store %arg3[%c0_3, %c0_4], %13 {strides = array<i32>} : memref<7x768xf32, #tpu.memory_space<vmem>>, vector<1x768xf32>,
    %15 = vector.extract_strided_slice %0 {offsets = [1, 0], sizes = [1, 768], strides = [1, 1]} : vector<7x768xf32> to vector<1x768xf32>
    %16 = arith.mulf %15, %9 : vector<1x768xf32>
    %17 = vector.extract_strided_slice %1 {offsets = [1, 0], sizes = [1, 768], strides = [1, 1]} : vector<7x768xf32> to vector<1x768xf32>
    %18 = arith.addf %16, %17 : vector<1x768xf32>
    %c1 = arith.constant 1 : index
    %c0_5 = arith.constant 0 : index
    %19 = vector.load %arg3[%c1, %c0_5] : memref<7x768xf32, #tpu.memory_space<vmem>>, vector<1x768xf32>
    tpu.vector_store %arg3[%c1, %c0_5], %18 {strides = array<i32>} : memref<7x768xf32, #tpu.memory_space<vmem>>, vector<1x768xf32>,
    %20 = vector.extract_strided_slice %0 {offsets = [2, 0], sizes = [1, 768], strides = [1, 1]} : vector<7x768xf32> to vector<1x768xf32>
    %21 = vector.extract_strided_slice %1 {offsets = [5, 0], sizes = [1, 768], strides = [1, 1]} : vector<7x768xf32> to vector<1x768xf32>
    %22 = arith.mulf %20, %21 : vector<1x768xf32>
    %23 = vector.extract_strided_slice %1 {offsets = [2, 0], sizes = [1, 768], strides = [1, 1]} : vector<7x768xf32> to vector<1x768xf32>
    %24 = arith.addf %22, %23 : vector<1x768xf32>
    %c2 = arith.constant 2 : index
    %c0_6 = arith.constant 0 : index
    %25 = vector.load %arg3[%c2, %c0_6] : memref<7x768xf32, #tpu.memory_space<vmem>>, vector<1x768xf32>
    tpu.vector_store %arg3[%c2, %c0_6], %24 {strides = array<i32>} : memref<7x768xf32, #tpu.memory_space<vmem>>, vector<1x768xf32>,
    %26 = vector.extract_strided_slice %0 {offsets = [3, 0], sizes = [1, 768], strides = [1, 1]} : vector<7x768xf32> to vector<1x768xf32>
    %27 = math.exp %26 : vector<1x768xf32>
    %28 = vector.extract_strided_slice %1 {offsets = [3, 0], sizes = [1, 768], strides = [1, 1]} : vector<7x768xf32> to vector<1x768xf32>
    %29 = arith.mulf %27, %28 : vector<1x768xf32>
    %c3 = arith.constant 3 : index
    %c0_7 = arith.constant 0 : index
    %30 = vector.load %arg3[%c3, %c0_7] : memref<7x768xf32, #tpu.memory_space<vmem>>, vector<1x768xf32>
    tpu.vector_store %arg3[%c3, %c0_7], %29 {strides = array<i32>} : memref<7x768xf32, #tpu.memory_space<vmem>>, vector<1x768xf32>,
    %31 = vector.extract_strided_slice %0 {offsets = [4, 0], sizes = [1, 768], strides = [1, 1]} : vector<7x768xf32> to vector<1x768xf32>
    %32 = math.exp %31 : vector<1x768xf32>
    %33 = vector.extract_strided_slice %1 {offsets = [4, 0], sizes = [1, 768], strides = [1, 1]} : vector<7x768xf32> to vector<1x768xf32>
    %34 = arith.mulf %32, %33 : vector<1x768xf32>
    %c4 = arith.constant 4 : index
    %c0_8 = arith.constant 0 : index
    %35 = vector.load %arg3[%c4, %c0_8] : memref<7x768xf32, #tpu.memory_space<vmem>>, vector<1x768xf32>
    tpu.vector_store %arg3[%c4, %c0_8], %34 {strides = array<i32>} : memref<7x768xf32, #tpu.memory_space<vmem>>, vector<1x768xf32>,
    %36 = vector.extract_strided_slice %0 {offsets = [5, 0], sizes = [1, 768], strides = [1, 1]} : vector<7x768xf32> to vector<1x768xf32>
    %37 = math.exp %36 : vector<1x768xf32>
    %38 = vector.extract_strided_slice %1 {offsets = [5, 0], sizes = [1, 768], strides = [1, 1]} : vector<7x768xf32> to vector<1x768xf32>
    %39 = arith.mulf %37, %38 : vector<1x768xf32>
    %c5 = arith.constant 5 : index
    %c0_9 = arith.constant 0 : index
    %40 = vector.load %arg3[%c5, %c0_9] : memref<7x768xf32, #tpu.memory_space<vmem>>, vector<1x768xf32>
    tpu.vector_store %arg3[%c5, %c0_9], %39 {strides = array<i32>} : memref<7x768xf32, #tpu.memory_space<vmem>>, vector<1x768xf32>,
    %41 = vector.extract_strided_slice %0 {offsets = [6, 0], sizes = [1, 768], strides = [1, 1]} : vector<7x768xf32> to vector<1x768xf32>
    %42 = vector.extract_strided_slice %1 {offsets = [6, 0], sizes = [1, 768], strides = [1, 1]} : vector<7x768xf32> to vector<1x768xf32>
    %43 = arith.addf %41, %42 : vector<1x768xf32>
    %c6 = arith.constant 6 : index
    %c0_10 = arith.constant 0 : index
    %44 = vector.load %arg3[%c6, %c0_10] : memref<7x768xf32, #tpu.memory_space<vmem>>, vector<1x768xf32>
    tpu.vector_store %arg3[%c6, %c0_10], %43 {strides = array<i32>} : memref<7x768xf32, #tpu.memory_space<vmem>>, vector<1x768xf32>,
    return
  }
  func.func @transform_0(%arg0: i32) -> (i32, i32) {
    %c0_i32 = arith.constant 0 : i32
    %c0_i32_0 = arith.constant 0 : i32
    return %c0_i32, %arg0 : i32, i32
  }
  func.func @transform_1(%arg0: i32) -> (i32, i32) {
    %c0_i32 = arith.constant 0 : i32
    %c0_i32_0 = arith.constant 0 : i32
    return %c0_i32, %arg0 : i32, i32
  }
  func.func @transform_2(%arg0: i32) -> (i32, i32) {
    %c0_i32 = arith.constant 0 : i32
    %c0_i32_0 = arith.constant 0 : i32
    return %c0_i32, %arg0 : i32, i32
  }
}

</mosaic_0001>

<llo_original>
// kernel: backbone_forward.12
$region0: #{backbone_forward.12}
  #allocation0 [shape = 'u32[]', space=smem, size = 0x4, offset = 0x4, fixed_abs, tag = 'smem constant byte address 0x4 - core index']
  #allocation1 [shape = 'u32[144,128]{1,0:T(1,128)}', space=vmem, size = 0x12000, scoped, tag = 'internal scratch']
  %s0 = inlined_call_operand.vmem [shape: bf16[128,640], index: 0, kind: input, shape index: {}]
  %s1 = inlined_call_operand.vmem [shape: bf16[640,128], index: 1, kind: input, shape index: {}]
  %s2 = inlined_call_operand.vmem [shape: f32[1,128], index: 2, kind: input, shape index: {}]
  %s3 = inlined_call_operand.vmem [shape: f32[128,128], index: 3, kind: output, shape index: {}]
  %s4 = sld [smem:[#allocation0]]
  $region30: #{backbone_forward.12} parent=0
    _
  %s6 = ssub.s32 1, %s4
  %s7 = scalar_select 0, %s6, %s4
  // Predicated region
  $region2: #{backbone_forward.12} parent=0 // pred_check
    _
  $region3: #{backbone_forward.12} parent=0 // pred_check_branch
    %9 = sbr.rel (0) target = $region5
  $region4: #{backbone_forward.12} parent=0 // pred_region
    _
  $region5: #{backbone_forward.12} parent=0 // pred_fallthru
    _
  // Predicated region
  $region6: #{backbone_forward.12} parent=0 // pred_check
    _
  $region7: #{backbone_forward.12} parent=0 // pred_check_branch
    %11 = sbr.rel (0) target = $region9
  $region8: #{backbone_forward.12} parent=0 // pred_region
    _
  $region9: #{backbone_forward.12} parent=0 // pred_fallthru
    _
  // Predicated region
  $region10: #{backbone_forward.12} parent=0 // pred_check
    _
  $region11: #{backbone_forward.12} parent=0 // pred_check_branch
    %13 = sbr.rel (0) target = $region13
  $region12: #{backbone_forward.12} parent=0 // pred_region
    _
  $region13: #{backbone_forward.12} parent=0 // pred_fallthru
    _
  %p15 = scmp.eq.s32.totalorder 0, 0
  // Predicated region
  $region14: #{backbone_forward.12} parent=0 // pred_check
    %p16 = pneg %p15
  $region15: #{backbone_forward.12} parent=0 // pred_check_branch
    %18 = sbr.rel (%p16) target = $region17
  $region16: #{backbone_forward.12} parent=0 // pred_region
    %19 = vst [vmem:[%s3] sm:$0xff] 0.0
    %20 = vst [vmem:[%s3 + $0x8] sm:$0xff] 0.0
    %21 = vst [vmem:[%s3 + $0x10] sm:$0xff] 0.0
    %22 = vst [vmem:[%s3 + $0x18] sm:$0xff] 0.0
    %23 = vst [vmem:[%s3 + $0x20] sm:$0xff] 0.0
    %24 = vst [vmem:[%s3 + $0x28] sm:$0xff] 0.0
    %25 = vst [vmem:[%s3 + $0x30] sm:$0xff] 0.0
    %26 = vst [vmem:[%s3 + $0x38] sm:$0xff] 0.0
    %27 = vst [vmem:[%s3 + $0x40] sm:$0xff] 0.0
    %28 = vst [vmem:[%s3 + $0x48] sm:$0xff] 0.0
    %29 = vst [vmem:[%s3 + $0x50] sm:$0xff] 0.0
    %30 = vst [vmem:[%s3 + $0x58] sm:$0xff] 0.0
    %31 = vst [vmem:[%s3 + $0x60] sm:$0xff] 0.0
    %32 = vst [vmem:[%s3 + $0x68] sm:$0xff] 0.0
    %33 = vst [vmem:[%s3 + $0x70] sm:$0xff] 0.0
    %34 = vst [vmem:[%s3 + $0x78] sm:$0xff] 0.0
  $region17: #{backbone_forward.12} parent=0 // pred_fallthru
    _
  %v35 = vld [vmem:[%s3] sm:$0xff]
  %v36 = vld [vmem:[%s3 + $0x8] sm:$0xff]
  %v37 = vld [vmem:[%s3 + $0x10] sm:$0xff]
  %v38 = vld [vmem:[%s3 + $0x18] sm:$0xff]
  %v39 = vld [vmem:[%s3 + $0x20] sm:$0xff]
  %v40 = vld [vmem:[%s3 + $0x28] sm:$0xff]
  %v41 = vld [vmem:[%s3 + $0x30] sm:$0xff]
  %v42 = vld [vmem:[%s3 + $0x38] sm:$0xff]
  %v43 = vld [vmem:[%s3 + $0x40] sm:$0xff]
  %v44 = vld [vmem:[%s3 + $0x48] sm:$0xff]
  %v45 = vld [vmem:[%s3 + $0x50] sm:$0xff]
  %v46 = vld [vmem:[%s3 + $0x58] sm:$0xff]
  %v47 = vld [vmem:[%s3 + $0x60] sm:$0xff]
  %v48 = vld [vmem:[%s3 + $0x68] sm:$0xff]
  %v49 = vld [vmem:[%s3 + $0x70] sm:$0xff]
  %v50 = vld [vmem:[%s3 + $0x78] sm:$0xff]
  %v51 = vld [vmem:[%s0] sm:$0xff]
  %v52 = vld [vmem:[%s0 + $0x8] sm:$0xff]
  %v53 = vld [vmem:[%s0 + $0x10] sm:$0xf]
  %v54 = vld [vmem:[%s0 + $0x14] sm:$0xff]
  %v55 = vld [vmem:[%s0 + $0x1c] sm:$0xff]
  %v56 = vld [vmem:[%s0 + $0x24] sm:$0xf]
  %v57 = vld [vmem:[%s0 + $0x28] sm:$0xff]
  %v58 = vld [vmem:[%s0 + $0x30] sm:$0xff]
  %v59 = vld [vmem:[%s0 + $0x38] sm:$0xf]
  %v60 = vld [vmem:[%s0 + $0x3c] sm:$0xff]
  %v61 = vld [vmem:[%s0 + $0x44] sm:$0xff]
  %v62 = vld [vmem:[%s0 + $0x4c] sm:$0xf]
  %v63 = vld [vmem:[%s0 + $0x50] sm:$0xff]
  %v64 = vld [vmem:[%s0 + $0x58] sm:$0xff]
  %v65 = vld [vmem:[%s0 + $0x60] sm:$0xf]
  %v66 = vld [vmem:[%s0 + $0x64] sm:$0xff]
  %v67 = vld [vmem:[%s0 + $0x6c] sm:$0xff]
  %v68 = vld [vmem:[%s0 + $0x74] sm:$0xf]
  %v69 = vld [vmem:[%s0 + $0x78] sm:$0xff]
  %v70 = vld [vmem:[%s0 + $0x80] sm:$0xff]
  %v71 = vld [vmem:[%s0 + $0x88] sm:$0xf]
  %v72 = vld [vmem:[%s0 + $0x8c] sm:$0xff]
  %v73 = vld [vmem:[%s0 + $0x94] sm:$0xff]
  %v74 = vld [vmem:[%s0 + $0x9c] sm:$0xf]
  %v75 = vld [vmem:[%s0 + $0xa0] sm:$0xff]
  %v76 = vld [vmem:[%s0 + $0xa8] sm:$0xff]
  %v77 = vld [vmem:[%s0 + $0xb0] sm:$0xf]
  %v78 = vld [vmem:[%s0 + $0xb4] sm:$0xff]
  %v79 = vld [vmem:[%s0 + $0xbc] sm:$0xff]
  %v80 = vld [vmem:[%s0 + $0xc4] sm:$0xf]
  %v81 = vld [vmem:[%s0 + $0xc8] sm:$0xff]
  %v82 = vld [vmem:[%s0 + $0xd0] sm:$0xff]
  %v83 = vld [vmem:[%s0 + $0xd8] sm:$0xf]
  %v84 = vld [vmem:[%s0 + $0xdc] sm:$0xff]
  %v85 = vld [vmem:[%s0 + $0xe4] sm:$0xff]
  %v86 = vld [vmem:[%s0 + $0xec] sm:$0xf]
  %v87 = vld [vmem:[%s0 + $0xf0] sm:$0xff]
  %v88 = vld [vmem:[%s0 + $0xf8] sm:$0xff]
  %v89 = vld [vmem:[%s0 + $0x100] sm:$0xf]
  %v90 = vld [vmem:[%s0 + $0x104] sm:$0xff]
  %v91 = vld [vmem:[%s0 + $0x10c] sm:$0xff]
  %v92 = vld [vmem:[%s0 + $0x114] sm:$0xf]
  %v93 = vld [vmem:[%s0 + $0x118] sm:$0xff]
  %v94 = vld [vmem:[%s0 + $0x120] sm:$0xff]
  %v95 = vld [vmem:[%s0 + $0x128] sm:$0xf]
  %v96 = vld [vmem:[%s0 + $0x12c] sm:$0xff]
  %v97 = vld [vmem:[%s0 + $0x134] sm:$0xff]
  %v98 = vld [vmem:[%s0 + $0x13c] sm:$0xf]
  %v99 = vld [vmem:[%s1] sm:$0xf]
  %v100 = vld [vmem:[%s1 + $0x4] sm:$0xf]
  %v101 = vld [vmem:[%s1 + $0x8] sm:$0xf]
  %v102 = vld [vmem:[%s1 + $0xc] sm:$0xf]
  %v103 = vld [vmem:[%s1 + $0x10] sm:$0xf]
  %v104 = vld [vmem:[%s1 + $0x14] sm:$0xf]
  %v105 = vld [vmem:[%s1 + $0x18] sm:$0xf]
  %v106 = vld [vmem:[%s1 + $0x1c] sm:$0xf]
  %v107 = vld [vmem:[%s1 + $0x20] sm:$0xf]
  %v108 = vld [vmem:[%s1 + $0x24] sm:$0xf]
  %v109 = vld [vmem:[%s1 + $0x28] sm:$0xf]
  %v110 = vld [vmem:[%s1 + $0x2c] sm:$0xf]
  %v111 = vld [vmem:[%s1 + $0x30] sm:$0xf]
  %v112 = vld [vmem:[%s1 + $0x34] sm:$0xf]
  %v113 = vld [vmem:[%s1 + $0x38] sm:$0xf]
  %v114 = vld [vmem:[%s1 + $0x3c] sm:$0xf]
  %v115 = vld [vmem:[%s1 + $0x40] sm:$0xf]
  %v116 = vld [vmem:[%s1 + $0x44] sm:$0xf]
  %v117 = vld [vmem:[%s1 + $0x48] sm:$0xf]
  %v118 = vld [vmem:[%s1 + $0x4c] sm:$0xf]
  %v119 = vld [vmem:[%s1 + $0x50] sm:$0xf]
  %v120 = vld [vmem:[%s1 + $0x54] sm:$0xf]
  %v121 = vld [vmem:[%s1 + $0x58] sm:$0xf]
  %v122 = vld [vmem:[%s1 + $0x5c] sm:$0xf]
  %v123 = vld [vmem:[%s1 + $0x60] sm:$0xf]
  %v124 = vld [vmem:[%s1 + $0x64] sm:$0xf]
  %v125 = vld [vmem:[%s1 + $0x68] sm:$0xf]
  %v126 = vld [vmem:[%s1 + $0x6c] sm:$0xf]
  %v127 = vld [vmem:[%s1 + $0x70] sm:$0xf]
  %v128 = vld [vmem:[%s1 + $0x74] sm:$0xf]
  %v129 = vld [vmem:[%s1 + $0x78] sm:$0xf]
  %v130 = vld [vmem:[%s1 + $0x7c] sm:$0xf]
  %v131 = vld [vmem:[%s1 + $0x80] sm:$0xf]
  %v132 = vld [vmem:[%s1 + $0x84] sm:$0xf]
  %v133 = vld [vmem:[%s1 + $0x88] sm:$0xf]
  %v134 = vld [vmem:[%s1 + $0x8c] sm:$0xf]
  %v135 = vld [vmem:[%s1 + $0x90] sm:$0xf]
  %v136 = vld [vmem:[%s1 + $0x94] sm:$0xf]
  %v137 = vld [vmem:[%s1 + $0x98] sm:$0xf]
  %v138 = vld [vmem:[%s1 + $0x9c] sm:$0xf]
  %v139 = vld [vmem:[%s1 + $0xa0] sm:$0xf]
  %v140 = vld [vmem:[%s1 + $0xa4] sm:$0xf]
  %v141 = vld [vmem:[%s1 + $0xa8] sm:$0xf]
  %v142 = vld [vmem:[%s1 + $0xac] sm:$0xf]
  %v143 = vld [vmem:[%s1 + $0xb0] sm:$0xf]
  %v144 = vld [vmem:[%s1 + $0xb4] sm:$0xf]
  %v145 = vld [vmem:[%s1 + $0xb8] sm:$0xf]
  %v146 = vld [vmem:[%s1 + $0xbc] sm:$0xf]
  %v147 = vld [vmem:[%s1 + $0xc0] sm:$0xf]
  %v148 = vld [vmem:[%s1 + $0xc4] sm:$0xf]
  %v149 = vld [vmem:[%s1 + $0xc8] sm:$0xf]
  %v150 = vld [vmem:[%s1 + $0xcc] sm:$0xf]
  %v151 = vld [vmem:[%s1 + $0xd0] sm:$0xf]
  %v152 = vld [vmem:[%s1 + $0xd4] sm:$0xf]
  %v153 = vld [vmem:[%s1 + $0xd8] sm:$0xf]
  %v154 = vld [vmem:[%s1 + $0xdc] sm:$0xf]
  %v155 = vld [vmem:[%s1 + $0xe0] sm:$0xf]
  %v156 = vld [vmem:[%s1 + $0xe4] sm:$0xf]
  %v157 = vld [vmem:[%s1 + $0xe8] sm:$0xf]
  %v158 = vld [vmem:[%s1 + $0xec] sm:$0xf]
  %v159 = vld [vmem:[%s1 + $0xf0] sm:$0xf]
  %v160 = vld [vmem:[%s1 + $0xf4] sm:$0xf]
  %v161 = vld [vmem:[%s1 + $0xf8] sm:$0xf]
  %v162 = vld [vmem:[%s1 + $0xfc] sm:$0xf]
  %v163 = vld [vmem:[%s1 + $0x100] sm:$0xf]
  %v164 = vld [vmem:[%s1 + $0x104] sm:$0xf]
  %v165 = vld [vmem:[%s1 + $0x108] sm:$0xf]
  %v166 = vld [vmem:[%s1 + $0x10c] sm:$0xf]
  %v167 = vld [vmem:[%s1 + $0x110] sm:$0xf]
  %v168 = vld [vmem:[%s1 + $0x114] sm:$0xf]
  %v169 = vld [vmem:[%s1 + $0x118] sm:$0xf]
  %v170 = vld [vmem:[%s1 + $0x11c] sm:$0xf]
  %v171 = vld [vmem:[%s1 + $0x120] sm:$0xf]
  %v172 = vld [vmem:[%s1 + $0x124] sm:$0xf]
  %v173 = vld [vmem:[%s1 + $0x128] sm:$0xf]
  %v174 = vld [vmem:[%s1 + $0x12c] sm:$0xf]
  %v175 = vld [vmem:[%s1 + $0x130] sm:$0xf]
  %v176 = vld [vmem:[%s1 + $0x134] sm:$0xf]
  %v177 = vld [vmem:[%s1 + $0x138] sm:$0xf]
  %v178 = vld [vmem:[%s1 + $0x13c] sm:$0xf]
  %v227 = vunpack.c.l.b16 %v51
  %v228 = vunpack.c.h.b16 %v51
  %v229 = vunpack.c.l.b16 %v52
  %v230 = vunpack.c.h.b16 %v52
  %v231 = vunpack.c.l.b16 %v53
  %v232 = vunpack.c.l.b16 %v54
  %v233 = vunpack.c.h.b16 %v54
  %v234 = vunpack.c.l.b16 %v55
  %v235 = vunpack.c.h.b16 %v55
  %v236 = vunpack.c.l.b16 %v56
  %v237 = vunpack.c.l.b16 %v57
  %v238 = vunpack.c.h.b16 %v57
  %v239 = vunpack.c.l.b16 %v58
  %v240 = vunpack.c.h.b16 %v58
  %v241 = vunpack.c.l.b16 %v59
  %v242 = vunpack.c.l.b16 %v60
  %v243 = vunpack.c.h.b16 %v60
  %v244 = vunpack.c.l.b16 %v61
  %v245 = vunpack.c.h.b16 %v61
  %v246 = vunpack.c.l.b16 %v62
  %v247 = vunpack.c.l.b16 %v63
  %v248 = vunpack.c.h.b16 %v63
  %v249 = vunpack.c.l.b16 %v64
  %v250 = vunpack.c.h.b16 %v64
  %v251 = vunpack.c.l.b16 %v65
  %v252 = vunpack.c.l.b16 %v66
  %v253 = vunpack.c.h.b16 %v66
  %v254 = vunpack.c.l.b16 %v67
  %v255 = vunpack.c.h.b16 %v67
  %v256 = vunpack.c.l.b16 %v68
  %v257 = vunpack.c.l.b16 %v69
  %v258 = vunpack.c.h.b16 %v69
  %v259 = vunpack.c.l.b16 %v70
  %v260 = vunpack.c.h.b16 %v70
  %v261 = vunpack.c.l.b16 %v71
  %v262 = vunpack.c.l.b16 %v72
  %v263 = vunpack.c.h.b16 %v72
  %v264 = vunpack.c.l.b16 %v73
  %v265 = vunpack.c.h.b16 %v73
  %v266 = vunpack.c.l.b16 %v74
  %v267 = vunpack.c.l.b16 %v75
  %v268 = vunpack.c.h.b16 %v75
  %v269 = vunpack.c.l.b16 %v76
  %v270 = vunpack.c.h.b16 %v76
  %v271 = vunpack.c.l.b16 %v77
  %v272 = vunpack.c.l.b16 %v78
  %v273 = vunpack.c.h.b16 %v78
  %v274 = vunpack.c.l.b16 %v79
  %v275 = vunpack.c.h.b16 %v79
  %v276 = vunpack.c.l.b16 %v80
  %v277 = vunpack.c.l.b16 %v81
  %v278 = vunpack.c.h.b16 %v81
  %v279 = vunpack.c.l.b16 %v82
  %v280 = vunpack.c.h.b16 %v82
  %v281 = vunpack.c.l.b16 %v83
  %v282 = vunpack.c.l.b16 %v84
  %v283 = vunpack.c.h.b16 %v84
  %v284 = vunpack.c.l.b16 %v85
  %v285 = vunpack.c.h.b16 %v85
  %v286 = vunpack.c.l.b16 %v86
  %v287 = vunpack.c.l.b16 %v87
  %v288 = vunpack.c.h.b16 %v87
  %v289 = vunpack.c.l.b16 %v88
  %v290 = vunpack.c.h.b16 %v88
  %v291 = vunpack.c.l.b16 %v89
  %v292 = vunpack.c.l.b16 %v90
  %v293 = vunpack.c.h.b16 %v90
  %v294 = vunpack.c.l.b16 %v91
  %v295 = vunpack.c.h.b16 %v91
  %v296 = vunpack.c.l.b16 %v92
  %v297 = vunpack.c.l.b16 %v93
  %v298 = vunpack.c.h.b16 %v93
  %v299 = vunpack.c.l.b16 %v94
  %v300 = vunpack.c.h.b16 %v94
  %v301 = vunpack.c.l.b16 %v95
  %v302 = vunpack.c.l.b16 %v96
  %v303 = vunpack.c.h.b16 %v96
  %v304 = vunpack.c.l.b16 %v97
  %v305 = vunpack.c.h.b16 %v97
  %v306 = vunpack.c.l.b16 %v98
  %v307 = vpack.c.b16 %v232, %v227
  %v308 = vpack.c.b16 %v233, %v228
  %v309 = vpack.c.b16 %v234, %v229
  %v310 = vpack.c.b16 %v235, %v230
  %v311 = vpack.c.b16 %v236, %v231
  %v312 = vpack.c.b16 %v242, %v237
  %v313 = vpack.c.b16 %v243, %v238
  %v314 = vpack.c.b16 %v244, %v239
  %v315 = vpack.c.b16 %v245, %v240
  %v316 = vpack.c.b16 %v246, %v241
  %v317 = vpack.c.b16 %v252, %v247
  %v318 = vpack.c.b16 %v253, %v248
  %v319 = vpack.c.b16 %v254, %v249
  %v320 = vpack.c.b16 %v255, %v250
  %v321 = vpack.c.b16 %v256, %v251
  %v322 = vpack.c.b16 %v262, %v257
  %v323 = vpack.c.b16 %v263, %v258
  %v324 = vpack.c.b16 %v264, %v259
  %v325 = vpack.c.b16 %v265, %v260
  %v326 = vpack.c.b16 %v266, %v261
  %v327 = vpack.c.b16 %v272, %v267
  %v328 = vpack.c.b16 %v273, %v268
  %v329 = vpack.c.b16 %v274, %v269
  %v330 = vpack.c.b16 %v275, %v270
  %v331 = vpack.c.b16 %v276, %v271
  %v332 = vpack.c.b16 %v282, %v277
  %v333 = vpack.c.b16 %v283, %v278
  %v334 = vpack.c.b16 %v284, %v279
  %v335 = vpack.c.b16 %v285, %v280
  %v336 = vpack.c.b16 %v286, %v281
  %v337 = vpack.c.b16 %v292, %v287
  %v338 = vpack.c.b16 %v293, %v288
  %v339 = vpack.c.b16 %v294, %v289
  %v340 = vpack.c.b16 %v295, %v290
  %v341 = vpack.c.b16 %v296, %v291
  %v342 = vpack.c.b16 %v302, %v297
  %v343 = vpack.c.b16 %v303, %v298
  %v344 = vpack.c.b16 %v304, %v299
  %v345 = vpack.c.b16 %v305, %v300
  %v346 = vpack.c.b16 %v306, %v301
  %v467 = vunpack.c.l.b16 %v99
  %v468 = vunpack.c.l.b16 %v100
  %v469 = vunpack.c.l.b16 %v101
  %v470 = vunpack.c.l.b16 %v102
  %v471 = vunpack.c.l.b16 %v103
  %v472 = vunpack.c.l.b16 %v104
  %v473 = vunpack.c.l.b16 %v105
  %v474 = vunpack.c.l.b16 %v106
  %v475 = vunpack.c.l.b16 %v107
  %v476 = vunpack.c.l.b16 %v108
  %v477 = vunpack.c.l.b16 %v109
  %v478 = vunpack.c.l.b16 %v110
  %v479 = vunpack.c.l.b16 %v111
  %v480 = vunpack.c.l.b16 %v112
  %v481 = vunpack.c.l.b16 %v113
  %v482 = vunpack.c.l.b16 %v114
  %v483 = vunpack.c.l.b16 %v115
  %v484 = vunpack.c.l.b16 %v116
  %v485 = vunpack.c.l.b16 %v117
  %v486 = vunpack.c.l.b16 %v118
  %v487 = vunpack.c.l.b16 %v119
  %v488 = vunpack.c.l.b16 %v120
  %v489 = vunpack.c.l.b16 %v121
  %v490 = vunpack.c.l.b16 %v122
  %v491 = vunpack.c.l.b16 %v123
  %v492 = vunpack.c.l.b16 %v124
  %v493 = vunpack.c.l.b16 %v125
  %v494 = vunpack.c.l.b16 %v126
  %v495 = vunpack.c.l.b16 %v127
  %v496 = vunpack.c.l.b16 %v128
  %v497 = vunpack.c.l.b16 %v129
  %v498 = vunpack.c.l.b16 %v130
  %v499 = vunpack.c.l.b16 %v131
  %v500 = vunpack.c.l.b16 %v132
  %v501 = vunpack.c.l.b16 %v133
  %v502 = vunpack.c.l.b16 %v134
  %v503 = vunpack.c.l.b16 %v135
  %v504 = vunpack.c.l.b16 %v136
  %v505 = vunpack.c.l.b16 %v137
  %v506 = vunpack.c.l.b16 %v138
  %v507 = vunpack.c.l.b16 %v139
  %v508 = vunpack.c.l.b16 %v140
  %v509 = vunpack.c.l.b16 %v141
  %v510 = vunpack.c.l.b16 %v142
  %v511 = vunpack.c.l.b16 %v143
  %v512 = vunpack.c.l.b16 %v144
  %v513 = vunpack.c.l.b16 %v145
  %v514 = vunpack.c.l.b16 %v146
  %v515 = vunpack.c.l.b16 %v147
  %v516 = vunpack.c.l.b16 %v148
  %v517 = vunpack.c.l.b16 %v149
  %v518 = vunpack.c.l.b16 %v150
  %v519 = vunpack.c.l.b16 %v151
  %v520 = vunpack.c.l.b16 %v152
  %v521 = vunpack.c.l.b16 %v153
  %v522 = vunpack.c.l.b16 %v154
  %v523 = vunpack.c.l.b16 %v155
  %v524 = vunpack.c.l.b16 %v156
  %v525 = vunpack.c.l.b16 %v157
  %v526 = vunpack.c.l.b16 %v158
  %v527 = vunpack.c.l.b16 %v159
  %v528 = vunpack.c.l.b16 %v160
  %v529 = vunpack.c.l.b16 %v161
  %v530 = vunpack.c.l.b16 %v162
  %v531 = vunpack.c.l.b16 %v163
  %v532 = vunpack.c.l.b16 %v164
  %v533 = vunpack.c.l.b16 %v165
  %v534 = vunpack.c.l.b16 %v166
  %v535 = vunpack.c.l.b16 %v167
  %v536 = vunpack.c.l.b16 %v168
  %v537 = vunpack.c.l.b16 %v169
  %v538 = vunpack.c.l.b16 %v170
  %v539 = vunpack.c.l.b16 %v171
  %v540 = vunpack.c.l.b16 %v172
  %v541 = vunpack.c.l.b16 %v173
  %v542 = vunpack.c.l.b16 %v174
  %v543 = vunpack.c.l.b16 %v175
  %v544 = vunpack.c.l.b16 %v176
  %v545 = vunpack.c.l.b16 %v177
  %v546 = vunpack.c.l.b16 %v178
  %v547 = vpack.c.b16 %v468, %v467
  %v548 = vpack.c.b16 %v470, %v469
  %v549 = vpack.c.b16 %v472, %v471
  %v550 = vpack.c.b16 %v474, %v473
  %v551 = vpack.c.b16 %v476, %v475
  %v552 = vpack.c.b16 %v478, %v477
  %v553 = vpack.c.b16 %v480, %v479
  %v554 = vpack.c.b16 %v482, %v481
  %v555 = vpack.c.b16 %v484, %v483
  %v556 = vpack.c.b16 %v486, %v485
  %v557 = vpack.c.b16 %v488, %v487
  %v558 = vpack.c.b16 %v490, %v489
  %v559 = vpack.c.b16 %v492, %v491
  %v560 = vpack.c.b16 %v494, %v493
  %v561 = vpack.c.b16 %v496, %v495
  %v562 = vpack.c.b16 %v498, %v497
  %v563 = vpack.c.b16 %v500, %v499
  %v564 = vpack.c.b16 %v502, %v501
  %v565 = vpack.c.b16 %v504, %v503
  %v566 = vpack.c.b16 %v506, %v505
  %v567 = vpack.c.b16 %v508, %v507
  %v568 = vpack.c.b16 %v510, %v509
  %v569 = vpack.c.b16 %v512, %v511
  %v570 = vpack.c.b16 %v514, %v513
  %v571 = vpack.c.b16 %v516, %v515
  %v572 = vpack.c.b16 %v518, %v517
  %v573 = vpack.c.b16 %v520, %v519
  %v574 = vpack.c.b16 %v522, %v521
  %v575 = vpack.c.b16 %v524, %v523
  %v576 = vpack.c.b16 %v526, %v525
  %v577 = vpack.c.b16 %v528, %v527
  %v578 = vpack.c.b16 %v530, %v529
  %v579 = vpack.c.b16 %v532, %v531
  %v580 = vpack.c.b16 %v534, %v533
  %v581 = vpack.c.b16 %v536, %v535
  %v582 = vpack.c.b16 %v538, %v537
  %v583 = vpack.c.b16 %v540, %v539
  %v584 = vpack.c.b16 %v542, %v541
  %v585 = vpack.c.b16 %v544, %v543
  %v586 = vpack.c.b16 %v546, %v545
  %627 = vmatprep.subr.bf16.mxu0 0
  %628 = vmatpush1.bf16.msra.mxu0 %v547
  %629 = vmatprep.subr.bf16.mxu0 0
  %630 = vmatpush1.bf16.msra.mxu0 %v548
  %631 = vmatprep.subr.bf16.mxu0 0
  %632 = vmatpush1.bf16.msra.mxu0 %v549
  %633 = vmatprep.subr.bf16.mxu0 0
  %634 = vmatpush1.bf16.msra.mxu0 %v550
  %635 = vmatprep.subr.bf16.mxu0 0
  %636 = vmatpush1.bf16.msra.mxu0 %v551
  %637 = vmatprep.subr.bf16.mxu0 0
  %638 = vmatpush1.bf16.msra.mxu0 %v552
  %639 = vmatprep.subr.bf16.mxu0 0
  %640 = vmatpush1.bf16.msra.mxu0 %v553
  %641 = vmatprep.subr.bf16.mxu0 0
  %642 = vmatpush1.bf16.msra.mxu0 %v554
  %643 = vmatprep.subr.bf16.mxu0 0
  %644 = vmatpush1.bf16.msra.mxu0 %v555
  %645 = vmatprep.subr.bf16.mxu0 0
  %646 = vmatpush1.bf16.msra.mxu0 %v556
  %647 = vmatprep.subr.bf16.mxu0 0
  %648 = vmatpush1.bf16.msra.mxu0 %v557
  %649 = vmatprep.subr.bf16.mxu0 0
  %650 = vmatpush1.bf16.msra.mxu0 %v558
  %651 = vmatprep.subr.bf16.mxu0 0
  %652 = vmatpush1.bf16.msra.mxu0 %v559
  %653 = vmatprep.subr.bf16.mxu0 0
  %654 = vmatpush1.bf16.msra.mxu0 %v560
  %655 = vmatprep.subr.bf16.mxu0 0
  %656 = vmatpush1.bf16.msra.mxu0 %v561
  %657 = vmatprep.subr.bf16.mxu0 0
  %658 = vmatpush1.bf16.msra.mxu0 %v562
  %659 = vmatprep.mubr.bf16.mxu0 %v308
  %660 = vmatmul.mubr.bf16.gmra.mrb[0].mxu0 %v307
  %v661 = vpop.f32.mrb[0].mxu0
  %v662 = vadd.f32 0.0, %v661
  %v663 = vpop.f32.mrb[0].mxu0
  %v664 = vpop.f32.mrb[0].mxu0
  %v665 = vadd.f32 0.0, %v664
  %v666 = vpop.f32.mrb[0].mxu0
  %667 = vmatprep.mubr.bf16.mxu0 %v313
  %668 = vmatmul.mubr.bf16.gmra.mrb[0].mxu0 %v312
  %v669 = vpop.f32.mrb[0].mxu0
  %v670 = vadd.f32 0.0, %v669
  %v671 = vpop.f32.mrb[0].mxu0
  %v672 = vpop.f32.mrb[0].mxu0
  %v673 = vadd.f32 0.0, %v672
  %v674 = vpop.f32.mrb[0].mxu0
  %675 = vmatprep.mubr.bf16.mxu0 %v318
  %676 = vmatmul.mubr.bf16.gmra.mrb[0].mxu0 %v317
  %v677 = vpop.f32.mrb[0].mxu0
  %v678 = vadd.f32 0.0, %v677
  %v679 = vpop.f32.mrb[0].mxu0
  %v680 = vpop.f32.mrb[0].mxu0
  %v681 = vadd.f32 0.0, %v680
  %v682 = vpop.f32.mrb[0].mxu0
  %683 = vmatprep.mubr.bf16.mxu0 %v323
  %684 = vmatmul.mubr.bf16.gmra.mrb[0].mxu0 %v322
  %v685 = vpop.f32.mrb[0].mxu0
  %v686 = vadd.f32 0.0, %v685
  %v687 = vpop.f32.mrb[0].mxu0
  %v688 = vpop.f32.mrb[0].mxu0
  %v689 = vadd.f32 0.0, %v688
  %v690 = vpop.f32.mrb[0].mxu0
  %691 = vmatprep.mubr.bf16.mxu0 %v328
  %692 = vmatmul.mubr.bf16.gmra.mrb[0].mxu0 %v327
  %v693 = vpop.f32.mrb[0].mxu0
  %v694 = vadd.f32 0.0, %v693
  %v695 = vpop.f32.mrb[0].mxu0
  %v696 = vpop.f32.mrb[0].mxu0
  %v697 = vadd.f32 0.0, %v696
  %v698 = vpop.f32.mrb[0].mxu0
  %699 = vmatprep.mubr.bf16.mxu0 %v333
  %700 = vmatmul.mubr.bf16.gmra.mrb[0].mxu0 %v332
  %v701 = vpop.f32.mrb[0].mxu0
  %v702 = vadd.f32 0.0, %v701
  %v703 = vpop.f32.mrb[0].mxu0
  %v704 = vpop.f32.mrb[0].mxu0
  %v705 = vadd.f32 0.0, %v704
  %v706 = vpop.f32.mrb[0].mxu0
  %707 = vmatprep.mubr.bf16.mxu0 %v338
  %708 = vmatmul.mubr.bf16.gmra.mrb[0].mxu0 %v337
  %v709 = vpop.f32.mrb[0].mxu0
  %v710 = vadd.f32 0.0, %v709
  %v711 = vpop.f32.mrb[0].mxu0
  %v712 = vpop.f32.mrb[0].mxu0
  %v713 = vadd.f32 0.0, %v712
  %v714 = vpop.f32.mrb[0].mxu0
  %715 = vmatprep.mubr.bf16.mxu0 %v343
  %716 = vmatmul.mubr.bf16.gmra.mrb[0].mxu0 %v342
  %v717 = vpop.f32.mrb[0].mxu0
  %v718 = vadd.f32 0.0, %v717
  %v719 = vpop.f32.mrb[0].mxu0
  %v720 = vpop.f32.mrb[0].mxu0
  %v721 = vadd.f32 0.0, %v720
  %v722 = vpop.f32.mrb[0].mxu0
  %723 = vdwg.mxu0
  %724 = vmatprep.subr.bf16.mxu0 0
  %725 = vmatpush1.bf16.msra.mxu0 %v563
  %726 = vmatprep.subr.bf16.mxu0 0
  %727 = vmatpush1.bf16.msra.mxu0 %v564
  %728 = vmatprep.subr.bf16.mxu0 0
  %729 = vmatpush1.bf16.msra.mxu0 %v565
  %730 = vmatprep.subr.bf16.mxu0 0
  %731 = vmatpush1.bf16.msra.mxu0 %v566
  %732 = vmatprep.subr.bf16.mxu0 0
  %733 = vmatpush1.bf16.msra.mxu0 %v567
  %734 = vmatprep.subr.bf16.mxu0 0
  %735 = vmatpush1.bf16.msra.mxu0 %v568
  %736 = vmatprep.subr.bf16.mxu0 0
  %737 = vmatpush1.bf16.msra.mxu0 %v569
  %738 = vmatprep.subr.bf16.mxu0 0
  %739 = vmatpush1.bf16.msra.mxu0 %v570
  %740 = vmatprep.subr.bf16.mxu0 0
  %741 = vmatpush1.bf16.msra.mxu0 %v571
  %742 = vmatprep.subr.bf16.mxu0 0
  %743 = vmatpush1.bf16.msra.mxu0 %v572
  %744 = vmatprep.subr.bf16.mxu0 0
  %745 = vmatpush1.bf16.msra.mxu0 %v573
  %746 = vmatprep.subr.bf16.mxu0 0
  %747 = vmatpush1.bf16.msra.mxu0 %v574
  %748 = vmatprep.subr.bf16.mxu0 0
  %749 = vmatpush1.bf16.msra.mxu0 %v575
  %750 = vmatprep.subr.bf16.mxu0 0
  %751 = vmatpush1.bf16.msra.mxu0 %v576
  %752 = vmatprep.subr.bf16.mxu0 0
  %753 = vmatpush1.bf16.msra.mxu0 %v577
  %754 = vmatprep.subr.bf16.mxu0 0
  %755 = vmatpush1.bf16.msra.mxu0 %v578
  %756 = vmatprep.mubr.bf16.mxu0 %v310
  %757 = vmatmul.mubr.bf16.gmra.mrb[0].mxu0 %v309
  %v758 = vpop.f32.mrb[0].mxu0
  %v759 = vadd.f32 %v662, %v758
  %v760 = vpop.f32.mrb[0].mxu0
  %v761 = vpop.f32.mrb[0].mxu0
  %v762 = vadd.f32 %v665, %v761
  %v763 = vpop.f32.mrb[0].mxu0
  %764 = vmatprep.mubr.bf16.mxu0 %v315
  %765 = vmatmul.mubr.bf16.gmra.mrb[0].mxu0 %v314
  %v766 = vpop.f32.mrb[0].mxu0
  %v767 = vadd.f32 %v670, %v766
  %v768 = vpop.f32.mrb[0].mxu0
  %v769 = vpop.f32.mrb[0].mxu0
  %v770 = vadd.f32 %v673, %v769
  %v771 = vpop.f32.mrb[0].mxu0
  %772 = vmatprep.mubr.bf16.mxu0 %v320
  %773 = vmatmul.mubr.bf16.gmra.mrb[0].mxu0 %v319
  %v774 = vpop.f32.mrb[0].mxu0
  %v775 = vadd.f32 %v678, %v774
  %v776 = vpop.f32.mrb[0].mxu0
  %v777 = vpop.f32.mrb[0].mxu0
  %v778 = vadd.f32 %v681, %v777
  %v779 = vpop.f32.mrb[0].mxu0
  %780 = vmatprep.mubr.bf16.mxu0 %v325
  %781 = vmatmul.mubr.bf16.gmra.mrb[0].mxu0 %v324
  %v782 = vpop.f32.mrb[0].mxu0
  %v783 = vadd.f32 %v686, %v782
  %v784 = vpop.f32.mrb[0].mxu0
  %v785 = vpop.f32.mrb[0].mxu0
  %v786 = vadd.f32 %v689, %v785
  %v787 = vpop.f32.mrb[0].mxu0
  %788 = vmatprep.mubr.bf16.mxu0 %v330
  %789 = vmatmul.mubr.bf16.gmra.mrb[0].mxu0 %v329
  %v790 = vpop.f32.mrb[0].mxu0
  %v791 = vadd.f32 %v694, %v790
  %v792 = vpop.f32.mrb[0].mxu0
  %v793 = vpop.f32.mrb[0].mxu0
  %v794 = vadd.f32 %v697, %v793
  %v795 = vpop.f32.mrb[0].mxu0
  %796 = vmatprep.mubr.bf16.mxu0 %v335
  %797 = vmatmul.mubr.bf16.gmra.mrb[0].mxu0 %v334
  %v798 = vpop.f32.mrb[0].mxu0
  %v799 = vadd.f32 %v702, %v798
  %v800 = vpop.f32.mrb[0].mxu0
  %v801 = vpop.f32.mrb[0].mxu0
  %v802 = vadd.f32 %v705, %v801
  %v803 = vpop.f32.mrb[0].mxu0
  %804 = vmatprep.mubr.bf16.mxu0 %v340
  %805 = vmatmul.mubr.bf16.gmra.mrb[0].mxu0 %v339
  %v806 = vpop.f32.mrb[0].mxu0
  %v807 = vadd.f32 %v710, %v806
  %v808 = vpop.f32.mrb[0].mxu0
  %v809 = vpop.f32.mrb[0].mxu0
  %v810 = vadd.f32 %v713, %v809
  %v811 = vpop.f32.mrb[0].mxu0
  %812 = vmatprep.mubr.bf16.mxu0 %v345
  %813 = vmatmul.mubr.bf16.gmra.mrb[0].mxu0 %v344
  %v814 = vpop.f32.mrb[0].mxu0
  %v815 = vadd.f32 %v718, %v814
  %v816 = vpop.f32.mrb[0].mxu0
  %v817 = vpop.f32.mrb[0].mxu0
  %v818 = vadd.f32 %v721, %v817
  %v819 = vpop.f32.mrb[0].mxu0
  %820 = vdwg.mxu0
  %821 = vmatprep.subr.bf16.mxu0 0
  %822 = vmatpush1.bf16.msra.mxu0 %v579
  %823 = vmatprep.subr.bf16.mxu0 0
  %824 = vmatpush1.bf16.msra.mxu0 %v580
  %825 = vmatprep.subr.bf16.mxu0 0
  %826 = vmatpush1.bf16.msra.mxu0 %v581
  %827 = vmatprep.subr.bf16.mxu0 0
  %828 = vmatpush1.bf16.msra.mxu0 %v582
  %829 = vmatprep.subr.bf16.mxu0 0
  %830 = vmatpush1.bf16.msra.mxu0 %v583
  %831 = vmatprep.subr.bf16.mxu0 0
  %832 = vmatpush1.bf16.msra.mxu0 %v584
  %833 = vmatprep.subr.bf16.mxu0 0
  %834 = vmatpush1.bf16.msra.mxu0 %v585
  %835 = vmatprep.subr.bf16.mxu0 0
  %836 = vmatpush1.bf16.msra.mxu0 %v586
  %837 = vmatprep.subr.bf16.mxu0 0
  %838 = vmatpush1.bf16.msra.mxu0 0
  %839 = vmatprep.subr.bf16.mxu0 0
  %840 = vmatpush1.bf16.msra.mxu0 0
  %841 = vmatprep.subr.bf16.mxu0 0
  %842 = vmatpush1.bf16.msra.mxu0 0
  %843 = vmatprep.subr.bf16.mxu0 0
  %844 = vmatpush1.bf16.msra.mxu0 0
  %845 = vmatprep.subr.bf16.mxu0 0
  %846 = vmatpush1.bf16.msra.mxu0 0
  %847 = vmatprep.subr.bf16.mxu0 0
  %848 = vmatpush1.bf16.msra.mxu0 0
  %849 = vmatprep.subr.bf16.mxu0 0
  %850 = vmatpush1.bf16.msra.mxu0 0
  %851 = vmatprep.subr.bf16.mxu0 0
  %852 = vmatpush1.bf16.msra.mxu0 0
  %853 = vmatprep.mubr.bf16.mxu0 0
  %854 = vmatmul.mubr.bf16.gmra.mrb[0].mxu0 %v311
  %v855 = vpop.f32.mrb[0].mxu0
  %v856 = vadd.f32 %v759, %v855
  %v857 = vpop.f32.mrb[0].mxu0
  %v858 = vpop.f32.mrb[0].mxu0
  %v859 = vadd.f32 %v762, %v858
  %v860 = vpop.f32.mrb[0].mxu0
  %861 = vmatprep.mubr.bf16.mxu0 0
  %862 = vmatmul.mubr.bf16.gmra.mrb[0].mxu0 %v316
  %v863 = vpop.f32.mrb[0].mxu0
  %v864 = vadd.f32 %v767, %v863
  %v865 = vpop.f32.mrb[0].mxu0
  %v866 = vpop.f32.mrb[0].mxu0
  %v867 = vadd.f32 %v770, %v866
  %v868 = vpop.f32.mrb[0].mxu0
  %869 = vmatprep.mubr.bf16.mxu0 0
  %870 = vmatmul.mubr.bf16.gmra.mrb[0].mxu0 %v321
  %v871 = vpop.f32.mrb[0].mxu0
  %v872 = vadd.f32 %v775, %v871
  %v873 = vpop.f32.mrb[0].mxu0
  %v874 = vpop.f32.mrb[0].mxu0
  %v875 = vadd.f32 %v778, %v874
  %v876 = vpop.f32.mrb[0].mxu0
  %877 = vmatprep.mubr.bf16.mxu0 0
  %878 = vmatmul.mubr.bf16.gmra.mrb[0].mxu0 %v326
  %v879 = vpop.f32.mrb[0].mxu0
  %v880 = vadd.f32 %v783, %v879
  %v881 = vpop.f32.mrb[0].mxu0
  %v882 = vpop.f32.mrb[0].mxu0
  %v883 = vadd.f32 %v786, %v882
  %v884 = vpop.f32.mrb[0].mxu0
  %885 = vmatprep.mubr.bf16.mxu0 0
  %886 = vmatmul.mubr.bf16.gmra.mrb[0].mxu0 %v331
  %v887 = vpop.f32.mrb[0].mxu0
  %v888 = vadd.f32 %v791, %v887
  %v889 = vpop.f32.mrb[0].mxu0
  %v890 = vpop.f32.mrb[0].mxu0
  %v891 = vadd.f32 %v794, %v890
  %v892 = vpop.f32.mrb[0].mxu0
  %893 = vmatprep.mubr.bf16.mxu0 0
  %894 = vmatmul.mubr.bf16.gmra.mrb[0].mxu0 %v336
  %v895 = vpop.f32.mrb[0].mxu0
  %v896 = vadd.f32 %v799, %v895
  %v897 = vpop.f32.mrb[0].mxu0
  %v898 = vpop.f32.mrb[0].mxu0
  %v899 = vadd.f32 %v802, %v898
  %v900 = vpop.f32.mrb[0].mxu0
  %901 = vmatprep.mubr.bf16.mxu0 0
  %902 = vmatmul.mubr.bf16.gmra.mrb[0].mxu0 %v341
  %v903 = vpop.f32.mrb[0].mxu0
  %v904 = vadd.f32 %v807, %v903
  %v905 = vpop.f32.mrb[0].mxu0
  %v906 = vpop.f32.mrb[0].mxu0
  %v907 = vadd.f32 %v810, %v906
  %v908 = vpop.f32.mrb[0].mxu0
  %909 = vmatprep.mubr.bf16.mxu0 0
  %910 = vmatmul.mubr.bf16.gmra.mrb[0].mxu0 %v346
  %v911 = vpop.f32.mrb[0].mxu0
  %v912 = vadd.f32 %v815, %v911
  %v913 = vpop.f32.mrb[0].mxu0
  %v914 = vpop.f32.mrb[0].mxu0
  %v915 = vadd.f32 %v818, %v914
  %v916 = vpop.f32.mrb[0].mxu0
  %917 = vdwg.mxu0
  %v918 = vadd.f32 %v35, %v856
  %v919 = vadd.f32 %v36, %v859
  %v920 = vadd.f32 %v37, %v864
  %v921 = vadd.f32 %v38, %v867
  %v922 = vadd.f32 %v39, %v872
  %v923 = vadd.f32 %v40, %v875
  %v924 = vadd.f32 %v41, %v880
  %v925 = vadd.f32 %v42, %v883
  %v926 = vadd.f32 %v43, %v888
  %v927 = vadd.f32 %v44, %v891
  %v928 = vadd.f32 %v45, %v896
  %v929 = vadd.f32 %v46, %v899
  %v930 = vadd.f32 %v47, %v904
  %v931 = vadd.f32 %v48, %v907
  %v932 = vadd.f32 %v49, %v912
  %v933 = vadd.f32 %v50, %v915
  %934 = vst [vmem:[%s3] sm:$0xff] %v918
  %935 = vst [vmem:[%s3 + $0x8] sm:$0xff] %v919
  %936 = vst [vmem:[%s3 + $0x10] sm:$0xff] %v920
  %937 = vst [vmem:[%s3 + $0x18] sm:$0xff] %v921
  %938 = vst [vmem:[%s3 + $0x20] sm:$0xff] %v922
  %939 = vst [vmem:[%s3 + $0x28] sm:$0xff] %v923
  %940 = vst [vmem:[%s3 + $0x30] sm:$0xff] %v924
  %941 = vst [vmem:[%s3 + $0x38] sm:$0xff] %v925
  %942 = vst [vmem:[%s3 + $0x40] sm:$0xff] %v926
  %943 = vst [vmem:[%s3 + $0x48] sm:$0xff] %v927
  %944 = vst [vmem:[%s3 + $0x50] sm:$0xff] %v928
  %945 = vst [vmem:[%s3 + $0x58] sm:$0xff] %v929
  %946 = vst [vmem:[%s3 + $0x60] sm:$0xff] %v930
  %947 = vst [vmem:[%s3 + $0x68] sm:$0xff] %v931
  %948 = vst [vmem:[%s3 + $0x70] sm:$0xff] %v932
  %949 = vst [vmem:[%s3 + $0x78] sm:$0xff] %v933
  // Predicated region
  $region18: #{backbone_forward.12} parent=0 // pred_check
    %p950 = pneg %p15
  $region19: #{backbone_forward.12} parent=0 // pred_check_branch
    %952 = sbr.rel (%p950) target = $region21
  $region20: #{backbone_forward.12} parent=0 // pred_region
    %v953 = vld [vmem:[%s3] sm:$0xff]
    %v954 = vld [vmem:[%s3 + $0x8] sm:$0xff]
    %v955 = vld [vmem:[%s3 + $0x10] sm:$0xff]
    %v956 = vld [vmem:[%s3 + $0x18] sm:$0xff]
    %v957 = vld [vmem:[%s3 + $0x20] sm:$0xff]
    %v958 = vld [vmem:[%s3 + $0x28] sm:$0xff]
    %v959 = vld [vmem:[%s3 + $0x30] sm:$0xff]
    %v960 = vld [vmem:[%s3 + $0x38] sm:$0xff]
    %v961 = vld [vmem:[%s3 + $0x40] sm:$0xff]
    %v962 = vld [vmem:[%s3 + $0x48] sm:$0xff]
    %v963 = vld [vmem:[%s3 + $0x50] sm:$0xff]
    %v964 = vld [vmem:[%s3 + $0x58] sm:$0xff]
    %v965 = vld [vmem:[%s3 + $0x60] sm:$0xff]
    %v966 = vld [vmem:[%s3 + $0x68] sm:$0xff]
    %v967 = vld [vmem:[%s3 + $0x70] sm:$0xff]
    %v968 = vld [vmem:[%s3 + $0x78] sm:$0xff]
    %v969 = vld [vmem:[%s2] sm:$0x1]
    %v971 = vlaneseq
    %v972 = vshrl.u32 %v971, 7
    %v973 = vsub.s32 0, %v972
    %v974 = vrot.slane %v969, %v973
    %v976 = vadd.f32 %v953, %v974
    %v977 = vadd.f32 %v954, %v974
    %v978 = vadd.f32 %v955, %v974
    %v979 = vadd.f32 %v956, %v974
    %v980 = vadd.f32 %v957, %v974
    %v981 = vadd.f32 %v958, %v974
    %v982 = vadd.f32 %v959, %v974
    %v983 = vadd.f32 %v960, %v974
    %v984 = vadd.f32 %v961, %v974
    %v985 = vadd.f32 %v962, %v974
    %v986 = vadd.f32 %v963, %v974
    %v987 = vadd.f32 %v964, %v974
    %v988 = vadd.f32 %v965, %v974
    %v989 = vadd.f32 %v966, %v974
    %v990 = vadd.f32 %v967, %v974
    %v991 = vadd.f32 %v968, %v974
    %v992 = vmax.f32 %v976, 0.0
    %v993 = vmax.f32 %v977, 0.0
    %v994 = vmax.f32 %v978, 0.0
    %v995 = vmax.f32 %v979, 0.0
    %v996 = vmax.f32 %v980, 0.0
    %v997 = vmax.f32 %v981, 0.0
    %v998 = vmax.f32 %v982, 0.0
    %v999 = vmax.f32 %v983, 0.0
    %v1000 = vmax.f32 %v984, 0.0
    %v1001 = vmax.f32 %v985, 0.0
    %v1002 = vmax.f32 %v986, 0.0
    %v1003 = vmax.f32 %v987, 0.0
    %v1004 = vmax.f32 %v988, 0.0
    %v1005 = vmax.f32 %v989, 0.0
    %v1006 = vmax.f32 %v990, 0.0
    %v1007 = vmax.f32 %v991, 0.0
    %1008 = vst [vmem:[%s3] sm:$0xff] %v992
    %1009 = vst [vmem:[%s3 + $0x8] sm:$0xff] %v993
    %1010 = vst [vmem:[%s3 + $0x10] sm:$0xff] %v994
    %1011 = vst [vmem:[%s3 + $0x18] sm:$0xff] %v995
    %1012 = vst [vmem:[%s3 + $0x20] sm:$0xff] %v996
    %1013 = vst [vmem:[%s3 + $0x28] sm:$0xff] %v997
    %1014 = vst [vmem:[%s3 + $0x30] sm:$0xff] %v998
    %1015 = vst [vmem:[%s3 + $0x38] sm:$0xff] %v999
    %1016 = vst [vmem:[%s3 + $0x40] sm:$0xff] %v1000
    %1017 = vst [vmem:[%s3 + $0x48] sm:$0xff] %v1001
    %1018 = vst [vmem:[%s3 + $0x50] sm:$0xff] %v1002
    %1019 = vst [vmem:[%s3 + $0x58] sm:$0xff] %v1003
    %1020 = vst [vmem:[%s3 + $0x60] sm:$0xff] %v1004
    %1021 = vst [vmem:[%s3 + $0x68] sm:$0xff] %v1005
    %1022 = vst [vmem:[%s3 + $0x70] sm:$0xff] %v1006
    %1023 = vst [vmem:[%s3 + $0x78] sm:$0xff] %v1007
  $region21: #{backbone_forward.12} parent=0 // pred_fallthru
    _
  // Predicated region
  $region22: #{backbone_forward.12} parent=0 // pred_check
    _
  $region23: #{backbone_forward.12} parent=0 // pred_check_branch
    %1025 = sbr.rel (0) target = $region25
  $region24: #{backbone_forward.12} parent=0 // pred_region
    _
  $region25: #{backbone_forward.12} parent=0 // pred_fallthru
    _
  // Predicated region
  $region26: #{backbone_forward.12} parent=0 // pred_check
    _
  $region27: #{backbone_forward.12} parent=0 // pred_check_branch
    %1027 = sbr.rel (0) target = $region29
  $region28: #{backbone_forward.12} parent=0 // pred_region
    _
  $region29: #{backbone_forward.12} parent=0 // pred_fallthru
    _

// kernel: backbone_forward.15
$region0: #{backbone_forward.15}
  #allocation0 [shape = 'u32[]', space=smem, size = 0x4, offset = 0x4, fixed_abs, tag = 'smem constant byte address 0x4 - core index']
  #allocation1 [shape = 'u32[144,128]{1,0:T(1,128)}', space=vmem, size = 0x12000, scoped, tag = 'internal scratch']
  %s0 = inlined_call_operand.vmem [shape: bf16[32,640], index: 0, kind: input, shape index: {}]
  %s1 = inlined_call_operand.vmem [shape: bf16[640,128], index: 1, kind: input, shape index: {}]
  %s2 = inlined_call_operand.vmem [shape: f32[1,128], index: 2, kind: input, shape index: {}]
  %s3 = inlined_call_operand.vmem [shape: f32[32,128], index: 3, kind: output, shape index: {}]
  %s4 = sld [smem:[#allocation0]]
  $region30: #{backbone_forward.15} parent=0
    _
  %s6 = ssub.s32 1, %s4
  %s7 = scalar_select 0, %s6, %s4
  // Predicated region
  $region2: #{backbone_forward.15} parent=0 // pred_check
    _
  $region3: #{backbone_forward.15} parent=0 // pred_check_branch
    %9 = sbr.rel (0) target = $region5
  $region4: #{backbone_forward.15} parent=0 // pred_region
    _
  $region5: #{backbone_forward.15} parent=0 // pred_fallthru
    _
  // Predicated region
  $region6: #{backbone_forward.15} parent=0 // pred_check
    _
  $region7: #{backbone_forward.15} parent=0 // pred_check_branch
    %11 = sbr.rel (0) target = $region9
  $region8: #{backbone_forward.15} parent=0 // pred_region
    _
  $region9: #{backbone_forward.15} parent=0 // pred_fallthru
    _
  // Predicated region
  $region10: #{backbone_forward.15} parent=0 // pred_check
    _
  $region11: #{backbone_forward.15} parent=0 // pred_check_branch
    %13 = sbr.rel (0) target = $region13
  $region12: #{backbone_forward.15} parent=0 // pred_region
    _
  $region13: #{backbone_forward.15} parent=0 // pred_fallthru
    _
  %p15 = scmp.eq.s32.totalorder 0, 0
  // Predicated region
  $region14: #{backbone_forward.15} parent=0 // pred_check
    %p16 = pneg %p15
  $region15: #{backbone_forward.15} parent=0 // pred_check_branch
    %18 = sbr.rel (%p16) target = $region17
  $region16: #{backbone_forward.15} parent=0 // pred_region
    %19 = vst [vmem:[%s3] sm:$0xff] 0.0
    %20 = vst [vmem:[%s3 + $0x8] sm:$0xff] 0.0
    %21 = vst [vmem:[%s3 + $0x10] sm:$0xff] 0.0
    %22 = vst [vmem:[%s3 + $0x18] sm:$0xff] 0.0
  $region17: #{backbone_forward.15} parent=0 // pred_fallthru
    _
  %v23 = vld [vmem:[%s3] sm:$0xff]
  %v24 = vld [vmem:[%s3 + $0x8] sm:$0xff]
  %v25 = vld [vmem:[%s3 + $0x10] sm:$0xff]
  %v26 = vld [vmem:[%s3 + $0x18] sm:$0xff]
  %v27 = vld [vmem:[%s0] sm:$0xff]
  %v28 = vld [vmem:[%s0 + $0x8] sm:$0xff]
  %v29 = vld [vmem:[%s0 + $0x10] sm:$0xf]
  %v30 = vld [vmem:[%s0 + $0x14] sm:$0xff]
  %v31 = vld [vmem:[%s0 + $0x1c] sm:$0xff]
  %v32 = vld [vmem:[%s0 + $0x24] sm:$0xf]
  %v33 = vld [vmem:[%s0 + $0x28] sm:$0xff]
  %v34 = vld [vmem:[%s0 + $0x30] sm:$0xff]
  %v35 = vld [vmem:[%s0 + $0x38] sm:$0xf]
  %v36 = vld [vmem:[%s0 + $0x3c] sm:$0xff]
  %v37 = vld [vmem:[%s0 + $0x44] sm:$0xff]
  %v38 = vld [vmem:[%s0 + $0x4c] sm:$0xf]
  %v39 = vld [vmem:[%s1] sm:$0xf]
  %v40 = vld [vmem:[%s1 + $0x4] sm:$0xf]
  %v41 = vld [vmem:[%s1 + $0x8] sm:$0xf]
  %v42 = vld [vmem:[%s1 + $0xc] sm:$0xf]
  %v43 = vld [vmem:[%s1 + $0x10] sm:$0xf]
  %v44 = vld [vmem:[%s1 + $0x14] sm:$0xf]
  %v45 = vld [vmem:[%s1 + $0x18] sm:$0xf]
  %v46 = vld [vmem:[%s1 + $0x1c] sm:$0xf]
  %v47 = vld [vmem:[%s1 + $0x20] sm:$0xf]
  %v48 = vld [vmem:[%s1 + $0x24] sm:$0xf]
  %v49 = vld [vmem:[%s1 + $0x28] sm:$0xf]
  %v50 = vld [vmem:[%s1 + $0x2c] sm:$0xf]
  %v51 = vld [vmem:[%s1 + $0x30] sm:$0xf]
  %v52 = vld [vmem:[%s1 + $0x34] sm:$0xf]
  %v53 = vld [vmem:[%s1 + $0x38] sm:$0xf]
  %v54 = vld [vmem:[%s1 + $0x3c] sm:$0xf]
  %v55 = vld [vmem:[%s1 + $0x40] sm:$0xf]
  %v56 = vld [vmem:[%s1 + $0x44] sm:$0xf]
  %v57 = vld [vmem:[%s1 + $0x48] sm:$0xf]
  %v58 = vld [vmem:[%s1 + $0x4c] sm:$0xf]
  %v59 = vld [vmem:[%s1 + $0x50] sm:$0xf]
  %v60 = vld [vmem:[%s1 + $0x54] sm:$0xf]
  %v61 = vld [vmem:[%s1 + $0x58] sm:$0xf]
  %v62 = vld [vmem:[%s1 + $0x5c] sm:$0xf]
  %v63 = vld [vmem:[%s1 + $0x60] sm:$0xf]
  %v64 = vld [vmem:[%s1 + $0x64] sm:$0xf]
  %v65 = vld [vmem:[%s1 + $0x68] sm:$0xf]
  %v66 = vld [vmem:[%s1 + $0x6c] sm:$0xf]
  %v67 = vld [vmem:[%s1 + $0x70] sm:$0xf]
  %v68 = vld [vmem:[%s1 + $0x74] sm:$0xf]
  %v69 = vld [vmem:[%s1 + $0x78] sm:$0xf]
  %v70 = vld [vmem:[%s1 + $0x7c] sm:$0xf]
  %v71 = vld [vmem:[%s1 + $0x80] sm:$0xf]
  %v72 = vld [vmem:[%s1 + $0x84] sm:$0xf]
  %v73 = vld [vmem:[%s1 + $0x88] sm:$0xf]
  %v74 = vld [vmem:[%s1 + $0x8c] sm:$0xf]
  %v75 = vld [vmem:[%s1 + $0x90] sm:$0xf]
  %v76 = vld [vmem:[%s1 + $0x94] sm:$0xf]
  %v77 = vld [vmem:[%s1 + $0x98] sm:$0xf]
  %v78 = vld [vmem:[%s1 + $0x9c] sm:$0xf]
  %v79 = vld [vmem:[%s1 + $0xa0] sm:$0xf]
  %v80 = vld [vmem:[%s1 + $0xa4] sm:$0xf]
  %v81 = vld [vmem:[%s1 + $0xa8] sm:$0xf]
  %v82 = vld [vmem:[%s1 + $0xac] sm:$0xf]
  %v83 = vld [vmem:[%s1 + $0xb0] sm:$0xf]
  %v84 = vld [vmem:[%s1 + $0xb4] sm:$0xf]
  %v85 = vld [vmem:[%s1 + $0xb8] sm:$0xf]
  %v86 = vld [vmem:[%s1 + $0xbc] sm:$0xf]
  %v87 = vld [vmem:[%s1 + $0xc0] sm:$0xf]
  %v88 = vld [vmem:[%s1 + $0xc4] sm:$0xf]
  %v89 = vld [vmem:[%s1 + $0xc8] sm:$0xf]
  %v90 = vld [vmem:[%s1 + $0xcc] sm:$0xf]
  %v91 = vld [vmem:[%s1 + $0xd0] sm:$0xf]
  %v92 = vld [vmem:[%s1 + $0xd4] sm:$0xf]
  %v93 = vld [vmem:[%s1 + $0xd8] sm:$0xf]
  %v94 = vld [vmem:[%s1 + $0xdc] sm:$0xf]
  %v95 = vld [vmem:[%s1 + $0xe0] sm:$0xf]
  %v96 = vld [vmem:[%s1 + $0xe4] sm:$0xf]
  %v97 = vld [vmem:[%s1 + $0xe8] sm:$0xf]
  %v98 = vld [vmem:[%s1 + $0xec] sm:$0xf]
  %v99 = vld [vmem:[%s1 + $0xf0] sm:$0xf]
  %v100 = vld [vmem:[%s1 + $0xf4] sm:$0xf]
  %v101 = vld [vmem:[%s1 + $0xf8] sm:$0xf]
  %v102 = vld [vmem:[%s1 + $0xfc] sm:$0xf]
  %v103 = vld [vmem:[%s1 + $0x100] sm:$0xf]
  %v104 = vld [vmem:[%s1 + $0x104] sm:$0xf]
  %v105 = vld [vmem:[%s1 + $0x108] sm:$0xf]
  %v106 = vld [vmem:[%s1 + $0x10c] sm:$0xf]
  %v107 = vld [vmem:[%s1 + $0x110] sm:$0xf]
  %v108 = vld [vmem:[%s1 + $0x114] sm:$0xf]
  %v109 = vld [vmem:[%s1 + $0x118] sm:$0xf]
  %v110 = vld [vmem:[%s1 + $0x11c] sm:$0xf]
  %v111 = vld [vmem:[%s1 + $0x120] sm:$0xf]
  %v112 = vld [vmem:[%s1 + $0x124] sm:$0xf]
  %v113 = vld [vmem:[%s1 + $0x128] sm:$0xf]
  %v114 = vld [vmem:[%s1 + $0x12c] sm:$0xf]
  %v115 = vld [vmem:[%s1 + $0x130] sm:$0xf]
  %v116 = vld [vmem:[%s1 + $0x134] sm:$0xf]
  %v117 = vld [vmem:[%s1 + $0x138] sm:$0xf]
  %v118 = vld [vmem:[%s1 + $0x13c] sm:$0xf]
  %v131 = vunpack.c.l.b16 %v27
  %v132 = vunpack.c.h.b16 %v27
  %v133 = vunpack.c.l.b16 %v28
  %v134 = vunpack.c.h.b16 %v28
  %v135 = vunpack.c.l.b16 %v29
  %v136 = vunpack.c.l.b16 %v30
  %v137 = vunpack.c.h.b16 %v30
  %v138 = vunpack.c.l.b16 %v31
  %v139 = vunpack.c.h.b16 %v31
  %v140 = vunpack.c.l.b16 %v32
  %v141 = vunpack.c.l.b16 %v33
  %v142 = vunpack.c.h.b16 %v33
  %v143 = vunpack.c.l.b16 %v34
  %v144 = vunpack.c.h.b16 %v34
  %v145 = vunpack.c.l.b16 %v35
  %v146 = vunpack.c.l.b16 %v36
  %v147 = vunpack.c.h.b16 %v36
  %v148 = vunpack.c.l.b16 %v37
  %v149 = vunpack.c.h.b16 %v37
  %v150 = vunpack.c.l.b16 %v38
  %v151 = vpack.c.b16 %v136, %v131
  %v152 = vpack.c.b16 %v137, %v132
  %v153 = vpack.c.b16 %v138, %v133
  %v154 = vpack.c.b16 %v139, %v134
  %v155 = vpack.c.b16 %v140, %v135
  %v156 = vpack.c.b16 %v146, %v141
  %v157 = vpack.c.b16 %v147, %v142
  %v158 = vpack.c.b16 %v148, %v143
  %v159 = vpack.c.b16 %v149, %v144
  %v160 = vpack.c.b16 %v150, %v145
  %v251 = vunpack.c.l.b16 %v39
  %v252 = vunpack.c.l.b16 %v40
  %v253 = vunpack.c.l.b16 %v41
  %v254 = vunpack.c.l.b16 %v42
  %v255 = vunpack.c.l.b16 %v43
  %v256 = vunpack.c.l.b16 %v44
  %v257 = vunpack.c.l.b16 %v45
  %v258 = vunpack.c.l.b16 %v46
  %v259 = vunpack.c.l.b16 %v47
  %v260 = vunpack.c.l.b16 %v48
  %v261 = vunpack.c.l.b16 %v49
  %v262 = vunpack.c.l.b16 %v50
  %v263 = vunpack.c.l.b16 %v51
  %v264 = vunpack.c.l.b16 %v52
  %v265 = vunpack.c.l.b16 %v53
  %v266 = vunpack.c.l.b16 %v54
  %v267 = vunpack.c.l.b16 %v55
  %v268 = vunpack.c.l.b16 %v56
  %v269 = vunpack.c.l.b16 %v57
  %v270 = vunpack.c.l.b16 %v58
  %v271 = vunpack.c.l.b16 %v59
  %v272 = vunpack.c.l.b16 %v60
  %v273 = vunpack.c.l.b16 %v61
  %v274 = vunpack.c.l.b16 %v62
  %v275 = vunpack.c.l.b16 %v63
  %v276 = vunpack.c.l.b16 %v64
  %v277 = vunpack.c.l.b16 %v65
  %v278 = vunpack.c.l.b16 %v66
  %v279 = vunpack.c.l.b16 %v67
  %v280 = vunpack.c.l.b16 %v68
  %v281 = vunpack.c.l.b16 %v69
  %v282 = vunpack.c.l.b16 %v70
  %v283 = vunpack.c.l.b16 %v71
  %v284 = vunpack.c.l.b16 %v72
  %v285 = vunpack.c.l.b16 %v73
  %v286 = vunpack.c.l.b16 %v74
  %v287 = vunpack.c.l.b16 %v75
  %v288 = vunpack.c.l.b16 %v76
  %v289 = vunpack.c.l.b16 %v77
  %v290 = vunpack.c.l.b16 %v78
  %v291 = vunpack.c.l.b16 %v79
  %v292 = vunpack.c.l.b16 %v80
  %v293 = vunpack.c.l.b16 %v81
  %v294 = vunpack.c.l.b16 %v82
  %v295 = vunpack.c.l.b16 %v83
  %v296 = vunpack.c.l.b16 %v84
  %v297 = vunpack.c.l.b16 %v85
  %v298 = vunpack.c.l.b16 %v86
  %v299 = vunpack.c.l.b16 %v87
  %v300 = vunpack.c.l.b16 %v88
  %v301 = vunpack.c.l.b16 %v89
  %v302 = vunpack.c.l.b16 %v90
  %v303 = vunpack.c.l.b16 %v91
  %v304 = vunpack.c.l.b16 %v92
  %v305 = vunpack.c.l.b16 %v93
  %v306 = vunpack.c.l.b16 %v94
  %v307 = vunpack.c.l.b16 %v95
  %v308 = vunpack.c.l.b16 %v96
  %v309 = vunpack.c.l.b16 %v97
  %v310 = vunpack.c.l.b16 %v98
  %v311 = vunpack.c.l.b16 %v99
  %v312 = vunpack.c.l.b16 %v100
  %v313 = vunpack.c.l.b16 %v101
  %v314 = vunpack.c.l.b16 %v102
  %v315 = vunpack.c.l.b16 %v103
  %v316 = vunpack.c.l.b16 %v104
  %v317 = vunpack.c.l.b16 %v105
  %v318 = vunpack.c.l.b16 %v106
  %v319 = vunpack.c.l.b16 %v107
  %v320 = vunpack.c.l.b16 %v108
  %v321 = vunpack.c.l.b16 %v109
  %v322 = vunpack.c.l.b16 %v110
  %v323 = vunpack.c.l.b16 %v111
  %v324 = vunpack.c.l.b16 %v112
  %v325 = vunpack.c.l.b16 %v113
  %v326 = vunpack.c.l.b16 %v114
  %v327 = vunpack.c.l.b16 %v115
  %v328 = vunpack.c.l.b16 %v116
  %v329 = vunpack.c.l.b16 %v117
  %v330 = vunpack.c.l.b16 %v118
  %v331 = vpack.c.b16 %v252, %v251
  %v332 = vpack.c.b16 %v254, %v253
  %v333 = vpack.c.b16 %v256, %v255
  %v334 = vpack.c.b16 %v258, %v257
  %v335 = vpack.c.b16 %v260, %v259
  %v336 = vpack.c.b16 %v262, %v261
  %v337 = vpack.c.b16 %v264, %v263
  %v338 = vpack.c.b16 %v266, %v265
  %v339 = vpack.c.b16 %v268, %v267
  %v340 = vpack.c.b16 %v270, %v269
  %v341 = vpack.c.b16 %v272, %v271
  %v342 = vpack.c.b16 %v274, %v273
  %v343 = vpack.c.b16 %v276, %v275
  %v344 = vpack.c.b16 %v278, %v277
  %v345 = vpack.c.b16 %v280, %v279
  %v346 = vpack.c.b16 %v282, %v281
  %v347 = vpack.c.b16 %v284, %v283
  %v348 = vpack.c.b16 %v286, %v285
  %v349 = vpack.c.b16 %v288, %v287
  %v350 = vpack.c.b16 %v290, %v289
  %v351 = vpack.c.b16 %v292, %v291
  %v352 = vpack.c.b16 %v294, %v293
  %v353 = vpack.c.b16 %v296, %v295
  %v354 = vpack.c.b16 %v298, %v297
  %v355 = vpack.c.b16 %v300, %v299
  %v356 = vpack.c.b16 %v302, %v301
  %v357 = vpack.c.b16 %v304, %v303
  %v358 = vpack.c.b16 %v306, %v305
  %v359 = vpack.c.b16 %v308, %v307
  %v360 = vpack.c.b16 %v310, %v309
  %v361 = vpack.c.b16 %v312, %v311
  %v362 = vpack.c.b16 %v314, %v313
  %v363 = vpack.c.b16 %v316, %v315
  %v364 = vpack.c.b16 %v318, %v317
  %v365 = vpack.c.b16 %v320, %v319
  %v366 = vpack.c.b16 %v322, %v321
  %v367 = vpack.c.b16 %v324, %v323
  %v368 = vpack.c.b16 %v326, %v325
  %v369 = vpack.c.b16 %v328, %v327
  %v370 = vpack.c.b16 %v330, %v329
  %411 = vmatprep.subr.bf16.mxu0 0
  %412 = vmatpush1.bf16.msra.mxu0 %v331
  %413 = vmatprep.subr.bf16.mxu0 0
  %414 = vmatpush1.bf16.msra.mxu0 %v332
  %415 = vmatprep.subr.bf16.mxu0 0
  %416 = vmatpush1.bf16.msra.mxu0 %v333
  %417 = vmatprep.subr.bf16.mxu0 0
  %418 = vmatpush1.bf16.msra.mxu0 %v334
  %419 = vmatprep.subr.bf16.mxu0 0
  %420 = vmatpush1.bf16.msra.mxu0 %v335
  %421 = vmatprep.subr.bf16.mxu0 0
  %422 = vmatpush1.bf16.msra.mxu0 %v336
  %423 = vmatprep.subr.bf16.mxu0 0
  %424 = vmatpush1.bf16.msra.mxu0 %v337
  %425 = vmatprep.subr.bf16.mxu0 0
  %426 = vmatpush1.bf16.msra.mxu0 %v338
  %427 = vmatprep.subr.bf16.mxu0 0
  %428 = vmatpush1.bf16.msra.mxu0 %v339
  %429 = vmatprep.subr.bf16.mxu0 0
  %430 = vmatpush1.bf16.msra.mxu0 %v340
  %431 = vmatprep.subr.bf16.mxu0 0
  %432 = vmatpush1.bf16.msra.mxu0 %v341
  %433 = vmatprep.subr.bf16.mxu0 0
  %434 = vmatpush1.bf16.msra.mxu0 %v342
  %435 = vmatprep.subr.bf16.mxu0 0
  %436 = vmatpush1.bf16.msra.mxu0 %v343
  %437 = vmatprep.subr.bf16.mxu0 0
  %438 = vmatpush1.bf16.msra.mxu0 %v344
  %439 = vmatprep.subr.bf16.mxu0 0
  %440 = vmatpush1.bf16.msra.mxu0 %v345
  %441 = vmatprep.subr.bf16.mxu0 0
  %442 = vmatpush1.bf16.msra.mxu0 %v346
  %443 = vmatprep.mubr.bf16.mxu0 %v152
  %444 = vmatmul.mubr.bf16.gmra.mrb[0].mxu0 %v151
  %v445 = vpop.f32.mrb[0].mxu0
  %v446 = vadd.f32 0.0, %v445
  %v447 = vpop.f32.mrb[0].mxu0
  %v448 = vpop.f32.mrb[0].mxu0
  %v449 = vadd.f32 0.0, %v448
  %v450 = vpop.f32.mrb[0].mxu0
  %451 = vmatprep.mubr.bf16.mxu0 %v157
  %452 = vmatmul.mubr.bf16.gmra.mrb[0].mxu0 %v156
  %v453 = vpop.f32.mrb[0].mxu0
  %v454 = vadd.f32 0.0, %v453
  %v455 = vpop.f32.mrb[0].mxu0
  %v456 = vpop.f32.mrb[0].mxu0
  %v457 = vadd.f32 0.0, %v456
  %v458 = vpop.f32.mrb[0].mxu0
  %459 = vdwg.mxu0
  %460 = vmatprep.subr.bf16.mxu0 0
  %461 = vmatpush1.bf16.msra.mxu0 %v347
  %462 = vmatprep.subr.bf16.mxu0 0
  %463 = vmatpush1.bf16.msra.mxu0 %v348
  %464 = vmatprep.subr.bf16.mxu0 0
  %465 = vmatpush1.bf16.msra.mxu0 %v349
  %466 = vmatprep.subr.bf16.mxu0 0
  %467 = vmatpush1.bf16.msra.mxu0 %v350
  %468 = vmatprep.subr.bf16.mxu0 0
  %469 = vmatpush1.bf16.msra.mxu0 %v351
  %470 = vmatprep.subr.bf16.mxu0 0
  %471 = vmatpush1.bf16.msra.mxu0 %v352
  %472 = vmatprep.subr.bf16.mxu0 0
  %473 = vmatpush1.bf16.msra.mxu0 %v353
  %474 = vmatprep.subr.bf16.mxu0 0
  %475 = vmatpush1.bf16.msra.mxu0 %v354
  %476 = vmatprep.subr.bf16.mxu0 0
  %477 = vmatpush1.bf16.msra.mxu0 %v355
  %478 = vmatprep.subr.bf16.mxu0 0
  %479 = vmatpush1.bf16.msra.mxu0 %v356
  %480 = vmatprep.subr.bf16.mxu0 0
  %481 = vmatpush1.bf16.msra.mxu0 %v357
  %482 = vmatprep.subr.bf16.mxu0 0
  %483 = vmatpush1.bf16.msra.mxu0 %v358
  %484 = vmatprep.subr.bf16.mxu0 0
  %485 = vmatpush1.bf16.msra.mxu0 %v359
  %486 = vmatprep.subr.bf16.mxu0 0
  %487 = vmatpush1.bf16.msra.mxu0 %v360
  %488 = vmatprep.subr.bf16.mxu0 0
  %489 = vmatpush1.bf16.msra.mxu0 %v361
  %490 = vmatprep.subr.bf16.mxu0 0
  %491 = vmatpush1.bf16.msra.mxu0 %v362
  %492 = vmatprep.mubr.bf16.mxu0 %v154
  %493 = vmatmul.mubr.bf16.gmra.mrb[0].mxu0 %v153
  %v494 = vpop.f32.mrb[0].mxu0
  %v495 = vadd.f32 %v446, %v494
  %v496 = vpop.f32.mrb[0].mxu0
  %v497 = vpop.f32.mrb[0].mxu0
  %v498 = vadd.f32 %v449, %v497
  %v499 = vpop.f32.mrb[0].mxu0
  %500 = vmatprep.mubr.bf16.mxu0 %v159
  %501 = vmatmul.mubr.bf16.gmra.mrb[0].mxu0 %v158
  %v502 = vpop.f32.mrb[0].mxu0
  %v503 = vadd.f32 %v454, %v502
  %v504 = vpop.f32.mrb[0].mxu0
  %v505 = vpop.f32.mrb[0].mxu0
  %v506 = vadd.f32 %v457, %v505
  %v507 = vpop.f32.mrb[0].mxu0
  %508 = vdwg.mxu0
  %509 = vmatprep.subr.bf16.mxu0 0
  %510 = vmatpush1.bf16.msra.mxu0 %v363
  %511 = vmatprep.subr.bf16.mxu0 0
  %512 = vmatpush1.bf16.msra.mxu0 %v364
  %513 = vmatprep.subr.bf16.mxu0 0
  %514 = vmatpush1.bf16.msra.mxu0 %v365
  %515 = vmatprep.subr.bf16.mxu0 0
  %516 = vmatpush1.bf16.msra.mxu0 %v366
  %517 = vmatprep.subr.bf16.mxu0 0
  %518 = vmatpush1.bf16.msra.mxu0 %v367
  %519 = vmatprep.subr.bf16.mxu0 0
  %520 = vmatpush1.bf16.msra.mxu0 %v368
  %521 = vmatprep.subr.bf16.mxu0 0
  %522 = vmatpush1.bf16.msra.mxu0 %v369
  %523 = vmatprep.subr.bf16.mxu0 0
  %524 = vmatpush1.bf16.msra.mxu0 %v370
  %525 = vmatprep.subr.bf16.mxu0 0
  %526 = vmatpush1.bf16.msra.mxu0 0
  %527 = vmatprep.subr.bf16.mxu0 0
  %528 = vmatpush1.bf16.msra.mxu0 0
  %529 = vmatprep.subr.bf16.mxu0 0
  %530 = vmatpush1.bf16.msra.mxu0 0
  %531 = vmatprep.subr.bf16.mxu0 0
  %532 = vmatpush1.bf16.msra.mxu0 0
  %533 = vmatprep.subr.bf16.mxu0 0
  %534 = vmatpush1.bf16.msra.mxu0 0
  %535 = vmatprep.subr.bf16.mxu0 0
  %536 = vmatpush1.bf16.msra.mxu0 0
  %537 = vmatprep.subr.bf16.mxu0 0
  %538 = vmatpush1.bf16.msra.mxu0 0
  %539 = vmatprep.subr.bf16.mxu0 0
  %540 = vmatpush1.bf16.msra.mxu0 0
  %541 = vmatprep.mubr.bf16.mxu0 0
  %542 = vmatmul.mubr.bf16.gmra.mrb[0].mxu0 %v155
  %v543 = vpop.f32.mrb[0].mxu0
  %v544 = vadd.f32 %v495, %v543
  %v545 = vpop.f32.mrb[0].mxu0
  %v546 = vpop.f32.mrb[0].mxu0
  %v547 = vadd.f32 %v498, %v546
  %v548 = vpop.f32.mrb[0].mxu0
  %549 = vmatprep.mubr.bf16.mxu0 0
  %550 = vmatmul.mubr.bf16.gmra.mrb[0].mxu0 %v160
  %v551 = vpop.f32.mrb[0].mxu0
  %v552 = vadd.f32 %v503, %v551
  %v553 = vpop.f32.mrb[0].mxu0
  %v554 = vpop.f32.mrb[0].mxu0
  %v555 = vadd.f32 %v506, %v554
  %v556 = vpop.f32.mrb[0].mxu0
  %557 = vdwg.mxu0
  %v558 = vadd.f32 %v23, %v544
  %v559 = vadd.f32 %v24, %v547
  %v560 = vadd.f32 %v25, %v552
  %v561 = vadd.f32 %v26, %v555
  %562 = vst [vmem:[%s3] sm:$0xff] %v558
  %563 = vst [vmem:[%s3 + $0x8] sm:$0xff] %v559
  %564 = vst [vmem:[%s3 + $0x10] sm:$0xff] %v560
  %565 = vst [vmem:[%s3 + $0x18] sm:$0xff] %v561
  // Predicated region
  $region18: #{backbone_forward.15} parent=0 // pred_check
    %p566 = pneg %p15
  $region19: #{backbone_forward.15} parent=0 // pred_check_branch
    %568 = sbr.rel (%p566) target = $region21
  $region20: #{backbone_forward.15} parent=0 // pred_region
    %v569 = vld [vmem:[%s3] sm:$0xff]
    %v570 = vld [vmem:[%s3 + $0x8] sm:$0xff]
    %v571 = vld [vmem:[%s3 + $0x10] sm:$0xff]
    %v572 = vld [vmem:[%s3 + $0x18] sm:$0xff]
    %v573 = vld [vmem:[%s2] sm:$0x1]
    %v575 = vlaneseq
    %v576 = vshrl.u32 %v575, 7
    %v577 = vsub.s32 0, %v576
    %v578 = vrot.slane %v573, %v577
    %v580 = vadd.f32 %v569, %v578
    %v581 = vadd.f32 %v570, %v578
    %v582 = vadd.f32 %v571, %v578
    %v583 = vadd.f32 %v572, %v578
    %v584 = vmax.f32 %v580, 0.0
    %v585 = vmax.f32 %v581, 0.0
    %v586 = vmax.f32 %v582, 0.0
    %v587 = vmax.f32 %v583, 0.0
    %588 = vst [vmem:[%s3] sm:$0xff] %v584
    %589 = vst [vmem:[%s3 + $0x8] sm:$0xff] %v585
    %590 = vst [vmem:[%s3 + $0x10] sm:$0xff] %v586
    %591 = vst [vmem:[%s3 + $0x18] sm:$0xff] %v587
  $region21: #{backbone_forward.15} parent=0 // pred_fallthru
    _
  // Predicated region
  $region22: #{backbone_forward.15} parent=0 // pred_check
    _
  $region23: #{backbone_forward.15} parent=0 // pred_check_branch
    %593 = sbr.rel (0) target = $region25
  $region24: #{backbone_forward.15} parent=0 // pred_region
    _
  $region25: #{backbone_forward.15} parent=0 // pred_fallthru
    _
  // Predicated region
  $region26: #{backbone_forward.15} parent=0 // pred_check
    _
  $region27: #{backbone_forward.15} parent=0 // pred_check_branch
    %595 = sbr.rel (0) target = $region29
  $region28: #{backbone_forward.15} parent=0 // pred_region
    _
  $region29: #{backbone_forward.15} parent=0 // pred_fallthru
    _

// kernel: backbone_forward.16
$region0: #{backbone_forward.16}
  #allocation0 [shape = 'u32[]', space=smem, size = 0x4, offset = 0x4, fixed_abs, tag = 'smem constant byte address 0x4 - core index']
  #allocation1 [shape = 'u32[144,128]{1,0:T(1,128)}', space=vmem, size = 0x12000, scoped, tag = 'internal scratch']
  %s0 = inlined_call_operand.vmem [shape: bf16[32,1152], index: 0, kind: input, shape index: {}]
  %s1 = inlined_call_operand.vmem [shape: bf16[1152,128], index: 1, kind: input, shape index: {}]
  %s2 = inlined_call_operand.vmem [shape: f32[1,128], index: 2, kind: input, shape index: {}]
  %s3 = inlined_call_operand.vmem [shape: f32[32,128], index: 3, kind: output, shape index: {}]
  %s4 = sld [smem:[#allocation0]]
  $region30: #{backbone_forward.16} parent=0
    _
  %s6 = ssub.s32 1, %s4
  %s7 = scalar_select 0, %s6, %s4
  // Predicated region
  $region2: #{backbone_forward.16} parent=0 // pred_check
    _
  $region3: #{backbone_forward.16} parent=0 // pred_check_branch
    %9 = sbr.rel (0) target = $region5
  $region4: #{backbone_forward.16} parent=0 // pred_region
    _
  $region5: #{backbone_forward.16} parent=0 // pred_fallthru
    _
  // Predicated region
  $region6: #{backbone_forward.16} parent=0 // pred_check
    _
  $region7: #{backbone_forward.16} parent=0 // pred_check_branch
    %11 = sbr.rel (0) target = $region9
  $region8: #{backbone_forward.16} parent=0 // pred_region
    _
  $region9: #{backbone_forward.16} parent=0 // pred_fallthru
    _
  // Predicated region
  $region10: #{backbone_forward.16} parent=0 // pred_check
    _
  $region11: #{backbone_forward.16} parent=0 // pred_check_branch
    %13 = sbr.rel (0) target = $region13
  $region12: #{backbone_forward.16} parent=0 // pred_region
    _
  $region13: #{backbone_forward.16} parent=0 // pred_fallthru
    _
  %p15 = scmp.eq.s32.totalorder 0, 0
  // Predicated region
  $region14: #{backbone_forward.16} parent=0 // pred_check
    %p16 = pneg %p15
  $region15: #{backbone_forward.16} parent=0 // pred_check_branch
    %18 = sbr.rel (%p16) target = $region17
  $region16: #{backbone_forward.16} parent=0 // pred_region
    %19 = vst [vmem:[%s3] sm:$0xff] 0.0
    %20 = vst [vmem:[%s3 + $0x8] sm:$0xff] 0.0
    %21 = vst [vmem:[%s3 + $0x10] sm:$0xff] 0.0
    %22 = vst [vmem:[%s3 + $0x18] sm:$0xff] 0.0
  $region17: #{backbone_forward.16} parent=0 // pred_fallthru
    _
  %v23 = vld [vmem:[%s3] sm:$0xff]
  %v24 = vld [vmem:[%s3 + $0x8] sm:$0xff]
  %v25 = vld [vmem:[%s3 + $0x10] sm:$0xff]
  %v26 = vld [vmem:[%s3 + $0x18] sm:$0xff]
  %v27 = vld [vmem:[%s0] sm:$0xff]
  %v28 = vld [vmem:[%s0 + $0x8] sm:$0xff]
  %v29 = vld [vmem:[%s0 + $0x10] sm:$0xff]
  %v30 = vld [vmem:[%s0 + $0x18] sm:$0xff]
  %v31 = vld [vmem:[%s0 + $0x20] sm:$0xf]
  %v32 = vld [vmem:[%s0 + $0x24] sm:$0xff]
  %v33 = vld [vmem:[%s0 + $0x2c] sm:$0xff]
  %v34 = vld [vmem:[%s0 + $0x34] sm:$0xff]
  %v35 = vld [vmem:[%s0 + $0x3c] sm:$0xff]
  %v36 = vld [vmem:[%s0 + $0x44] sm:$0xf]
  %v37 = vld [vmem:[%s0 + $0x48] sm:$0xff]
  %v38 = vld [vmem:[%s0 + $0x50] sm:$0xff]
  %v39 = vld [vmem:[%s0 + $0x58] sm:$0xff]
  %v40 = vld [vmem:[%s0 + $0x60] sm:$0xff]
  %v41 = vld [vmem:[%s0 + $0x68] sm:$0xf]
  %v42 = vld [vmem:[%s0 + $0x6c] sm:$0xff]
  %v43 = vld [vmem:[%s0 + $0x74] sm:$0xff]
  %v44 = vld [vmem:[%s0 + $0x7c] sm:$0xff]
  %v45 = vld [vmem:[%s0 + $0x84] sm:$0xff]
  %v46 = vld [vmem:[%s0 + $0x8c] sm:$0xf]
  %v47 = vld [vmem:[%s1] sm:$0xf]
  %v48 = vld [vmem:[%s1 + $0x4] sm:$0xf]
  %v49 = vld [vmem:[%s1 + $0x8] sm:$0xf]
  %v50 = vld [vmem:[%s1 + $0xc] sm:$0xf]
  %v51 = vld [vmem:[%s1 + $0x10] sm:$0xf]
  %v52 = vld [vmem:[%s1 + $0x14] sm:$0xf]
  %v53 = vld [vmem:[%s1 + $0x18] sm:$0xf]
  %v54 = vld [vmem:[%s1 + $0x1c] sm:$0xf]
  %v55 = vld [vmem:[%s1 + $0x20] sm:$0xf]
  %v56 = vld [vmem:[%s1 + $0x24] sm:$0xf]
  %v57 = vld [vmem:[%s1 + $0x28] sm:$0xf]
  %v58 = vld [vmem:[%s1 + $0x2c] sm:$0xf]
  %v59 = vld [vmem:[%s1 + $0x30] sm:$0xf]
  %v60 = vld [vmem:[%s1 + $0x34] sm:$0xf]
  %v61 = vld [vmem:[%s1 + $0x38] sm:$0xf]
  %v62 = vld [vmem:[%s1 + $0x3c] sm:$0xf]
  %v63 = vld [vmem:[%s1 + $0x40] sm:$0xf]
  %v64 = vld [vmem:[%s1 + $0x44] sm:$0xf]
  %v65 = vld [vmem:[%s1 + $0x48] sm:$0xf]
  %v66 = vld [vmem:[%s1 + $0x4c] sm:$0xf]
  %v67 = vld [vmem:[%s1 + $0x50] sm:$0xf]
  %v68 = vld [vmem:[%s1 + $0x54] sm:$0xf]
  %v69 = vld [vmem:[%s1 + $0x58] sm:$0xf]
  %v70 = vld [vmem:[%s1 + $0x5c] sm:$0xf]
  %v71 = vld [vmem:[%s1 + $0x60] sm:$0xf]
  %v72 = vld [vmem:[%s1 + $0x64] sm:$0xf]
  %v73 = vld [vmem:[%s1 + $0x68] sm:$0xf]
  %v74 = vld [vmem:[%s1 + $0x6c] sm:$0xf]
  %v75 = vld [vmem:[%s1 + $0x70] sm:$0xf]
  %v76 = vld [vmem:[%s1 + $0x74] sm:$0xf]
  %v77 = vld [vmem:[%s1 + $0x78] sm:$0xf]
  %v78 = vld [vmem:[%s1 + $0x7c] sm:$0xf]
  %v79 = vld [vmem:[%s1 + $0x80] sm:$0xf]
  %v80 = vld [vmem:[%s1 + $0x84] sm:$0xf]
  %v81 = vld [vmem:[%s1 + $0x88] sm:$0xf]
  %v82 = vld [vmem:[%s1 + $0x8c] sm:$0xf]
  %v83 = vld [vmem:[%s1 + $0x90] sm:$0xf]
  %v84 = vld [vmem:[%s1 + $0x94] sm:$0xf]
  %v85 = vld [vmem:[%s1 + $0x98] sm:$0xf]
  %v86 = vld [vmem:[%s1 + $0x9c] sm:$0xf]
  %v87 = vld [vmem:[%s1 + $0xa0] sm:$0xf]
  %v88 = vld [vmem:[%s1 + $0xa4] sm:$0xf]
  %v89 = vld [vmem:[%s1 + $0xa8] sm:$0xf]
  %v90 = vld [vmem:[%s1 + $0xac] sm:$0xf]
  %v91 = vld [vmem:[%s1 + $0xb0] sm:$0xf]
  %v92 = vld [vmem:[%s1 + $0xb4] sm:$0xf]
  %v93 = vld [vmem:[%s1 + $0xb8] sm:$0xf]
  %v94 = vld [vmem:[%s1 + $0xbc] sm:$0xf]
  %v95 = vld [vmem:[%s1 + $0xc0] sm:$0xf]
  %v96 = vld [vmem:[%s1 + $0xc4] sm:$0xf]
  %v97 = vld [vmem:[%s1 + $0xc8] sm:$0xf]
  %v98 = vld [vmem:[%s1 + $0xcc] sm:$0xf]
  %v99 = vld [vmem:[%s1 + $0xd0] sm:$0xf]
  %v100 = vld [vmem:[%s1 + $0xd4] sm:$0xf]
  %v101 = vld [vmem:[%s1 + $0xd8] sm:$0xf]
  %v102 = vld [vmem:[%s1 + $0xdc] sm:$0xf]
  %v103 = vld [vmem:[%s1 + $0xe0] sm:$0xf]
  %v104 = vld [vmem:[%s1 + $0xe4] sm:$0xf]
  %v105 = vld [vmem:[%s1 + $0xe8] sm:$0xf]
  %v106 = vld [vmem:[%s1 + $0xec] sm:$0xf]
  %v107 = vld [vmem:[%s1 + $0xf0] sm:$0xf]
  %v108 = vld [vmem:[%s1 + $0xf4] sm:$0xf]
  %v109 = vld [vmem:[%s1 + $0xf8] sm:$0xf]
  %v110 = vld [vmem:[%s1 + $0xfc] sm:$0xf]
  %v111 = vld [vmem:[%s1 + $0x100] sm:$0xf]
  %v112 = vld [vmem:[%s1 + $0x104] sm:$0xf]
  %v113 = vld [vmem:[%s1 + $0x108] sm:$0xf]
  %v114 = vld [vmem:[%s1 + $0x10c] sm:$0xf]
  %v115 = vld [vmem:[%s1 + $0x110] sm:$0xf]
  %v116 = vld [vmem:[%s1 + $0x114] sm:$0xf]
  %v117 = vld [vmem:[%s1 + $0x118] sm:$0xf]
  %v118 = vld [vmem:[%s1 + $0x11c] sm:$0xf]
  %v119 = vld [vmem:[%s1 + $0x120] sm:$0xf]
  %v120 = vld [vmem:[%s1 + $0x124] sm:$0xf]
  %v121 = vld [vmem:[%s1 + $0x128] sm:$0xf]
  %v122 = vld [vmem:[%s1 + $0x12c] sm:$0xf]
  %v123 = vld [vmem:[%s1 + $0x130] sm:$0xf]
  %v124 = vld [vmem:[%s1 + $0x134] sm:$0xf]
  %v125 = vld [vmem:[%s1 + $0x138] sm:$0xf]
  %v126 = vld [vmem:[%s1 + $0x13c] sm:$0xf]
  %v127 = vld [vmem:[%s1 + $0x140] sm:$0xf]
  %v128 = vld [vmem:[%s1 + $0x144] sm:$0xf]
  %v129 = vld [vmem:[%s1 + $0x148] sm:$0xf]
  %v130 = vld [vmem:[%s1 + $0x14c] sm:$0xf]
  %v131 = vld [vmem:[%s1 + $0x150] sm:$0xf]
  %v132 = vld [vmem:[%s1 + $0x154] sm:$0xf]
  %v133 = vld [vmem:[%s1 + $0x158] sm:$0xf]
  %v134 = vld [vmem:[%s1 + $0x15c] sm:$0xf]
  %v135 = vld [vmem:[%s1 + $0x160] sm:$0xf]
  %v136 = vld [vmem:[%s1 + $0x164] sm:$0xf]
  %v137 = vld [vmem:[%s1 + $0x168] sm:$0xf]
  %v138 = vld [vmem:[%s1 + $0x16c] sm:$0xf]
  %v139 = vld [vmem:[%s1 + $0x170] sm:$0xf]
  %v140 = vld [vmem:[%s1 + $0x174] sm:$0xf]
  %v141 = vld [vmem:[%s1 + $0x178] sm:$0xf]
  %v142 = vld [vmem:[%s1 + $0x17c] sm:$0xf]
  %v143 = vld [vmem:[%s1 + $0x180] sm:$0xf]
  %v144 = vld [vmem:[%s1 + $0x184] sm:$0xf]
  %v145 = vld [vmem:[%s1 + $0x188] sm:$0xf]
  %v146 = vld [vmem:[%s1 + $0x18c] sm:$0xf]
  %v147 = vld [vmem:[%s1 + $0x190] sm:$0xf]
  %v148 = vld [vmem:[%s1 + $0x194] sm:$0xf]
  %v149 = vld [vmem:[%s1 + $0x198] sm:$0xf]
  %v150 = vld [vmem:[%s1 + $0x19c] sm:$0xf]
  %v151 = vld [vmem:[%s1 + $0x1a0] sm:$0xf]
  %v152 = vld [vmem:[%s1 + $0x1a4] sm:$0xf]
  %v153 = vld [vmem:[%s1 + $0x1a8] sm:$0xf]
  %v154 = vld [vmem:[%s1 + $0x1ac] sm:$0xf]
  %v155 = vld [vmem:[%s1 + $0x1b0] sm:$0xf]
  %v156 = vld [vmem:[%s1 + $0x1b4] sm:$0xf]
  %v157 = vld [vmem:[%s1 + $0x1b8] sm:$0xf]
  %v158 = vld [vmem:[%s1 + $0x1bc] sm:$0xf]
  %v159 = vld [vmem:[%s1 + $0x1c0] sm:$0xf]
  %v160 = vld [vmem:[%s1 + $0x1c4] sm:$0xf]
  %v161 = vld [vmem:[%s1 + $0x1c8] sm:$0xf]
  %v162 = vld [vmem:[%s1 + $0x1cc] sm:$0xf]
  %v163 = vld [vmem:[%s1 + $0x1d0] sm:$0xf]
  %v164 = vld [vmem:[%s1 + $0x1d4] sm:$0xf]
  %v165 = vld [vmem:[%s1 + $0x1d8] sm:$0xf]
  %v166 = vld [vmem:[%s1 + $0x1dc] sm:$0xf]
  %v167 = vld [vmem:[%s1 + $0x1e0] sm:$0xf]
  %v168 = vld [vmem:[%s1 + $0x1e4] sm:$0xf]
  %v169 = vld [vmem:[%s1 + $0x1e8] sm:$0xf]
  %v170 = vld [vmem:[%s1 + $0x1ec] sm:$0xf]
  %v171 = vld [vmem:[%s1 + $0x1f0] sm:$0xf]
  %v172 = vld [vmem:[%s1 + $0x1f4] sm:$0xf]
  %v173 = vld [vmem:[%s1 + $0x1f8] sm:$0xf]
  %v174 = vld [vmem:[%s1 + $0x1fc] sm:$0xf]
  %v175 = vld [vmem:[%s1 + $0x200] sm:$0xf]
  %v176 = vld [vmem:[%s1 + $0x204] sm:$0xf]
  %v177 = vld [vmem:[%s1 + $0x208] sm:$0xf]
  %v178 = vld [vmem:[%s1 + $0x20c] sm:$0xf]
  %v179 = vld [vmem:[%s1 + $0x210] sm:$0xf]
  %v180 = vld [vmem:[%s1 + $0x214] sm:$0xf]
  %v181 = vld [vmem:[%s1 + $0x218] sm:$0xf]
  %v182 = vld [vmem:[%s1 + $0x21c] sm:$0xf]
  %v183 = vld [vmem:[%s1 + $0x220] sm:$0xf]
  %v184 = vld [vmem:[%s1 + $0x224] sm:$0xf]
  %v185 = vld [vmem:[%s1 + $0x228] sm:$0xf]
  %v186 = vld [vmem:[%s1 + $0x22c] sm:$0xf]
  %v187 = vld [vmem:[%s1 + $0x230] sm:$0xf]
  %v188 = vld [vmem:[%s1 + $0x234] sm:$0xf]
  %v189 = vld [vmem:[%s1 + $0x238] sm:$0xf]
  %v190 = vld [vmem:[%s1 + $0x23c] sm:$0xf]
  %v211 = vunpack.c.l.b16 %v27
  %v212 = vunpack.c.h.b16 %v27
  %v213 = vunpack.c.l.b16 %v28
  %v214 = vunpack.c.h.b16 %v28
  %v215 = vunpack.c.l.b16 %v29
  %v216 = vunpack.c.h.b16 %v29
  %v217 = vunpack.c.l.b16 %v30
  %v218 = vunpack.c.h.b16 %v30
  %v219 = vunpack.c.l.b16 %v31
  %v220 = vunpack.c.l.b16 %v32
  %v221 = vunpack.c.h.b16 %v32
  %v222 = vunpack.c.l.b16 %v33
  %v223 = vunpack.c.h.b16 %v33
  %v224 = vunpack.c.l.b16 %v34
  %v225 = vunpack.c.h.b16 %v34
  %v226 = vunpack.c.l.b16 %v35
  %v227 = vunpack.c.h.b16 %v35
  %v228 = vunpack.c.l.b16 %v36
  %v229 = vunpack.c.l.b16 %v37
  %v230 = vunpack.c.h.b16 %v37
  %v231 = vunpack.c.l.b16 %v38
  %v232 = vunpack.c.h.b16 %v38
  %v233 = vunpack.c.l.b16 %v39
  %v234 = vunpack.c.h.b16 %v39
  %v235 = vunpack.c.l.b16 %v40
  %v236 = vunpack.c.h.b16 %v40
  %v237 = vunpack.c.l.b16 %v41
  %v238 = vunpack.c.l.b16 %v42
  %v239 = vunpack.c.h.b16 %v42
  %v240 = vunpack.c.l.b16 %v43
  %v241 = vunpack.c.h.b16 %v43
  %v242 = vunpack.c.l.b16 %v44
  %v243 = vunpack.c.h.b16 %v44
  %v244 = vunpack.c.l.b16 %v45
  %v245 = vunpack.c.h.b16 %v45
  %v246 = vunpack.c.l.b16 %v46
  %v247 = vpack.c.b16 %v220, %v211
  %v248 = vpack.c.b16 %v221, %v212
  %v249 = vpack.c.b16 %v222, %v213
  %v250 = vpack.c.b16 %v223, %v214
  %v251 = vpack.c.b16 %v224, %v215
  %v252 = vpack.c.b16 %v225, %v216
  %v253 = vpack.c.b16 %v226, %v217
  %v254 = vpack.c.b16 %v227, %v218
  %v255 = vpack.c.b16 %v228, %v219
  %v256 = vpack.c.b16 %v238, %v229
  %v257 = vpack.c.b16 %v239, %v230
  %v258 = vpack.c.b16 %v240, %v231
  %v259 = vpack.c.b16 %v241, %v232
  %v260 = vpack.c.b16 %v242, %v233
  %v261 = vpack.c.b16 %v243, %v234
  %v262 = vpack.c.b16 %v244, %v235
  %v263 = vpack.c.b16 %v245, %v236
  %v264 = vpack.c.b16 %v246, %v237
  %v427 = vunpack.c.l.b16 %v47
  %v428 = vunpack.c.l.b16 %v48
  %v429 = vunpack.c.l.b16 %v49
  %v430 = vunpack.c.l.b16 %v50
  %v431 = vunpack.c.l.b16 %v51
  %v432 = vunpack.c.l.b16 %v52
  %v433 = vunpack.c.l.b16 %v53
  %v434 = vunpack.c.l.b16 %v54
  %v435 = vunpack.c.l.b16 %v55
  %v436 = vunpack.c.l.b16 %v56
  %v437 = vunpack.c.l.b16 %v57
  %v438 = vunpack.c.l.b16 %v58
  %v439 = vunpack.c.l.b16 %v59
  %v440 = vunpack.c.l.b16 %v60
  %v441 = vunpack.c.l.b16 %v61
  %v442 = vunpack.c.l.b16 %v62
  %v443 = vunpack.c.l.b16 %v63
  %v444 = vunpack.c.l.b16 %v64
  %v445 = vunpack.c.l.b16 %v65
  %v446 = vunpack.c.l.b16 %v66
  %v447 = vunpack.c.l.b16 %v67
  %v448 = vunpack.c.l.b16 %v68
  %v449 = vunpack.c.l.b16 %v69
  %v450 = vunpack.c.l.b16 %v70
  %v451 = vunpack.c.l.b16 %v71
  %v452 = vunpack.c.l.b16 %v72
  %v453 = vunpack.c.l.b16 %v73
  %v454 = vunpack.c.l.b16 %v74
  %v455 = vunpack.c.l.b16 %v75
  %v456 = vunpack.c.l.b16 %v76
  %v457 = vunpack.c.l.b16 %v77
  %v458 = vunpack.c.l.b16 %v78
  %v459 = vunpack.c.l.b16 %v79
  %v460 = vunpack.c.l.b16 %v80
  %v461 = vunpack.c.l.b16 %v81
  %v462 = vunpack.c.l.b16 %v82
  %v463 = vunpack.c.l.b16 %v83
  %v464 = vunpack.c.l.b16 %v84
  %v465 = vunpack.c.l.b16 %v85
  %v466 = vunpack.c.l.b16 %v86
  %v467 = vunpack.c.l.b16 %v87
  %v468 = vunpack.c.l.b16 %v88
  %v469 = vunpack.c.l.b16 %v89
  %v470 = vunpack.c.l.b16 %v90
  %v471 = vunpack.c.l.b16 %v91
  %v472 = vunpack.c.l.b16 %v92
  %v473 = vunpack.c.l.b16 %v93
  %v474 = vunpack.c.l.b16 %v94
  %v475 = vunpack.c.l.b16 %v95
  %v476 = vunpack.c.l.b16 %v96
  %v477 = vunpack.c.l.b16 %v97
  %v478 = vunpack.c.l.b16 %v98
  %v479 = vunpack.c.l.b16 %v99
  %v480 = vunpack.c.l.b16 %v100
  %v481 = vunpack.c.l.b16 %v101
  %v482 = vunpack.c.l.b16 %v102
  %v483 = vunpack.c.l.b16 %v103
  %v484 = vunpack.c.l.b16 %v104
  %v485 = vunpack.c.l.b16 %v105
  %v486 = vunpack.c.l.b16 %v106
  %v487 = vunpack.c.l.b16 %v107
  %v488 = vunpack.c.l.b16 %v108
  %v489 = vunpack.c.l.b16 %v109
  %v490 = vunpack.c.l.b16 %v110
  %v491 = vunpack.c.l.b16 %v111
  %v492 = vunpack.c.l.b16 %v112
  %v493 = vunpack.c.l.b16 %v113
  %v494 = vunpack.c.l.b16 %v114
  %v495 = vunpack.c.l.b16 %v115
  %v496 = vunpack.c.l.b16 %v116
  %v497 = vunpack.c.l.b16 %v117
  %v498 = vunpack.c.l.b16 %v118
  %v499 = vunpack.c.l.b16 %v119
  %v500 = vunpack.c.l.b16 %v120
  %v501 = vunpack.c.l.b16 %v121
  %v502 = vunpack.c.l.b16 %v122
  %v503 = vunpack.c.l.b16 %v123
  %v504 = vunpack.c.l.b16 %v124
  %v505 = vunpack.c.l.b16 %v125
  %v506 = vunpack.c.l.b16 %v126
  %v507 = vunpack.c.l.b16 %v127
  %v508 = vunpack.c.l.b16 %v128
  %v509 = vunpack.c.l.b16 %v129
  %v510 = vunpack.c.l.b16 %v130
  %v511 = vunpack.c.l.b16 %v131
  %v512 = vunpack.c.l.b16 %v132
  %v513 = vunpack.c.l.b16 %v133
  %v514 = vunpack.c.l.b16 %v134
  %v515 = vunpack.c.l.b16 %v135
  %v516 = vunpack.c.l.b16 %v136
  %v517 = vunpack.c.l.b16 %v137
  %v518 = vunpack.c.l.b16 %v138
  %v519 = vunpack.c.l.b16 %v139
  %v520 = vunpack.c.l.b16 %v140
  %v521 = vunpack.c.l.b16 %v141
  %v522 = vunpack.c.l.b16 %v142
  %v523 = vunpack.c.l.b16 %v143
  %v524 = vunpack.c.l.b16 %v144
  %v525 = vunpack.c.l.b16 %v145
  %v526 = vunpack.c.l.b16 %v146
  %v527 = vunpack.c.l.b16 %v147
  %v528 = vunpack.c.l.b16 %v148
  %v529 = vunpack.c.l.b16 %v149
  %v530 = vunpack.c.l.b16 %v150
  %v531 = vunpack.c.l.b16 %v151
  %v532 = vunpack.c.l.b16 %v152
  %v533 = vunpack.c.l.b16 %v153
  %v534 = vunpack.c.l.b16 %v154
  %v535 = vunpack.c.l.b16 %v155
  %v536 = vunpack.c.l.b16 %v156
  %v537 = vunpack.c.l.b16 %v157
  %v538 = vunpack.c.l.b16 %v158
  %v539 = vunpack.c.l.b16 %v159
  %v540 = vunpack.c.l.b16 %v160
  %v541 = vunpack.c.l.b16 %v161
  %v542 = vunpack.c.l.b16 %v162
  %v543 = vunpack.c.l.b16 %v163
  %v544 = vunpack.c.l.b16 %v164
  %v545 = vunpack.c.l.b16 %v165
  %v546 = vunpack.c.l.b16 %v166
  %v547 = vunpack.c.l.b16 %v167
  %v548 = vunpack.c.l.b16 %v168
  %v549 = vunpack.c.l.b16 %v169
  %v550 = vunpack.c.l.b16 %v170
  %v551 = vunpack.c.l.b16 %v171
  %v552 = vunpack.c.l.b16 %v172
  %v553 = vunpack.c.l.b16 %v173
  %v554 = vunpack.c.l.b16 %v174
  %v555 = vunpack.c.l.b16 %v175
  %v556 = vunpack.c.l.b16 %v176
  %v557 = vunpack.c.l.b16 %v177
  %v558 = vunpack.c.l.b16 %v178
  %v559 = vunpack.c.l.b16 %v179
  %v560 = vunpack.c.l.b16 %v180
  %v561 = vunpack.c.l.b16 %v181
  %v562 = vunpack.c.l.b16 %v182
  %v563 = vunpack.c.l.b16 %v183
  %v564 = vunpack.c.l.b16 %v184
  %v565 = vunpack.c.l.b16 %v185
  %v566 = vunpack.c.l.b16 %v186
  %v567 = vunpack.c.l.b16 %v187
  %v568 = vunpack.c.l.b16 %v188
  %v569 = vunpack.c.l.b16 %v189
  %v570 = vunpack.c.l.b16 %v190
  %v571 = vpack.c.b16 %v428, %v427
  %v572 = vpack.c.b16 %v430, %v429
  %v573 = vpack.c.b16 %v432, %v431
  %v574 = vpack.c.b16 %v434, %v433
  %v575 = vpack.c.b16 %v436, %v435
  %v576 = vpack.c.b16 %v438, %v437
  %v577 = vpack.c.b16 %v440, %v439
  %v578 = vpack.c.b16 %v442, %v441
  %v579 = vpack.c.b16 %v444, %v443
  %v580 = vpack.c.b16 %v446, %v445
  %v581 = vpack.c.b16 %v448, %v447
  %v582 = vpack.c.b16 %v450, %v449
  %v583 = vpack.c.b16 %v452, %v451
  %v584 = vpack.c.b16 %v454, %v453
  %v585 = vpack.c.b16 %v456, %v455
  %v586 = vpack.c.b16 %v458, %v457
  %v587 = vpack.c.b16 %v460, %v459
  %v588 = vpack.c.b16 %v462, %v461
  %v589 = vpack.c.b16 %v464, %v463
  %v590 = vpack.c.b16 %v466, %v465
  %v591 = vpack.c.b16 %v468, %v467
  %v592 = vpack.c.b16 %v470, %v469
  %v593 = vpack.c.b16 %v472, %v471
  %v594 = vpack.c.b16 %v474, %v473
  %v595 = vpack.c.b16 %v476, %v475
  %v596 = vpack.c.b16 %v478, %v477
  %v597 = vpack.c.b16 %v480, %v479
  %v598 = vpack.c.b16 %v482, %v481
  %v599 = vpack.c.b16 %v484, %v483
  %v600 = vpack.c.b16 %v486, %v485
  %v601 = vpack.c.b16 %v488, %v487
  %v602 = vpack.c.b16 %v490, %v489
  %v603 = vpack.c.b16 %v492, %v491
  %v604 = vpack.c.b16 %v494, %v493
  %v605 = vpack.c.b16 %v496, %v495
  %v606 = vpack.c.b16 %v498, %v497
  %v607 = vpack.c.b16 %v500, %v499
  %v608 = vpack.c.b16 %v502, %v501
  %v609 = vpack.c.b16 %v504, %v503
  %v610 = vpack.c.b16 %v506, %v505
  %v611 = vpack.c.b16 %v508, %v507
  %v612 = vpack.c.b16 %v510, %v509
  %v613 = vpack.c.b16 %v512, %v511
  %v614 = vpack.c.b16 %v514, %v513
  %v615 = vpack.c.b16 %v516, %v515
  %v616 = vpack.c.b16 %v518, %v517
  %v617 = vpack.c.b16 %v520, %v519
  %v618 = vpack.c.b16 %v522, %v521
  %v619 = vpack.c.b16 %v524, %v523
  %v620 = vpack.c.b16 %v526, %v525
  %v621 = vpack.c.b16 %v528, %v527
  %v622 = vpack.c.b16 %v530, %v529
  %v623 = vpack.c.b16 %v532, %v531
  %v624 = vpack.c.b16 %v534, %v533
  %v625 = vpack.c.b16 %v536, %v535
  %v626 = vpack.c.b16 %v538, %v537
  %v627 = vpack.c.b16 %v540, %v539
  %v628 = vpack.c.b16 %v542, %v541
  %v629 = vpack.c.b16 %v544, %v543
  %v630 = vpack.c.b16 %v546, %v545
  %v631 = vpack.c.b16 %v548, %v547
  %v632 = vpack.c.b16 %v550, %v549
  %v633 = vpack.c.b16 %v552, %v551
  %v634 = vpack.c.b16 %v554, %v553
  %v635 = vpack.c.b16 %v556, %v555
  %v636 = vpack.c.b16 %v558, %v557
  %v637 = vpack.c.b16 %v560, %v559
  %v638 = vpack.c.b16 %v562, %v561
  %v639 = vpack.c.b16 %v564, %v563
  %v640 = vpack.c.b16 %v566, %v565
  %v641 = vpack.c.b16 %v568, %v567
  %v642 = vpack.c.b16 %v570, %v569
  %715 = vmatprep.subr.bf16.mxu0 0
  %716 = vmatpush1.bf16.msra.mxu0 %v571
  %717 = vmatprep.subr.bf16.mxu0 0
  %718 = vmatpush1.bf16.msra.mxu0 %v572
  %719 = vmatprep.subr.bf16.mxu0 0
  %720 = vmatpush1.bf16.msra.mxu0 %v573
  %721 = vmatprep.subr.bf16.mxu0 0
  %722 = vmatpush1.bf16.msra.mxu0 %v574
  %723 = vmatprep.subr.bf16.mxu0 0
  %724 = vmatpush1.bf16.msra.mxu0 %v575
  %725 = vmatprep.subr.bf16.mxu0 0
  %726 = vmatpush1.bf16.msra.mxu0 %v576
  %727 = vmatprep.subr.bf16.mxu0 0
  %728 = vmatpush1.bf16.msra.mxu0 %v577
  %729 = vmatprep.subr.bf16.mxu0 0
  %730 = vmatpush1.bf16.msra.mxu0 %v578
  %731 = vmatprep.subr.bf16.mxu0 0
  %732 = vmatpush1.bf16.msra.mxu0 %v579
  %733 = vmatprep.subr.bf16.mxu0 0
  %734 = vmatpush1.bf16.msra.mxu0 %v580
  %735 = vmatprep.subr.bf16.mxu0 0
  %736 = vmatpush1.bf16.msra.mxu0 %v581
  %737 = vmatprep.subr.bf16.mxu0 0
  %738 = vmatpush1.bf16.msra.mxu0 %v582
  %739 = vmatprep.subr.bf16.mxu0 0
  %740 = vmatpush1.bf16.msra.mxu0 %v583
  %741 = vmatprep.subr.bf16.mxu0 0
  %742 = vmatpush1.bf16.msra.mxu0 %v584
  %743 = vmatprep.subr.bf16.mxu0 0
  %744 = vmatpush1.bf16.msra.mxu0 %v585
  %745 = vmatprep.subr.bf16.mxu0 0
  %746 = vmatpush1.bf16.msra.mxu0 %v586
  %747 = vmatprep.mubr.bf16.mxu0 %v248
  %748 = vmatmul.mubr.bf16.gmra.mrb[0].mxu0 %v247
  %v749 = vpop.f32.mrb[0].mxu0
  %v750 = vadd.f32 0.0, %v749
  %v751 = vpop.f32.mrb[0].mxu0
  %v752 = vpop.f32.mrb[0].mxu0
  %v753 = vadd.f32 0.0, %v752
  %v754 = vpop.f32.mrb[0].mxu0
  %755 = vmatprep.mubr.bf16.mxu0 %v257
  %756 = vmatmul.mubr.bf16.gmra.mrb[0].mxu0 %v256
  %v757 = vpop.f32.mrb[0].mxu0
  %v758 = vadd.f32 0.0, %v757
  %v759 = vpop.f32.mrb[0].mxu0
  %v760 = vpop.f32.mrb[0].mxu0
  %v761 = vadd.f32 0.0, %v760
  %v762 = vpop.f32.mrb[0].mxu0
  %763 = vdwg.mxu0
  %764 = vmatprep.subr.bf16.mxu0 0
  %765 = vmatpush1.bf16.msra.mxu0 %v587
  %766 = vmatprep.subr.bf16.mxu0 0
  %767 = vmatpush1.bf16.msra.mxu0 %v588
  %768 = vmatprep.subr.bf16.mxu0 0
  %769 = vmatpush1.bf16.msra.mxu0 %v589
  %770 = vmatprep.subr.bf16.mxu0 0
  %771 = vmatpush1.bf16.msra.mxu0 %v590
  %772 = vmatprep.subr.bf16.mxu0 0
  %773 = vmatpush1.bf16.msra.mxu0 %v591
  %774 = vmatprep.subr.bf16.mxu0 0
  %775 = vmatpush1.bf16.msra.mxu0 %v592
  %776 = vmatprep.subr.bf16.mxu0 0
  %777 = vmatpush1.bf16.msra.mxu0 %v593
  %778 = vmatprep.subr.bf16.mxu0 0
  %779 = vmatpush1.bf16.msra.mxu0 %v594
  %780 = vmatprep.subr.bf16.mxu0 0
  %781 = vmatpush1.bf16.msra.mxu0 %v595
  %782 = vmatprep.subr.bf16.mxu0 0
  %783 = vmatpush1.bf16.msra.mxu0 %v596
  %784 = vmatprep.subr.bf16.mxu0 0
  %785 = vmatpush1.bf16.msra.mxu0 %v597
  %786 = vmatprep.subr.bf16.mxu0 0
  %787 = vmatpush1.bf16.msra.mxu0 %v598
  %788 = vmatprep.subr.bf16.mxu0 0
  %789 = vmatpush1.bf16.msra.mxu0 %v599
  %790 = vmatprep.subr.bf16.mxu0 0
  %791 = vmatpush1.bf16.msra.mxu0 %v600
  %792 = vmatprep.subr.bf16.mxu0 0
  %793 = vmatpush1.bf16.msra.mxu0 %v601
  %794 = vmatprep.subr.bf16.mxu0 0
  %795 = vmatpush1.bf16.msra.mxu0 %v602
  %796 = vmatprep.mubr.bf16.mxu0 %v250
  %797 = vmatmul.mubr.bf16.gmra.mrb[0].mxu0 %v249
  %v798 = vpop.f32.mrb[0].mxu0
  %v799 = vadd.f32 %v750, %v798
  %v800 = vpop.f32.mrb[0].mxu0
  %v801 = vpop.f32.mrb[0].mxu0
  %v802 = vadd.f32 %v753, %v801
  %v803 = vpop.f32.mrb[0].mxu0
  %804 = vmatprep.mubr.bf16.mxu0 %v259
  %805 = vmatmul.mubr.bf16.gmra.mrb[0].mxu0 %v258
  %v806 = vpop.f32.mrb[0].mxu0
  %v807 = vadd.f32 %v758, %v806
  %v808 = vpop.f32.mrb[0].mxu0
  %v809 = vpop.f32.mrb[0].mxu0
  %v810 = vadd.f32 %v761, %v809
  %v811 = vpop.f32.mrb[0].mxu0
  %812 = vdwg.mxu0
  %813 = vmatprep.subr.bf16.mxu0 0
  %814 = vmatpush1.bf16.msra.mxu0 %v603
  %815 = vmatprep.subr.bf16.mxu0 0
  %816 = vmatpush1.bf16.msra.mxu0 %v604
  %817 = vmatprep.subr.bf16.mxu0 0
  %818 = vmatpush1.bf16.msra.mxu0 %v605
  %819 = vmatprep.subr.bf16.mxu0 0
  %820 = vmatpush1.bf16.msra.mxu0 %v606
  %821 = vmatprep.subr.bf16.mxu0 0
  %822 = vmatpush1.bf16.msra.mxu0 %v607
  %823 = vmatprep.subr.bf16.mxu0 0
  %824 = vmatpush1.bf16.msra.mxu0 %v608
  %825 = vmatprep.subr.bf16.mxu0 0
  %826 = vmatpush1.bf16.msra.mxu0 %v609
  %827 = vmatprep.subr.bf16.mxu0 0
  %828 = vmatpush1.bf16.msra.mxu0 %v610
  %829 = vmatprep.subr.bf16.mxu0 0
  %830 = vmatpush1.bf16.msra.mxu0 %v611
  %831 = vmatprep.subr.bf16.mxu0 0
  %832 = vmatpush1.bf16.msra.mxu0 %v612
  %833 = vmatprep.subr.bf16.mxu0 0
  %834 = vmatpush1.bf16.msra.mxu0 %v613
  %835 = vmatprep.subr.bf16.mxu0 0
  %836 = vmatpush1.bf16.msra.mxu0 %v614
  %837 = vmatprep.subr.bf16.mxu0 0
  %838 = vmatpush1.bf16.msra.mxu0 %v615
  %839 = vmatprep.subr.bf16.mxu0 0
  %840 = vmatpush1.bf16.msra.mxu0 %v616
  %841 = vmatprep.subr.bf16.mxu0 0
  %842 = vmatpush1.bf16.msra.mxu0 %v617
  %843 = vmatprep.subr.bf16.mxu0 0
  %844 = vmatpush1.bf16.msra.mxu0 %v618
  %845 = vmatprep.mubr.bf16.mxu0 %v252
  %846 = vmatmul.mubr.bf16.gmra.mrb[0].mxu0 %v251
  %v847 = vpop.f32.mrb[0].mxu0
  %v848 = vadd.f32 %v799, %v847
  %v849 = vpop.f32.mrb[0].mxu0
  %v850 = vpop.f32.mrb[0].mxu0
  %v851 = vadd.f32 %v802, %v850
  %v852 = vpop.f32.mrb[0].mxu0
  %853 = vmatprep.mubr.bf16.mxu0 %v261
  %854 = vmatmul.mubr.bf16.gmra.mrb[0].mxu0 %v260
  %v855 = vpop.f32.mrb[0].mxu0
  %v856 = vadd.f32 %v807, %v855
  %v857 = vpop.f32.mrb[0].mxu0
  %v858 = vpop.f32.mrb[0].mxu0
  %v859 = vadd.f32 %v810, %v858
  %v860 = vpop.f32.mrb[0].mxu0
  %861 = vdwg.mxu0
  %862 = vmatprep.subr.bf16.mxu0 0
  %863 = vmatpush1.bf16.msra.mxu0 %v619
  %864 = vmatprep.subr.bf16.mxu0 0
  %865 = vmatpush1.bf16.msra.mxu0 %v620
  %866 = vmatprep.subr.bf16.mxu0 0
  %867 = vmatpush1.bf16.msra.mxu0 %v621
  %868 = vmatprep.subr.bf16.mxu0 0
  %869 = vmatpush1.bf16.msra.mxu0 %v622
  %870 = vmatprep.subr.bf16.mxu0 0
  %871 = vmatpush1.bf16.msra.mxu0 %v623
  %872 = vmatprep.subr.bf16.mxu0 0
  %873 = vmatpush1.bf16.msra.mxu0 %v624
  %874 = vmatprep.subr.bf16.mxu0 0
  %875 = vmatpush1.bf16.msra.mxu0 %v625
  %876 = vmatprep.subr.bf16.mxu0 0
  %877 = vmatpush1.bf16.msra.mxu0 %v626
  %878 = vmatprep.subr.bf16.mxu0 0
  %879 = vmatpush1.bf16.msra.mxu0 %v627
  %880 = vmatprep.subr.bf16.mxu0 0
  %881 = vmatpush1.bf16.msra.mxu0 %v628
  %882 = vmatprep.subr.bf16.mxu0 0
  %883 = vmatpush1.bf16.msra.mxu0 %v629
  %884 = vmatprep.subr.bf16.mxu0 0
  %885 = vmatpush1.bf16.msra.mxu0 %v630
  %886 = vmatprep.subr.bf16.mxu0 0
  %887 = vmatpush1.bf16.msra.mxu0 %v631
  %888 = vmatprep.subr.bf16.mxu0 0
  %889 = vmatpush1.bf16.msra.mxu0 %v632
  %890 = vmatprep.subr.bf16.mxu0 0
  %891 = vmatpush1.bf16.msra.mxu0 %v633
  %892 = vmatprep.subr.bf16.mxu0 0
  %893 = vmatpush1.bf16.msra.mxu0 %v634
  %894 = vmatprep.mubr.bf16.mxu0 %v254
  %895 = vmatmul.mubr.bf16.gmra.mrb[0].mxu0 %v253
  %v896 = vpop.f32.mrb[0].mxu0
  %v897 = vadd.f32 %v848, %v896
  %v898 = vpop.f32.mrb[0].mxu0
  %v899 = vpop.f32.mrb[0].mxu0
  %v900 = vadd.f32 %v851, %v899
  %v901 = vpop.f32.mrb[0].mxu0
  %902 = vmatprep.mubr.bf16.mxu0 %v263
  %903 = vmatmul.mubr.bf16.gmra.mrb[0].mxu0 %v262
  %v904 = vpop.f32.mrb[0].mxu0
  %v905 = vadd.f32 %v856, %v904
  %v906 = vpop.f32.mrb[0].mxu0
  %v907 = vpop.f32.mrb[0].mxu0
  %v908 = vadd.f32 %v859, %v907
  %v909 = vpop.f32.mrb[0].mxu0
  %910 = vdwg.mxu0
  %911 = vmatprep.subr.bf16.mxu0 0
  %912 = vmatpush1.bf16.msra.mxu0 %v635
  %913 = vmatprep.subr.bf16.mxu0 0
  %914 = vmatpush1.bf16.msra.mxu0 %v636
  %915 = vmatprep.subr.bf16.mxu0 0
  %916 = vmatpush1.bf16.msra.mxu0 %v637
  %917 = vmatprep.subr.bf16.mxu0 0
  %918 = vmatpush1.bf16.msra.mxu0 %v638
  %919 = vmatprep.subr.bf16.mxu0 0
  %920 = vmatpush1.bf16.msra.mxu0 %v639
  %921 = vmatprep.subr.bf16.mxu0 0
  %922 = vmatpush1.bf16.msra.mxu0 %v640
  %923 = vmatprep.subr.bf16.mxu0 0
  %924 = vmatpush1.bf16.msra.mxu0 %v641
  %925 = vmatprep.subr.bf16.mxu0 0
  %926 = vmatpush1.bf16.msra.mxu0 %v642
  %927 = vmatprep.subr.bf16.mxu0 0
  %928 = vmatpush1.bf16.msra.mxu0 0
  %929 = vmatprep.subr.bf16.mxu0 0
  %930 = vmatpush1.bf16.msra.mxu0 0
  %931 = vmatprep.subr.bf16.mxu0 0
  %932 = vmatpush1.bf16.msra.mxu0 0
  %933 = vmatprep.subr.bf16.mxu0 0
  %934 = vmatpush1.bf16.msra.mxu0 0
  %935 = vmatprep.subr.bf16.mxu0 0
  %936 = vmatpush1.bf16.msra.mxu0 0
  %937 = vmatprep.subr.bf16.mxu0 0
  %938 = vmatpush1.bf16.msra.mxu0 0
  %939 = vmatprep.subr.bf16.mxu0 0
  %940 = vmatpush1.bf16.msra.mxu0 0
  %941 = vmatprep.subr.bf16.mxu0 0
  %942 = vmatpush1.bf16.msra.mxu0 0
  %943 = vmatprep.mubr.bf16.mxu0 0
  %944 = vmatmul.mubr.bf16.gmra.mrb[0].mxu0 %v255
  %v945 = vpop.f32.mrb[0].mxu0
  %v946 = vadd.f32 %v897, %v945
  %v947 = vpop.f32.mrb[0].mxu0
  %v948 = vpop.f32.mrb[0].mxu0
  %v949 = vadd.f32 %v900, %v948
  %v950 = vpop.f32.mrb[0].mxu0
  %951 = vmatprep.mubr.bf16.mxu0 0
  %952 = vmatmul.mubr.bf16.gmra.mrb[0].mxu0 %v264
  %v953 = vpop.f32.mrb[0].mxu0
  %v954 = vadd.f32 %v905, %v953
  %v955 = vpop.f32.mrb[0].mxu0
  %v956 = vpop.f32.mrb[0].mxu0
  %v957 = vadd.f32 %v908, %v956
  %v958 = vpop.f32.mrb[0].mxu0
  %959 = vdwg.mxu0
  %v960 = vadd.f32 %v23, %v946
  %v961 = vadd.f32 %v24, %v949
  %v962 = vadd.f32 %v25, %v954
  %v963 = vadd.f32 %v26, %v957
  %964 = vst [vmem:[%s3] sm:$0xff] %v960
  %965 = vst [vmem:[%s3 + $0x8] sm:$0xff] %v961
  %966 = vst [vmem:[%s3 + $0x10] sm:$0xff] %v962
  %967 = vst [vmem:[%s3 + $0x18] sm:$0xff] %v963
  // Predicated region
  $region18: #{backbone_forward.16} parent=0 // pred_check
    %p968 = pneg %p15
  $region19: #{backbone_forward.16} parent=0 // pred_check_branch
    %970 = sbr.rel (%p968) target = $region21
  $region20: #{backbone_forward.16} parent=0 // pred_region
    %v971 = vld [vmem:[%s3] sm:$0xff]
    %v972 = vld [vmem:[%s3 + $0x8] sm:$0xff]
    %v973 = vld [vmem:[%s3 + $0x10] sm:$0xff]
    %v974 = vld [vmem:[%s3 + $0x18] sm:$0xff]
    %v975 = vld [vmem:[%s2] sm:$0x1]
    %v977 = vlaneseq
    %v978 = vshrl.u32 %v977, 7
    %v979 = vsub.s32 0, %v978
    %v980 = vrot.slane %v975, %v979
    %v982 = vadd.f32 %v971, %v980
    %v983 = vadd.f32 %v972, %v980
    %v984 = vadd.f32 %v973, %v980
    %v985 = vadd.f32 %v974, %v980
    %v986 = vmax.f32 %v982, 0.0
    %v987 = vmax.f32 %v983, 0.0
    %v988 = vmax.f32 %v984, 0.0
    %v989 = vmax.f32 %v985, 0.0
    %990 = vst [vmem:[%s3] sm:$0xff] %v986
    %991 = vst [vmem:[%s3 + $0x8] sm:$0xff] %v987
    %992 = vst [vmem:[%s3 + $0x10] sm:$0xff] %v988
    %993 = vst [vmem:[%s3 + $0x18] sm:$0xff] %v989
  $region21: #{backbone_forward.16} parent=0 // pred_fallthru
    _
  // Predicated region
  $region22: #{backbone_forward.16} parent=0 // pred_check
    _
  $region23: #{backbone_forward.16} parent=0 // pred_check_branch
    %995 = sbr.rel (0) target = $region25
  $region24: #{backbone_forward.16} parent=0 // pred_region
    _
  $region25: #{backbone_forward.16} parent=0 // pred_fallthru
    _
  // Predicated region
  $region26: #{backbone_forward.16} parent=0 // pred_check
    _
  $region27: #{backbone_forward.16} parent=0 // pred_check_branch
    %997 = sbr.rel (0) target = $region29
  $region28: #{backbone_forward.16} parent=0 // pred_region
    _
  $region29: #{backbone_forward.16} parent=0 // pred_fallthru
    _

// kernel: backbone_forward.18
$region0: #{backbone_forward.18}
  #allocation0 [shape = 'u32[]', space=smem, size = 0x4, offset = 0x4, fixed_abs, tag = 'smem constant byte address 0x4 - core index']
  #allocation1 [shape = 'u32[144,128]{1,0:T(1,128)}', space=vmem, size = 0x12000, scoped, tag = 'internal scratch']
  %s0 = inlined_call_operand.vmem [shape: bf16[8,1152], index: 0, kind: input, shape index: {}]
  %s1 = inlined_call_operand.vmem [shape: bf16[1152,256], index: 1, kind: input, shape index: {}]
  %s2 = inlined_call_operand.vmem [shape: f32[1,256], index: 2, kind: input, shape index: {}]
  %s3 = inlined_call_operand.vmem [shape: f32[8,256], index: 3, kind: output, shape index: {}]
  %s4 = sld [smem:[#allocation0]]
  $region30: #{backbone_forward.18} parent=0
    _
  %s6 = ssub.s32 1, %s4
  %s7 = scalar_select 0, %s6, %s4
  // Predicated region
  $region2: #{backbone_forward.18} parent=0 // pred_check
    _
  $region3: #{backbone_forward.18} parent=0 // pred_check_branch
    %9 = sbr.rel (0) target = $region5
  $region4: #{backbone_forward.18} parent=0 // pred_region
    _
  $region5: #{backbone_forward.18} parent=0 // pred_fallthru
    _
  // Predicated region
  $region6: #{backbone_forward.18} parent=0 // pred_check
    _
  $region7: #{backbone_forward.18} parent=0 // pred_check_branch
    %11 = sbr.rel (0) target = $region9
  $region8: #{backbone_forward.18} parent=0 // pred_region
    _
  $region9: #{backbone_forward.18} parent=0 // pred_fallthru
    _
  // Predicated region
  $region10: #{backbone_forward.18} parent=0 // pred_check
    _
  $region11: #{backbone_forward.18} parent=0 // pred_check_branch
    %13 = sbr.rel (0) target = $region13
  $region12: #{backbone_forward.18} parent=0 // pred_region
    _
  $region13: #{backbone_forward.18} parent=0 // pred_fallthru
    _
  %p15 = scmp.eq.s32.totalorder 0, 0
  // Predicated region
  $region14: #{backbone_forward.18} parent=0 // pred_check
    %p16 = pneg %p15
  $region15: #{backbone_forward.18} parent=0 // pred_check_branch
    %18 = sbr.rel (%p16) target = $region17
  $region16: #{backbone_forward.18} parent=0 // pred_region
    %19 = vst [vmem:[%s3] sm:$0xff] 0.0
    %20 = vst [vmem:[%s3 + $0x8] sm:$0xff] 0.0
  $region17: #{backbone_forward.18} parent=0 // pred_fallthru
    _
  %v21 = vld [vmem:[%s3] sm:$0xff]
  %v22 = vld [vmem:[%s3 + $0x8] sm:$0xff]
  %v23 = vld [vmem:[%s0] sm:$0xff]
  %v24 = vld [vmem:[%s0 + $0x8] sm:$0xff]
  %v25 = vld [vmem:[%s0 + $0x10] sm:$0xff]
  %v26 = vld [vmem:[%s0 + $0x18] sm:$0xff]
  %v27 = vld [vmem:[%s0 + $0x20] sm:$0xf]
  %v28 = vld [vmem:[%s1] sm:$0xff]
  %v29 = vld [vmem:[%s1 + $0x8] sm:$0xff]
  %v30 = vld [vmem:[%s1 + $0x10] sm:$0xff]
  %v31 = vld [vmem:[%s1 + $0x18] sm:$0xff]
  %v32 = vld [vmem:[%s1 + $0x20] sm:$0xff]
  %v33 = vld [vmem:[%s1 + $0x28] sm:$0xff]
  %v34 = vld [vmem:[%s1 + $0x30] sm:$0xff]
  %v35 = vld [vmem:[%s1 + $0x38] sm:$0xff]
  %v36 = vld [vmem:[%s1 + $0x40] sm:$0xff]
  %v37 = vld [vmem:[%s1 + $0x48] sm:$0xff]
  %v38 = vld [vmem:[%s1 + $0x50] sm:$0xff]
  %v39 = vld [vmem:[%s1 + $0x58] sm:$0xff]
  %v40 = vld [vmem:[%s1 + $0x60] sm:$0xff]
  %v41 = vld [vmem:[%s1 + $0x68] sm:$0xff]
  %v42 = vld [vmem:[%s1 + $0x70] sm:$0xff]
  %v43 = vld [vmem:[%s1 + $0x78] sm:$0xff]
  %v44 = vld [vmem:[%s1 + $0x80] sm:$0xff]
  %v45 = vld [vmem:[%s1 + $0x88] sm:$0xff]
  %v46 = vld [vmem:[%s1 + $0x90] sm:$0xff]
  %v47 = vld [vmem:[%s1 + $0x98] sm:$0xff]
  %v48 = vld [vmem:[%s1 + $0xa0] sm:$0xff]
  %v49 = vld [vmem:[%s1 + $0xa8] sm:$0xff]
  %v50 = vld [vmem:[%s1 + $0xb0] sm:$0xff]
  %v51 = vld [vmem:[%s1 + $0xb8] sm:$0xff]
  %v52 = vld [vmem:[%s1 + $0xc0] sm:$0xff]
  %v53 = vld [vmem:[%s1 + $0xc8] sm:$0xff]
  %v54 = vld [vmem:[%s1 + $0xd0] sm:$0xff]
  %v55 = vld [vmem:[%s1 + $0xd8] sm:$0xff]
  %v56 = vld [vmem:[%s1 + $0xe0] sm:$0xff]
  %v57 = vld [vmem:[%s1 + $0xe8] sm:$0xff]
  %v58 = vld [vmem:[%s1 + $0xf0] sm:$0xff]
  %v59 = vld [vmem:[%s1 + $0xf8] sm:$0xff]
  %v60 = vld [vmem:[%s1 + $0x100] sm:$0xff]
  %v61 = vld [vmem:[%s1 + $0x108] sm:$0xff]
  %v62 = vld [vmem:[%s1 + $0x110] sm:$0xff]
  %v63 = vld [vmem:[%s1 + $0x118] sm:$0xff]
  %v64 = vld [vmem:[%s1 + $0x120] sm:$0xff]
  %v65 = vld [vmem:[%s1 + $0x128] sm:$0xff]
  %v66 = vld [vmem:[%s1 + $0x130] sm:$0xff]
  %v67 = vld [vmem:[%s1 + $0x138] sm:$0xff]
  %v68 = vld [vmem:[%s1 + $0x140] sm:$0xff]
  %v69 = vld [vmem:[%s1 + $0x148] sm:$0xff]
  %v70 = vld [vmem:[%s1 + $0x150] sm:$0xff]
  %v71 = vld [vmem:[%s1 + $0x158] sm:$0xff]
  %v72 = vld [vmem:[%s1 + $0x160] sm:$0xff]
  %v73 = vld [vmem:[%s1 + $0x168] sm:$0xff]
  %v74 = vld [vmem:[%s1 + $0x170] sm:$0xff]
  %v75 = vld [vmem:[%s1 + $0x178] sm:$0xff]
  %v76 = vld [vmem:[%s1 + $0x180] sm:$0xff]
  %v77 = vld [vmem:[%s1 + $0x188] sm:$0xff]
  %v78 = vld [vmem:[%s1 + $0x190] sm:$0xff]
  %v79 = vld [vmem:[%s1 + $0x198] sm:$0xff]
  %v80 = vld [vmem:[%s1 + $0x1a0] sm:$0xff]
  %v81 = vld [vmem:[%s1 + $0x1a8] sm:$0xff]
  %v82 = vld [vmem:[%s1 + $0x1b0] sm:$0xff]
  %v83 = vld [vmem:[%s1 + $0x1b8] sm:$0xff]
  %v84 = vld [vmem:[%s1 + $0x1c0] sm:$0xff]
  %v85 = vld [vmem:[%s1 + $0x1c8] sm:$0xff]
  %v86 = vld [vmem:[%s1 + $0x1d0] sm:$0xff]
  %v87 = vld [vmem:[%s1 + $0x1d8] sm:$0xff]
  %v88 = vld [vmem:[%s1 + $0x1e0] sm:$0xff]
  %v89 = vld [vmem:[%s1 + $0x1e8] sm:$0xff]
  %v90 = vld [vmem:[%s1 + $0x1f0] sm:$0xff]
  %v91 = vld [vmem:[%s1 + $0x1f8] sm:$0xff]
  %v92 = vld [vmem:[%s1 + $0x200] sm:$0xff]
  %v93 = vld [vmem:[%s1 + $0x208] sm:$0xff]
  %v94 = vld [vmem:[%s1 + $0x210] sm:$0xff]
  %v95 = vld [vmem:[%s1 + $0x218] sm:$0xff]
  %v96 = vld [vmem:[%s1 + $0x220] sm:$0xff]
  %v97 = vld [vmem:[%s1 + $0x228] sm:$0xff]
  %v98 = vld [vmem:[%s1 + $0x230] sm:$0xff]
  %v99 = vld [vmem:[%s1 + $0x238] sm:$0xff]
  %v100 = vld [vmem:[%s1 + $0x240] sm:$0xff]
  %v101 = vld [vmem:[%s1 + $0x248] sm:$0xff]
  %v102 = vld [vmem:[%s1 + $0x250] sm:$0xff]
  %v103 = vld [vmem:[%s1 + $0x258] sm:$0xff]
  %v104 = vld [vmem:[%s1 + $0x260] sm:$0xff]
  %v105 = vld [vmem:[%s1 + $0x268] sm:$0xff]
  %v106 = vld [vmem:[%s1 + $0x270] sm:$0xff]
  %v107 = vld [vmem:[%s1 + $0x278] sm:$0xff]
  %v108 = vld [vmem:[%s1 + $0x280] sm:$0xff]
  %v109 = vld [vmem:[%s1 + $0x288] sm:$0xff]
  %v110 = vld [vmem:[%s1 + $0x290] sm:$0xff]
  %v111 = vld [vmem:[%s1 + $0x298] sm:$0xff]
  %v112 = vld [vmem:[%s1 + $0x2a0] sm:$0xff]
  %v113 = vld [vmem:[%s1 + $0x2a8] sm:$0xff]
  %v114 = vld [vmem:[%s1 + $0x2b0] sm:$0xff]
  %v115 = vld [vmem:[%s1 + $0x2b8] sm:$0xff]
  %v116 = vld [vmem:[%s1 + $0x2c0] sm:$0xff]
  %v117 = vld [vmem:[%s1 + $0x2c8] sm:$0xff]
  %v118 = vld [vmem:[%s1 + $0x2d0] sm:$0xff]
  %v119 = vld [vmem:[%s1 + $0x2d8] sm:$0xff]
  %v120 = vld [vmem:[%s1 + $0x2e0] sm:$0xff]
  %v121 = vld [vmem:[%s1 + $0x2e8] sm:$0xff]
  %v122 = vld [vmem:[%s1 + $0x2f0] sm:$0xff]
  %v123 = vld [vmem:[%s1 + $0x2f8] sm:$0xff]
  %v124 = vld [vmem:[%s1 + $0x300] sm:$0xff]
  %v125 = vld [vmem:[%s1 + $0x308] sm:$0xff]
  %v126 = vld [vmem:[%s1 + $0x310] sm:$0xff]
  %v127 = vld [vmem:[%s1 + $0x318] sm:$0xff]
  %v128 = vld [vmem:[%s1 + $0x320] sm:$0xff]
  %v129 = vld [vmem:[%s1 + $0x328] sm:$0xff]
  %v130 = vld [vmem:[%s1 + $0x330] sm:$0xff]
  %v131 = vld [vmem:[%s1 + $0x338] sm:$0xff]
  %v132 = vld [vmem:[%s1 + $0x340] sm:$0xff]
  %v133 = vld [vmem:[%s1 + $0x348] sm:$0xff]
  %v134 = vld [vmem:[%s1 + $0x350] sm:$0xff]
  %v135 = vld [vmem:[%s1 + $0x358] sm:$0xff]
  %v136 = vld [vmem:[%s1 + $0x360] sm:$0xff]
  %v137 = vld [vmem:[%s1 + $0x368] sm:$0xff]
  %v138 = vld [vmem:[%s1 + $0x370] sm:$0xff]
  %v139 = vld [vmem:[%s1 + $0x378] sm:$0xff]
  %v140 = vld [vmem:[%s1 + $0x380] sm:$0xff]
  %v141 = vld [vmem:[%s1 + $0x388] sm:$0xff]
  %v142 = vld [vmem:[%s1 + $0x390] sm:$0xff]
  %v143 = vld [vmem:[%s1 + $0x398] sm:$0xff]
  %v144 = vld [vmem:[%s1 + $0x3a0] sm:$0xff]
  %v145 = vld [vmem:[%s1 + $0x3a8] sm:$0xff]
  %v146 = vld [vmem:[%s1 + $0x3b0] sm:$0xff]
  %v147 = vld [vmem:[%s1 + $0x3b8] sm:$0xff]
  %v148 = vld [vmem:[%s1 + $0x3c0] sm:$0xff]
  %v149 = vld [vmem:[%s1 + $0x3c8] sm:$0xff]
  %v150 = vld [vmem:[%s1 + $0x3d0] sm:$0xff]
  %v151 = vld [vmem:[%s1 + $0x3d8] sm:$0xff]
  %v152 = vld [vmem:[%s1 + $0x3e0] sm:$0xff]
  %v153 = vld [vmem:[%s1 + $0x3e8] sm:$0xff]
  %v154 = vld [vmem:[%s1 + $0x3f0] sm:$0xff]
  %v155 = vld [vmem:[%s1 + $0x3f8] sm:$0xff]
  %v156 = vld [vmem:[%s1 + $0x400] sm:$0xff]
  %v157 = vld [vmem:[%s1 + $0x408] sm:$0xff]
  %v158 = vld [vmem:[%s1 + $0x410] sm:$0xff]
  %v159 = vld [vmem:[%s1 + $0x418] sm:$0xff]
  %v160 = vld [vmem:[%s1 + $0x420] sm:$0xff]
  %v161 = vld [vmem:[%s1 + $0x428] sm:$0xff]
  %v162 = vld [vmem:[%s1 + $0x430] sm:$0xff]
  %v163 = vld [vmem:[%s1 + $0x438] sm:$0xff]
  %v164 = vld [vmem:[%s1 + $0x440] sm:$0xff]
  %v165 = vld [vmem:[%s1 + $0x448] sm:$0xff]
  %v166 = vld [vmem:[%s1 + $0x450] sm:$0xff]
  %v167 = vld [vmem:[%s1 + $0x458] sm:$0xff]
  %v168 = vld [vmem:[%s1 + $0x460] sm:$0xff]
  %v169 = vld [vmem:[%s1 + $0x468] sm:$0xff]
  %v170 = vld [vmem:[%s1 + $0x470] sm:$0xff]
  %v171 = vld [vmem:[%s1 + $0x478] sm:$0xff]
  %v177 = vunpack.c.l.b16 %v23
  %v178 = vunpack.c.h.b16 %v23
  %v179 = vunpack.c.l.b16 %v24
  %v180 = vunpack.c.h.b16 %v24
  %v181 = vunpack.c.l.b16 %v25
  %v182 = vunpack.c.h.b16 %v25
  %v183 = vunpack.c.l.b16 %v26
  %v184 = vunpack.c.h.b16 %v26
  %v185 = vunpack.c.l.b16 %v27
  %v186 = vpack.c.b16 %v177, %v177
  %v187 = vpack.c.b16 %v178, %v178
  %v188 = vpack.c.b16 %v179, %v179
  %v189 = vpack.c.b16 %v180, %v180
  %v190 = vpack.c.b16 %v181, %v181
  %v191 = vpack.c.b16 %v182, %v182
  %v192 = vpack.c.b16 %v183, %v183
  %v193 = vpack.c.b16 %v184, %v184
  %v194 = vpack.c.b16 %v185, %v185
  %v348 = vunpack.c.l.b16 %v28
  %v349 = vunpack.c.h.b16 %v28
  %v350 = vunpack.c.l.b16 %v29
  %v351 = vunpack.c.h.b16 %v29
  %v352 = vunpack.c.l.b16 %v30
  %v353 = vunpack.c.h.b16 %v30
  %v354 = vunpack.c.l.b16 %v31
  %v355 = vunpack.c.h.b16 %v31
  %v356 = vunpack.c.l.b16 %v32
  %v357 = vunpack.c.h.b16 %v32
  %v358 = vunpack.c.l.b16 %v33
  %v359 = vunpack.c.h.b16 %v33
  %v360 = vunpack.c.l.b16 %v34
  %v361 = vunpack.c.h.b16 %v34
  %v362 = vunpack.c.l.b16 %v35
  %v363 = vunpack.c.h.b16 %v35
  %v364 = vunpack.c.l.b16 %v36
  %v365 = vunpack.c.h.b16 %v36
  %v366 = vunpack.c.l.b16 %v37
  %v367 = vunpack.c.h.b16 %v37
  %v368 = vunpack.c.l.b16 %v38
  %v369 = vunpack.c.h.b16 %v38
  %v370 = vunpack.c.l.b16 %v39
  %v371 = vunpack.c.h.b16 %v39
  %v372 = vunpack.c.l.b16 %v40
  %v373 = vunpack.c.h.b16 %v40
  %v374 = vunpack.c.l.b16 %v41
  %v375 = vunpack.c.h.b16 %v41
  %v376 = vunpack.c.l.b16 %v42
  %v377 = vunpack.c.h.b16 %v42
  %v378 = vunpack.c.l.b16 %v43
  %v379 = vunpack.c.h.b16 %v43
  %v380 = vunpack.c.l.b16 %v44
  %v381 = vunpack.c.h.b16 %v44
  %v382 = vunpack.c.l.b16 %v45
  %v383 = vunpack.c.h.b16 %v45
  %v384 = vunpack.c.l.b16 %v46
  %v385 = vunpack.c.h.b16 %v46
  %v386 = vunpack.c.l.b16 %v47
  %v387 = vunpack.c.h.b16 %v47
  %v388 = vunpack.c.l.b16 %v48
  %v389 = vunpack.c.h.b16 %v48
  %v390 = vunpack.c.l.b16 %v49
  %v391 = vunpack.c.h.b16 %v49
  %v392 = vunpack.c.l.b16 %v50
  %v393 = vunpack.c.h.b16 %v50
  %v394 = vunpack.c.l.b16 %v51
  %v395 = vunpack.c.h.b16 %v51
  %v396 = vunpack.c.l.b16 %v52
  %v397 = vunpack.c.h.b16 %v52
  %v398 = vunpack.c.l.b16 %v53
  %v399 = vunpack.c.h.b16 %v53
  %v400 = vunpack.c.l.b16 %v54
  %v401 = vunpack.c.h.b16 %v54
  %v402 = vunpack.c.l.b16 %v55
  %v403 = vunpack.c.h.b16 %v55
  %v404 = vunpack.c.l.b16 %v56
  %v405 = vunpack.c.h.b16 %v56
  %v406 = vunpack.c.l.b16 %v57
  %v407 = vunpack.c.h.b16 %v57
  %v408 = vunpack.c.l.b16 %v58
  %v409 = vunpack.c.h.b16 %v58
  %v410 = vunpack.c.l.b16 %v59
  %v411 = vunpack.c.h.b16 %v59
  %v412 = vunpack.c.l.b16 %v60
  %v413 = vunpack.c.h.b16 %v60
  %v414 = vunpack.c.l.b16 %v61
  %v415 = vunpack.c.h.b16 %v61
  %v416 = vunpack.c.l.b16 %v62
  %v417 = vunpack.c.h.b16 %v62
  %v418 = vunpack.c.l.b16 %v63
  %v419 = vunpack.c.h.b16 %v63
  %v420 = vunpack.c.l.b16 %v64
  %v421 = vunpack.c.h.b16 %v64
  %v422 = vunpack.c.l.b16 %v65
  %v423 = vunpack.c.h.b16 %v65
  %v424 = vunpack.c.l.b16 %v66
  %v425 = vunpack.c.h.b16 %v66
  %v426 = vunpack.c.l.b16 %v67
  %v427 = vunpack.c.h.b16 %v67
  %v428 = vunpack.c.l.b16 %v68
  %v429 = vunpack.c.h.b16 %v68
  %v430 = vunpack.c.l.b16 %v69
  %v431 = vunpack.c.h.b16 %v69
  %v432 = vunpack.c.l.b16 %v70
  %v433 = vunpack.c.h.b16 %v70
  %v434 = vunpack.c.l.b16 %v71
  %v435 = vunpack.c.h.b16 %v71
  %v436 = vunpack.c.l.b16 %v72
  %v437 = vunpack.c.h.b16 %v72
  %v438 = vunpack.c.l.b16 %v73
  %v439 = vunpack.c.h.b16 %v73
  %v440 = vunpack.c.l.b16 %v74
  %v441 = vunpack.c.h.b16 %v74
  %v442 = vunpack.c.l.b16 %v75
  %v443 = vunpack.c.h.b16 %v75
  %v444 = vunpack.c.l.b16 %v76
  %v445 = vunpack.c.h.b16 %v76
  %v446 = vunpack.c.l.b16 %v77
  %v447 = vunpack.c.h.b16 %v77
  %v448 = vunpack.c.l.b16 %v78
  %v449 = vunpack.c.h.b16 %v78
  %v450 = vunpack.c.l.b16 %v79
  %v451 = vunpack.c.h.b16 %v79
  %v452 = vunpack.c.l.b16 %v80
  %v453 = vunpack.c.h.b16 %v80
  %v454 = vunpack.c.l.b16 %v81
  %v455 = vunpack.c.h.b16 %v81
  %v456 = vunpack.c.l.b16 %v82
  %v457 = vunpack.c.h.b16 %v82
  %v458 = vunpack.c.l.b16 %v83
  %v459 = vunpack.c.h.b16 %v83
  %v460 = vunpack.c.l.b16 %v84
  %v461 = vunpack.c.h.b16 %v84
  %v462 = vunpack.c.l.b16 %v85
  %v463 = vunpack.c.h.b16 %v85
  %v464 = vunpack.c.l.b16 %v86
  %v465 = vunpack.c.h.b16 %v86
  %v466 = vunpack.c.l.b16 %v87
  %v467 = vunpack.c.h.b16 %v87
  %v468 = vunpack.c.l.b16 %v88
  %v469 = vunpack.c.h.b16 %v88
  %v470 = vunpack.c.l.b16 %v89
  %v471 = vunpack.c.h.b16 %v89
  %v472 = vunpack.c.l.b16 %v90
  %v473 = vunpack.c.h.b16 %v90
  %v474 = vunpack.c.l.b16 %v91
  %v475 = vunpack.c.h.b16 %v91
  %v476 = vunpack.c.l.b16 %v92
  %v477 = vunpack.c.h.b16 %v92
  %v478 = vunpack.c.l.b16 %v93
  %v479 = vunpack.c.h.b16 %v93
  %v480 = vunpack.c.l.b16 %v94
  %v481 = vunpack.c.h.b16 %v94
  %v482 = vunpack.c.l.b16 %v95
  %v483 = vunpack.c.h.b16 %v95
  %v484 = vunpack.c.l.b16 %v96
  %v485 = vunpack.c.h.b16 %v96
  %v486 = vunpack.c.l.b16 %v97
  %v487 = vunpack.c.h.b16 %v97
  %v488 = vunpack.c.l.b16 %v98
  %v489 = vunpack.c.h.b16 %v98
  %v490 = vunpack.c.l.b16 %v99
  %v491 = vunpack.c.h.b16 %v99
  %v492 = vunpack.c.l.b16 %v100
  %v493 = vunpack.c.h.b16 %v100
  %v494 = vunpack.c.l.b16 %v101
  %v495 = vunpack.c.h.b16 %v101
  %v496 = vunpack.c.l.b16 %v102
  %v497 = vunpack.c.h.b16 %v102
  %v498 = vunpack.c.l.b16 %v103
  %v499 = vunpack.c.h.b16 %v103
  %v500 = vunpack.c.l.b16 %v104
  %v501 = vunpack.c.h.b16 %v104
  %v502 = vunpack.c.l.b16 %v105
  %v503 = vunpack.c.h.b16 %v105
  %v504 = vunpack.c.l.b16 %v106
  %v505 = vunpack.c.h.b16 %v106
  %v506 = vunpack.c.l.b16 %v107
  %v507 = vunpack.c.h.b16 %v107
  %v508 = vunpack.c.l.b16 %v108
  %v509 = vunpack.c.h.b16 %v108
  %v510 = vunpack.c.l.b16 %v109
  %v511 = vunpack.c.h.b16 %v109
  %v512 = vunpack.c.l.b16 %v110
  %v513 = vunpack.c.h.b16 %v110
  %v514 = vunpack.c.l.b16 %v111
  %v515 = vunpack.c.h.b16 %v111
  %v516 = vunpack.c.l.b16 %v112
  %v517 = vunpack.c.h.b16 %v112
  %v518 = vunpack.c.l.b16 %v113
  %v519 = vunpack.c.h.b16 %v113
  %v520 = vunpack.c.l.b16 %v114
  %v521 = vunpack.c.h.b16 %v114
  %v522 = vunpack.c.l.b16 %v115
  %v523 = vunpack.c.h.b16 %v115
  %v524 = vunpack.c.l.b16 %v116
  %v525 = vunpack.c.h.b16 %v116
  %v526 = vunpack.c.l.b16 %v117
  %v527 = vunpack.c.h.b16 %v117
  %v528 = vunpack.c.l.b16 %v118
  %v529 = vunpack.c.h.b16 %v118
  %v530 = vunpack.c.l.b16 %v119
  %v531 = vunpack.c.h.b16 %v119
  %v532 = vunpack.c.l.b16 %v120
  %v533 = vunpack.c.h.b16 %v120
  %v534 = vunpack.c.l.b16 %v121
  %v535 = vunpack.c.h.b16 %v121
  %v536 = vunpack.c.l.b16 %v122
  %v537 = vunpack.c.h.b16 %v122
  %v538 = vunpack.c.l.b16 %v123
  %v539 = vunpack.c.h.b16 %v123
  %v540 = vunpack.c.l.b16 %v124
  %v541 = vunpack.c.h.b16 %v124
  %v542 = vunpack.c.l.b16 %v125
  %v543 = vunpack.c.h.b16 %v125
  %v544 = vunpack.c.l.b16 %v126
  %v545 = vunpack.c.h.b16 %v126
  %v546 = vunpack.c.l.b16 %v127
  %v547 = vunpack.c.h.b16 %v127
  %v548 = vunpack.c.l.b16 %v128
  %v549 = vunpack.c.h.b16 %v128
  %v550 = vunpack.c.l.b16 %v129
  %v551 = vunpack.c.h.b16 %v129
  %v552 = vunpack.c.l.b16 %v130
  %v553 = vunpack.c.h.b16 %v130
  %v554 = vunpack.c.l.b16 %v131
  %v555 = vunpack.c.h.b16 %v131
  %v556 = vunpack.c.l.b16 %v132
  %v557 = vunpack.c.h.b16 %v132
  %v558 = vunpack.c.l.b16 %v133
  %v559 = vunpack.c.h.b16 %v133
  %v560 = vunpack.c.l.b16 %v134
  %v561 = vunpack.c.h.b16 %v134
  %v562 = vunpack.c.l.b16 %v135
  %v563 = vunpack.c.h.b16 %v135
  %v564 = vunpack.c.l.b16 %v136
  %v565 = vunpack.c.h.b16 %v136
  %v566 = vunpack.c.l.b16 %v137
  %v567 = vunpack.c.h.b16 %v137
  %v568 = vunpack.c.l.b16 %v138
  %v569 = vunpack.c.h.b16 %v138
  %v570 = vunpack.c.l.b16 %v139
  %v571 = vunpack.c.h.b16 %v139
  %v572 = vunpack.c.l.b16 %v140
  %v573 = vunpack.c.h.b16 %v140
  %v574 = vunpack.c.l.b16 %v141
  %v575 = vunpack.c.h.b16 %v141
  %v576 = vunpack.c.l.b16 %v142
  %v577 = vunpack.c.h.b16 %v142
  %v578 = vunpack.c.l.b16 %v143
  %v579 = vunpack.c.h.b16 %v143
  %v580 = vunpack.c.l.b16 %v144
  %v581 = vunpack.c.h.b16 %v144
  %v582 = vunpack.c.l.b16 %v145
  %v583 = vunpack.c.h.b16 %v145
  %v584 = vunpack.c.l.b16 %v146
  %v585 = vunpack.c.h.b16 %v146
  %v586 = vunpack.c.l.b16 %v147
  %v587 = vunpack.c.h.b16 %v147
  %v588 = vunpack.c.l.b16 %v148
  %v589 = vunpack.c.h.b16 %v148
  %v590 = vunpack.c.l.b16 %v149
  %v591 = vunpack.c.h.b16 %v149
  %v592 = vunpack.c.l.b16 %v150
  %v593 = vunpack.c.h.b16 %v150
  %v594 = vunpack.c.l.b16 %v151
  %v595 = vunpack.c.h.b16 %v151
  %v596 = vunpack.c.l.b16 %v152
  %v597 = vunpack.c.h.b16 %v152
  %v598 = vunpack.c.l.b16 %v153
  %v599 = vunpack.c.h.b16 %v153
  %v600 = vunpack.c.l.b16 %v154
  %v601 = vunpack.c.h.b16 %v154
  %v602 = vunpack.c.l.b16 %v155
  %v603 = vunpack.c.h.b16 %v155
  %v604 = vunpack.c.l.b16 %v156
  %v605 = vunpack.c.h.b16 %v156
  %v606 = vunpack.c.l.b16 %v157
  %v607 = vunpack.c.h.b16 %v157
  %v608 = vunpack.c.l.b16 %v158
  %v609 = vunpack.c.h.b16 %v158
  %v610 = vunpack.c.l.b16 %v159
  %v611 = vunpack.c.h.b16 %v159
  %v612 = vunpack.c.l.b16 %v160
  %v613 = vunpack.c.h.b16 %v160
  %v614 = vunpack.c.l.b16 %v161
  %v615 = vunpack.c.h.b16 %v161
  %v616 = vunpack.c.l.b16 %v162
  %v617 = vunpack.c.h.b16 %v162
  %v618 = vunpack.c.l.b16 %v163
  %v619 = vunpack.c.h.b16 %v163
  %v620 = vunpack.c.l.b16 %v164
  %v621 = vunpack.c.h.b16 %v164
  %v622 = vunpack.c.l.b16 %v165
  %v623 = vunpack.c.h.b16 %v165
  %v624 = vunpack.c.l.b16 %v166
  %v625 = vunpack.c.h.b16 %v166
  %v626 = vunpack.c.l.b16 %v167
  %v627 = vunpack.c.h.b16 %v167
  %v628 = vunpack.c.l.b16 %v168
  %v629 = vunpack.c.h.b16 %v168
  %v630 = vunpack.c.l.b16 %v169
  %v631 = vunpack.c.h.b16 %v169
  %v632 = vunpack.c.l.b16 %v170
  %v633 = vunpack.c.h.b16 %v170
  %v634 = vunpack.c.l.b16 %v171
  %v635 = vunpack.c.h.b16 %v171
  %v636 = vpack.c.b16 %v350, %v348
  %v637 = vpack.c.b16 %v351, %v349
  %v638 = vpack.c.b16 %v354, %v352
  %v639 = vpack.c.b16 %v355, %v353
  %v640 = vpack.c.b16 %v358, %v356
  %v641 = vpack.c.b16 %v359, %v357
  %v642 = vpack.c.b16 %v362, %v360
  %v643 = vpack.c.b16 %v363, %v361
  %v644 = vpack.c.b16 %v366, %v364
  %v645 = vpack.c.b16 %v367, %v365
  %v646 = vpack.c.b16 %v370, %v368
  %v647 = vpack.c.b16 %v371, %v369
  %v648 = vpack.c.b16 %v374, %v372
  %v649 = vpack.c.b16 %v375, %v373
  %v650 = vpack.c.b16 %v378, %v376
  %v651 = vpack.c.b16 %v379, %v377
  %v652 = vpack.c.b16 %v382, %v380
  %v653 = vpack.c.b16 %v383, %v381
  %v654 = vpack.c.b16 %v386, %v384
  %v655 = vpack.c.b16 %v387, %v385
  %v656 = vpack.c.b16 %v390, %v388
  %v657 = vpack.c.b16 %v391, %v389
  %v658 = vpack.c.b16 %v394, %v392
  %v659 = vpack.c.b16 %v395, %v393
  %v660 = vpack.c.b16 %v398, %v396
  %v661 = vpack.c.b16 %v399, %v397
  %v662 = vpack.c.b16 %v402, %v400
  %v663 = vpack.c.b16 %v403, %v401
  %v664 = vpack.c.b16 %v406, %v404
  %v665 = vpack.c.b16 %v407, %v405
  %v666 = vpack.c.b16 %v410, %v408
  %v667 = vpack.c.b16 %v411, %v409
  %v668 = vpack.c.b16 %v414, %v412
  %v669 = vpack.c.b16 %v415, %v413
  %v670 = vpack.c.b16 %v418, %v416
  %v671 = vpack.c.b16 %v419, %v417
  %v672 = vpack.c.b16 %v422, %v420
  %v673 = vpack.c.b16 %v423, %v421
  %v674 = vpack.c.b16 %v426, %v424
  %v675 = vpack.c.b16 %v427, %v425
  %v676 = vpack.c.b16 %v430, %v428
  %v677 = vpack.c.b16 %v431, %v429
  %v678 = vpack.c.b16 %v434, %v432
  %v679 = vpack.c.b16 %v435, %v433
  %v680 = vpack.c.b16 %v438, %v436
  %v681 = vpack.c.b16 %v439, %v437
  %v682 = vpack.c.b16 %v442, %v440
  %v683 = vpack.c.b16 %v443, %v441
  %v684 = vpack.c.b16 %v446, %v444
  %v685 = vpack.c.b16 %v447, %v445
  %v686 = vpack.c.b16 %v450, %v448
  %v687 = vpack.c.b16 %v451, %v449
  %v688 = vpack.c.b16 %v454, %v452
  %v689 = vpack.c.b16 %v455, %v453
  %v690 = vpack.c.b16 %v458, %v456
  %v691 = vpack.c.b16 %v459, %v457
  %v692 = vpack.c.b16 %v462, %v460
  %v693 = vpack.c.b16 %v463, %v461
  %v694 = vpack.c.b16 %v466, %v464
  %v695 = vpack.c.b16 %v467, %v465
  %v696 = vpack.c.b16 %v470, %v468
  %v697 = vpack.c.b16 %v471, %v469
  %v698 = vpack.c.b16 %v474, %v472
  %v699 = vpack.c.b16 %v475, %v473
  %v700 = vpack.c.b16 %v478, %v476
  %v701 = vpack.c.b16 %v479, %v477
  %v702 = vpack.c.b16 %v482, %v480
  %v703 = vpack.c.b16 %v483, %v481
  %v704 = vpack.c.b16 %v486, %v484
  %v705 = vpack.c.b16 %v487, %v485
  %v706 = vpack.c.b16 %v490, %v488
  %v707 = vpack.c.b16 %v491, %v489
  %v708 = vpack.c.b16 %v494, %v492
  %v709 = vpack.c.b16 %v495, %v493
  %v710 = vpack.c.b16 %v498, %v496
  %v711 = vpack.c.b16 %v499, %v497
  %v712 = vpack.c.b16 %v502, %v500
  %v713 = vpack.c.b16 %v503, %v501
  %v714 = vpack.c.b16 %v506, %v504
  %v715 = vpack.c.b16 %v507, %v505
  %v716 = vpack.c.b16 %v510, %v508
  %v717 = vpack.c.b16 %v511, %v509
  %v718 = vpack.c.b16 %v514, %v512
  %v719 = vpack.c.b16 %v515, %v513
  %v720 = vpack.c.b16 %v518, %v516
  %v721 = vpack.c.b16 %v519, %v517
  %v722 = vpack.c.b16 %v522, %v520
  %v723 = vpack.c.b16 %v523, %v521
  %v724 = vpack.c.b16 %v526, %v524
  %v725 = vpack.c.b16 %v527, %v525
  %v726 = vpack.c.b16 %v530, %v528
  %v727 = vpack.c.b16 %v531, %v529
  %v728 = vpack.c.b16 %v534, %v532
  %v729 = vpack.c.b16 %v535, %v533
  %v730 = vpack.c.b16 %v538, %v536
  %v731 = vpack.c.b16 %v539, %v537
  %v732 = vpack.c.b16 %v542, %v540
  %v733 = vpack.c.b16 %v543, %v541
  %v734 = vpack.c.b16 %v546, %v544
  %v735 = vpack.c.b16 %v547, %v545
  %v736 = vpack.c.b16 %v550, %v548
  %v737 = vpack.c.b16 %v551, %v549
  %v738 = vpack.c.b16 %v554, %v552
  %v739 = vpack.c.b16 %v555, %v553
  %v740 = vpack.c.b16 %v558, %v556
  %v741 = vpack.c.b16 %v559, %v557
  %v742 = vpack.c.b16 %v562, %v560
  %v743 = vpack.c.b16 %v563, %v561
  %v744 = vpack.c.b16 %v566, %v564
  %v745 = vpack.c.b16 %v567, %v565
  %v746 = vpack.c.b16 %v570, %v568
  %v747 = vpack.c.b16 %v571, %v569
  %v748 = vpack.c.b16 %v574, %v572
  %v749 = vpack.c.b16 %v575, %v573
  %v750 = vpack.c.b16 %v578, %v576
  %v751 = vpack.c.b16 %v579, %v577
  %v752 = vpack.c.b16 %v582, %v580
  %v753 = vpack.c.b16 %v583, %v581
  %v754 = vpack.c.b16 %v586, %v584
  %v755 = vpack.c.b16 %v587, %v585
  %v756 = vpack.c.b16 %v590, %v588
  %v757 = vpack.c.b16 %v591, %v589
  %v758 = vpack.c.b16 %v594, %v592
  %v759 = vpack.c.b16 %v595, %v593
  %v760 = vpack.c.b16 %v598, %v596
  %v761 = vpack.c.b16 %v599, %v597
  %v762 = vpack.c.b16 %v602, %v600
  %v763 = vpack.c.b16 %v603, %v601
  %v764 = vpack.c.b16 %v606, %v604
  %v765 = vpack.c.b16 %v607, %v605
  %v766 = vpack.c.b16 %v610, %v608
  %v767 = vpack.c.b16 %v611, %v609
  %v768 = vpack.c.b16 %v614, %v612
  %v769 = vpack.c.b16 %v615, %v613
  %v770 = vpack.c.b16 %v618, %v616
  %v771 = vpack.c.b16 %v619, %v617
  %v772 = vpack.c.b16 %v622, %v620
  %v773 = vpack.c.b16 %v623, %v621
  %v774 = vpack.c.b16 %v626, %v624
  %v775 = vpack.c.b16 %v627, %v625
  %v776 = vpack.c.b16 %v630, %v628
  %v777 = vpack.c.b16 %v631, %v629
  %v778 = vpack.c.b16 %v634, %v632
  %v779 = vpack.c.b16 %v635, %v633
  %924 = vmatprep.subr.bf16.mxu0 %v637
  %925 = vmatpush1.bf16.msra.mxu0 %v636
  %926 = vmatprep.subr.bf16.mxu0 %v639
  %927 = vmatpush1.bf16.msra.mxu0 %v638
  %928 = vmatprep.subr.bf16.mxu0 %v641
  %929 = vmatpush1.bf16.msra.mxu0 %v640
  %930 = vmatprep.subr.bf16.mxu0 %v643
  %931 = vmatpush1.bf16.msra.mxu0 %v642
  %932 = vmatprep.subr.bf16.mxu0 %v645
  %933 = vmatpush1.bf16.msra.mxu0 %v644
  %934 = vmatprep.subr.bf16.mxu0 %v647
  %935 = vmatpush1.bf16.msra.mxu0 %v646
  %936 = vmatprep.subr.bf16.mxu0 %v649
  %937 = vmatpush1.bf16.msra.mxu0 %v648
  %938 = vmatprep.subr.bf16.mxu0 %v651
  %939 = vmatpush1.bf16.msra.mxu0 %v650
  %940 = vmatprep.subr.bf16.mxu0 %v653
  %941 = vmatpush1.bf16.msra.mxu0 %v652
  %942 = vmatprep.subr.bf16.mxu0 %v655
  %943 = vmatpush1.bf16.msra.mxu0 %v654
  %944 = vmatprep.subr.bf16.mxu0 %v657
  %945 = vmatpush1.bf16.msra.mxu0 %v656
  %946 = vmatprep.subr.bf16.mxu0 %v659
  %947 = vmatpush1.bf16.msra.mxu0 %v658
  %948 = vmatprep.subr.bf16.mxu0 %v661
  %949 = vmatpush1.bf16.msra.mxu0 %v660
  %950 = vmatprep.subr.bf16.mxu0 %v663
  %951 = vmatpush1.bf16.msra.mxu0 %v662
  %952 = vmatprep.subr.bf16.mxu0 %v665
  %953 = vmatpush1.bf16.msra.mxu0 %v664
  %954 = vmatprep.subr.bf16.mxu0 %v667
  %955 = vmatpush1.bf16.msra.mxu0 %v666
  %956 = vmatprep.mubr.bf16.mxu0 %v187
  %957 = vmatmul.mubr.bf16.gmra.mrb[0].mxu0 %v186
  %v958 = vpop.f32.mrb[0].mxu0
  %v959 = vadd.f32 0.0, %v958
  %v960 = vpop.f32.mrb[0].mxu0
  %v961 = vadd.f32 0.0, %v960
  %v962 = vpop.f32.mrb[0].mxu0
  %v963 = vpop.f32.mrb[0].mxu0
  %964 = vdwg.mxu0
  %965 = vmatprep.subr.bf16.mxu0 %v669
  %966 = vmatpush1.bf16.msra.mxu0 %v668
  %967 = vmatprep.subr.bf16.mxu0 %v671
  %968 = vmatpush1.bf16.msra.mxu0 %v670
  %969 = vmatprep.subr.bf16.mxu0 %v673
  %970 = vmatpush1.bf16.msra.mxu0 %v672
  %971 = vmatprep.subr.bf16.mxu0 %v675
  %972 = vmatpush1.bf16.msra.mxu0 %v674
  %973 = vmatprep.subr.bf16.mxu0 %v677
  %974 = vmatpush1.bf16.msra.mxu0 %v676
  %975 = vmatprep.subr.bf16.mxu0 %v679
  %976 = vmatpush1.bf16.msra.mxu0 %v678
  %977 = vmatprep.subr.bf16.mxu0 %v681
  %978 = vmatpush1.bf16.msra.mxu0 %v680
  %979 = vmatprep.subr.bf16.mxu0 %v683
  %980 = vmatpush1.bf16.msra.mxu0 %v682
  %981 = vmatprep.subr.bf16.mxu0 %v685
  %982 = vmatpush1.bf16.msra.mxu0 %v684
  %983 = vmatprep.subr.bf16.mxu0 %v687
  %984 = vmatpush1.bf16.msra.mxu0 %v686
  %985 = vmatprep.subr.bf16.mxu0 %v689
  %986 = vmatpush1.bf16.msra.mxu0 %v688
  %987 = vmatprep.subr.bf16.mxu0 %v691
  %988 = vmatpush1.bf16.msra.mxu0 %v690
  %989 = vmatprep.subr.bf16.mxu0 %v693
  %990 = vmatpush1.bf16.msra.mxu0 %v692
  %991 = vmatprep.subr.bf16.mxu0 %v695
  %992 = vmatpush1.bf16.msra.mxu0 %v694
  %993 = vmatprep.subr.bf16.mxu0 %v697
  %994 = vmatpush1.bf16.msra.mxu0 %v696
  %995 = vmatprep.subr.bf16.mxu0 %v699
  %996 = vmatpush1.bf16.msra.mxu0 %v698
  %997 = vmatprep.mubr.bf16.mxu0 %v189
  %998 = vmatmul.mubr.bf16.gmra.mrb[0].mxu0 %v188
  %v999 = vpop.f32.mrb[0].mxu0
  %v1000 = vadd.f32 %v959, %v999
  %v1001 = vpop.f32.mrb[0].mxu0
  %v1002 = vadd.f32 %v961, %v1001
  %v1003 = vpop.f32.mrb[0].mxu0
  %v1004 = vpop.f32.mrb[0].mxu0
  %1005 = vdwg.mxu0
  %1006 = vmatprep.subr.bf16.mxu0 %v701
  %1007 = vmatpush1.bf16.msra.mxu0 %v700
  %1008 = vmatprep.subr.bf16.mxu0 %v703
  %1009 = vmatpush1.bf16.msra.mxu0 %v702
  %1010 = vmatprep.subr.bf16.mxu0 %v705
  %1011 = vmatpush1.bf16.msra.mxu0 %v704
  %1012 = vmatprep.subr.bf16.mxu0 %v707
  %1013 = vmatpush1.bf16.msra.mxu0 %v706
  %1014 = vmatprep.subr.bf16.mxu0 %v709
  %1015 = vmatpush1.bf16.msra.mxu0 %v708
  %1016 = vmatprep.subr.bf16.mxu0 %v711
  %1017 = vmatpush1.bf16.msra.mxu0 %v710
  %1018 = vmatprep.subr.bf16.mxu0 %v713
  %1019 = vmatpush1.bf16.msra.mxu0 %v712
  %1020 = vmatprep.subr.bf16.mxu0 %v715
  %1021 = vmatpush1.bf16.msra.mxu0 %v714
  %1022 = vmatprep.subr.bf16.mxu0 %v717
  %1023 = vmatpush1.bf16.msra.mxu0 %v716
  %1024 = vmatprep.subr.bf16.mxu0 %v719
  %1025 = vmatpush1.bf16.msra.mxu0 %v718
  %1026 = vmatprep.subr.bf16.mxu0 %v721
  %1027 = vmatpush1.bf16.msra.mxu0 %v720
  %1028 = vmatprep.subr.bf16.mxu0 %v723
  %1029 = vmatpush1.bf16.msra.mxu0 %v722
  %1030 = vmatprep.subr.bf16.mxu0 %v725
  %1031 = vmatpush1.bf16.msra.mxu0 %v724
  %1032 = vmatprep.subr.bf16.mxu0 %v727
  %1033 = vmatpush1.bf16.msra.mxu0 %v726
  %1034 = vmatprep.subr.bf16.mxu0 %v729
  %1035 = vmatpush1.bf16.msra.mxu0 %v728
  %1036 = vmatprep.subr.bf16.mxu0 %v731
  %1037 = vmatpush1.bf16.msra.mxu0 %v730
  %1038 = vmatprep.mubr.bf16.mxu0 %v191
  %1039 = vmatmul.mubr.bf16.gmra.mrb[0].mxu0 %v190
  %v1040 = vpop.f32.mrb[0].mxu0
  %v1041 = vadd.f32 %v1000, %v1040
  %v1042 = vpop.f32.mrb[0].mxu0
  %v1043 = vadd.f32 %v1002, %v1042
  %v1044 = vpop.f32.mrb[0].mxu0
  %v1045 = vpop.f32.mrb[0].mxu0
  %1046 = vdwg.mxu0
  %1047 = vmatprep.subr.bf16.mxu0 %v733
  %1048 = vmatpush1.bf16.msra.mxu0 %v732
  %1049 = vmatprep.subr.bf16.mxu0 %v735
  %1050 = vmatpush1.bf16.msra.mxu0 %v734
  %1051 = vmatprep.subr.bf16.mxu0 %v737
  %1052 = vmatpush1.bf16.msra.mxu0 %v736
  %1053 = vmatprep.subr.bf16.mxu0 %v739
  %1054 = vmatpush1.bf16.msra.mxu0 %v738
  %1055 = vmatprep.subr.bf16.mxu0 %v741
  %1056 = vmatpush1.bf16.msra.mxu0 %v740
  %1057 = vmatprep.subr.bf16.mxu0 %v743
  %1058 = vmatpush1.bf16.msra.mxu0 %v742
  %1059 = vmatprep.subr.bf16.mxu0 %v745
  %1060 = vmatpush1.bf16.msra.mxu0 %v744
  %1061 = vmatprep.subr.bf16.mxu0 %v747
  %1062 = vmatpush1.bf16.msra.mxu0 %v746
  %1063 = vmatprep.subr.bf16.mxu0 %v749
  %1064 = vmatpush1.bf16.msra.mxu0 %v748
  %1065 = vmatprep.subr.bf16.mxu0 %v751
  %1066 = vmatpush1.bf16.msra.mxu0 %v750
  %1067 = vmatprep.subr.bf16.mxu0 %v753
  %1068 = vmatpush1.bf16.msra.mxu0 %v752
  %1069 = vmatprep.subr.bf16.mxu0 %v755
  %1070 = vmatpush1.bf16.msra.mxu0 %v754
  %1071 = vmatprep.subr.bf16.mxu0 %v757
  %1072 = vmatpush1.bf16.msra.mxu0 %v756
  %1073 = vmatprep.subr.bf16.mxu0 %v759
  %1074 = vmatpush1.bf16.msra.mxu0 %v758
  %1075 = vmatprep.subr.bf16.mxu0 %v761
  %1076 = vmatpush1.bf16.msra.mxu0 %v760
  %1077 = vmatprep.subr.bf16.mxu0 %v763
  %1078 = vmatpush1.bf16.msra.mxu0 %v762
  %1079 = vmatprep.mubr.bf16.mxu0 %v193
  %1080 = vmatmul.mubr.bf16.gmra.mrb[0].mxu0 %v192
  %v1081 = vpop.f32.mrb[0].mxu0
  %v1082 = vadd.f32 %v1041, %v1081
  %v1083 = vpop.f32.mrb[0].mxu0
  %v1084 = vadd.f32 %v1043, %v1083
  %v1085 = vpop.f32.mrb[0].mxu0
  %v1086 = vpop.f32.mrb[0].mxu0
  %1087 = vdwg.mxu0
  %1088 = vmatprep.subr.bf16.mxu0 %v765
  %1089 = vmatpush1.bf16.msra.mxu0 %v764
  %1090 = vmatprep.subr.bf16.mxu0 %v767
  %1091 = vmatpush1.bf16.msra.mxu0 %v766
  %1092 = vmatprep.subr.bf16.mxu0 %v769
  %1093 = vmatpush1.bf16.msra.mxu0 %v768
  %1094 = vmatprep.subr.bf16.mxu0 %v771
  %1095 = vmatpush1.bf16.msra.mxu0 %v770
  %1096 = vmatprep.subr.bf16.mxu0 %v773
  %1097 = vmatpush1.bf16.msra.mxu0 %v772
  %1098 = vmatprep.subr.bf16.mxu0 %v775
  %1099 = vmatpush1.bf16.msra.mxu0 %v774
  %1100 = vmatprep.subr.bf16.mxu0 %v777
  %1101 = vmatpush1.bf16.msra.mxu0 %v776
  %1102 = vmatprep.subr.bf16.mxu0 %v779
  %1103 = vmatpush1.bf16.msra.mxu0 %v778
  %1104 = vmatprep.subr.bf16.mxu0 0
  %1105 = vmatpush1.bf16.msra.mxu0 0
  %1106 = vmatprep.subr.bf16.mxu0 0
  %1107 = vmatpush1.bf16.msra.mxu0 0
  %1108 = vmatprep.subr.bf16.mxu0 0
  %1109 = vmatpush1.bf16.msra.mxu0 0
  %1110 = vmatprep.subr.bf16.mxu0 0
  %1111 = vmatpush1.bf16.msra.mxu0 0
  %1112 = vmatprep.subr.bf16.mxu0 0
  %1113 = vmatpush1.bf16.msra.mxu0 0
  %1114 = vmatprep.subr.bf16.mxu0 0
  %1115 = vmatpush1.bf16.msra.mxu0 0
  %1116 = vmatprep.subr.bf16.mxu0 0
  %1117 = vmatpush1.bf16.msra.mxu0 0
  %1118 = vmatprep.subr.bf16.mxu0 0
  %1119 = vmatpush1.bf16.msra.mxu0 0
  %1120 = vmatprep.mubr.bf16.mxu0 0
  %1121 = vmatmul.mubr.bf16.gmra.mrb[0].mxu0 %v194
  %v1122 = vpop.f32.mrb[0].mxu0
  %v1123 = vadd.f32 %v1082, %v1122
  %v1124 = vpop.f32.mrb[0].mxu0
  %v1125 = vadd.f32 %v1084, %v1124
  %v1126 = vpop.f32.mrb[0].mxu0
  %v1127 = vpop.f32.mrb[0].mxu0
  %1128 = vdwg.mxu0
  %v1129 = vadd.f32 %v21, %v1123
  %v1130 = vadd.f32 %v22, %v1125
  %1131 = vst [vmem:[%s3] sm:$0xff] %v1129
  %1132 = vst [vmem:[%s3 + $0x8] sm:$0xff] %v1130
  // Predicated region
  $region18: #{backbone_forward.18} parent=0 // pred_check
    %p1133 = pneg %p15
  $region19: #{backbone_forward.18} parent=0 // pred_check_branch
    %1135 = sbr.rel (%p1133) target = $region21
  $region20: #{backbone_forward.18} parent=0 // pred_region
    %v1136 = vld [vmem:[%s3] sm:$0xff]
    %v1137 = vld [vmem:[%s3 + $0x8] sm:$0xff]
    %v1138 = vld [vmem:[%s2] sm:$0x3]
    %v1140 = vlaneseq
    %v1141 = vshrl.u32 %v1140, 7
    %v1142 = vsub.s32 0, %v1141
    %v1143 = vrot.slane %v1138, %v1142
    %v1144 = vlaneseq
    %v1145 = vshrl.u32 %v1144, 7
    %v1146 = vsub.s32 1, %v1145
    %v1147 = vrot.slane %v1138, %v1146
    %v1150 = vadd.f32 %v1136, %v1143
    %v1151 = vadd.f32 %v1137, %v1147
    %v1152 = vmax.f32 %v1150, 0.0
    %v1153 = vmax.f32 %v1151, 0.0
    %1154 = vst [vmem:[%s3] sm:$0xff] %v1152
    %1155 = vst [vmem:[%s3 + $0x8] sm:$0xff] %v1153
  $region21: #{backbone_forward.18} parent=0 // pred_fallthru
    _
  // Predicated region
  $region22: #{backbone_forward.18} parent=0 // pred_check
    _
  $region23: #{backbone_forward.18} parent=0 // pred_check_branch
    %1157 = sbr.rel (0) target = $region25
  $region24: #{backbone_forward.18} parent=0 // pred_region
    _
  $region25: #{backbone_forward.18} parent=0 // pred_fallthru
    _
  // Predicated region
  $region26: #{backbone_forward.18} parent=0 // pred_check
    _
  $region27: #{backbone_forward.18} parent=0 // pred_check_branch
    %1159 = sbr.rel (0) target = $region29
  $region28: #{backbone_forward.18} parent=0 // pred_region
    _
  $region29: #{backbone_forward.18} parent=0 // pred_fallthru
    _

// kernel: backbone_forward.19
$region0: #{backbone_forward.19}
  #allocation0 [shape = 'u32[]', space=smem, size = 0x4, offset = 0x4, fixed_abs, tag = 'smem constant byte address 0x4 - core index']
  #allocation1 [shape = 'u32[144,128]{1,0:T(1,128)}', space=vmem, size = 0x12000, scoped, tag = 'internal scratch']
  %s0 = inlined_call_operand.vmem [shape: bf16[8,2304], index: 0, kind: input, shape index: {}]
  %s1 = inlined_call_operand.vmem [shape: bf16[2304,256], index: 1, kind: input, shape index: {}]
  %s2 = inlined_call_operand.vmem [shape: f32[1,256], index: 2, kind: input, shape index: {}]
  %s3 = inlined_call_operand.vmem [shape: f32[8,256], index: 3, kind: output, shape index: {}]
  %s4 = sld [smem:[#allocation0]]
  $region53: #{backbone_forward.19} parent=0
    _
  %s6 = ssub.s32 1, %s4
  %s7 = scalar_select 0, %s6, %s4
  loop: start=0, step=1, limit=4
  $region2: #{backbone_forward.19} parent=0 // loop_pre_header
    _
  $region3: #{backbone_forward.19} parent=0 // loop_header
    %s9 = sphi 0, %s13
    %p10 = scmp.ge.s32.totalorder %s9, 4
    %s16 = sphi 0, %s28
    %s17 = sphi 0, %s24
    %s18 = sphi 0, %s16
    %s19 = sphi 0, %s17
    %s20 = sphi 0, %s18
    %s21 = sphi 0, %s19
    %s33 = sphi 0, %s35
    %s36 = sphi 0, %s33
    %s37 = sphi 0, %s36
    %s53 = sphi 0, %s37
    %s59 = sphi 0, %s61
    %s62 = sphi 0, %s59
    %s63 = sphi 0, %s62
    %s79 = sphi 0, %s63
    %s83 = sphi 0, %s83
    %s85 = sphi 0, %s83
    %s86 = sphi 0, %s85
    %s100 = sphi 0, %s86
    %s106 = sphi 0, %s108
    %s109 = sphi 0, %s106
    %s110 = sphi 0, %s109
    %s126 = sphi 0, %s110
  $region4: #{backbone_forward.19} parent=0 // loop_header_branch
    %12 = sbr.rel (%p10) target = $region8
  $region5: #{backbone_forward.19} parent=0 // loop_body
    %s14 = ssub.s32 %s9, 1
    %s15 = ssub.s32 %s9, 2
    %s22 = sadd.s32 1, %s17
    %p23 = scmp.ge.s32.totalorder %s22, 2
    %s24 = scalar_select %p23, 0, %s22
    %s25 = sadd.s32 1, %s16
    %s26 = scalar_select %p23, %s25, %s16
    %p27 = scmp.ge.s32.totalorder %s26, 1
    %s28 = scalar_select %p27, 0, %s26
    %s29 = ssub.s32 %s16, %s28
    %s30 = ssub.s32 %s17, %s24
    %s31 = sor.u32 %s29, %s30
    %p32 = scmp.eq.s32.totalorder %s31, 0
    %s34 = sadd.s32 %s33, 1
    %s35 = scalar_select %p32, %s33, %s34
    %p38 = pneg %p32
    %p39 = scmp.eq.s32.totalorder %s9, 1
    %p40 = por %p38, %p39
    %p41 = scmp.ne.s32.totalorder %s33, %s36
    %p42 = scmp.eq.s32.totalorder %s9, 0
    %p43 = por %p41, %p42
    %p44 = scmp.ne.s32.totalorder %s33, %s36
    %p45 = scmp.eq.s32.totalorder %s14, 1
    %p46 = por %p44, %p45
    %p47 = scmp.ne.s32.totalorder %s36, %s37
    %p48 = scmp.eq.s32.totalorder %s14, 0
    %p49 = por %p47, %p48
    %p50 = scmp.ne.s32.totalorder %s36, %s37
    %p51 = scmp.eq.s32.totalorder %s15, 1
    %p52 = por %p50, %p51
    %p54 = scmp.ne.s32.totalorder %s37, %s53
    %p55 = scmp.eq.s32.totalorder %s15, 0
    %p56 = por %p54, %p55
    %s57 = ssub.s32 %s17, %s24
    %p58 = scmp.eq.s32.totalorder %s57, 0
    %s60 = sadd.s32 %s59, 1
    %s61 = scalar_select %p58, %s59, %s60
    %p64 = pneg %p58
    %p65 = scmp.eq.s32.totalorder %s9, 1
    %p66 = por %p64, %p65
    %p67 = scmp.ne.s32.totalorder %s59, %s62
    %p68 = scmp.eq.s32.totalorder %s9, 0
    %p69 = por %p67, %p68
    %p70 = scmp.ne.s32.totalorder %s59, %s62
    %p71 = scmp.eq.s32.totalorder %s14, 1
    %p72 = por %p70, %p71
    %p73 = scmp.ne.s32.totalorder %s62, %s63
    %p74 = scmp.eq.s32.totalorder %s14, 0
    %p75 = por %p73, %p74
    %p76 = scmp.ne.s32.totalorder %s62, %s63
    %p77 = scmp.eq.s32.totalorder %s15, 1
    %p78 = por %p76, %p77
    %p80 = scmp.ne.s32.totalorder %s63, %s79
    %p81 = scmp.eq.s32.totalorder %s15, 0
    %p82 = por %p80, %p81
    %s84 = sadd.s32 %s83, 1
    %p87 = scmp.eq.s32.totalorder %s9, 1
    %p88 = scmp.ne.s32.totalorder %s83, %s85
    %p89 = scmp.eq.s32.totalorder %s9, 0
    %p90 = por %p88, %p89
    %p91 = scmp.ne.s32.totalorder %s83, %s85
    %p92 = scmp.eq.s32.totalorder %s14, 1
    %p93 = por %p91, %p92
    %p94 = scmp.ne.s32.totalorder %s85, %s86
    %p95 = scmp.eq.s32.totalorder %s14, 0
    %p96 = por %p94, %p95
    %p97 = scmp.ne.s32.totalorder %s85, %s86
    %p98 = scmp.eq.s32.totalorder %s15, 1
    %p99 = por %p97, %p98
    %p101 = scmp.ne.s32.totalorder %s86, %s100
    %p102 = scmp.eq.s32.totalorder %s15, 0
    %p103 = por %p101, %p102
    %s104 = ssub.s32 %s16, %s28
    %p105 = scmp.eq.s32.totalorder %s104, 0
    %s107 = sadd.s32 %s106, 1
    %s108 = scalar_select %p105, %s106, %s107
    %p111 = pneg %p105
    %p112 = scmp.eq.s32.totalorder %s9, 1
    %p113 = por %p111, %p112
    %p114 = scmp.ne.s32.totalorder %s106, %s109
    %p115 = scmp.eq.s32.totalorder %s9, 0
    %p116 = por %p114, %p115
    %p117 = scmp.ne.s32.totalorder %s106, %s109
    %p118 = scmp.eq.s32.totalorder %s14, 1
    %p119 = por %p117, %p118
    %p120 = scmp.ne.s32.totalorder %s109, %s110
    %p121 = scmp.eq.s32.totalorder %s14, 0
    %p122 = por %p120, %p121
    %p123 = scmp.ne.s32.totalorder %s109, %s110
    %p124 = scmp.eq.s32.totalorder %s15, 1
    %p125 = por %p123, %p124
    %p127 = scmp.ne.s32.totalorder %s110, %s126
    %p128 = scmp.eq.s32.totalorder %s15, 0
    %p129 = por %p127, %p128
    %p130 = scmp.le.s32.totalorder 1, %s9
    %p131 = scmp.lt.s32.totalorder %s9, 3
    %p132 = pnand %p130, %p131
    %p133 = pneg %p132
    // Predicated region
    $region9: #{backbone_forward.19} parent=5 // pred_check
      _
    $region10: #{backbone_forward.19} parent=5 // pred_check_branch
      %135 = sbr.rel (%p132) target = $region12
    $region11: #{backbone_forward.19} parent=5 // pred_region
      %s136 = ssub.s32 %s9, 1
      // Predicated region
      $region13: #{backbone_forward.19} parent=11 // pred_check
        %p137 = pneg %p96
      $region14: #{backbone_forward.19} parent=11 // pred_check_branch
        %139 = sbr.rel (%p137) target = $region16
      $region15: #{backbone_forward.19} parent=11 // pred_region
        _
      $region16: #{backbone_forward.19} parent=11 // pred_fallthru
        _
    $region12: #{backbone_forward.19} parent=5 // pred_fallthru
      _
    %p140 = scmp.lt.s32.totalorder %s9, 2
    // Predicated region
    $region17: #{backbone_forward.19} parent=5 // pred_check
      %p141 = pneg %p140
    $region18: #{backbone_forward.19} parent=5 // pred_check_branch
      %143 = sbr.rel (%p141) target = $region20
    $region19: #{backbone_forward.19} parent=5 // pred_region
      // Predicated region
      $region21: #{backbone_forward.19} parent=19 // pred_check
        %p144 = pneg %p43
      $region22: #{backbone_forward.19} parent=19 // pred_check_branch
        %146 = sbr.rel (%p144) target = $region24
      $region23: #{backbone_forward.19} parent=19 // pred_region
        %s147 = smul.u32 9, %s17
        %p148 = scmp.lt.s32.totalorder %s16, 0
        %s149 = scalar_select %p148, %s16, 0
        %p150 = scmp.lt.s32.totalorder %s147, 17
        %s151 = scalar_select %p150, %s147, 17
        %s152 = smul.addr %s149, 18
        %s153 = sadd.s32 %s151, %s152
        %s154 = smul.addr %s153, 4
        %s155 = scalar_lea.vmem %s0, %s154
        %s156 = smul.u32 9, %s17
      $region24: #{backbone_forward.19} parent=19 // pred_fallthru
        _
      // Predicated region
      $region25: #{backbone_forward.19} parent=19 // pred_check
        %p157 = pneg %p69
      $region26: #{backbone_forward.19} parent=19 // pred_check_branch
        %159 = sbr.rel (%p157) target = $region28
      $region27: #{backbone_forward.19} parent=19 // pred_region
        %s160 = smul.u32 144, %s17
        %p161 = scmp.lt.s32.totalorder %s160, 287
        %s162 = scalar_select %p161, %s160, 287
        %s163 = smul.addr %s162, 2
        %s164 = smul.addr %s163, 4
        %s165 = scalar_lea.vmem %s1, %s164
        %s166 = smul.u32 144, %s17
      $region28: #{backbone_forward.19} parent=19 // pred_fallthru
        _
    $region20: #{backbone_forward.19} parent=5 // pred_fallthru
      _
    %p167 = scmp.le.s32.totalorder 1, %s9
    %p168 = scmp.lt.s32.totalorder %s9, 3
    %p169 = pnand %p167, %p168
    %p170 = pneg %p169
    // Predicated region
    $region29: #{backbone_forward.19} parent=5 // pred_check
      _
    $region30: #{backbone_forward.19} parent=5 // pred_check_branch
      %172 = sbr.rel (%p169) target = $region32
    $region31: #{backbone_forward.19} parent=5 // pred_region
      %s173 = ssub.s32 %s9, 1
      %s174 = smul.u32 9, %s19
      %p175 = scmp.lt.s32.totalorder %s18, 0
      %s176 = scalar_select %p175, %s18, 0
      %p177 = scmp.lt.s32.totalorder %s174, 17
      %s178 = scalar_select %p177, %s174, 17
      %s179 = smul.addr %s176, 18
      %s180 = sadd.s32 %s178, %s179
      %s181 = smul.addr %s180, 4
      %s182 = scalar_lea.vmem %s0, %s181
      %p183 = pneg %p49
      %p184 = pneg %p46
      %s185 = smul.u32 144, %s19
      %p186 = scmp.lt.s32.totalorder %s185, 287
      %s187 = scalar_select %p186, %s185, 287
      %s188 = smul.addr %s187, 2
      %s189 = smul.addr %s188, 4
      %s190 = scalar_lea.vmem %s1, %s189
      %p191 = pneg %p75
      %p192 = pneg %p72
      %p193 = pneg %p96
      %p194 = pneg %p93
      %p195 = pneg %p122
      %p196 = pneg %p119
      %p197 = scmp.lt.s32.totalorder %s18, 0
      %s198 = scalar_select %p197, %s18, 0
      %s199 = smul.addr %s198, 2
      %s200 = smul.addr %s199, 8
      %s201 = scalar_lea.vmem %s3, %s200
      %s202 = smul.u32 9, %s19
      %p203 = scmp.lt.s32.totalorder %s18, 0
      %s204 = scalar_select %p203, %s18, 0
      %p205 = scmp.lt.s32.totalorder %s202, 17
      %s206 = scalar_select %p205, %s202, 17
      %s207 = smul.addr %s204, 18
      %s208 = sadd.s32 %s206, %s207
      %s209 = smul.addr %s208, 4
      %s210 = scalar_lea.vmem %s0, %s209
      %s211 = smul.u32 9, %s19
      %s212 = smul.u32 144, %s19
      %p213 = scmp.lt.s32.totalorder %s212, 287
      %s214 = scalar_select %p213, %s212, 287
      %s215 = smul.addr %s214, 2
      %s216 = smul.addr %s215, 4
      %s217 = scalar_lea.vmem %s1, %s216
      %s218 = smul.u32 144, %s19
      %p219 = scmp.lt.s32.totalorder %s18, 0
      %s220 = scalar_select %p219, %s18, 0
      %s221 = smul.addr %s220, 2
      %s222 = smul.addr %s221, 8
      %s223 = scalar_lea.vmem %s3, %s222
      %p225 = scmp.eq.s32.totalorder %s19, 0
      // Predicated region
      $region33: #{backbone_forward.19} parent=31 // pred_check
        %p226 = pneg %p225
      $region34: #{backbone_forward.19} parent=31 // pred_check_branch
        %228 = sbr.rel (%p226) target = $region36
      $region35: #{backbone_forward.19} parent=31 // pred_region
        %229 = vst [vmem:[%s223] sm:$0xff] 0.0
        %230 = vst [vmem:[%s223 + $0x8] sm:$0xff] 0.0
      $region36: #{backbone_forward.19} parent=31 // pred_fallthru
        _
      %v231 = vld [vmem:[%s223] sm:$0xff]
      %v232 = vld [vmem:[%s223 + $0x8] sm:$0xff]
      %v233 = vld [vmem:[%s210] sm:$0xff]
      %v234 = vld [vmem:[%s210 + $0x8] sm:$0xff]
      %v235 = vld [vmem:[%s210 + $0x10] sm:$0xff]
      %v236 = vld [vmem:[%s210 + $0x18] sm:$0xff]
      %v237 = vld [vmem:[%s210 + $0x20] sm:$0xf]
      %v238 = vld [vmem:[%s217] sm:$0xff]
      %v239 = vld [vmem:[%s217 + $0x8] sm:$0xff]
      %v240 = vld [vmem:[%s217 + $0x10] sm:$0xff]
      %v241 = vld [vmem:[%s217 + $0x18] sm:$0xff]
      %v242 = vld [vmem:[%s217 + $0x20] sm:$0xff]
      %v243 = vld [vmem:[%s217 + $0x28] sm:$0xff]
      %v244 = vld [vmem:[%s217 + $0x30] sm:$0xff]
      %v245 = vld [vmem:[%s217 + $0x38] sm:$0xff]
      %v246 = vld [vmem:[%s217 + $0x40] sm:$0xff]
      %v247 = vld [vmem:[%s217 + $0x48] sm:$0xff]
      %v248 = vld [vmem:[%s217 + $0x50] sm:$0xff]
      %v249 = vld [vmem:[%s217 + $0x58] sm:$0xff]
      %v250 = vld [vmem:[%s217 + $0x60] sm:$0xff]
      %v251 = vld [vmem:[%s217 + $0x68] sm:$0xff]
      %v252 = vld [vmem:[%s217 + $0x70] sm:$0xff]
      %v253 = vld [vmem:[%s217 + $0x78] sm:$0xff]
      %v254 = vld [vmem:[%s217 + $0x80] sm:$0xff]
      %v255 = vld [vmem:[%s217 + $0x88] sm:$0xff]
      %v256 = vld [vmem:[%s217 + $0x90] sm:$0xff]
      %v257 = vld [vmem:[%s217 + $0x98] sm:$0xff]
      %v258 = vld [vmem:[%s217 + $0xa0] sm:$0xff]
      %v259 = vld [vmem:[%s217 + $0xa8] sm:$0xff]
      %v260 = vld [vmem:[%s217 + $0xb0] sm:$0xff]
      %v261 = vld [vmem:[%s217 + $0xb8] sm:$0xff]
      %v262 = vld [vmem:[%s217 + $0xc0] sm:$0xff]
      %v263 = vld [vmem:[%s217 + $0xc8] sm:$0xff]
      %v264 = vld [vmem:[%s217 + $0xd0] sm:$0xff]
      %v265 = vld [vmem:[%s217 + $0xd8] sm:$0xff]
      %v266 = vld [vmem:[%s217 + $0xe0] sm:$0xff]
      %v267 = vld [vmem:[%s217 + $0xe8] sm:$0xff]
      %v268 = vld [vmem:[%s217 + $0xf0] sm:$0xff]
      %v269 = vld [vmem:[%s217 + $0xf8] sm:$0xff]
      %v270 = vld [vmem:[%s217 + $0x100] sm:$0xff]
      %v271 = vld [vmem:[%s217 + $0x108] sm:$0xff]
      %v272 = vld [vmem:[%s217 + $0x110] sm:$0xff]
      %v273 = vld [vmem:[%s217 + $0x118] sm:$0xff]
      %v274 = vld [vmem:[%s217 + $0x120] sm:$0xff]
      %v275 = vld [vmem:[%s217 + $0x128] sm:$0xff]
      %v276 = vld [vmem:[%s217 + $0x130] sm:$0xff]
      %v277 = vld [vmem:[%s217 + $0x138] sm:$0xff]
      %v278 = vld [vmem:[%s217 + $0x140] sm:$0xff]
      %v279 = vld [vmem:[%s217 + $0x148] sm:$0xff]
      %v280 = vld [vmem:[%s217 + $0x150] sm:$0xff]
      %v281 = vld [vmem:[%s217 + $0x158] sm:$0xff]
      %v282 = vld [vmem:[%s217 + $0x160] sm:$0xff]
      %v283 = vld [vmem:[%s217 + $0x168] sm:$0xff]
      %v284 = vld [vmem:[%s217 + $0x170] sm:$0xff]
      %v285 = vld [vmem:[%s217 + $0x178] sm:$0xff]
      %v286 = vld [vmem:[%s217 + $0x180] sm:$0xff]
      %v287 = vld [vmem:[%s217 + $0x188] sm:$0xff]
      %v288 = vld [vmem:[%s217 + $0x190] sm:$0xff]
      %v289 = vld [vmem:[%s217 + $0x198] sm:$0xff]
      %v290 = vld [vmem:[%s217 + $0x1a0] sm:$0xff]
      %v291 = vld [vmem:[%s217 + $0x1a8] sm:$0xff]
      %v292 = vld [vmem:[%s217 + $0x1b0] sm:$0xff]
      %v293 = vld [vmem:[%s217 + $0x1b8] sm:$0xff]
      %v294 = vld [vmem:[%s217 + $0x1c0] sm:$0xff]
      %v295 = vld [vmem:[%s217 + $0x1c8] sm:$0xff]
      %v296 = vld [vmem:[%s217 + $0x1d0] sm:$0xff]
      %v297 = vld [vmem:[%s217 + $0x1d8] sm:$0xff]
      %v298 = vld [vmem:[%s217 + $0x1e0] sm:$0xff]
      %v299 = vld [vmem:[%s217 + $0x1e8] sm:$0xff]
      %v300 = vld [vmem:[%s217 + $0x1f0] sm:$0xff]
      %v301 = vld [vmem:[%s217 + $0x1f8] sm:$0xff]
      %v302 = vld [vmem:[%s217 + $0x200] sm:$0xff]
      %v303 = vld [vmem:[%s217 + $0x208] sm:$0xff]
      %v304 = vld [vmem:[%s217 + $0x210] sm:$0xff]
      %v305 = vld [vmem:[%s217 + $0x218] sm:$0xff]
      %v306 = vld [vmem:[%s217 + $0x220] sm:$0xff]
      %v307 = vld [vmem:[%s217 + $0x228] sm:$0xff]
      %v308 = vld [vmem:[%s217 + $0x230] sm:$0xff]
      %v309 = vld [vmem:[%s217 + $0x238] sm:$0xff]
      %v310 = vld [vmem:[%s217 + $0x240] sm:$0xff]
      %v311 = vld [vmem:[%s217 + $0x248] sm:$0xff]
      %v312 = vld [vmem:[%s217 + $0x250] sm:$0xff]
      %v313 = vld [vmem:[%s217 + $0x258] sm:$0xff]
      %v314 = vld [vmem:[%s217 + $0x260] sm:$0xff]
      %v315 = vld [vmem:[%s217 + $0x268] sm:$0xff]
      %v316 = vld [vmem:[%s217 + $0x270] sm:$0xff]
      %v317 = vld [vmem:[%s217 + $0x278] sm:$0xff]
      %v318 = vld [vmem:[%s217 + $0x280] sm:$0xff]
      %v319 = vld [vmem:[%s217 + $0x288] sm:$0xff]
      %v320 = vld [vmem:[%s217 + $0x290] sm:$0xff]
      %v321 = vld [vmem:[%s217 + $0x298] sm:$0xff]
      %v322 = vld [vmem:[%s217 + $0x2a0] sm:$0xff]
      %v323 = vld [vmem:[%s217 + $0x2a8] sm:$0xff]
      %v324 = vld [vmem:[%s217 + $0x2b0] sm:$0xff]
      %v325 = vld [vmem:[%s217 + $0x2b8] sm:$0xff]
      %v326 = vld [vmem:[%s217 + $0x2c0] sm:$0xff]
      %v327 = vld [vmem:[%s217 + $0x2c8] sm:$0xff]
      %v328 = vld [vmem:[%s217 + $0x2d0] sm:$0xff]
      %v329 = vld [vmem:[%s217 + $0x2d8] sm:$0xff]
      %v330 = vld [vmem:[%s217 + $0x2e0] sm:$0xff]
      %v331 = vld [vmem:[%s217 + $0x2e8] sm:$0xff]
      %v332 = vld [vmem:[%s217 + $0x2f0] sm:$0xff]
      %v333 = vld [vmem:[%s217 + $0x2f8] sm:$0xff]
      %v334 = vld [vmem:[%s217 + $0x300] sm:$0xff]
      %v335 = vld [vmem:[%s217 + $0x308] sm:$0xff]
      %v336 = vld [vmem:[%s217 + $0x310] sm:$0xff]
      %v337 = vld [vmem:[%s217 + $0x318] sm:$0xff]
      %v338 = vld [vmem:[%s217 + $0x320] sm:$0xff]
      %v339 = vld [vmem:[%s217 + $0x328] sm:$0xff]
      %v340 = vld [vmem:[%s217 + $0x330] sm:$0xff]
      %v341 = vld [vmem:[%s217 + $0x338] sm:$0xff]
      %v342 = vld [vmem:[%s217 + $0x340] sm:$0xff]
      %v343 = vld [vmem:[%s217 + $0x348] sm:$0xff]
      %v344 = vld [vmem:[%s217 + $0x350] sm:$0xff]
      %v345 = vld [vmem:[%s217 + $0x358] sm:$0xff]
      %v346 = vld [vmem:[%s217 + $0x360] sm:$0xff]
      %v347 = vld [vmem:[%s217 + $0x368] sm:$0xff]
      %v348 = vld [vmem:[%s217 + $0x370] sm:$0xff]
      %v349 = vld [vmem:[%s217 + $0x378] sm:$0xff]
      %v350 = vld [vmem:[%s217 + $0x380] sm:$0xff]
      %v351 = vld [vmem:[%s217 + $0x388] sm:$0xff]
      %v352 = vld [vmem:[%s217 + $0x390] sm:$0xff]
      %v353 = vld [vmem:[%s217 + $0x398] sm:$0xff]
      %v354 = vld [vmem:[%s217 + $0x3a0] sm:$0xff]
      %v355 = vld [vmem:[%s217 + $0x3a8] sm:$0xff]
      %v356 = vld [vmem:[%s217 + $0x3b0] sm:$0xff]
      %v357 = vld [vmem:[%s217 + $0x3b8] sm:$0xff]
      %v358 = vld [vmem:[%s217 + $0x3c0] sm:$0xff]
      %v359 = vld [vmem:[%s217 + $0x3c8] sm:$0xff]
      %v360 = vld [vmem:[%s217 + $0x3d0] sm:$0xff]
      %v361 = vld [vmem:[%s217 + $0x3d8] sm:$0xff]
      %v362 = vld [vmem:[%s217 + $0x3e0] sm:$0xff]
      %v363 = vld [vmem:[%s217 + $0x3e8] sm:$0xff]
      %v364 = vld [vmem:[%s217 + $0x3f0] sm:$0xff]
      %v365 = vld [vmem:[%s217 + $0x3f8] sm:$0xff]
      %v366 = vld [vmem:[%s217 + $0x400] sm:$0xff]
      %v367 = vld [vmem:[%s217 + $0x408] sm:$0xff]
      %v368 = vld [vmem:[%s217 + $0x410] sm:$0xff]
      %v369 = vld [vmem:[%s217 + $0x418] sm:$0xff]
      %v370 = vld [vmem:[%s217 + $0x420] sm:$0xff]
      %v371 = vld [vmem:[%s217 + $0x428] sm:$0xff]
      %v372 = vld [vmem:[%s217 + $0x430] sm:$0xff]
      %v373 = vld [vmem:[%s217 + $0x438] sm:$0xff]
      %v374 = vld [vmem:[%s217 + $0x440] sm:$0xff]
      %v375 = vld [vmem:[%s217 + $0x448] sm:$0xff]
      %v376 = vld [vmem:[%s217 + $0x450] sm:$0xff]
      %v377 = vld [vmem:[%s217 + $0x458] sm:$0xff]
      %v378 = vld [vmem:[%s217 + $0x460] sm:$0xff]
      %v379 = vld [vmem:[%s217 + $0x468] sm:$0xff]
      %v380 = vld [vmem:[%s217 + $0x470] sm:$0xff]
      %v381 = vld [vmem:[%s217 + $0x478] sm:$0xff]
      %v387 = vunpack.c.l.b16 %v233
      %v388 = vunpack.c.h.b16 %v233
      %v389 = vunpack.c.l.b16 %v234
      %v390 = vunpack.c.h.b16 %v234
      %v391 = vunpack.c.l.b16 %v235
      %v392 = vunpack.c.h.b16 %v235
      %v393 = vunpack.c.l.b16 %v236
      %v394 = vunpack.c.h.b16 %v236
      %v395 = vunpack.c.l.b16 %v237
      %v396 = vpack.c.b16 %v387, %v387
      %v397 = vpack.c.b16 %v388, %v388
      %v398 = vpack.c.b16 %v389, %v389
      %v399 = vpack.c.b16 %v390, %v390
      %v400 = vpack.c.b16 %v391, %v391
      %v401 = vpack.c.b16 %v392, %v392
      %v402 = vpack.c.b16 %v393, %v393
      %v403 = vpack.c.b16 %v394, %v394
      %v404 = vpack.c.b16 %v395, %v395
      %v558 = vunpack.c.l.b16 %v238
      %v559 = vunpack.c.h.b16 %v238
      %v560 = vunpack.c.l.b16 %v239
      %v561 = vunpack.c.h.b16 %v239
      %v562 = vunpack.c.l.b16 %v240
      %v563 = vunpack.c.h.b16 %v240
      %v564 = vunpack.c.l.b16 %v241
      %v565 = vunpack.c.h.b16 %v241
      %v566 = vunpack.c.l.b16 %v242
      %v567 = vunpack.c.h.b16 %v242
      %v568 = vunpack.c.l.b16 %v243
      %v569 = vunpack.c.h.b16 %v243
      %v570 = vunpack.c.l.b16 %v244
      %v571 = vunpack.c.h.b16 %v244
      %v572 = vunpack.c.l.b16 %v245
      %v573 = vunpack.c.h.b16 %v245
      %v574 = vunpack.c.l.b16 %v246
      %v575 = vunpack.c.h.b16 %v246
      %v576 = vunpack.c.l.b16 %v247
      %v577 = vunpack.c.h.b16 %v247
      %v578 = vunpack.c.l.b16 %v248
      %v579 = vunpack.c.h.b16 %v248
      %v580 = vunpack.c.l.b16 %v249
      %v581 = vunpack.c.h.b16 %v249
      %v582 = vunpack.c.l.b16 %v250
      %v583 = vunpack.c.h.b16 %v250
      %v584 = vunpack.c.l.b16 %v251
      %v585 = vunpack.c.h.b16 %v251
      %v586 = vunpack.c.l.b16 %v252
      %v587 = vunpack.c.h.b16 %v252
      %v588 = vunpack.c.l.b16 %v253
      %v589 = vunpack.c.h.b16 %v253
      %v590 = vunpack.c.l.b16 %v254
      %v591 = vunpack.c.h.b16 %v254
      %v592 = vunpack.c.l.b16 %v255
      %v593 = vunpack.c.h.b16 %v255
      %v594 = vunpack.c.l.b16 %v256
      %v595 = vunpack.c.h.b16 %v256
      %v596 = vunpack.c.l.b16 %v257
      %v597 = vunpack.c.h.b16 %v257
      %v598 = vunpack.c.l.b16 %v258
      %v599 = vunpack.c.h.b16 %v258
      %v600 = vunpack.c.l.b16 %v259
      %v601 = vunpack.c.h.b16 %v259
      %v602 = vunpack.c.l.b16 %v260
      %v603 = vunpack.c.h.b16 %v260
      %v604 = vunpack.c.l.b16 %v261
      %v605 = vunpack.c.h.b16 %v261
      %v606 = vunpack.c.l.b16 %v262
      %v607 = vunpack.c.h.b16 %v262
      %v608 = vunpack.c.l.b16 %v263
      %v609 = vunpack.c.h.b16 %v263
      %v610 = vunpack.c.l.b16 %v264
      %v611 = vunpack.c.h.b16 %v264
      %v612 = vunpack.c.l.b16 %v265
      %v613 = vunpack.c.h.b16 %v265
      %v614 = vunpack.c.l.b16 %v266
      %v615 = vunpack.c.h.b16 %v266
      %v616 = vunpack.c.l.b16 %v267
      %v617 = vunpack.c.h.b16 %v267
      %v618 = vunpack.c.l.b16 %v268
      %v619 = vunpack.c.h.b16 %v268
      %v620 = vunpack.c.l.b16 %v269
      %v621 = vunpack.c.h.b16 %v269
      %v622 = vunpack.c.l.b16 %v270
      %v623 = vunpack.c.h.b16 %v270
      %v624 = vunpack.c.l.b16 %v271
      %v625 = vunpack.c.h.b16 %v271
      %v626 = vunpack.c.l.b16 %v272
      %v627 = vunpack.c.h.b16 %v272
      %v628 = vunpack.c.l.b16 %v273
      %v629 = vunpack.c.h.b16 %v273
      %v630 = vunpack.c.l.b16 %v274
      %v631 = vunpack.c.h.b16 %v274
      %v632 = vunpack.c.l.b16 %v275
      %v633 = vunpack.c.h.b16 %v275
      %v634 = vunpack.c.l.b16 %v276
      %v635 = vunpack.c.h.b16 %v276
      %v636 = vunpack.c.l.b16 %v277
      %v637 = vunpack.c.h.b16 %v277
      %v638 = vunpack.c.l.b16 %v278
      %v639 = vunpack.c.h.b16 %v278
      %v640 = vunpack.c.l.b16 %v279
      %v641 = vunpack.c.h.b16 %v279
      %v642 = vunpack.c.l.b16 %v280
      %v643 = vunpack.c.h.b16 %v280
      %v644 = vunpack.c.l.b16 %v281
      %v645 = vunpack.c.h.b16 %v281
      %v646 = vunpack.c.l.b16 %v282
      %v647 = vunpack.c.h.b16 %v282
      %v648 = vunpack.c.l.b16 %v283
      %v649 = vunpack.c.h.b16 %v283
      %v650 = vunpack.c.l.b16 %v284
      %v651 = vunpack.c.h.b16 %v284
      %v652 = vunpack.c.l.b16 %v285
      %v653 = vunpack.c.h.b16 %v285
      %v654 = vunpack.c.l.b16 %v286
      %v655 = vunpack.c.h.b16 %v286
      %v656 = vunpack.c.l.b16 %v287
      %v657 = vunpack.c.h.b16 %v287
      %v658 = vunpack.c.l.b16 %v288
      %v659 = vunpack.c.h.b16 %v288
      %v660 = vunpack.c.l.b16 %v289
      %v661 = vunpack.c.h.b16 %v289
      %v662 = vunpack.c.l.b16 %v290
      %v663 = vunpack.c.h.b16 %v290
      %v664 = vunpack.c.l.b16 %v291
      %v665 = vunpack.c.h.b16 %v291
      %v666 = vunpack.c.l.b16 %v292
      %v667 = vunpack.c.h.b16 %v292
      %v668 = vunpack.c.l.b16 %v293
      %v669 = vunpack.c.h.b16 %v293
      %v670 = vunpack.c.l.b16 %v294
      %v671 = vunpack.c.h.b16 %v294
      %v672 = vunpack.c.l.b16 %v295
      %v673 = vunpack.c.h.b16 %v295
      %v674 = vunpack.c.l.b16 %v296
      %v675 = vunpack.c.h.b16 %v296
      %v676 = vunpack.c.l.b16 %v297
      %v677 = vunpack.c.h.b16 %v297
      %v678 = vunpack.c.l.b16 %v298
      %v679 = vunpack.c.h.b16 %v298
      %v680 = vunpack.c.l.b16 %v299
      %v681 = vunpack.c.h.b16 %v299
      %v682 = vunpack.c.l.b16 %v300
      %v683 = vunpack.c.h.b16 %v300
      %v684 = vunpack.c.l.b16 %v301
      %v685 = vunpack.c.h.b16 %v301
      %v686 = vunpack.c.l.b16 %v302
      %v687 = vunpack.c.h.b16 %v302
      %v688 = vunpack.c.l.b16 %v303
      %v689 = vunpack.c.h.b16 %v303
      %v690 = vunpack.c.l.b16 %v304
      %v691 = vunpack.c.h.b16 %v304
      %v692 = vunpack.c.l.b16 %v305
      %v693 = vunpack.c.h.b16 %v305
      %v694 = vunpack.c.l.b16 %v306
      %v695 = vunpack.c.h.b16 %v306
      %v696 = vunpack.c.l.b16 %v307
      %v697 = vunpack.c.h.b16 %v307
      %v698 = vunpack.c.l.b16 %v308
      %v699 = vunpack.c.h.b16 %v308
      %v700 = vunpack.c.l.b16 %v309
      %v701 = vunpack.c.h.b16 %v309
      %v702 = vunpack.c.l.b16 %v310
      %v703 = vunpack.c.h.b16 %v310
      %v704 = vunpack.c.l.b16 %v311
      %v705 = vunpack.c.h.b16 %v311
      %v706 = vunpack.c.l.b16 %v312
      %v707 = vunpack.c.h.b16 %v312
      %v708 = vunpack.c.l.b16 %v313
      %v709 = vunpack.c.h.b16 %v313
      %v710 = vunpack.c.l.b16 %v314
      %v711 = vunpack.c.h.b16 %v314
      %v712 = vunpack.c.l.b16 %v315
      %v713 = vunpack.c.h.b16 %v315
      %v714 = vunpack.c.l.b16 %v316
      %v715 = vunpack.c.h.b16 %v316
      %v716 = vunpack.c.l.b16 %v317
      %v717 = vunpack.c.h.b16 %v317
      %v718 = vunpack.c.l.b16 %v318
      %v719 = vunpack.c.h.b16 %v318
      %v720 = vunpack.c.l.b16 %v319
      %v721 = vunpack.c.h.b16 %v319
      %v722 = vunpack.c.l.b16 %v320
      %v723 = vunpack.c.h.b16 %v320
      %v724 = vunpack.c.l.b16 %v321
      %v725 = vunpack.c.h.b16 %v321
      %v726 = vunpack.c.l.b16 %v322
      %v727 = vunpack.c.h.b16 %v322
      %v728 = vunpack.c.l.b16 %v323
      %v729 = vunpack.c.h.b16 %v323
      %v730 = vunpack.c.l.b16 %v324
      %v731 = vunpack.c.h.b16 %v324
      %v732 = vunpack.c.l.b16 %v325
      %v733 = vunpack.c.h.b16 %v325
      %v734 = vunpack.c.l.b16 %v326
      %v735 = vunpack.c.h.b16 %v326
      %v736 = vunpack.c.l.b16 %v327
      %v737 = vunpack.c.h.b16 %v327
      %v738 = vunpack.c.l.b16 %v328
      %v739 = vunpack.c.h.b16 %v328
      %v740 = vunpack.c.l.b16 %v329
      %v741 = vunpack.c.h.b16 %v329
      %v742 = vunpack.c.l.b16 %v330
      %v743 = vunpack.c.h.b16 %v330
      %v744 = vunpack.c.l.b16 %v331
      %v745 = vunpack.c.h.b16 %v331
      %v746 = vunpack.c.l.b16 %v332
      %v747 = vunpack.c.h.b16 %v332
      %v748 = vunpack.c.l.b16 %v333
      %v749 = vunpack.c.h.b16 %v333
      %v750 = vunpack.c.l.b16 %v334
      %v751 = vunpack.c.h.b16 %v334
      %v752 = vunpack.c.l.b16 %v335
      %v753 = vunpack.c.h.b16 %v335
      %v754 = vunpack.c.l.b16 %v336
      %v755 = vunpack.c.h.b16 %v336
      %v756 = vunpack.c.l.b16 %v337
      %v757 = vunpack.c.h.b16 %v337
      %v758 = vunpack.c.l.b16 %v338
      %v759 = vunpack.c.h.b16 %v338
      %v760 = vunpack.c.l.b16 %v339
      %v761 = vunpack.c.h.b16 %v339
      %v762 = vunpack.c.l.b16 %v340
      %v763 = vunpack.c.h.b16 %v340
      %v764 = vunpack.c.l.b16 %v341
      %v765 = vunpack.c.h.b16 %v341
      %v766 = vunpack.c.l.b16 %v342
      %v767 = vunpack.c.h.b16 %v342
      %v768 = vunpack.c.l.b16 %v343
      %v769 = vunpack.c.h.b16 %v343
      %v770 = vunpack.c.l.b16 %v344
      %v771 = vunpack.c.h.b16 %v344
      %v772 = vunpack.c.l.b16 %v345
      %v773 = vunpack.c.h.b16 %v345
      %v774 = vunpack.c.l.b16 %v346
      %v775 = vunpack.c.h.b16 %v346
      %v776 = vunpack.c.l.b16 %v347
      %v777 = vunpack.c.h.b16 %v347
      %v778 = vunpack.c.l.b16 %v348
      %v779 = vunpack.c.h.b16 %v348
      %v780 = vunpack.c.l.b16 %v349
      %v781 = vunpack.c.h.b16 %v349
      %v782 = vunpack.c.l.b16 %v350
      %v783 = vunpack.c.h.b16 %v350
      %v784 = vunpack.c.l.b16 %v351
      %v785 = vunpack.c.h.b16 %v351
      %v786 = vunpack.c.l.b16 %v352
      %v787 = vunpack.c.h.b16 %v352
      %v788 = vunpack.c.l.b16 %v353
      %v789 = vunpack.c.h.b16 %v353
      %v790 = vunpack.c.l.b16 %v354
      %v791 = vunpack.c.h.b16 %v354
      %v792 = vunpack.c.l.b16 %v355
      %v793 = vunpack.c.h.b16 %v355
      %v794 = vunpack.c.l.b16 %v356
      %v795 = vunpack.c.h.b16 %v356
      %v796 = vunpack.c.l.b16 %v357
      %v797 = vunpack.c.h.b16 %v357
      %v798 = vunpack.c.l.b16 %v358
      %v799 = vunpack.c.h.b16 %v358
      %v800 = vunpack.c.l.b16 %v359
      %v801 = vunpack.c.h.b16 %v359
      %v802 = vunpack.c.l.b16 %v360
      %v803 = vunpack.c.h.b16 %v360
      %v804 = vunpack.c.l.b16 %v361
      %v805 = vunpack.c.h.b16 %v361
      %v806 = vunpack.c.l.b16 %v362
      %v807 = vunpack.c.h.b16 %v362
      %v808 = vunpack.c.l.b16 %v363
      %v809 = vunpack.c.h.b16 %v363
      %v810 = vunpack.c.l.b16 %v364
      %v811 = vunpack.c.h.b16 %v364
      %v812 = vunpack.c.l.b16 %v365
      %v813 = vunpack.c.h.b16 %v365
      %v814 = vunpack.c.l.b16 %v366
      %v815 = vunpack.c.h.b16 %v366
      %v816 = vunpack.c.l.b16 %v367
      %v817 = vunpack.c.h.b16 %v367
      %v818 = vunpack.c.l.b16 %v368
      %v819 = vunpack.c.h.b16 %v368
      %v820 = vunpack.c.l.b16 %v369
      %v821 = vunpack.c.h.b16 %v369
      %v822 = vunpack.c.l.b16 %v370
      %v823 = vunpack.c.h.b16 %v370
      %v824 = vunpack.c.l.b16 %v371
      %v825 = vunpack.c.h.b16 %v371
      %v826 = vunpack.c.l.b16 %v372
      %v827 = vunpack.c.h.b16 %v372
      %v828 = vunpack.c.l.b16 %v373
      %v829 = vunpack.c.h.b16 %v373
      %v830 = vunpack.c.l.b16 %v374
      %v831 = vunpack.c.h.b16 %v374
      %v832 = vunpack.c.l.b16 %v375
      %v833 = vunpack.c.h.b16 %v375
      %v834 = vunpack.c.l.b16 %v376
      %v835 = vunpack.c.h.b16 %v376
      %v836 = vunpack.c.l.b16 %v377
      %v837 = vunpack.c.h.b16 %v377
      %v838 = vunpack.c.l.b16 %v378
      %v839 = vunpack.c.h.b16 %v378
      %v840 = vunpack.c.l.b16 %v379
      %v841 = vunpack.c.h.b16 %v379
      %v842 = vunpack.c.l.b16 %v380
      %v843 = vunpack.c.h.b16 %v380
      %v844 = vunpack.c.l.b16 %v381
      %v845 = vunpack.c.h.b16 %v381
      %v846 = vpack.c.b16 %v560, %v558
      %v847 = vpack.c.b16 %v561, %v559
      %v848 = vpack.c.b16 %v564, %v562
      %v849 = vpack.c.b16 %v565, %v563
      %v850 = vpack.c.b16 %v568, %v566
      %v851 = vpack.c.b16 %v569, %v567
      %v852 = vpack.c.b16 %v572, %v570
      %v853 = vpack.c.b16 %v573, %v571
      %v854 = vpack.c.b16 %v576, %v574
      %v855 = vpack.c.b16 %v577, %v575
      %v856 = vpack.c.b16 %v580, %v578
      %v857 = vpack.c.b16 %v581, %v579
      %v858 = vpack.c.b16 %v584, %v582
      %v859 = vpack.c.b16 %v585, %v583
      %v860 = vpack.c.b16 %v588, %v586
      %v861 = vpack.c.b16 %v589, %v587
      %v862 = vpack.c.b16 %v592, %v590
      %v863 = vpack.c.b16 %v593, %v591
      %v864 = vpack.c.b16 %v596, %v594
      %v865 = vpack.c.b16 %v597, %v595
      %v866 = vpack.c.b16 %v600, %v598
      %v867 = vpack.c.b16 %v601, %v599
      %v868 = vpack.c.b16 %v604, %v602
      %v869 = vpack.c.b16 %v605, %v603
      %v870 = vpack.c.b16 %v608, %v606
      %v871 = vpack.c.b16 %v609, %v607
      %v872 = vpack.c.b16 %v612, %v610
      %v873 = vpack.c.b16 %v613, %v611
      %v874 = vpack.c.b16 %v616, %v614
      %v875 = vpack.c.b16 %v617, %v615
      %v876 = vpack.c.b16 %v620, %v618
      %v877 = vpack.c.b16 %v621, %v619
      %v878 = vpack.c.b16 %v624, %v622
      %v879 = vpack.c.b16 %v625, %v623
      %v880 = vpack.c.b16 %v628, %v626
      %v881 = vpack.c.b16 %v629, %v627
      %v882 = vpack.c.b16 %v632, %v630
      %v883 = vpack.c.b16 %v633, %v631
      %v884 = vpack.c.b16 %v636, %v634
      %v885 = vpack.c.b16 %v637, %v635
      %v886 = vpack.c.b16 %v640, %v638
      %v887 = vpack.c.b16 %v641, %v639
      %v888 = vpack.c.b16 %v644, %v642
      %v889 = vpack.c.b16 %v645, %v643
      %v890 = vpack.c.b16 %v648, %v646
      %v891 = vpack.c.b16 %v649, %v647
      %v892 = vpack.c.b16 %v652, %v650
      %v893 = vpack.c.b16 %v653, %v651
      %v894 = vpack.c.b16 %v656, %v654
      %v895 = vpack.c.b16 %v657, %v655
      %v896 = vpack.c.b16 %v660, %v658
      %v897 = vpack.c.b16 %v661, %v659
      %v898 = vpack.c.b16 %v664, %v662
      %v899 = vpack.c.b16 %v665, %v663
      %v900 = vpack.c.b16 %v668, %v666
      %v901 = vpack.c.b16 %v669, %v667
      %v902 = vpack.c.b16 %v672, %v670
      %v903 = vpack.c.b16 %v673, %v671
      %v904 = vpack.c.b16 %v676, %v674
      %v905 = vpack.c.b16 %v677, %v675
      %v906 = vpack.c.b16 %v680, %v678
      %v907 = vpack.c.b16 %v681, %v679
      %v908 = vpack.c.b16 %v684, %v682
      %v909 = vpack.c.b16 %v685, %v683
      %v910 = vpack.c.b16 %v688, %v686
      %v911 = vpack.c.b16 %v689, %v687
      %v912 = vpack.c.b16 %v692, %v690
      %v913 = vpack.c.b16 %v693, %v691
      %v914 = vpack.c.b16 %v696, %v694
      %v915 = vpack.c.b16 %v697, %v695
      %v916 = vpack.c.b16 %v700, %v698
      %v917 = vpack.c.b16 %v701, %v699
      %v918 = vpack.c.b16 %v704, %v702
      %v919 = vpack.c.b16 %v705, %v703
      %v920 = vpack.c.b16 %v708, %v706
      %v921 = vpack.c.b16 %v709, %v707
      %v922 = vpack.c.b16 %v712, %v710
      %v923 = vpack.c.b16 %v713, %v711
      %v924 = vpack.c.b16 %v716, %v714
      %v925 = vpack.c.b16 %v717, %v715
      %v926 = vpack.c.b16 %v720, %v718
      %v927 = vpack.c.b16 %v721, %v719
      %v928 = vpack.c.b16 %v724, %v722
      %v929 = vpack.c.b16 %v725, %v723
      %v930 = vpack.c.b16 %v728, %v726
      %v931 = vpack.c.b16 %v729, %v727
      %v932 = vpack.c.b16 %v732, %v730
      %v933 = vpack.c.b16 %v733, %v731
      %v934 = vpack.c.b16 %v736, %v734
      %v935 = vpack.c.b16 %v737, %v735
      %v936 = vpack.c.b16 %v740, %v738
      %v937 = vpack.c.b16 %v741, %v739
      %v938 = vpack.c.b16 %v744, %v742
      %v939 = vpack.c.b16 %v745, %v743
      %v940 = vpack.c.b16 %v748, %v746
      %v941 = vpack.c.b16 %v749, %v747
      %v942 = vpack.c.b16 %v752, %v750
      %v943 = vpack.c.b16 %v753, %v751
      %v944 = vpack.c.b16 %v756, %v754
      %v945 = vpack.c.b16 %v757, %v755
      %v946 = vpack.c.b16 %v760, %v758
      %v947 = vpack.c.b16 %v761, %v759
      %v948 = vpack.c.b16 %v764, %v762
      %v949 = vpack.c.b16 %v765, %v763
      %v950 = vpack.c.b16 %v768, %v766
      %v951 = vpack.c.b16 %v769, %v767
      %v952 = vpack.c.b16 %v772, %v770
      %v953 = vpack.c.b16 %v773, %v771
      %v954 = vpack.c.b16 %v776, %v774
      %v955 = vpack.c.b16 %v777, %v775
      %v956 = vpack.c.b16 %v780, %v778
      %v957 = vpack.c.b16 %v781, %v779
      %v958 = vpack.c.b16 %v784, %v782
      %v959 = vpack.c.b16 %v785, %v783
      %v960 = vpack.c.b16 %v788, %v786
      %v961 = vpack.c.b16 %v789, %v787
      %v962 = vpack.c.b16 %v792, %v790
      %v963 = vpack.c.b16 %v793, %v791
      %v964 = vpack.c.b16 %v796, %v794
      %v965 = vpack.c.b16 %v797, %v795
      %v966 = vpack.c.b16 %v800, %v798
      %v967 = vpack.c.b16 %v801, %v799
      %v968 = vpack.c.b16 %v804, %v802
      %v969 = vpack.c.b16 %v805, %v803
      %v970 = vpack.c.b16 %v808, %v806
      %v971 = vpack.c.b16 %v809, %v807
      %v972 = vpack.c.b16 %v812, %v810
      %v973 = vpack.c.b16 %v813, %v811
      %v974 = vpack.c.b16 %v816, %v814
      %v975 = vpack.c.b16 %v817, %v815
      %v976 = vpack.c.b16 %v820, %v818
      %v977 = vpack.c.b16 %v821, %v819
      %v978 = vpack.c.b16 %v824, %v822
      %v979 = vpack.c.b16 %v825, %v823
      %v980 = vpack.c.b16 %v828, %v826
      %v981 = vpack.c.b16 %v829, %v827
      %v982 = vpack.c.b16 %v832, %v830
      %v983 = vpack.c.b16 %v833, %v831
      %v984 = vpack.c.b16 %v836, %v834
      %v985 = vpack.c.b16 %v837, %v835
      %v986 = vpack.c.b16 %v840, %v838
      %v987 = vpack.c.b16 %v841, %v839
      %v988 = vpack.c.b16 %v844, %v842
      %v989 = vpack.c.b16 %v845, %v843
      %1134 = vmatprep.subr.bf16.mxu0 %v847
      %1135 = vmatpush1.bf16.msra.mxu0 %v846
      %1136 = vmatprep.subr.bf16.mxu0 %v849
      %1137 = vmatpush1.bf16.msra.mxu0 %v848
      %1138 = vmatprep.subr.bf16.mxu0 %v851
      %1139 = vmatpush1.bf16.msra.mxu0 %v850
      %1140 = vmatprep.subr.bf16.mxu0 %v853
      %1141 = vmatpush1.bf16.msra.mxu0 %v852
      %1142 = vmatprep.subr.bf16.mxu0 %v855
      %1143 = vmatpush1.bf16.msra.mxu0 %v854
      %1144 = vmatprep.subr.bf16.mxu0 %v857
      %1145 = vmatpush1.bf16.msra.mxu0 %v856
      %1146 = vmatprep.subr.bf16.mxu0 %v859
      %1147 = vmatpush1.bf16.msra.mxu0 %v858
      %1148 = vmatprep.subr.bf16.mxu0 %v861
      %1149 = vmatpush1.bf16.msra.mxu0 %v860
      %1150 = vmatprep.subr.bf16.mxu0 %v863
      %1151 = vmatpush1.bf16.msra.mxu0 %v862
      %1152 = vmatprep.subr.bf16.mxu0 %v865
      %1153 = vmatpush1.bf16.msra.mxu0 %v864
      %1154 = vmatprep.subr.bf16.mxu0 %v867
      %1155 = vmatpush1.bf16.msra.mxu0 %v866
      %1156 = vmatprep.subr.bf16.mxu0 %v869
      %1157 = vmatpush1.bf16.msra.mxu0 %v868
      %1158 = vmatprep.subr.bf16.mxu0 %v871
      %1159 = vmatpush1.bf16.msra.mxu0 %v870
      %1160 = vmatprep.subr.bf16.mxu0 %v873
      %1161 = vmatpush1.bf16.msra.mxu0 %v872
      %1162 = vmatprep.subr.bf16.mxu0 %v875
      %1163 = vmatpush1.bf16.msra.mxu0 %v874
      %1164 = vmatprep.subr.bf16.mxu0 %v877
      %1165 = vmatpush1.bf16.msra.mxu0 %v876
      %1166 = vmatprep.mubr.bf16.mxu0 %v397
      %1167 = vmatmul.mubr.bf16.gmra.mrb[0].mxu0 %v396
      %v1168 = vpop.f32.mrb[0].mxu0
      %v1169 = vadd.f32 0.0, %v1168
      %v1170 = vpop.f32.mrb[0].mxu0
      %v1171 = vadd.f32 0.0, %v1170
      %v1172 = vpop.f32.mrb[0].mxu0
      %v1173 = vpop.f32.mrb[0].mxu0
      %1174 = vdwg.mxu0
      %1175 = vmatprep.subr.bf16.mxu0 %v879
      %1176 = vmatpush1.bf16.msra.mxu0 %v878
      %1177 = vmatprep.subr.bf16.mxu0 %v881
      %1178 = vmatpush1.bf16.msra.mxu0 %v880
      %1179 = vmatprep.subr.bf16.mxu0 %v883
      %1180 = vmatpush1.bf16.msra.mxu0 %v882
      %1181 = vmatprep.subr.bf16.mxu0 %v885
      %1182 = vmatpush1.bf16.msra.mxu0 %v884
      %1183 = vmatprep.subr.bf16.mxu0 %v887
      %1184 = vmatpush1.bf16.msra.mxu0 %v886
      %1185 = vmatprep.subr.bf16.mxu0 %v889
      %1186 = vmatpush1.bf16.msra.mxu0 %v888
      %1187 = vmatprep.subr.bf16.mxu0 %v891
      %1188 = vmatpush1.bf16.msra.mxu0 %v890
      %1189 = vmatprep.subr.bf16.mxu0 %v893
      %1190 = vmatpush1.bf16.msra.mxu0 %v892
      %1191 = vmatprep.subr.bf16.mxu0 %v895
      %1192 = vmatpush1.bf16.msra.mxu0 %v894
      %1193 = vmatprep.subr.bf16.mxu0 %v897
      %1194 = vmatpush1.bf16.msra.mxu0 %v896
      %1195 = vmatprep.subr.bf16.mxu0 %v899
      %1196 = vmatpush1.bf16.msra.mxu0 %v898
      %1197 = vmatprep.subr.bf16.mxu0 %v901
      %1198 = vmatpush1.bf16.msra.mxu0 %v900
      %1199 = vmatprep.subr.bf16.mxu0 %v903
      %1200 = vmatpush1.bf16.msra.mxu0 %v902
      %1201 = vmatprep.subr.bf16.mxu0 %v905
      %1202 = vmatpush1.bf16.msra.mxu0 %v904
      %1203 = vmatprep.subr.bf16.mxu0 %v907
      %1204 = vmatpush1.bf16.msra.mxu0 %v906
      %1205 = vmatprep.subr.bf16.mxu0 %v909
      %1206 = vmatpush1.bf16.msra.mxu0 %v908
      %1207 = vmatprep.mubr.bf16.mxu0 %v399
      %1208 = vmatmul.mubr.bf16.gmra.mrb[0].mxu0 %v398
      %v1209 = vpop.f32.mrb[0].mxu0
      %v1210 = vadd.f32 %v1169, %v1209
      %v1211 = vpop.f32.mrb[0].mxu0
      %v1212 = vadd.f32 %v1171, %v1211
      %v1213 = vpop.f32.mrb[0].mxu0
      %v1214 = vpop.f32.mrb[0].mxu0
      %1215 = vdwg.mxu0
      %1216 = vmatprep.subr.bf16.mxu0 %v911
      %1217 = vmatpush1.bf16.msra.mxu0 %v910
      %1218 = vmatprep.subr.bf16.mxu0 %v913
      %1219 = vmatpush1.bf16.msra.mxu0 %v912
      %1220 = vmatprep.subr.bf16.mxu0 %v915
      %1221 = vmatpush1.bf16.msra.mxu0 %v914
      %1222 = vmatprep.subr.bf16.mxu0 %v917
      %1223 = vmatpush1.bf16.msra.mxu0 %v916
      %1224 = vmatprep.subr.bf16.mxu0 %v919
      %1225 = vmatpush1.bf16.msra.mxu0 %v918
      %1226 = vmatprep.subr.bf16.mxu0 %v921
      %1227 = vmatpush1.bf16.msra.mxu0 %v920
      %1228 = vmatprep.subr.bf16.mxu0 %v923
      %1229 = vmatpush1.bf16.msra.mxu0 %v922
      %1230 = vmatprep.subr.bf16.mxu0 %v925
      %1231 = vmatpush1.bf16.msra.mxu0 %v924
      %1232 = vmatprep.subr.bf16.mxu0 %v927
      %1233 = vmatpush1.bf16.msra.mxu0 %v926
      %1234 = vmatprep.subr.bf16.mxu0 %v929
      %1235 = vmatpush1.bf16.msra.mxu0 %v928
      %1236 = vmatprep.subr.bf16.mxu0 %v931
      %1237 = vmatpush1.bf16.msra.mxu0 %v930
      %1238 = vmatprep.subr.bf16.mxu0 %v933
      %1239 = vmatpush1.bf16.msra.mxu0 %v932
      %1240 = vmatprep.subr.bf16.mxu0 %v935
      %1241 = vmatpush1.bf16.msra.mxu0 %v934
      %1242 = vmatprep.subr.bf16.mxu0 %v937
      %1243 = vmatpush1.bf16.msra.mxu0 %v936
      %1244 = vmatprep.subr.bf16.mxu0 %v939
      %1245 = vmatpush1.bf16.msra.mxu0 %v938
      %1246 = vmatprep.subr.bf16.mxu0 %v941
      %1247 = vmatpush1.bf16.msra.mxu0 %v940
      %1248 = vmatprep.mubr.bf16.mxu0 %v401
      %1249 = vmatmul.mubr.bf16.gmra.mrb[0].mxu0 %v400
      %v1250 = vpop.f32.mrb[0].mxu0
      %v1251 = vadd.f32 %v1210, %v1250
      %v1252 = vpop.f32.mrb[0].mxu0
      %v1253 = vadd.f32 %v1212, %v1252
      %v1254 = vpop.f32.mrb[0].mxu0
      %v1255 = vpop.f32.mrb[0].mxu0
      %1256 = vdwg.mxu0
      %1257 = vmatprep.subr.bf16.mxu0 %v943
      %1258 = vmatpush1.bf16.msra.mxu0 %v942
      %1259 = vmatprep.subr.bf16.mxu0 %v945
      %1260 = vmatpush1.bf16.msra.mxu0 %v944
      %1261 = vmatprep.subr.bf16.mxu0 %v947
      %1262 = vmatpush1.bf16.msra.mxu0 %v946
      %1263 = vmatprep.subr.bf16.mxu0 %v949
      %1264 = vmatpush1.bf16.msra.mxu0 %v948
      %1265 = vmatprep.subr.bf16.mxu0 %v951
      %1266 = vmatpush1.bf16.msra.mxu0 %v950
      %1267 = vmatprep.subr.bf16.mxu0 %v953
      %1268 = vmatpush1.bf16.msra.mxu0 %v952
      %1269 = vmatprep.subr.bf16.mxu0 %v955
      %1270 = vmatpush1.bf16.msra.mxu0 %v954
      %1271 = vmatprep.subr.bf16.mxu0 %v957
      %1272 = vmatpush1.bf16.msra.mxu0 %v956
      %1273 = vmatprep.subr.bf16.mxu0 %v959
      %1274 = vmatpush1.bf16.msra.mxu0 %v958
      %1275 = vmatprep.subr.bf16.mxu0 %v961
      %1276 = vmatpush1.bf16.msra.mxu0 %v960
      %1277 = vmatprep.subr.bf16.mxu0 %v963
      %1278 = vmatpush1.bf16.msra.mxu0 %v962
      %1279 = vmatprep.subr.bf16.mxu0 %v965
      %1280 = vmatpush1.bf16.msra.mxu0 %v964
      %1281 = vmatprep.subr.bf16.mxu0 %v967
      %1282 = vmatpush1.bf16.msra.mxu0 %v966
      %1283 = vmatprep.subr.bf16.mxu0 %v969
      %1284 = vmatpush1.bf16.msra.mxu0 %v968
      %1285 = vmatprep.subr.bf16.mxu0 %v971
      %1286 = vmatpush1.bf16.msra.mxu0 %v970
      %1287 = vmatprep.subr.bf16.mxu0 %v973
      %1288 = vmatpush1.bf16.msra.mxu0 %v972
      %1289 = vmatprep.mubr.bf16.mxu0 %v403
      %1290 = vmatmul.mubr.bf16.gmra.mrb[0].mxu0 %v402
      %v1291 = vpop.f32.mrb[0].mxu0
      %v1292 = vadd.f32 %v1251, %v1291
      %v1293 = vpop.f32.mrb[0].mxu0
      %v1294 = vadd.f32 %v1253, %v1293
      %v1295 = vpop.f32.mrb[0].mxu0
      %v1296 = vpop.f32.mrb[0].mxu0
      %1297 = vdwg.mxu0
      %1298 = vmatprep.subr.bf16.mxu0 %v975
      %1299 = vmatpush1.bf16.msra.mxu0 %v974
      %1300 = vmatprep.subr.bf16.mxu0 %v977
      %1301 = vmatpush1.bf16.msra.mxu0 %v976
      %1302 = vmatprep.subr.bf16.mxu0 %v979
      %1303 = vmatpush1.bf16.msra.mxu0 %v978
      %1304 = vmatprep.subr.bf16.mxu0 %v981
      %1305 = vmatpush1.bf16.msra.mxu0 %v980
      %1306 = vmatprep.subr.bf16.mxu0 %v983
      %1307 = vmatpush1.bf16.msra.mxu0 %v982
      %1308 = vmatprep.subr.bf16.mxu0 %v985
      %1309 = vmatpush1.bf16.msra.mxu0 %v984
      %1310 = vmatprep.subr.bf16.mxu0 %v987
      %1311 = vmatpush1.bf16.msra.mxu0 %v986
      %1312 = vmatprep.subr.bf16.mxu0 %v989
      %1313 = vmatpush1.bf16.msra.mxu0 %v988
      %1314 = vmatprep.subr.bf16.mxu0 0
      %1315 = vmatpush1.bf16.msra.mxu0 0
      %1316 = vmatprep.subr.bf16.mxu0 0
      %1317 = vmatpush1.bf16.msra.mxu0 0
      %1318 = vmatprep.subr.bf16.mxu0 0
      %1319 = vmatpush1.bf16.msra.mxu0 0
      %1320 = vmatprep.subr.bf16.mxu0 0
      %1321 = vmatpush1.bf16.msra.mxu0 0
      %1322 = vmatprep.subr.bf16.mxu0 0
      %1323 = vmatpush1.bf16.msra.mxu0 0
      %1324 = vmatprep.subr.bf16.mxu0 0
      %1325 = vmatpush1.bf16.msra.mxu0 0
      %1326 = vmatprep.subr.bf16.mxu0 0
      %1327 = vmatpush1.bf16.msra.mxu0 0
      %1328 = vmatprep.subr.bf16.mxu0 0
      %1329 = vmatpush1.bf16.msra.mxu0 0
      %1330 = vmatprep.mubr.bf16.mxu0 0
      %1331 = vmatmul.mubr.bf16.gmra.mrb[0].mxu0 %v404
      %v1332 = vpop.f32.mrb[0].mxu0
      %v1333 = vadd.f32 %v1292, %v1332
      %v1334 = vpop.f32.mrb[0].mxu0
      %v1335 = vadd.f32 %v1294, %v1334
      %v1336 = vpop.f32.mrb[0].mxu0
      %v1337 = vpop.f32.mrb[0].mxu0
      %1338 = vdwg.mxu0
      %v1339 = vadd.f32 %v231, %v1333
      %v1340 = vadd.f32 %v232, %v1335
      %1341 = vst [vmem:[%s223] sm:$0xff] %v1339
      %1342 = vst [vmem:[%s223 + $0x8] sm:$0xff] %v1340
      %p1343 = scmp.eq.s32.totalorder %s19, 1
      // Predicated region
      $region37: #{backbone_forward.19} parent=31 // pred_check
        %p1344 = pneg %p1343
      $region38: #{backbone_forward.19} parent=31 // pred_check_branch
        %1346 = sbr.rel (%p1344) target = $region40
      $region39: #{backbone_forward.19} parent=31 // pred_region
        %v1347 = vld [vmem:[%s223] sm:$0xff]
        %v1348 = vld [vmem:[%s223 + $0x8] sm:$0xff]
        %v1349 = vld [vmem:[%s2] sm:$0x3]
        %v1351 = vlaneseq
        %v1352 = vshrl.u32 %v1351, 7
        %v1353 = vsub.s32 0, %v1352
        %v1354 = vrot.slane %v1349, %v1353
        %v1355 = vlaneseq
        %v1356 = vshrl.u32 %v1355, 7
        %v1357 = vsub.s32 1, %v1356
        %v1358 = vrot.slane %v1349, %v1357
        %v1361 = vadd.f32 %v1347, %v1354
        %v1362 = vadd.f32 %v1348, %v1358
        %v1363 = vmax.f32 %v1361, 0.0
        %v1364 = vmax.f32 %v1362, 0.0
        %1365 = vst [vmem:[%s223] sm:$0xff] %v1363
        %1366 = vst [vmem:[%s223 + $0x8] sm:$0xff] %v1364
      $region40: #{backbone_forward.19} parent=31 // pred_fallthru
        _
      %p1367 = scmp.lt.s32.totalorder %s18, 0
      %s1368 = scalar_select %p1367, %s18, 0
      %s1369 = smul.addr %s1368, 2
      %s1370 = smul.addr %s1369, 8
      %s1371 = scalar_lea.vmem %s3, %s1370
      // Predicated region
      $region41: #{backbone_forward.19} parent=31 // pred_check
        %p1372 = pneg %p119
      $region42: #{backbone_forward.19} parent=31 // pred_check_branch
        %1374 = sbr.rel (%p1372) target = $region44
      $region43: #{backbone_forward.19} parent=31 // pred_region
        _
      $region44: #{backbone_forward.19} parent=31 // pred_fallthru
        _
      // Predicated region
      $region45: #{backbone_forward.19} parent=31 // pred_check
        %p1375 = pneg %p119
      $region46: #{backbone_forward.19} parent=31 // pred_check_branch
        %1377 = sbr.rel (%p1375) target = $region48
      $region47: #{backbone_forward.19} parent=31 // pred_region
        %p1378 = scmp.lt.s32.totalorder %s18, 0
        %s1379 = scalar_select %p1378, %s18, 0
        %s1380 = smul.addr %s1379, 2
        %s1381 = smul.addr %s1380, 8
        %s1382 = scalar_lea.vmem %s3, %s1381
      $region48: #{backbone_forward.19} parent=31 // pred_fallthru
        _
    $region32: #{backbone_forward.19} parent=5 // pred_fallthru
      _
    %p1383 = scmp.le.s32.totalorder 2, %s9
    // Predicated region
    $region49: #{backbone_forward.19} parent=5 // pred_check
      %p1384 = pneg %p1383
    $region50: #{backbone_forward.19} parent=5 // pred_check_branch
      %1386 = sbr.rel (%p1384) target = $region52
    $region51: #{backbone_forward.19} parent=5 // pred_region
      %s1387 = ssub.s32 %s9, 2
    $region52: #{backbone_forward.19} parent=5 // pred_fallthru
      _
  $region6: #{backbone_forward.19} parent=0 // loop_footer
    %s13 = sadd.s32 1, %s9
  $region7: #{backbone_forward.19} parent=0 // loop_footer_branch
    %8 = sbr.rel target = $region3
  $region8: #{backbone_forward.19} parent=0 // loop_exit
    _

// kernel: backbone_forward.20
$region0: #{backbone_forward.20}
  #allocation0 [shape = 'u32[]', space=smem, size = 0x4, offset = 0x4, fixed_abs, tag = 'smem constant byte address 0x4 - core index']
  #allocation1 [shape = 'u32[144,128]{1,0:T(1,128)}', space=vmem, size = 0x12000, scoped, tag = 'internal scratch']
  %s0 = inlined_call_operand.vmem [shape: bf16[8,256], index: 0, kind: input, shape index: {}]
  %s1 = inlined_call_operand.vmem [shape: bf16[256,2048], index: 1, kind: input, shape index: {}]
  %s2 = inlined_call_operand.vmem [shape: f32[1,2048], index: 2, kind: input, shape index: {}]
  %s3 = inlined_call_operand.vmem [shape: f32[8,2048], index: 3, kind: output, shape index: {}]
  %s4 = sld [smem:[#allocation0]]
  $region30: #{backbone_forward.20} parent=0
    _
  %s6 = ssub.s32 1, %s4
  %s7 = scalar_select 0, %s6, %s4
  // Predicated region
  $region2: #{backbone_forward.20} parent=0 // pred_check
    _
  $region3: #{backbone_forward.20} parent=0 // pred_check_branch
    %9 = sbr.rel (0) target = $region5
  $region4: #{backbone_forward.20} parent=0 // pred_region
    _
  $region5: #{backbone_forward.20} parent=0 // pred_fallthru
    _
  // Predicated region
  $region6: #{backbone_forward.20} parent=0 // pred_check
    _
  $region7: #{backbone_forward.20} parent=0 // pred_check_branch
    %11 = sbr.rel (0) target = $region9
  $region8: #{backbone_forward.20} parent=0 // pred_region
    _
  $region9: #{backbone_forward.20} parent=0 // pred_fallthru
    _
  // Predicated region
  $region10: #{backbone_forward.20} parent=0 // pred_check
    _
  $region11: #{backbone_forward.20} parent=0 // pred_check_branch
    %13 = sbr.rel (0) target = $region13
  $region12: #{backbone_forward.20} parent=0 // pred_region
    _
  $region13: #{backbone_forward.20} parent=0 // pred_fallthru
    _
  %p14 = scmp.eq.s32.totalorder 0, 0
  // Predicated region
  $region14: #{backbone_forward.20} parent=0 // pred_check
    %p15 = pneg %p14
  $region15: #{backbone_forward.20} parent=0 // pred_check_branch
    %17 = sbr.rel (%p15) target = $region17
  $region16: #{backbone_forward.20} parent=0 // pred_region
    %18 = vst [vmem:[%s3] sm:$0xff] 0.0
    %19 = vst [vmem:[%s3 + $0x8] sm:$0xff] 0.0
    %20 = vst [vmem:[%s3 + $0x10] sm:$0xff] 0.0
    %21 = vst [vmem:[%s3 + $0x18] sm:$0xff] 0.0
    %22 = vst [vmem:[%s3 + $0x20] sm:$0xff] 0.0
    %23 = vst [vmem:[%s3 + $0x28] sm:$0xff] 0.0
    %24 = vst [vmem:[%s3 + $0x30] sm:$0xff] 0.0
    %25 = vst [vmem:[%s3 + $0x38] sm:$0xff] 0.0
    %26 = vst [vmem:[%s3 + $0x40] sm:$0xff] 0.0
    %27 = vst [vmem:[%s3 + $0x48] sm:$0xff] 0.0
    %28 = vst [vmem:[%s3 + $0x50] sm:$0xff] 0.0
    %29 = vst [vmem:[%s3 + $0x58] sm:$0xff] 0.0
    %30 = vst [vmem:[%s3 + $0x60] sm:$0xff] 0.0
    %31 = vst [vmem:[%s3 + $0x68] sm:$0xff] 0.0
    %32 = vst [vmem:[%s3 + $0x70] sm:$0xff] 0.0
    %33 = vst [vmem:[%s3 + $0x78] sm:$0xff] 0.0
  $region17: #{backbone_forward.20} parent=0 // pred_fallthru
    _
  %v34 = vld [vmem:[%s3] sm:$0xff]
  %v35 = vld [vmem:[%s3 + $0x8] sm:$0xff]
  %v36 = vld [vmem:[%s3 + $0x10] sm:$0xff]
  %v37 = vld [vmem:[%s3 + $0x18] sm:$0xff]
  %v38 = vld [vmem:[%s3 + $0x20] sm:$0xff]
  %v39 = vld [vmem:[%s3 + $0x28] sm:$0xff]
  %v40 = vld [vmem:[%s3 + $0x30] sm:$0xff]
  %v41 = vld [vmem:[%s3 + $0x38] sm:$0xff]
  %v42 = vld [vmem:[%s3 + $0x40] sm:$0xff]
  %v43 = vld [vmem:[%s3 + $0x48] sm:$0xff]
  %v44 = vld [vmem:[%s3 + $0x50] sm:$0xff]
  %v45 = vld [vmem:[%s3 + $0x58] sm:$0xff]
  %v46 = vld [vmem:[%s3 + $0x60] sm:$0xff]
  %v47 = vld [vmem:[%s3 + $0x68] sm:$0xff]
  %v48 = vld [vmem:[%s3 + $0x70] sm:$0xff]
  %v49 = vld [vmem:[%s3 + $0x78] sm:$0xff]
  %v50 = vld [vmem:[%s0] sm:$0xff]
  %v51 = vld [vmem:[%s1] sm:$0xff]
  %v52 = vld [vmem:[%s1 + $0x8] sm:$0xff]
  %v53 = vld [vmem:[%s1 + $0x10] sm:$0xff]
  %v54 = vld [vmem:[%s1 + $0x18] sm:$0xff]
  %v55 = vld [vmem:[%s1 + $0x20] sm:$0xff]
  %v56 = vld [vmem:[%s1 + $0x28] sm:$0xff]
  %v57 = vld [vmem:[%s1 + $0x30] sm:$0xff]
  %v58 = vld [vmem:[%s1 + $0x38] sm:$0xff]
  %v59 = vld [vmem:[%s1 + $0x40] sm:$0xff]
  %v60 = vld [vmem:[%s1 + $0x48] sm:$0xff]
  %v61 = vld [vmem:[%s1 + $0x50] sm:$0xff]
  %v62 = vld [vmem:[%s1 + $0x58] sm:$0xff]
  %v63 = vld [vmem:[%s1 + $0x60] sm:$0xff]
  %v64 = vld [vmem:[%s1 + $0x68] sm:$0xff]
  %v65 = vld [vmem:[%s1 + $0x70] sm:$0xff]
  %v66 = vld [vmem:[%s1 + $0x78] sm:$0xff]
  %v67 = vld [vmem:[%s1 + $0x80] sm:$0xff]
  %v68 = vld [vmem:[%s1 + $0x88] sm:$0xff]
  %v69 = vld [vmem:[%s1 + $0x90] sm:$0xff]
  %v70 = vld [vmem:[%s1 + $0x98] sm:$0xff]
  %v71 = vld [vmem:[%s1 + $0xa0] sm:$0xff]
  %v72 = vld [vmem:[%s1 + $0xa8] sm:$0xff]
  %v73 = vld [vmem:[%s1 + $0xb0] sm:$0xff]
  %v74 = vld [vmem:[%s1 + $0xb8] sm:$0xff]
  %v75 = vld [vmem:[%s1 + $0xc0] sm:$0xff]
  %v76 = vld [vmem:[%s1 + $0xc8] sm:$0xff]
  %v77 = vld [vmem:[%s1 + $0xd0] sm:$0xff]
  %v78 = vld [vmem:[%s1 + $0xd8] sm:$0xff]
  %v79 = vld [vmem:[%s1 + $0xe0] sm:$0xff]
  %v80 = vld [vmem:[%s1 + $0xe8] sm:$0xff]
  %v81 = vld [vmem:[%s1 + $0xf0] sm:$0xff]
  %v82 = vld [vmem:[%s1 + $0xf8] sm:$0xff]
  %v83 = vld [vmem:[%s1 + $0x100] sm:$0xff]
  %v84 = vld [vmem:[%s1 + $0x108] sm:$0xff]
  %v85 = vld [vmem:[%s1 + $0x110] sm:$0xff]
  %v86 = vld [vmem:[%s1 + $0x118] sm:$0xff]
  %v87 = vld [vmem:[%s1 + $0x120] sm:$0xff]
  %v88 = vld [vmem:[%s1 + $0x128] sm:$0xff]
  %v89 = vld [vmem:[%s1 + $0x130] sm:$0xff]
  %v90 = vld [vmem:[%s1 + $0x138] sm:$0xff]
  %v91 = vld [vmem:[%s1 + $0x140] sm:$0xff]
  %v92 = vld [vmem:[%s1 + $0x148] sm:$0xff]
  %v93 = vld [vmem:[%s1 + $0x150] sm:$0xff]
  %v94 = vld [vmem:[%s1 + $0x158] sm:$0xff]
  %v95 = vld [vmem:[%s1 + $0x160] sm:$0xff]
  %v96 = vld [vmem:[%s1 + $0x168] sm:$0xff]
  %v97 = vld [vmem:[%s1 + $0x170] sm:$0xff]
  %v98 = vld [vmem:[%s1 + $0x178] sm:$0xff]
  %v99 = vld [vmem:[%s1 + $0x180] sm:$0xff]
  %v100 = vld [vmem:[%s1 + $0x188] sm:$0xff]
  %v101 = vld [vmem:[%s1 + $0x190] sm:$0xff]
  %v102 = vld [vmem:[%s1 + $0x198] sm:$0xff]
  %v103 = vld [vmem:[%s1 + $0x1a0] sm:$0xff]
  %v104 = vld [vmem:[%s1 + $0x1a8] sm:$0xff]
  %v105 = vld [vmem:[%s1 + $0x1b0] sm:$0xff]
  %v106 = vld [vmem:[%s1 + $0x1b8] sm:$0xff]
  %v107 = vld [vmem:[%s1 + $0x1c0] sm:$0xff]
  %v108 = vld [vmem:[%s1 + $0x1c8] sm:$0xff]
  %v109 = vld [vmem:[%s1 + $0x1d0] sm:$0xff]
  %v110 = vld [vmem:[%s1 + $0x1d8] sm:$0xff]
  %v111 = vld [vmem:[%s1 + $0x1e0] sm:$0xff]
  %v112 = vld [vmem:[%s1 + $0x1e8] sm:$0xff]
  %v113 = vld [vmem:[%s1 + $0x1f0] sm:$0xff]
  %v114 = vld [vmem:[%s1 + $0x1f8] sm:$0xff]
  %v115 = vld [vmem:[%s1 + $0x200] sm:$0xff]
  %v116 = vld [vmem:[%s1 + $0x208] sm:$0xff]
  %v117 = vld [vmem:[%s1 + $0x210] sm:$0xff]
  %v118 = vld [vmem:[%s1 + $0x218] sm:$0xff]
  %v119 = vld [vmem:[%s1 + $0x220] sm:$0xff]
  %v120 = vld [vmem:[%s1 + $0x228] sm:$0xff]
  %v121 = vld [vmem:[%s1 + $0x230] sm:$0xff]
  %v122 = vld [vmem:[%s1 + $0x238] sm:$0xff]
  %v123 = vld [vmem:[%s1 + $0x240] sm:$0xff]
  %v124 = vld [vmem:[%s1 + $0x248] sm:$0xff]
  %v125 = vld [vmem:[%s1 + $0x250] sm:$0xff]
  %v126 = vld [vmem:[%s1 + $0x258] sm:$0xff]
  %v127 = vld [vmem:[%s1 + $0x260] sm:$0xff]
  %v128 = vld [vmem:[%s1 + $0x268] sm:$0xff]
  %v129 = vld [vmem:[%s1 + $0x270] sm:$0xff]
  %v130 = vld [vmem:[%s1 + $0x278] sm:$0xff]
  %v131 = vld [vmem:[%s1 + $0x280] sm:$0xff]
  %v132 = vld [vmem:[%s1 + $0x288] sm:$0xff]
  %v133 = vld [vmem:[%s1 + $0x290] sm:$0xff]
  %v134 = vld [vmem:[%s1 + $0x298] sm:$0xff]
  %v135 = vld [vmem:[%s1 + $0x2a0] sm:$0xff]
  %v136 = vld [vmem:[%s1 + $0x2a8] sm:$0xff]
  %v137 = vld [vmem:[%s1 + $0x2b0] sm:$0xff]
  %v138 = vld [vmem:[%s1 + $0x2b8] sm:$0xff]
  %v139 = vld [vmem:[%s1 + $0x2c0] sm:$0xff]
  %v140 = vld [vmem:[%s1 + $0x2c8] sm:$0xff]
  %v141 = vld [vmem:[%s1 + $0x2d0] sm:$0xff]
  %v142 = vld [vmem:[%s1 + $0x2d8] sm:$0xff]
  %v143 = vld [vmem:[%s1 + $0x2e0] sm:$0xff]
  %v144 = vld [vmem:[%s1 + $0x2e8] sm:$0xff]
  %v145 = vld [vmem:[%s1 + $0x2f0] sm:$0xff]
  %v146 = vld [vmem:[%s1 + $0x2f8] sm:$0xff]
  %v147 = vld [vmem:[%s1 + $0x300] sm:$0xff]
  %v148 = vld [vmem:[%s1 + $0x308] sm:$0xff]
  %v149 = vld [vmem:[%s1 + $0x310] sm:$0xff]
  %v150 = vld [vmem:[%s1 + $0x318] sm:$0xff]
  %v151 = vld [vmem:[%s1 + $0x320] sm:$0xff]
  %v152 = vld [vmem:[%s1 + $0x328] sm:$0xff]
  %v153 = vld [vmem:[%s1 + $0x330] sm:$0xff]
  %v154 = vld [vmem:[%s1 + $0x338] sm:$0xff]
  %v155 = vld [vmem:[%s1 + $0x340] sm:$0xff]
  %v156 = vld [vmem:[%s1 + $0x348] sm:$0xff]
  %v157 = vld [vmem:[%s1 + $0x350] sm:$0xff]
  %v158 = vld [vmem:[%s1 + $0x358] sm:$0xff]
  %v159 = vld [vmem:[%s1 + $0x360] sm:$0xff]
  %v160 = vld [vmem:[%s1 + $0x368] sm:$0xff]
  %v161 = vld [vmem:[%s1 + $0x370] sm:$0xff]
  %v162 = vld [vmem:[%s1 + $0x378] sm:$0xff]
  %v163 = vld [vmem:[%s1 + $0x380] sm:$0xff]
  %v164 = vld [vmem:[%s1 + $0x388] sm:$0xff]
  %v165 = vld [vmem:[%s1 + $0x390] sm:$0xff]
  %v166 = vld [vmem:[%s1 + $0x398] sm:$0xff]
  %v167 = vld [vmem:[%s1 + $0x3a0] sm:$0xff]
  %v168 = vld [vmem:[%s1 + $0x3a8] sm:$0xff]
  %v169 = vld [vmem:[%s1 + $0x3b0] sm:$0xff]
  %v170 = vld [vmem:[%s1 + $0x3b8] sm:$0xff]
  %v171 = vld [vmem:[%s1 + $0x3c0] sm:$0xff]
  %v172 = vld [vmem:[%s1 + $0x3c8] sm:$0xff]
  %v173 = vld [vmem:[%s1 + $0x3d0] sm:$0xff]
  %v174 = vld [vmem:[%s1 + $0x3d8] sm:$0xff]
  %v175 = vld [vmem:[%s1 + $0x3e0] sm:$0xff]
  %v176 = vld [vmem:[%s1 + $0x3e8] sm:$0xff]
  %v177 = vld [vmem:[%s1 + $0x3f0] sm:$0xff]
  %v178 = vld [vmem:[%s1 + $0x3f8] sm:$0xff]
  %v179 = vld [vmem:[%s1 + $0x400] sm:$0xff]
  %v180 = vld [vmem:[%s1 + $0x408] sm:$0xff]
  %v181 = vld [vmem:[%s1 + $0x410] sm:$0xff]
  %v182 = vld [vmem:[%s1 + $0x418] sm:$0xff]
  %v183 = vld [vmem:[%s1 + $0x420] sm:$0xff]
  %v184 = vld [vmem:[%s1 + $0x428] sm:$0xff]
  %v185 = vld [vmem:[%s1 + $0x430] sm:$0xff]
  %v186 = vld [vmem:[%s1 + $0x438] sm:$0xff]
  %v187 = vld [vmem:[%s1 + $0x440] sm:$0xff]
  %v188 = vld [vmem:[%s1 + $0x448] sm:$0xff]
  %v189 = vld [vmem:[%s1 + $0x450] sm:$0xff]
  %v190 = vld [vmem:[%s1 + $0x458] sm:$0xff]
  %v191 = vld [vmem:[%s1 + $0x460] sm:$0xff]
  %v192 = vld [vmem:[%s1 + $0x468] sm:$0xff]
  %v193 = vld [vmem:[%s1 + $0x470] sm:$0xff]
  %v194 = vld [vmem:[%s1 + $0x478] sm:$0xff]
  %v195 = vld [vmem:[%s1 + $0x480] sm:$0xff]
  %v196 = vld [vmem:[%s1 + $0x488] sm:$0xff]
  %v197 = vld [vmem:[%s1 + $0x490] sm:$0xff]
  %v198 = vld [vmem:[%s1 + $0x498] sm:$0xff]
  %v199 = vld [vmem:[%s1 + $0x4a0] sm:$0xff]
  %v200 = vld [vmem:[%s1 + $0x4a8] sm:$0xff]
  %v201 = vld [vmem:[%s1 + $0x4b0] sm:$0xff]
  %v202 = vld [vmem:[%s1 + $0x4b8] sm:$0xff]
  %v203 = vld [vmem:[%s1 + $0x4c0] sm:$0xff]
  %v204 = vld [vmem:[%s1 + $0x4c8] sm:$0xff]
  %v205 = vld [vmem:[%s1 + $0x4d0] sm:$0xff]
  %v206 = vld [vmem:[%s1 + $0x4d8] sm:$0xff]
  %v207 = vld [vmem:[%s1 + $0x4e0] sm:$0xff]
  %v208 = vld [vmem:[%s1 + $0x4e8] sm:$0xff]
  %v209 = vld [vmem:[%s1 + $0x4f0] sm:$0xff]
  %v210 = vld [vmem:[%s1 + $0x4f8] sm:$0xff]
  %v211 = vld [vmem:[%s1 + $0x500] sm:$0xff]
  %v212 = vld [vmem:[%s1 + $0x508] sm:$0xff]
  %v213 = vld [vmem:[%s1 + $0x510] sm:$0xff]
  %v214 = vld [vmem:[%s1 + $0x518] sm:$0xff]
  %v215 = vld [vmem:[%s1 + $0x520] sm:$0xff]
  %v216 = vld [vmem:[%s1 + $0x528] sm:$0xff]
  %v217 = vld [vmem:[%s1 + $0x530] sm:$0xff]
  %v218 = vld [vmem:[%s1 + $0x538] sm:$0xff]
  %v219 = vld [vmem:[%s1 + $0x540] sm:$0xff]
  %v220 = vld [vmem:[%s1 + $0x548] sm:$0xff]
  %v221 = vld [vmem:[%s1 + $0x550] sm:$0xff]
  %v222 = vld [vmem:[%s1 + $0x558] sm:$0xff]
  %v223 = vld [vmem:[%s1 + $0x560] sm:$0xff]
  %v224 = vld [vmem:[%s1 + $0x568] sm:$0xff]
  %v225 = vld [vmem:[%s1 + $0x570] sm:$0xff]
  %v226 = vld [vmem:[%s1 + $0x578] sm:$0xff]
  %v227 = vld [vmem:[%s1 + $0x580] sm:$0xff]
  %v228 = vld [vmem:[%s1 + $0x588] sm:$0xff]
  %v229 = vld [vmem:[%s1 + $0x590] sm:$0xff]
  %v230 = vld [vmem:[%s1 + $0x598] sm:$0xff]
  %v231 = vld [vmem:[%s1 + $0x5a0] sm:$0xff]
  %v232 = vld [vmem:[%s1 + $0x5a8] sm:$0xff]
  %v233 = vld [vmem:[%s1 + $0x5b0] sm:$0xff]
  %v234 = vld [vmem:[%s1 + $0x5b8] sm:$0xff]
  %v235 = vld [vmem:[%s1 + $0x5c0] sm:$0xff]
  %v236 = vld [vmem:[%s1 + $0x5c8] sm:$0xff]
  %v237 = vld [vmem:[%s1 + $0x5d0] sm:$0xff]
  %v238 = vld [vmem:[%s1 + $0x5d8] sm:$0xff]
  %v239 = vld [vmem:[%s1 + $0x5e0] sm:$0xff]
  %v240 = vld [vmem:[%s1 + $0x5e8] sm:$0xff]
  %v241 = vld [vmem:[%s1 + $0x5f0] sm:$0xff]
  %v242 = vld [vmem:[%s1 + $0x5f8] sm:$0xff]
  %v243 = vld [vmem:[%s1 + $0x600] sm:$0xff]
  %v244 = vld [vmem:[%s1 + $0x608] sm:$0xff]
  %v245 = vld [vmem:[%s1 + $0x610] sm:$0xff]
  %v246 = vld [vmem:[%s1 + $0x618] sm:$0xff]
  %v247 = vld [vmem:[%s1 + $0x620] sm:$0xff]
  %v248 = vld [vmem:[%s1 + $0x628] sm:$0xff]
  %v249 = vld [vmem:[%s1 + $0x630] sm:$0xff]
  %v250 = vld [vmem:[%s1 + $0x638] sm:$0xff]
  %v251 = vld [vmem:[%s1 + $0x640] sm:$0xff]
  %v252 = vld [vmem:[%s1 + $0x648] sm:$0xff]
  %v253 = vld [vmem:[%s1 + $0x650] sm:$0xff]
  %v254 = vld [vmem:[%s1 + $0x658] sm:$0xff]
  %v255 = vld [vmem:[%s1 + $0x660] sm:$0xff]
  %v256 = vld [vmem:[%s1 + $0x668] sm:$0xff]
  %v257 = vld [vmem:[%s1 + $0x670] sm:$0xff]
  %v258 = vld [vmem:[%s1 + $0x678] sm:$0xff]
  %v259 = vld [vmem:[%s1 + $0x680] sm:$0xff]
  %v260 = vld [vmem:[%s1 + $0x688] sm:$0xff]
  %v261 = vld [vmem:[%s1 + $0x690] sm:$0xff]
  %v262 = vld [vmem:[%s1 + $0x698] sm:$0xff]
  %v263 = vld [vmem:[%s1 + $0x6a0] sm:$0xff]
  %v264 = vld [vmem:[%s1 + $0x6a8] sm:$0xff]
  %v265 = vld [vmem:[%s1 + $0x6b0] sm:$0xff]
  %v266 = vld [vmem:[%s1 + $0x6b8] sm:$0xff]
  %v267 = vld [vmem:[%s1 + $0x6c0] sm:$0xff]
  %v268 = vld [vmem:[%s1 + $0x6c8] sm:$0xff]
  %v269 = vld [vmem:[%s1 + $0x6d0] sm:$0xff]
  %v270 = vld [vmem:[%s1 + $0x6d8] sm:$0xff]
  %v271 = vld [vmem:[%s1 + $0x6e0] sm:$0xff]
  %v272 = vld [vmem:[%s1 + $0x6e8] sm:$0xff]
  %v273 = vld [vmem:[%s1 + $0x6f0] sm:$0xff]
  %v274 = vld [vmem:[%s1 + $0x6f8] sm:$0xff]
  %v275 = vld [vmem:[%s1 + $0x700] sm:$0xff]
  %v276 = vld [vmem:[%s1 + $0x708] sm:$0xff]
  %v277 = vld [vmem:[%s1 + $0x710] sm:$0xff]
  %v278 = vld [vmem:[%s1 + $0x718] sm:$0xff]
  %v279 = vld [vmem:[%s1 + $0x720] sm:$0xff]
  %v280 = vld [vmem:[%s1 + $0x728] sm:$0xff]
  %v281 = vld [vmem:[%s1 + $0x730] sm:$0xff]
  %v282 = vld [vmem:[%s1 + $0x738] sm:$0xff]
  %v283 = vld [vmem:[%s1 + $0x740] sm:$0xff]
  %v284 = vld [vmem:[%s1 + $0x748] sm:$0xff]
  %v285 = vld [vmem:[%s1 + $0x750] sm:$0xff]
  %v286 = vld [vmem:[%s1 + $0x758] sm:$0xff]
  %v287 = vld [vmem:[%s1 + $0x760] sm:$0xff]
  %v288 = vld [vmem:[%s1 + $0x768] sm:$0xff]
  %v289 = vld [vmem:[%s1 + $0x770] sm:$0xff]
  %v290 = vld [vmem:[%s1 + $0x778] sm:$0xff]
  %v291 = vld [vmem:[%s1 + $0x780] sm:$0xff]
  %v292 = vld [vmem:[%s1 + $0x788] sm:$0xff]
  %v293 = vld [vmem:[%s1 + $0x790] sm:$0xff]
  %v294 = vld [vmem:[%s1 + $0x798] sm:$0xff]
  %v295 = vld [vmem:[%s1 + $0x7a0] sm:$0xff]
  %v296 = vld [vmem:[%s1 + $0x7a8] sm:$0xff]
  %v297 = vld [vmem:[%s1 + $0x7b0] sm:$0xff]
  %v298 = vld [vmem:[%s1 + $0x7b8] sm:$0xff]
  %v299 = vld [vmem:[%s1 + $0x7c0] sm:$0xff]
  %v300 = vld [vmem:[%s1 + $0x7c8] sm:$0xff]
  %v301 = vld [vmem:[%s1 + $0x7d0] sm:$0xff]
  %v302 = vld [vmem:[%s1 + $0x7d8] sm:$0xff]
  %v303 = vld [vmem:[%s1 + $0x7e0] sm:$0xff]
  %v304 = vld [vmem:[%s1 + $0x7e8] sm:$0xff]
  %v305 = vld [vmem:[%s1 + $0x7f0] sm:$0xff]
  %v306 = vld [vmem:[%s1 + $0x7f8] sm:$0xff]
  %v308 = vunpack.c.l.b16 %v50
  %v309 = vunpack.c.h.b16 %v50
  %v310 = vpack.c.b16 %v308, %v308
  %v311 = vpack.c.b16 %v309, %v309
  %v570 = vunpack.c.l.b16 %v51
  %v571 = vunpack.c.h.b16 %v51
  %v572 = vunpack.c.l.b16 %v52
  %v573 = vunpack.c.h.b16 %v52
  %v574 = vunpack.c.l.b16 %v53
  %v575 = vunpack.c.h.b16 %v53
  %v576 = vunpack.c.l.b16 %v54
  %v577 = vunpack.c.h.b16 %v54
  %v578 = vunpack.c.l.b16 %v55
  %v579 = vunpack.c.h.b16 %v55
  %v580 = vunpack.c.l.b16 %v56
  %v581 = vunpack.c.h.b16 %v56
  %v582 = vunpack.c.l.b16 %v57
  %v583 = vunpack.c.h.b16 %v57
  %v584 = vunpack.c.l.b16 %v58
  %v585 = vunpack.c.h.b16 %v58
  %v586 = vunpack.c.l.b16 %v59
  %v587 = vunpack.c.h.b16 %v59
  %v588 = vunpack.c.l.b16 %v60
  %v589 = vunpack.c.h.b16 %v60
  %v590 = vunpack.c.l.b16 %v61
  %v591 = vunpack.c.h.b16 %v61
  %v592 = vunpack.c.l.b16 %v62
  %v593 = vunpack.c.h.b16 %v62
  %v594 = vunpack.c.l.b16 %v63
  %v595 = vunpack.c.h.b16 %v63
  %v596 = vunpack.c.l.b16 %v64
  %v597 = vunpack.c.h.b16 %v64
  %v598 = vunpack.c.l.b16 %v65
  %v599 = vunpack.c.h.b16 %v65
  %v600 = vunpack.c.l.b16 %v66
  %v601 = vunpack.c.h.b16 %v66
  %v602 = vunpack.c.l.b16 %v67
  %v603 = vunpack.c.h.b16 %v67
  %v604 = vunpack.c.l.b16 %v68
  %v605 = vunpack.c.h.b16 %v68
  %v606 = vunpack.c.l.b16 %v69
  %v607 = vunpack.c.h.b16 %v69
  %v608 = vunpack.c.l.b16 %v70
  %v609 = vunpack.c.h.b16 %v70
  %v610 = vunpack.c.l.b16 %v71
  %v611 = vunpack.c.h.b16 %v71
  %v612 = vunpack.c.l.b16 %v72
  %v613 = vunpack.c.h.b16 %v72
  %v614 = vunpack.c.l.b16 %v73
  %v615 = vunpack.c.h.b16 %v73
  %v616 = vunpack.c.l.b16 %v74
  %v617 = vunpack.c.h.b16 %v74
  %v618 = vunpack.c.l.b16 %v75
  %v619 = vunpack.c.h.b16 %v75
  %v620 = vunpack.c.l.b16 %v76
  %v621 = vunpack.c.h.b16 %v76
  %v622 = vunpack.c.l.b16 %v77
  %v623 = vunpack.c.h.b16 %v77
  %v624 = vunpack.c.l.b16 %v78
  %v625 = vunpack.c.h.b16 %v78
  %v626 = vunpack.c.l.b16 %v79
  %v627 = vunpack.c.h.b16 %v79
  %v628 = vunpack.c.l.b16 %v80
  %v629 = vunpack.c.h.b16 %v80
  %v630 = vunpack.c.l.b16 %v81
  %v631 = vunpack.c.h.b16 %v81
  %v632 = vunpack.c.l.b16 %v82
  %v633 = vunpack.c.h.b16 %v82
  %v634 = vunpack.c.l.b16 %v83
  %v635 = vunpack.c.h.b16 %v83
  %v636 = vunpack.c.l.b16 %v84
  %v637 = vunpack.c.h.b16 %v84
  %v638 = vunpack.c.l.b16 %v85
  %v639 = vunpack.c.h.b16 %v85
  %v640 = vunpack.c.l.b16 %v86
  %v641 = vunpack.c.h.b16 %v86
  %v642 = vunpack.c.l.b16 %v87
  %v643 = vunpack.c.h.b16 %v87
  %v644 = vunpack.c.l.b16 %v88
  %v645 = vunpack.c.h.b16 %v88
  %v646 = vunpack.c.l.b16 %v89
  %v647 = vunpack.c.h.b16 %v89
  %v648 = vunpack.c.l.b16 %v90
  %v649 = vunpack.c.h.b16 %v90
  %v650 = vunpack.c.l.b16 %v91
  %v651 = vunpack.c.h.b16 %v91
  %v652 = vunpack.c.l.b16 %v92
  %v653 = vunpack.c.h.b16 %v92
  %v654 = vunpack.c.l.b16 %v93
  %v655 = vunpack.c.h.b16 %v93
  %v656 = vunpack.c.l.b16 %v94
  %v657 = vunpack.c.h.b16 %v94
  %v658 = vunpack.c.l.b16 %v95
  %v659 = vunpack.c.h.b16 %v95
  %v660 = vunpack.c.l.b16 %v96
  %v661 = vunpack.c.h.b16 %v96
  %v662 = vunpack.c.l.b16 %v97
  %v663 = vunpack.c.h.b16 %v97
  %v664 = vunpack.c.l.b16 %v98
  %v665 = vunpack.c.h.b16 %v98
  %v666 = vunpack.c.l.b16 %v99
  %v667 = vunpack.c.h.b16 %v99
  %v668 = vunpack.c.l.b16 %v100
  %v669 = vunpack.c.h.b16 %v100
  %v670 = vunpack.c.l.b16 %v101
  %v671 = vunpack.c.h.b16 %v101
  %v672 = vunpack.c.l.b16 %v102
  %v673 = vunpack.c.h.b16 %v102
  %v674 = vunpack.c.l.b16 %v103
  %v675 = vunpack.c.h.b16 %v103
  %v676 = vunpack.c.l.b16 %v104
  %v677 = vunpack.c.h.b16 %v104
  %v678 = vunpack.c.l.b16 %v105
  %v679 = vunpack.c.h.b16 %v105
  %v680 = vunpack.c.l.b16 %v106
  %v681 = vunpack.c.h.b16 %v106
  %v682 = vunpack.c.l.b16 %v107
  %v683 = vunpack.c.h.b16 %v107
  %v684 = vunpack.c.l.b16 %v108
  %v685 = vunpack.c.h.b16 %v108
  %v686 = vunpack.c.l.b16 %v109
  %v687 = vunpack.c.h.b16 %v109
  %v688 = vunpack.c.l.b16 %v110
  %v689 = vunpack.c.h.b16 %v110
  %v690 = vunpack.c.l.b16 %v111
  %v691 = vunpack.c.h.b16 %v111
  %v692 = vunpack.c.l.b16 %v112
  %v693 = vunpack.c.h.b16 %v112
  %v694 = vunpack.c.l.b16 %v113
  %v695 = vunpack.c.h.b16 %v113
  %v696 = vunpack.c.l.b16 %v114
  %v697 = vunpack.c.h.b16 %v114
  %v698 = vunpack.c.l.b16 %v115
  %v699 = vunpack.c.h.b16 %v115
  %v700 = vunpack.c.l.b16 %v116
  %v701 = vunpack.c.h.b16 %v116
  %v702 = vunpack.c.l.b16 %v117
  %v703 = vunpack.c.h.b16 %v117
  %v704 = vunpack.c.l.b16 %v118
  %v705 = vunpack.c.h.b16 %v118
  %v706 = vunpack.c.l.b16 %v119
  %v707 = vunpack.c.h.b16 %v119
  %v708 = vunpack.c.l.b16 %v120
  %v709 = vunpack.c.h.b16 %v120
  %v710 = vunpack.c.l.b16 %v121
  %v711 = vunpack.c.h.b16 %v121
  %v712 = vunpack.c.l.b16 %v122
  %v713 = vunpack.c.h.b16 %v122
  %v714 = vunpack.c.l.b16 %v123
  %v715 = vunpack.c.h.b16 %v123
  %v716 = vunpack.c.l.b16 %v124
  %v717 = vunpack.c.h.b16 %v124
  %v718 = vunpack.c.l.b16 %v125
  %v719 = vunpack.c.h.b16 %v125
  %v720 = vunpack.c.l.b16 %v126
  %v721 = vunpack.c.h.b16 %v126
  %v722 = vunpack.c.l.b16 %v127
  %v723 = vunpack.c.h.b16 %v127
  %v724 = vunpack.c.l.b16 %v128
  %v725 = vunpack.c.h.b16 %v128
  %v726 = vunpack.c.l.b16 %v129
  %v727 = vunpack.c.h.b16 %v129
  %v728 = vunpack.c.l.b16 %v130
  %v729 = vunpack.c.h.b16 %v130
  %v730 = vunpack.c.l.b16 %v131
  %v731 = vunpack.c.h.b16 %v131
  %v732 = vunpack.c.l.b16 %v132
  %v733 = vunpack.c.h.b16 %v132
  %v734 = vunpack.c.l.b16 %v133
  %v735 = vunpack.c.h.b16 %v133
  %v736 = vunpack.c.l.b16 %v134
  %v737 = vunpack.c.h.b16 %v134
  %v738 = vunpack.c.l.b16 %v135
  %v739 = vunpack.c.h.b16 %v135
  %v740 = vunpack.c.l.b16 %v136
  %v741 = vunpack.c.h.b16 %v136
  %v742 = vunpack.c.l.b16 %v137
  %v743 = vunpack.c.h.b16 %v137
  %v744 = vunpack.c.l.b16 %v138
  %v745 = vunpack.c.h.b16 %v138
  %v746 = vunpack.c.l.b16 %v139
  %v747 = vunpack.c.h.b16 %v139
  %v748 = vunpack.c.l.b16 %v140
  %v749 = vunpack.c.h.b16 %v140
  %v750 = vunpack.c.l.b16 %v141
  %v751 = vunpack.c.h.b16 %v141
  %v752 = vunpack.c.l.b16 %v142
  %v753 = vunpack.c.h.b16 %v142
  %v754 = vunpack.c.l.b16 %v143
  %v755 = vunpack.c.h.b16 %v143
  %v756 = vunpack.c.l.b16 %v144
  %v757 = vunpack.c.h.b16 %v144
  %v758 = vunpack.c.l.b16 %v145
  %v759 = vunpack.c.h.b16 %v145
  %v760 = vunpack.c.l.b16 %v146
  %v761 = vunpack.c.h.b16 %v146
  %v762 = vunpack.c.l.b16 %v147
  %v763 = vunpack.c.h.b16 %v147
  %v764 = vunpack.c.l.b16 %v148
  %v765 = vunpack.c.h.b16 %v148
  %v766 = vunpack.c.l.b16 %v149
  %v767 = vunpack.c.h.b16 %v149
  %v768 = vunpack.c.l.b16 %v150
  %v769 = vunpack.c.h.b16 %v150
  %v770 = vunpack.c.l.b16 %v151
  %v771 = vunpack.c.h.b16 %v151
  %v772 = vunpack.c.l.b16 %v152
  %v773 = vunpack.c.h.b16 %v152
  %v774 = vunpack.c.l.b16 %v153
  %v775 = vunpack.c.h.b16 %v153
  %v776 = vunpack.c.l.b16 %v154
  %v777 = vunpack.c.h.b16 %v154
  %v778 = vunpack.c.l.b16 %v155
  %v779 = vunpack.c.h.b16 %v155
  %v780 = vunpack.c.l.b16 %v156
  %v781 = vunpack.c.h.b16 %v156
  %v782 = vunpack.c.l.b16 %v157
  %v783 = vunpack.c.h.b16 %v157
  %v784 = vunpack.c.l.b16 %v158
  %v785 = vunpack.c.h.b16 %v158
  %v786 = vunpack.c.l.b16 %v159
  %v787 = vunpack.c.h.b16 %v159
  %v788 = vunpack.c.l.b16 %v160
  %v789 = vunpack.c.h.b16 %v160
  %v790 = vunpack.c.l.b16 %v161
  %v791 = vunpack.c.h.b16 %v161
  %v792 = vunpack.c.l.b16 %v162
  %v793 = vunpack.c.h.b16 %v162
  %v794 = vunpack.c.l.b16 %v163
  %v795 = vunpack.c.h.b16 %v163
  %v796 = vunpack.c.l.b16 %v164
  %v797 = vunpack.c.h.b16 %v164
  %v798 = vunpack.c.l.b16 %v165
  %v799 = vunpack.c.h.b16 %v165
  %v800 = vunpack.c.l.b16 %v166
  %v801 = vunpack.c.h.b16 %v166
  %v802 = vunpack.c.l.b16 %v167
  %v803 = vunpack.c.h.b16 %v167
  %v804 = vunpack.c.l.b16 %v168
  %v805 = vunpack.c.h.b16 %v168
  %v806 = vunpack.c.l.b16 %v169
  %v807 = vunpack.c.h.b16 %v169
  %v808 = vunpack.c.l.b16 %v170
  %v809 = vunpack.c.h.b16 %v170
  %v810 = vunpack.c.l.b16 %v171
  %v811 = vunpack.c.h.b16 %v171
  %v812 = vunpack.c.l.b16 %v172
  %v813 = vunpack.c.h.b16 %v172
  %v814 = vunpack.c.l.b16 %v173
  %v815 = vunpack.c.h.b16 %v173
  %v816 = vunpack.c.l.b16 %v174
  %v817 = vunpack.c.h.b16 %v174
  %v818 = vunpack.c.l.b16 %v175
  %v819 = vunpack.c.h.b16 %v175
  %v820 = vunpack.c.l.b16 %v176
  %v821 = vunpack.c.h.b16 %v176
  %v822 = vunpack.c.l.b16 %v177
  %v823 = vunpack.c.h.b16 %v177
  %v824 = vunpack.c.l.b16 %v178
  %v825 = vunpack.c.h.b16 %v178
  %v826 = vunpack.c.l.b16 %v179
  %v827 = vunpack.c.h.b16 %v179
  %v828 = vunpack.c.l.b16 %v180
  %v829 = vunpack.c.h.b16 %v180
  %v830 = vunpack.c.l.b16 %v181
  %v831 = vunpack.c.h.b16 %v181
  %v832 = vunpack.c.l.b16 %v182
  %v833 = vunpack.c.h.b16 %v182
  %v834 = vunpack.c.l.b16 %v183
  %v835 = vunpack.c.h.b16 %v183
  %v836 = vunpack.c.l.b16 %v184
  %v837 = vunpack.c.h.b16 %v184
  %v838 = vunpack.c.l.b16 %v185
  %v839 = vunpack.c.h.b16 %v185
  %v840 = vunpack.c.l.b16 %v186
  %v841 = vunpack.c.h.b16 %v186
  %v842 = vunpack.c.l.b16 %v187
  %v843 = vunpack.c.h.b16 %v187
  %v844 = vunpack.c.l.b16 %v188
  %v845 = vunpack.c.h.b16 %v188
  %v846 = vunpack.c.l.b16 %v189
  %v847 = vunpack.c.h.b16 %v189
  %v848 = vunpack.c.l.b16 %v190
  %v849 = vunpack.c.h.b16 %v190
  %v850 = vunpack.c.l.b16 %v191
  %v851 = vunpack.c.h.b16 %v191
  %v852 = vunpack.c.l.b16 %v192
  %v853 = vunpack.c.h.b16 %v192
  %v854 = vunpack.c.l.b16 %v193
  %v855 = vunpack.c.h.b16 %v193
  %v856 = vunpack.c.l.b16 %v194
  %v857 = vunpack.c.h.b16 %v194
  %v858 = vunpack.c.l.b16 %v195
  %v859 = vunpack.c.h.b16 %v195
  %v860 = vunpack.c.l.b16 %v196
  %v861 = vunpack.c.h.b16 %v196
  %v862 = vunpack.c.l.b16 %v197
  %v863 = vunpack.c.h.b16 %v197
  %v864 = vunpack.c.l.b16 %v198
  %v865 = vunpack.c.h.b16 %v198
  %v866 = vunpack.c.l.b16 %v199
  %v867 = vunpack.c.h.b16 %v199
  %v868 = vunpack.c.l.b16 %v200
  %v869 = vunpack.c.h.b16 %v200
  %v870 = vunpack.c.l.b16 %v201
  %v871 = vunpack.c.h.b16 %v201
  %v872 = vunpack.c.l.b16 %v202
  %v873 = vunpack.c.h.b16 %v202
  %v874 = vunpack.c.l.b16 %v203
  %v875 = vunpack.c.h.b16 %v203
  %v876 = vunpack.c.l.b16 %v204
  %v877 = vunpack.c.h.b16 %v204
  %v878 = vunpack.c.l.b16 %v205
  %v879 = vunpack.c.h.b16 %v205
  %v880 = vunpack.c.l.b16 %v206
  %v881 = vunpack.c.h.b16 %v206
  %v882 = vunpack.c.l.b16 %v207
  %v883 = vunpack.c.h.b16 %v207
  %v884 = vunpack.c.l.b16 %v208
  %v885 = vunpack.c.h.b16 %v208
  %v886 = vunpack.c.l.b16 %v209
  %v887 = vunpack.c.h.b16 %v209
  %v888 = vunpack.c.l.b16 %v210
  %v889 = vunpack.c.h.b16 %v210
  %v890 = vunpack.c.l.b16 %v211
  %v891 = vunpack.c.h.b16 %v211
  %v892 = vunpack.c.l.b16 %v212
  %v893 = vunpack.c.h.b16 %v212
  %v894 = vunpack.c.l.b16 %v213
  %v895 = vunpack.c.h.b16 %v213
  %v896 = vunpack.c.l.b16 %v214
  %v897 = vunpack.c.h.b16 %v214
  %v898 = vunpack.c.l.b16 %v215
  %v899 = vunpack.c.h.b16 %v215
  %v900 = vunpack.c.l.b16 %v216
  %v901 = vunpack.c.h.b16 %v216
  %v902 = vunpack.c.l.b16 %v217
  %v903 = vunpack.c.h.b16 %v217
  %v904 = vunpack.c.l.b16 %v218
  %v905 = vunpack.c.h.b16 %v218
  %v906 = vunpack.c.l.b16 %v219
  %v907 = vunpack.c.h.b16 %v219
  %v908 = vunpack.c.l.b16 %v220
  %v909 = vunpack.c.h.b16 %v220
  %v910 = vunpack.c.l.b16 %v221
  %v911 = vunpack.c.h.b16 %v221
  %v912 = vunpack.c.l.b16 %v222
  %v913 = vunpack.c.h.b16 %v222
  %v914 = vunpack.c.l.b16 %v223
  %v915 = vunpack.c.h.b16 %v223
  %v916 = vunpack.c.l.b16 %v224
  %v917 = vunpack.c.h.b16 %v224
  %v918 = vunpack.c.l.b16 %v225
  %v919 = vunpack.c.h.b16 %v225
  %v920 = vunpack.c.l.b16 %v226
  %v921 = vunpack.c.h.b16 %v226
  %v922 = vunpack.c.l.b16 %v227
  %v923 = vunpack.c.h.b16 %v227
  %v924 = vunpack.c.l.b16 %v228
  %v925 = vunpack.c.h.b16 %v228
  %v926 = vunpack.c.l.b16 %v229
  %v927 = vunpack.c.h.b16 %v229
  %v928 = vunpack.c.l.b16 %v230
  %v929 = vunpack.c.h.b16 %v230
  %v930 = vunpack.c.l.b16 %v231
  %v931 = vunpack.c.h.b16 %v231
  %v932 = vunpack.c.l.b16 %v232
  %v933 = vunpack.c.h.b16 %v232
  %v934 = vunpack.c.l.b16 %v233
  %v935 = vunpack.c.h.b16 %v233
  %v936 = vunpack.c.l.b16 %v234
  %v937 = vunpack.c.h.b16 %v234
  %v938 = vunpack.c.l.b16 %v235
  %v939 = vunpack.c.h.b16 %v235
  %v940 = vunpack.c.l.b16 %v236
  %v941 = vunpack.c.h.b16 %v236
  %v942 = vunpack.c.l.b16 %v237
  %v943 = vunpack.c.h.b16 %v237
  %v944 = vunpack.c.l.b16 %v238
  %v945 = vunpack.c.h.b16 %v238
  %v946 = vunpack.c.l.b16 %v239
  %v947 = vunpack.c.h.b16 %v239
  %v948 = vunpack.c.l.b16 %v240
  %v949 = vunpack.c.h.b16 %v240
  %v950 = vunpack.c.l.b16 %v241
  %v951 = vunpack.c.h.b16 %v241
  %v952 = vunpack.c.l.b16 %v242
  %v953 = vunpack.c.h.b16 %v242
  %v954 = vunpack.c.l.b16 %v243
  %v955 = vunpack.c.h.b16 %v243
  %v956 = vunpack.c.l.b16 %v244
  %v957 = vunpack.c.h.b16 %v244
  %v958 = vunpack.c.l.b16 %v245
  %v959 = vunpack.c.h.b16 %v245
  %v960 = vunpack.c.l.b16 %v246
  %v961 = vunpack.c.h.b16 %v246
  %v962 = vunpack.c.l.b16 %v247
  %v963 = vunpack.c.h.b16 %v247
  %v964 = vunpack.c.l.b16 %v248
  %v965 = vunpack.c.h.b16 %v248
  %v966 = vunpack.c.l.b16 %v249
  %v967 = vunpack.c.h.b16 %v249
  %v968 = vunpack.c.l.b16 %v250
  %v969 = vunpack.c.h.b16 %v250
  %v970 = vunpack.c.l.b16 %v251
  %v971 = vunpack.c.h.b16 %v251
  %v972 = vunpack.c.l.b16 %v252
  %v973 = vunpack.c.h.b16 %v252
  %v974 = vunpack.c.l.b16 %v253
  %v975 = vunpack.c.h.b16 %v253
  %v976 = vunpack.c.l.b16 %v254
  %v977 = vunpack.c.h.b16 %v254
  %v978 = vunpack.c.l.b16 %v255
  %v979 = vunpack.c.h.b16 %v255
  %v980 = vunpack.c.l.b16 %v256
  %v981 = vunpack.c.h.b16 %v256
  %v982 = vunpack.c.l.b16 %v257
  %v983 = vunpack.c.h.b16 %v257
  %v984 = vunpack.c.l.b16 %v258
  %v985 = vunpack.c.h.b16 %v258
  %v986 = vunpack.c.l.b16 %v259
  %v987 = vunpack.c.h.b16 %v259
  %v988 = vunpack.c.l.b16 %v260
  %v989 = vunpack.c.h.b16 %v260
  %v990 = vunpack.c.l.b16 %v261
  %v991 = vunpack.c.h.b16 %v261
  %v992 = vunpack.c.l.b16 %v262
  %v993 = vunpack.c.h.b16 %v262
  %v994 = vunpack.c.l.b16 %v263
  %v995 = vunpack.c.h.b16 %v263
  %v996 = vunpack.c.l.b16 %v264
  %v997 = vunpack.c.h.b16 %v264
  %v998 = vunpack.c.l.b16 %v265
  %v999 = vunpack.c.h.b16 %v265
  %v1000 = vunpack.c.l.b16 %v266
  %v1001 = vunpack.c.h.b16 %v266
  %v1002 = vunpack.c.l.b16 %v267
  %v1003 = vunpack.c.h.b16 %v267
  %v1004 = vunpack.c.l.b16 %v268
  %v1005 = vunpack.c.h.b16 %v268
  %v1006 = vunpack.c.l.b16 %v269
  %v1007 = vunpack.c.h.b16 %v269
  %v1008 = vunpack.c.l.b16 %v270
  %v1009 = vunpack.c.h.b16 %v270
  %v1010 = vunpack.c.l.b16 %v271
  %v1011 = vunpack.c.h.b16 %v271
  %v1012 = vunpack.c.l.b16 %v272
  %v1013 = vunpack.c.h.b16 %v272
  %v1014 = vunpack.c.l.b16 %v273
  %v1015 = vunpack.c.h.b16 %v273
  %v1016 = vunpack.c.l.b16 %v274
  %v1017 = vunpack.c.h.b16 %v274
  %v1018 = vunpack.c.l.b16 %v275
  %v1019 = vunpack.c.h.b16 %v275
  %v1020 = vunpack.c.l.b16 %v276
  %v1021 = vunpack.c.h.b16 %v276
  %v1022 = vunpack.c.l.b16 %v277
  %v1023 = vunpack.c.h.b16 %v277
  %v1024 = vunpack.c.l.b16 %v278
  %v1025 = vunpack.c.h.b16 %v278
  %v1026 = vunpack.c.l.b16 %v279
  %v1027 = vunpack.c.h.b16 %v279
  %v1028 = vunpack.c.l.b16 %v280
  %v1029 = vunpack.c.h.b16 %v280
  %v1030 = vunpack.c.l.b16 %v281
  %v1031 = vunpack.c.h.b16 %v281
  %v1032 = vunpack.c.l.b16 %v282
  %v1033 = vunpack.c.h.b16 %v282
  %v1034 = vunpack.c.l.b16 %v283
  %v1035 = vunpack.c.h.b16 %v283
  %v1036 = vunpack.c.l.b16 %v284
  %v1037 = vunpack.c.h.b16 %v284
  %v1038 = vunpack.c.l.b16 %v285
  %v1039 = vunpack.c.h.b16 %v285
  %v1040 = vunpack.c.l.b16 %v286
  %v1041 = vunpack.c.h.b16 %v286
  %v1042 = vunpack.c.l.b16 %v287
  %v1043 = vunpack.c.h.b16 %v287
  %v1044 = vunpack.c.l.b16 %v288
  %v1045 = vunpack.c.h.b16 %v288
  %v1046 = vunpack.c.l.b16 %v289
  %v1047 = vunpack.c.h.b16 %v289
  %v1048 = vunpack.c.l.b16 %v290
  %v1049 = vunpack.c.h.b16 %v290
  %v1050 = vunpack.c.l.b16 %v291
  %v1051 = vunpack.c.h.b16 %v291
  %v1052 = vunpack.c.l.b16 %v292
  %v1053 = vunpack.c.h.b16 %v292
  %v1054 = vunpack.c.l.b16 %v293
  %v1055 = vunpack.c.h.b16 %v293
  %v1056 = vunpack.c.l.b16 %v294
  %v1057 = vunpack.c.h.b16 %v294
  %v1058 = vunpack.c.l.b16 %v295
  %v1059 = vunpack.c.h.b16 %v295
  %v1060 = vunpack.c.l.b16 %v296
  %v1061 = vunpack.c.h.b16 %v296
  %v1062 = vunpack.c.l.b16 %v297
  %v1063 = vunpack.c.h.b16 %v297
  %v1064 = vunpack.c.l.b16 %v298
  %v1065 = vunpack.c.h.b16 %v298
  %v1066 = vunpack.c.l.b16 %v299
  %v1067 = vunpack.c.h.b16 %v299
  %v1068 = vunpack.c.l.b16 %v300
  %v1069 = vunpack.c.h.b16 %v300
  %v1070 = vunpack.c.l.b16 %v301
  %v1071 = vunpack.c.h.b16 %v301
  %v1072 = vunpack.c.l.b16 %v302
  %v1073 = vunpack.c.h.b16 %v302
  %v1074 = vunpack.c.l.b16 %v303
  %v1075 = vunpack.c.h.b16 %v303
  %v1076 = vunpack.c.l.b16 %v304
  %v1077 = vunpack.c.h.b16 %v304
  %v1078 = vunpack.c.l.b16 %v305
  %v1079 = vunpack.c.h.b16 %v305
  %v1080 = vunpack.c.l.b16 %v306
  %v1081 = vunpack.c.h.b16 %v306
  %v1082 = vpack.c.b16 %v586, %v570
  %v1083 = vpack.c.b16 %v587, %v571
  %v1084 = vpack.c.b16 %v588, %v572
  %v1085 = vpack.c.b16 %v589, %v573
  %v1086 = vpack.c.b16 %v590, %v574
  %v1087 = vpack.c.b16 %v591, %v575
  %v1088 = vpack.c.b16 %v592, %v576
  %v1089 = vpack.c.b16 %v593, %v577
  %v1090 = vpack.c.b16 %v594, %v578
  %v1091 = vpack.c.b16 %v595, %v579
  %v1092 = vpack.c.b16 %v596, %v580
  %v1093 = vpack.c.b16 %v597, %v581
  %v1094 = vpack.c.b16 %v598, %v582
  %v1095 = vpack.c.b16 %v599, %v583
  %v1096 = vpack.c.b16 %v600, %v584
  %v1097 = vpack.c.b16 %v601, %v585
  %v1098 = vpack.c.b16 %v618, %v602
  %v1099 = vpack.c.b16 %v619, %v603
  %v1100 = vpack.c.b16 %v620, %v604
  %v1101 = vpack.c.b16 %v621, %v605
  %v1102 = vpack.c.b16 %v622, %v606
  %v1103 = vpack.c.b16 %v623, %v607
  %v1104 = vpack.c.b16 %v624, %v608
  %v1105 = vpack.c.b16 %v625, %v609
  %v1106 = vpack.c.b16 %v626, %v610
  %v1107 = vpack.c.b16 %v627, %v611
  %v1108 = vpack.c.b16 %v628, %v612
  %v1109 = vpack.c.b16 %v629, %v613
  %v1110 = vpack.c.b16 %v630, %v614
  %v1111 = vpack.c.b16 %v631, %v615
  %v1112 = vpack.c.b16 %v632, %v616
  %v1113 = vpack.c.b16 %v633, %v617
  %v1114 = vpack.c.b16 %v650, %v634
  %v1115 = vpack.c.b16 %v651, %v635
  %v1116 = vpack.c.b16 %v652, %v636
  %v1117 = vpack.c.b16 %v653, %v637
  %v1118 = vpack.c.b16 %v654, %v638
  %v1119 = vpack.c.b16 %v655, %v639
  %v1120 = vpack.c.b16 %v656, %v640
  %v1121 = vpack.c.b16 %v657, %v641
  %v1122 = vpack.c.b16 %v658, %v642
  %v1123 = vpack.c.b16 %v659, %v643
  %v1124 = vpack.c.b16 %v660, %v644
  %v1125 = vpack.c.b16 %v661, %v645
  %v1126 = vpack.c.b16 %v662, %v646
  %v1127 = vpack.c.b16 %v663, %v647
  %v1128 = vpack.c.b16 %v664, %v648
  %v1129 = vpack.c.b16 %v665, %v649
  %v1130 = vpack.c.b16 %v682, %v666
  %v1131 = vpack.c.b16 %v683, %v667
  %v1132 = vpack.c.b16 %v684, %v668
  %v1133 = vpack.c.b16 %v685, %v669
  %v1134 = vpack.c.b16 %v686, %v670
  %v1135 = vpack.c.b16 %v687, %v671
  %v1136 = vpack.c.b16 %v688, %v672
  %v1137 = vpack.c.b16 %v689, %v673
  %v1138 = vpack.c.b16 %v690, %v674
  %v1139 = vpack.c.b16 %v691, %v675
  %v1140 = vpack.c.b16 %v692, %v676
  %v1141 = vpack.c.b16 %v693, %v677
  %v1142 = vpack.c.b16 %v694, %v678
  %v1143 = vpack.c.b16 %v695, %v679
  %v1144 = vpack.c.b16 %v696, %v680
  %v1145 = vpack.c.b16 %v697, %v681
  %v1146 = vpack.c.b16 %v714, %v698
  %v1147 = vpack.c.b16 %v715, %v699
  %v1148 = vpack.c.b16 %v716, %v700
  %v1149 = vpack.c.b16 %v717, %v701
  %v1150 = vpack.c.b16 %v718, %v702
  %v1151 = vpack.c.b16 %v719, %v703
  %v1152 = vpack.c.b16 %v720, %v704
  %v1153 = vpack.c.b16 %v721, %v705
  %v1154 = vpack.c.b16 %v722, %v706
  %v1155 = vpack.c.b16 %v723, %v707
  %v1156 = vpack.c.b16 %v724, %v708
  %v1157 = vpack.c.b16 %v725, %v709
  %v1158 = vpack.c.b16 %v726, %v710
  %v1159 = vpack.c.b16 %v727, %v711
  %v1160 = vpack.c.b16 %v728, %v712
  %v1161 = vpack.c.b16 %v729, %v713
  %v1162 = vpack.c.b16 %v746, %v730
  %v1163 = vpack.c.b16 %v747, %v731
  %v1164 = vpack.c.b16 %v748, %v732
  %v1165 = vpack.c.b16 %v749, %v733
  %v1166 = vpack.c.b16 %v750, %v734
  %v1167 = vpack.c.b16 %v751, %v735
  %v1168 = vpack.c.b16 %v752, %v736
  %v1169 = vpack.c.b16 %v753, %v737
  %v1170 = vpack.c.b16 %v754, %v738
  %v1171 = vpack.c.b16 %v755, %v739
  %v1172 = vpack.c.b16 %v756, %v740
  %v1173 = vpack.c.b16 %v757, %v741
  %v1174 = vpack.c.b16 %v758, %v742
  %v1175 = vpack.c.b16 %v759, %v743
  %v1176 = vpack.c.b16 %v760, %v744
  %v1177 = vpack.c.b16 %v761, %v745
  %v1178 = vpack.c.b16 %v778, %v762
  %v1179 = vpack.c.b16 %v779, %v763
  %v1180 = vpack.c.b16 %v780, %v764
  %v1181 = vpack.c.b16 %v781, %v765
  %v1182 = vpack.c.b16 %v782, %v766
  %v1183 = vpack.c.b16 %v783, %v767
  %v1184 = vpack.c.b16 %v784, %v768
  %v1185 = vpack.c.b16 %v785, %v769
  %v1186 = vpack.c.b16 %v786, %v770
  %v1187 = vpack.c.b16 %v787, %v771
  %v1188 = vpack.c.b16 %v788, %v772
  %v1189 = vpack.c.b16 %v789, %v773
  %v1190 = vpack.c.b16 %v790, %v774
  %v1191 = vpack.c.b16 %v791, %v775
  %v1192 = vpack.c.b16 %v792, %v776
  %v1193 = vpack.c.b16 %v793, %v777
  %v1194 = vpack.c.b16 %v810, %v794
  %v1195 = vpack.c.b16 %v811, %v795
  %v1196 = vpack.c.b16 %v812, %v796
  %v1197 = vpack.c.b16 %v813, %v797
  %v1198 = vpack.c.b16 %v814, %v798
  %v1199 = vpack.c.b16 %v815, %v799
  %v1200 = vpack.c.b16 %v816, %v800
  %v1201 = vpack.c.b16 %v817, %v801
  %v1202 = vpack.c.b16 %v818, %v802
  %v1203 = vpack.c.b16 %v819, %v803
  %v1204 = vpack.c.b16 %v820, %v804
  %v1205 = vpack.c.b16 %v821, %v805
  %v1206 = vpack.c.b16 %v822, %v806
  %v1207 = vpack.c.b16 %v823, %v807
  %v1208 = vpack.c.b16 %v824, %v808
  %v1209 = vpack.c.b16 %v825, %v809
  %v1210 = vpack.c.b16 %v842, %v826
  %v1211 = vpack.c.b16 %v843, %v827
  %v1212 = vpack.c.b16 %v844, %v828
  %v1213 = vpack.c.b16 %v845, %v829
  %v1214 = vpack.c.b16 %v846, %v830
  %v1215 = vpack.c.b16 %v847, %v831
  %v1216 = vpack.c.b16 %v848, %v832
  %v1217 = vpack.c.b16 %v849, %v833
  %v1218 = vpack.c.b16 %v850, %v834
  %v1219 = vpack.c.b16 %v851, %v835
  %v1220 = vpack.c.b16 %v852, %v836
  %v1221 = vpack.c.b16 %v853, %v837
  %v1222 = vpack.c.b16 %v854, %v838
  %v1223 = vpack.c.b16 %v855, %v839
  %v1224 = vpack.c.b16 %v856, %v840
  %v1225 = vpack.c.b16 %v857, %v841
  %v1226 = vpack.c.b16 %v874, %v858
  %v1227 = vpack.c.b16 %v875, %v859
  %v1228 = vpack.c.b16 %v876, %v860
  %v1229 = vpack.c.b16 %v877, %v861
  %v1230 = vpack.c.b16 %v878, %v862
  %v1231 = vpack.c.b16 %v879, %v863
  %v1232 = vpack.c.b16 %v880, %v864
  %v1233 = vpack.c.b16 %v881, %v865
  %v1234 = vpack.c.b16 %v882, %v866
  %v1235 = vpack.c.b16 %v883, %v867
  %v1236 = vpack.c.b16 %v884, %v868
  %v1237 = vpack.c.b16 %v885, %v869
  %v1238 = vpack.c.b16 %v886, %v870
  %v1239 = vpack.c.b16 %v887, %v871
  %v1240 = vpack.c.b16 %v888, %v872
  %v1241 = vpack.c.b16 %v889, %v873
  %v1242 = vpack.c.b16 %v906, %v890
  %v1243 = vpack.c.b16 %v907, %v891
  %v1244 = vpack.c.b16 %v908, %v892
  %v1245 = vpack.c.b16 %v909, %v893
  %v1246 = vpack.c.b16 %v910, %v894
  %v1247 = vpack.c.b16 %v911, %v895
  %v1248 = vpack.c.b16 %v912, %v896
  %v1249 = vpack.c.b16 %v913, %v897
  %v1250 = vpack.c.b16 %v914, %v898
  %v1251 = vpack.c.b16 %v915, %v899
  %v1252 = vpack.c.b16 %v916, %v900
  %v1253 = vpack.c.b16 %v917, %v901
  %v1254 = vpack.c.b16 %v918, %v902
  %v1255 = vpack.c.b16 %v919, %v903
  %v1256 = vpack.c.b16 %v920, %v904
  %v1257 = vpack.c.b16 %v921, %v905
  %v1258 = vpack.c.b16 %v938, %v922
  %v1259 = vpack.c.b16 %v939, %v923
  %v1260 = vpack.c.b16 %v940, %v924
  %v1261 = vpack.c.b16 %v941, %v925
  %v1262 = vpack.c.b16 %v942, %v926
  %v1263 = vpack.c.b16 %v943, %v927
  %v1264 = vpack.c.b16 %v944, %v928
  %v1265 = vpack.c.b16 %v945, %v929
  %v1266 = vpack.c.b16 %v946, %v930
  %v1267 = vpack.c.b16 %v947, %v931
  %v1268 = vpack.c.b16 %v948, %v932
  %v1269 = vpack.c.b16 %v949, %v933
  %v1270 = vpack.c.b16 %v950, %v934
  %v1271 = vpack.c.b16 %v951, %v935
  %v1272 = vpack.c.b16 %v952, %v936
  %v1273 = vpack.c.b16 %v953, %v937
  %v1274 = vpack.c.b16 %v970, %v954
  %v1275 = vpack.c.b16 %v971, %v955
  %v1276 = vpack.c.b16 %v972, %v956
  %v1277 = vpack.c.b16 %v973, %v957
  %v1278 = vpack.c.b16 %v974, %v958
  %v1279 = vpack.c.b16 %v975, %v959
  %v1280 = vpack.c.b16 %v976, %v960
  %v1281 = vpack.c.b16 %v977, %v961
  %v1282 = vpack.c.b16 %v978, %v962
  %v1283 = vpack.c.b16 %v979, %v963
  %v1284 = vpack.c.b16 %v980, %v964
  %v1285 = vpack.c.b16 %v981, %v965
  %v1286 = vpack.c.b16 %v982, %v966
  %v1287 = vpack.c.b16 %v983, %v967
  %v1288 = vpack.c.b16 %v984, %v968
  %v1289 = vpack.c.b16 %v985, %v969
  %v1290 = vpack.c.b16 %v1002, %v986
  %v1291 = vpack.c.b16 %v1003, %v987
  %v1292 = vpack.c.b16 %v1004, %v988
  %v1293 = vpack.c.b16 %v1005, %v989
  %v1294 = vpack.c.b16 %v1006, %v990
  %v1295 = vpack.c.b16 %v1007, %v991
  %v1296 = vpack.c.b16 %v1008, %v992
  %v1297 = vpack.c.b16 %v1009, %v993
  %v1298 = vpack.c.b16 %v1010, %v994
  %v1299 = vpack.c.b16 %v1011, %v995
  %v1300 = vpack.c.b16 %v1012, %v996
  %v1301 = vpack.c.b16 %v1013, %v997
  %v1302 = vpack.c.b16 %v1014, %v998
  %v1303 = vpack.c.b16 %v1015, %v999
  %v1304 = vpack.c.b16 %v1016, %v1000
  %v1305 = vpack.c.b16 %v1017, %v1001
  %v1306 = vpack.c.b16 %v1034, %v1018
  %v1307 = vpack.c.b16 %v1035, %v1019
  %v1308 = vpack.c.b16 %v1036, %v1020
  %v1309 = vpack.c.b16 %v1037, %v1021
  %v1310 = vpack.c.b16 %v1038, %v1022
  %v1311 = vpack.c.b16 %v1039, %v1023
  %v1312 = vpack.c.b16 %v1040, %v1024
  %v1313 = vpack.c.b16 %v1041, %v1025
  %v1314 = vpack.c.b16 %v1042, %v1026
  %v1315 = vpack.c.b16 %v1043, %v1027
  %v1316 = vpack.c.b16 %v1044, %v1028
  %v1317 = vpack.c.b16 %v1045, %v1029
  %v1318 = vpack.c.b16 %v1046, %v1030
  %v1319 = vpack.c.b16 %v1047, %v1031
  %v1320 = vpack.c.b16 %v1048, %v1032
  %v1321 = vpack.c.b16 %v1049, %v1033
  %v1322 = vpack.c.b16 %v1066, %v1050
  %v1323 = vpack.c.b16 %v1067, %v1051
  %v1324 = vpack.c.b16 %v1068, %v1052
  %v1325 = vpack.c.b16 %v1069, %v1053
  %v1326 = vpack.c.b16 %v1070, %v1054
  %v1327 = vpack.c.b16 %v1071, %v1055
  %v1328 = vpack.c.b16 %v1072, %v1056
  %v1329 = vpack.c.b16 %v1073, %v1057
  %v1330 = vpack.c.b16 %v1074, %v1058
  %v1331 = vpack.c.b16 %v1075, %v1059
  %v1332 = vpack.c.b16 %v1076, %v1060
  %v1333 = vpack.c.b16 %v1077, %v1061
  %v1334 = vpack.c.b16 %v1078, %v1062
  %v1335 = vpack.c.b16 %v1079, %v1063
  %v1336 = vpack.c.b16 %v1080, %v1064
  %v1337 = vpack.c.b16 %v1081, %v1065
  %1594 = vmatprep.subr.bf16.mxu0 %v1083
  %1595 = vmatpush1.bf16.msra.mxu0 %v1082
  %1596 = vmatprep.subr.bf16.mxu0 %v1099
  %1597 = vmatpush1.bf16.msra.mxu0 %v1098
  %1598 = vmatprep.subr.bf16.mxu0 %v1115
  %1599 = vmatpush1.bf16.msra.mxu0 %v1114
  %1600 = vmatprep.subr.bf16.mxu0 %v1131
  %1601 = vmatpush1.bf16.msra.mxu0 %v1130
  %1602 = vmatprep.subr.bf16.mxu0 %v1147
  %1603 = vmatpush1.bf16.msra.mxu0 %v1146
  %1604 = vmatprep.subr.bf16.mxu0 %v1163
  %1605 = vmatpush1.bf16.msra.mxu0 %v1162
  %1606 = vmatprep.subr.bf16.mxu0 %v1179
  %1607 = vmatpush1.bf16.msra.mxu0 %v1178
  %1608 = vmatprep.subr.bf16.mxu0 %v1195
  %1609 = vmatpush1.bf16.msra.mxu0 %v1194
  %1610 = vmatprep.subr.bf16.mxu0 %v1211
  %1611 = vmatpush1.bf16.msra.mxu0 %v1210
  %1612 = vmatprep.subr.bf16.mxu0 %v1227
  %1613 = vmatpush1.bf16.msra.mxu0 %v1226
  %1614 = vmatprep.subr.bf16.mxu0 %v1243
  %1615 = vmatpush1.bf16.msra.mxu0 %v1242
  %1616 = vmatprep.subr.bf16.mxu0 %v1259
  %1617 = vmatpush1.bf16.msra.mxu0 %v1258
  %1618 = vmatprep.subr.bf16.mxu0 %v1275
  %1619 = vmatpush1.bf16.msra.mxu0 %v1274
  %1620 = vmatprep.subr.bf16.mxu0 %v1291
  %1621 = vmatpush1.bf16.msra.mxu0 %v1290
  %1622 = vmatprep.subr.bf16.mxu0 %v1307
  %1623 = vmatpush1.bf16.msra.mxu0 %v1306
  %1624 = vmatprep.subr.bf16.mxu0 %v1323
  %1625 = vmatpush1.bf16.msra.mxu0 %v1322
  %1626 = vmatprep.mubr.bf16.mxu0 %v311
  %1627 = vmatmul.mubr.bf16.gmra.mrb[0].mxu0 %v310
  %v1628 = vpop.f32.mrb[0].mxu0
  %v1629 = vadd.f32 0.0, %v1628
  %v1630 = vpop.f32.mrb[0].mxu0
  %v1631 = vadd.f32 0.0, %v1630
  %v1632 = vpop.f32.mrb[0].mxu0
  %v1633 = vpop.f32.mrb[0].mxu0
  %1634 = vdwg.mxu0
  %1635 = vmatprep.subr.bf16.mxu0 %v1085
  %1636 = vmatpush1.bf16.msra.mxu0 %v1084
  %1637 = vmatprep.subr.bf16.mxu0 %v1101
  %1638 = vmatpush1.bf16.msra.mxu0 %v1100
  %1639 = vmatprep.subr.bf16.mxu0 %v1117
  %1640 = vmatpush1.bf16.msra.mxu0 %v1116
  %1641 = vmatprep.subr.bf16.mxu0 %v1133
  %1642 = vmatpush1.bf16.msra.mxu0 %v1132
  %1643 = vmatprep.subr.bf16.mxu0 %v1149
  %1644 = vmatpush1.bf16.msra.mxu0 %v1148
  %1645 = vmatprep.subr.bf16.mxu0 %v1165
  %1646 = vmatpush1.bf16.msra.mxu0 %v1164
  %1647 = vmatprep.subr.bf16.mxu0 %v1181
  %1648 = vmatpush1.bf16.msra.mxu0 %v1180
  %1649 = vmatprep.subr.bf16.mxu0 %v1197
  %1650 = vmatpush1.bf16.msra.mxu0 %v1196
  %1651 = vmatprep.subr.bf16.mxu0 %v1213
  %1652 = vmatpush1.bf16.msra.mxu0 %v1212
  %1653 = vmatprep.subr.bf16.mxu0 %v1229
  %1654 = vmatpush1.bf16.msra.mxu0 %v1228
  %1655 = vmatprep.subr.bf16.mxu0 %v1245
  %1656 = vmatpush1.bf16.msra.mxu0 %v1244
  %1657 = vmatprep.subr.bf16.mxu0 %v1261
  %1658 = vmatpush1.bf16.msra.mxu0 %v1260
  %1659 = vmatprep.subr.bf16.mxu0 %v1277
  %1660 = vmatpush1.bf16.msra.mxu0 %v1276
  %1661 = vmatprep.subr.bf16.mxu0 %v1293
  %1662 = vmatpush1.bf16.msra.mxu0 %v1292
  %1663 = vmatprep.subr.bf16.mxu0 %v1309
  %1664 = vmatpush1.bf16.msra.mxu0 %v1308
  %1665 = vmatprep.subr.bf16.mxu0 %v1325
  %1666 = vmatpush1.bf16.msra.mxu0 %v1324
  %1667 = vmatprep.mubr.bf16.mxu0 %v311
  %1668 = vmatmul.mubr.bf16.gmra.mrb[0].mxu0 %v310
  %v1669 = vpop.f32.mrb[0].mxu0
  %v1670 = vadd.f32 0.0, %v1669
  %v1671 = vpop.f32.mrb[0].mxu0
  %v1672 = vadd.f32 0.0, %v1671
  %v1673 = vpop.f32.mrb[0].mxu0
  %v1674 = vpop.f32.mrb[0].mxu0
  %1675 = vdwg.mxu0
  %1676 = vmatprep.subr.bf16.mxu0 %v1087
  %1677 = vmatpush1.bf16.msra.mxu0 %v1086
  %1678 = vmatprep.subr.bf16.mxu0 %v1103
  %1679 = vmatpush1.bf16.msra.mxu0 %v1102
  %1680 = vmatprep.subr.bf16.mxu0 %v1119
  %1681 = vmatpush1.bf16.msra.mxu0 %v1118
  %1682 = vmatprep.subr.bf16.mxu0 %v1135
  %1683 = vmatpush1.bf16.msra.mxu0 %v1134
  %1684 = vmatprep.subr.bf16.mxu0 %v1151
  %1685 = vmatpush1.bf16.msra.mxu0 %v1150
  %1686 = vmatprep.subr.bf16.mxu0 %v1167
  %1687 = vmatpush1.bf16.msra.mxu0 %v1166
  %1688 = vmatprep.subr.bf16.mxu0 %v1183
  %1689 = vmatpush1.bf16.msra.mxu0 %v1182
  %1690 = vmatprep.subr.bf16.mxu0 %v1199
  %1691 = vmatpush1.bf16.msra.mxu0 %v1198
  %1692 = vmatprep.subr.bf16.mxu0 %v1215
  %1693 = vmatpush1.bf16.msra.mxu0 %v1214
  %1694 = vmatprep.subr.bf16.mxu0 %v1231
  %1695 = vmatpush1.bf16.msra.mxu0 %v1230
  %1696 = vmatprep.subr.bf16.mxu0 %v1247
  %1697 = vmatpush1.bf16.msra.mxu0 %v1246
  %1698 = vmatprep.subr.bf16.mxu0 %v1263
  %1699 = vmatpush1.bf16.msra.mxu0 %v1262
  %1700 = vmatprep.subr.bf16.mxu0 %v1279
  %1701 = vmatpush1.bf16.msra.mxu0 %v1278
  %1702 = vmatprep.subr.bf16.mxu0 %v1295
  %1703 = vmatpush1.bf16.msra.mxu0 %v1294
  %1704 = vmatprep.subr.bf16.mxu0 %v1311
  %1705 = vmatpush1.bf16.msra.mxu0 %v1310
  %1706 = vmatprep.subr.bf16.mxu0 %v1327
  %1707 = vmatpush1.bf16.msra.mxu0 %v1326
  %1708 = vmatprep.mubr.bf16.mxu0 %v311
  %1709 = vmatmul.mubr.bf16.gmra.mrb[0].mxu0 %v310
  %v1710 = vpop.f32.mrb[0].mxu0
  %v1711 = vadd.f32 0.0, %v1710
  %v1712 = vpop.f32.mrb[0].mxu0
  %v1713 = vadd.f32 0.0, %v1712
  %v1714 = vpop.f32.mrb[0].mxu0
  %v1715 = vpop.f32.mrb[0].mxu0
  %1716 = vdwg.mxu0
  %1717 = vmatprep.subr.bf16.mxu0 %v1089
  %1718 = vmatpush1.bf16.msra.mxu0 %v1088
  %1719 = vmatprep.subr.bf16.mxu0 %v1105
  %1720 = vmatpush1.bf16.msra.mxu0 %v1104
  %1721 = vmatprep.subr.bf16.mxu0 %v1121
  %1722 = vmatpush1.bf16.msra.mxu0 %v1120
  %1723 = vmatprep.subr.bf16.mxu0 %v1137
  %1724 = vmatpush1.bf16.msra.mxu0 %v1136
  %1725 = vmatprep.subr.bf16.mxu0 %v1153
  %1726 = vmatpush1.bf16.msra.mxu0 %v1152
  %1727 = vmatprep.subr.bf16.mxu0 %v1169
  %1728 = vmatpush1.bf16.msra.mxu0 %v1168
  %1729 = vmatprep.subr.bf16.mxu0 %v1185
  %1730 = vmatpush1.bf16.msra.mxu0 %v1184
  %1731 = vmatprep.subr.bf16.mxu0 %v1201
  %1732 = vmatpush1.bf16.msra.mxu0 %v1200
  %1733 = vmatprep.subr.bf16.mxu0 %v1217
  %1734 = vmatpush1.bf16.msra.mxu0 %v1216
  %1735 = vmatprep.subr.bf16.mxu0 %v1233
  %1736 = vmatpush1.bf16.msra.mxu0 %v1232
  %1737 = vmatprep.subr.bf16.mxu0 %v1249
  %1738 = vmatpush1.bf16.msra.mxu0 %v1248
  %1739 = vmatprep.subr.bf16.mxu0 %v1265
  %1740 = vmatpush1.bf16.msra.mxu0 %v1264
  %1741 = vmatprep.subr.bf16.mxu0 %v1281
  %1742 = vmatpush1.bf16.msra.mxu0 %v1280
  %1743 = vmatprep.subr.bf16.mxu0 %v1297
  %1744 = vmatpush1.bf16.msra.mxu0 %v1296
  %1745 = vmatprep.subr.bf16.mxu0 %v1313
  %1746 = vmatpush1.bf16.msra.mxu0 %v1312
  %1747 = vmatprep.subr.bf16.mxu0 %v1329
  %1748 = vmatpush1.bf16.msra.mxu0 %v1328
  %1749 = vmatprep.mubr.bf16.mxu0 %v311
  %1750 = vmatmul.mubr.bf16.gmra.mrb[0].mxu0 %v310
  %v1751 = vpop.f32.mrb[0].mxu0
  %v1752 = vadd.f32 0.0, %v1751
  %v1753 = vpop.f32.mrb[0].mxu0
  %v1754 = vadd.f32 0.0, %v1753
  %v1755 = vpop.f32.mrb[0].mxu0
  %v1756 = vpop.f32.mrb[0].mxu0
  %1757 = vdwg.mxu0
  %1758 = vmatprep.subr.bf16.mxu0 %v1091
  %1759 = vmatpush1.bf16.msra.mxu0 %v1090
  %1760 = vmatprep.subr.bf16.mxu0 %v1107
  %1761 = vmatpush1.bf16.msra.mxu0 %v1106
  %1762 = vmatprep.subr.bf16.mxu0 %v1123
  %1763 = vmatpush1.bf16.msra.mxu0 %v1122
  %1764 = vmatprep.subr.bf16.mxu0 %v1139
  %1765 = vmatpush1.bf16.msra.mxu0 %v1138
  %1766 = vmatprep.subr.bf16.mxu0 %v1155
  %1767 = vmatpush1.bf16.msra.mxu0 %v1154
  %1768 = vmatprep.subr.bf16.mxu0 %v1171
  %1769 = vmatpush1.bf16.msra.mxu0 %v1170
  %1770 = vmatprep.subr.bf16.mxu0 %v1187
  %1771 = vmatpush1.bf16.msra.mxu0 %v1186
  %1772 = vmatprep.subr.bf16.mxu0 %v1203
  %1773 = vmatpush1.bf16.msra.mxu0 %v1202
  %1774 = vmatprep.subr.bf16.mxu0 %v1219
  %1775 = vmatpush1.bf16.msra.mxu0 %v1218
  %1776 = vmatprep.subr.bf16.mxu0 %v1235
  %1777 = vmatpush1.bf16.msra.mxu0 %v1234
  %1778 = vmatprep.subr.bf16.mxu0 %v1251
  %1779 = vmatpush1.bf16.msra.mxu0 %v1250
  %1780 = vmatprep.subr.bf16.mxu0 %v1267
  %1781 = vmatpush1.bf16.msra.mxu0 %v1266
  %1782 = vmatprep.subr.bf16.mxu0 %v1283
  %1783 = vmatpush1.bf16.msra.mxu0 %v1282
  %1784 = vmatprep.subr.bf16.mxu0 %v1299
  %1785 = vmatpush1.bf16.msra.mxu0 %v1298
  %1786 = vmatprep.subr.bf16.mxu0 %v1315
  %1787 = vmatpush1.bf16.msra.mxu0 %v1314
  %1788 = vmatprep.subr.bf16.mxu0 %v1331
  %1789 = vmatpush1.bf16.msra.mxu0 %v1330
  %1790 = vmatprep.mubr.bf16.mxu0 %v311
  %1791 = vmatmul.mubr.bf16.gmra.mrb[0].mxu0 %v310
  %v1792 = vpop.f32.mrb[0].mxu0
  %v1793 = vadd.f32 0.0, %v1792
  %v1794 = vpop.f32.mrb[0].mxu0
  %v1795 = vadd.f32 0.0, %v1794
  %v1796 = vpop.f32.mrb[0].mxu0
  %v1797 = vpop.f32.mrb[0].mxu0
  %1798 = vdwg.mxu0
  %1799 = vmatprep.subr.bf16.mxu0 %v1093
  %1800 = vmatpush1.bf16.msra.mxu0 %v1092
  %1801 = vmatprep.subr.bf16.mxu0 %v1109
  %1802 = vmatpush1.bf16.msra.mxu0 %v1108
  %1803 = vmatprep.subr.bf16.mxu0 %v1125
  %1804 = vmatpush1.bf16.msra.mxu0 %v1124
  %1805 = vmatprep.subr.bf16.mxu0 %v1141
  %1806 = vmatpush1.bf16.msra.mxu0 %v1140
  %1807 = vmatprep.subr.bf16.mxu0 %v1157
  %1808 = vmatpush1.bf16.msra.mxu0 %v1156
  %1809 = vmatprep.subr.bf16.mxu0 %v1173
  %1810 = vmatpush1.bf16.msra.mxu0 %v1172
  %1811 = vmatprep.subr.bf16.mxu0 %v1189
  %1812 = vmatpush1.bf16.msra.mxu0 %v1188
  %1813 = vmatprep.subr.bf16.mxu0 %v1205
  %1814 = vmatpush1.bf16.msra.mxu0 %v1204
  %1815 = vmatprep.subr.bf16.mxu0 %v1221
  %1816 = vmatpush1.bf16.msra.mxu0 %v1220
  %1817 = vmatprep.subr.bf16.mxu0 %v1237
  %1818 = vmatpush1.bf16.msra.mxu0 %v1236
  %1819 = vmatprep.subr.bf16.mxu0 %v1253
  %1820 = vmatpush1.bf16.msra.mxu0 %v1252
  %1821 = vmatprep.subr.bf16.mxu0 %v1269
  %1822 = vmatpush1.bf16.msra.mxu0 %v1268
  %1823 = vmatprep.subr.bf16.mxu0 %v1285
  %1824 = vmatpush1.bf16.msra.mxu0 %v1284
  %1825 = vmatprep.subr.bf16.mxu0 %v1301
  %1826 = vmatpush1.bf16.msra.mxu0 %v1300
  %1827 = vmatprep.subr.bf16.mxu0 %v1317
  %1828 = vmatpush1.bf16.msra.mxu0 %v1316
  %1829 = vmatprep.subr.bf16.mxu0 %v1333
  %1830 = vmatpush1.bf16.msra.mxu0 %v1332
  %1831 = vmatprep.mubr.bf16.mxu0 %v311
  %1832 = vmatmul.mubr.bf16.gmra.mrb[0].mxu0 %v310
  %v1833 = vpop.f32.mrb[0].mxu0
  %v1834 = vadd.f32 0.0, %v1833
  %v1835 = vpop.f32.mrb[0].mxu0
  %v1836 = vadd.f32 0.0, %v1835
  %v1837 = vpop.f32.mrb[0].mxu0
  %v1838 = vpop.f32.mrb[0].mxu0
  %1839 = vdwg.mxu0
  %1840 = vmatprep.subr.bf16.mxu0 %v1095
  %1841 = vmatpush1.bf16.msra.mxu0 %v1094
  %1842 = vmatprep.subr.bf16.mxu0 %v1111
  %1843 = vmatpush1.bf16.msra.mxu0 %v1110
  %1844 = vmatprep.subr.bf16.mxu0 %v1127
  %1845 = vmatpush1.bf16.msra.mxu0 %v1126
  %1846 = vmatprep.subr.bf16.mxu0 %v1143
  %1847 = vmatpush1.bf16.msra.mxu0 %v1142
  %1848 = vmatprep.subr.bf16.mxu0 %v1159
  %1849 = vmatpush1.bf16.msra.mxu0 %v1158
  %1850 = vmatprep.subr.bf16.mxu0 %v1175
  %1851 = vmatpush1.bf16.msra.mxu0 %v1174
  %1852 = vmatprep.subr.bf16.mxu0 %v1191
  %1853 = vmatpush1.bf16.msra.mxu0 %v1190
  %1854 = vmatprep.subr.bf16.mxu0 %v1207
  %1855 = vmatpush1.bf16.msra.mxu0 %v1206
  %1856 = vmatprep.subr.bf16.mxu0 %v1223
  %1857 = vmatpush1.bf16.msra.mxu0 %v1222
  %1858 = vmatprep.subr.bf16.mxu0 %v1239
  %1859 = vmatpush1.bf16.msra.mxu0 %v1238
  %1860 = vmatprep.subr.bf16.mxu0 %v1255
  %1861 = vmatpush1.bf16.msra.mxu0 %v1254
  %1862 = vmatprep.subr.bf16.mxu0 %v1271
  %1863 = vmatpush1.bf16.msra.mxu0 %v1270
  %1864 = vmatprep.subr.bf16.mxu0 %v1287
  %1865 = vmatpush1.bf16.msra.mxu0 %v1286
  %1866 = vmatprep.subr.bf16.mxu0 %v1303
  %1867 = vmatpush1.bf16.msra.mxu0 %v1302
  %1868 = vmatprep.subr.bf16.mxu0 %v1319
  %1869 = vmatpush1.bf16.msra.mxu0 %v1318
  %1870 = vmatprep.subr.bf16.mxu0 %v1335
  %1871 = vmatpush1.bf16.msra.mxu0 %v1334
  %1872 = vmatprep.mubr.bf16.mxu0 %v311
  %1873 = vmatmul.mubr.bf16.gmra.mrb[0].mxu0 %v310
  %v1874 = vpop.f32.mrb[0].mxu0
  %v1875 = vadd.f32 0.0, %v1874
  %v1876 = vpop.f32.mrb[0].mxu0
  %v1877 = vadd.f32 0.0, %v1876
  %v1878 = vpop.f32.mrb[0].mxu0
  %v1879 = vpop.f32.mrb[0].mxu0
  %1880 = vdwg.mxu0
  %1881 = vmatprep.subr.bf16.mxu0 %v1097
  %1882 = vmatpush1.bf16.msra.mxu0 %v1096
  %1883 = vmatprep.subr.bf16.mxu0 %v1113
  %1884 = vmatpush1.bf16.msra.mxu0 %v1112
  %1885 = vmatprep.subr.bf16.mxu0 %v1129
  %1886 = vmatpush1.bf16.msra.mxu0 %v1128
  %1887 = vmatprep.subr.bf16.mxu0 %v1145
  %1888 = vmatpush1.bf16.msra.mxu0 %v1144
  %1889 = vmatprep.subr.bf16.mxu0 %v1161
  %1890 = vmatpush1.bf16.msra.mxu0 %v1160
  %1891 = vmatprep.subr.bf16.mxu0 %v1177
  %1892 = vmatpush1.bf16.msra.mxu0 %v1176
  %1893 = vmatprep.subr.bf16.mxu0 %v1193
  %1894 = vmatpush1.bf16.msra.mxu0 %v1192
  %1895 = vmatprep.subr.bf16.mxu0 %v1209
  %1896 = vmatpush1.bf16.msra.mxu0 %v1208
  %1897 = vmatprep.subr.bf16.mxu0 %v1225
  %1898 = vmatpush1.bf16.msra.mxu0 %v1224
  %1899 = vmatprep.subr.bf16.mxu0 %v1241
  %1900 = vmatpush1.bf16.msra.mxu0 %v1240
  %1901 = vmatprep.subr.bf16.mxu0 %v1257
  %1902 = vmatpush1.bf16.msra.mxu0 %v1256
  %1903 = vmatprep.subr.bf16.mxu0 %v1273
  %1904 = vmatpush1.bf16.msra.mxu0 %v1272
  %1905 = vmatprep.subr.bf16.mxu0 %v1289
  %1906 = vmatpush1.bf16.msra.mxu0 %v1288
  %1907 = vmatprep.subr.bf16.mxu0 %v1305
  %1908 = vmatpush1.bf16.msra.mxu0 %v1304
  %1909 = vmatprep.subr.bf16.mxu0 %v1321
  %1910 = vmatpush1.bf16.msra.mxu0 %v1320
  %1911 = vmatprep.subr.bf16.mxu0 %v1337
  %1912 = vmatpush1.bf16.msra.mxu0 %v1336
  %1913 = vmatprep.mubr.bf16.mxu0 %v311
  %1914 = vmatmul.mubr.bf16.gmra.mrb[0].mxu0 %v310
  %v1915 = vpop.f32.mrb[0].mxu0
  %v1916 = vadd.f32 0.0, %v1915
  %v1917 = vpop.f32.mrb[0].mxu0
  %v1918 = vadd.f32 0.0, %v1917
  %v1919 = vpop.f32.mrb[0].mxu0
  %v1920 = vpop.f32.mrb[0].mxu0
  %1921 = vdwg.mxu0
  %v1922 = vadd.f32 %v34, %v1629
  %v1923 = vadd.f32 %v35, %v1631
  %v1924 = vadd.f32 %v36, %v1670
  %v1925 = vadd.f32 %v37, %v1672
  %v1926 = vadd.f32 %v38, %v1711
  %v1927 = vadd.f32 %v39, %v1713
  %v1928 = vadd.f32 %v40, %v1752
  %v1929 = vadd.f32 %v41, %v1754
  %v1930 = vadd.f32 %v42, %v1793
  %v1931 = vadd.f32 %v43, %v1795
  %v1932 = vadd.f32 %v44, %v1834
  %v1933 = vadd.f32 %v45, %v1836
  %v1934 = vadd.f32 %v46, %v1875
  %v1935 = vadd.f32 %v47, %v1877
  %v1936 = vadd.f32 %v48, %v1916
  %v1937 = vadd.f32 %v49, %v1918
  %1938 = vst [vmem:[%s3] sm:$0xff] %v1922
  %1939 = vst [vmem:[%s3 + $0x8] sm:$0xff] %v1923
  %1940 = vst [vmem:[%s3 + $0x10] sm:$0xff] %v1924
  %1941 = vst [vmem:[%s3 + $0x18] sm:$0xff] %v1925
  %1942 = vst [vmem:[%s3 + $0x20] sm:$0xff] %v1926
  %1943 = vst [vmem:[%s3 + $0x28] sm:$0xff] %v1927
  %1944 = vst [vmem:[%s3 + $0x30] sm:$0xff] %v1928
  %1945 = vst [vmem:[%s3 + $0x38] sm:$0xff] %v1929
  %1946 = vst [vmem:[%s3 + $0x40] sm:$0xff] %v1930
  %1947 = vst [vmem:[%s3 + $0x48] sm:$0xff] %v1931
  %1948 = vst [vmem:[%s3 + $0x50] sm:$0xff] %v1932
  %1949 = vst [vmem:[%s3 + $0x58] sm:$0xff] %v1933
  %1950 = vst [vmem:[%s3 + $0x60] sm:$0xff] %v1934
  %1951 = vst [vmem:[%s3 + $0x68] sm:$0xff] %v1935
  %1952 = vst [vmem:[%s3 + $0x70] sm:$0xff] %v1936
  %1953 = vst [vmem:[%s3 + $0x78] sm:$0xff] %v1937
  // Predicated region
  $region18: #{backbone_forward.20} parent=0 // pred_check
    %p1954 = pneg %p14
  $region19: #{backbone_forward.20} parent=0 // pred_check_branch
    %1956 = sbr.rel (%p1954) target = $region21
  $region20: #{backbone_forward.20} parent=0 // pred_region
    %v1957 = vld [vmem:[%s3] sm:$0xff]
    %v1958 = vld [vmem:[%s3 + $0x8] sm:$0xff]
    %v1959 = vld [vmem:[%s3 + $0x10] sm:$0xff]
    %v1960 = vld [vmem:[%s3 + $0x18] sm:$0xff]
    %v1961 = vld [vmem:[%s3 + $0x20] sm:$0xff]
    %v1962 = vld [vmem:[%s3 + $0x28] sm:$0xff]
    %v1963 = vld [vmem:[%s3 + $0x30] sm:$0xff]
    %v1964 = vld [vmem:[%s3 + $0x38] sm:$0xff]
    %v1965 = vld [vmem:[%s3 + $0x40] sm:$0xff]
    %v1966 = vld [vmem:[%s3 + $0x48] sm:$0xff]
    %v1967 = vld [vmem:[%s3 + $0x50] sm:$0xff]
    %v1968 = vld [vmem:[%s3 + $0x58] sm:$0xff]
    %v1969 = vld [vmem:[%s3 + $0x60] sm:$0xff]
    %v1970 = vld [vmem:[%s3 + $0x68] sm:$0xff]
    %v1971 = vld [vmem:[%s3 + $0x70] sm:$0xff]
    %v1972 = vld [vmem:[%s3 + $0x78] sm:$0xff]
    %v1973 = vld [vmem:[%s2] sm:$0xff]
    %v1974 = vld [vmem:[%s2 + $0x8] sm:$0xff]
    %v1977 = vlaneseq
    %v1978 = vshrl.u32 %v1977, 7
    %v1979 = vsub.s32 0, %v1978
    %v1980 = vrot.slane %v1973, %v1979
    %v1981 = vlaneseq
    %v1982 = vshrl.u32 %v1981, 7
    %v1983 = vsub.s32 1, %v1982
    %v1984 = vrot.slane %v1973, %v1983
    %v1985 = vlaneseq
    %v1986 = vshrl.u32 %v1985, 7
    %v1987 = vsub.s32 2, %v1986
    %v1988 = vrot.slane %v1973, %v1987
    %v1989 = vlaneseq
    %v1990 = vshrl.u32 %v1989, 7
    %v1991 = vsub.s32 3, %v1990
    %v1992 = vrot.slane %v1973, %v1991
    %v1993 = vlaneseq
    %v1994 = vshrl.u32 %v1993, 7
    %v1995 = vsub.s32 4, %v1994
    %v1996 = vrot.slane %v1973, %v1995
    %v1997 = vlaneseq
    %v1998 = vshrl.u32 %v1997, 7
    %v1999 = vsub.s32 5, %v1998
    %v2000 = vrot.slane %v1973, %v1999
    %v2001 = vlaneseq
    %v2002 = vshrl.u32 %v2001, 7
    %v2003 = vsub.s32 6, %v2002
    %v2004 = vrot.slane %v1973, %v2003
    %v2005 = vlaneseq
    %v2006 = vshrl.u32 %v2005, 7
    %v2007 = vsub.s32 7, %v2006
    %v2008 = vrot.slane %v1973, %v2007
    %v2009 = vlaneseq
    %v2010 = vshrl.u32 %v2009, 7
    %v2011 = vsub.s32 0, %v2010
    %v2012 = vrot.slane %v1974, %v2011
    %v2013 = vlaneseq
    %v2014 = vshrl.u32 %v2013, 7
    %v2015 = vsub.s32 1, %v2014
    %v2016 = vrot.slane %v1974, %v2015
    %v2017 = vlaneseq
    %v2018 = vshrl.u32 %v2017, 7
    %v2019 = vsub.s32 2, %v2018
    %v2020 = vrot.slane %v1974, %v2019
    %v2021 = vlaneseq
    %v2022 = vshrl.u32 %v2021, 7
    %v2023 = vsub.s32 3, %v2022
    %v2024 = vrot.slane %v1974, %v2023
    %v2025 = vlaneseq
    %v2026 = vshrl.u32 %v2025, 7
    %v2027 = vsub.s32 4, %v2026
    %v2028 = vrot.slane %v1974, %v2027
    %v2029 = vlaneseq
    %v2030 = vshrl.u32 %v2029, 7
    %v2031 = vsub.s32 5, %v2030
    %v2032 = vrot.slane %v1974, %v2031
    %v2033 = vlaneseq
    %v2034 = vshrl.u32 %v2033, 7
    %v2035 = vsub.s32 6, %v2034
    %v2036 = vrot.slane %v1974, %v2035
    %v2037 = vlaneseq
    %v2038 = vshrl.u32 %v2037, 7
    %v2039 = vsub.s32 7, %v2038
    %v2040 = vrot.slane %v1974, %v2039
    %v2057 = vadd.f32 %v1957, %v1980
    %v2058 = vadd.f32 %v1958, %v1984
    %v2059 = vadd.f32 %v1959, %v1988
    %v2060 = vadd.f32 %v1960, %v1992
    %v2061 = vadd.f32 %v1961, %v1996
    %v2062 = vadd.f32 %v1962, %v2000
    %v2063 = vadd.f32 %v1963, %v2004
    %v2064 = vadd.f32 %v1964, %v2008
    %v2065 = vadd.f32 %v1965, %v2012
    %v2066 = vadd.f32 %v1966, %v2016
    %v2067 = vadd.f32 %v1967, %v2020
    %v2068 = vadd.f32 %v1968, %v2024
    %v2069 = vadd.f32 %v1969, %v2028
    %v2070 = vadd.f32 %v1970, %v2032
    %v2071 = vadd.f32 %v1971, %v2036
    %v2072 = vadd.f32 %v1972, %v2040
    %v2073 = vmax.f32 %v2057, 0.0
    %v2074 = vmax.f32 %v2058, 0.0
    %v2075 = vmax.f32 %v2059, 0.0
    %v2076 = vmax.f32 %v2060, 0.0
    %v2077 = vmax.f32 %v2061, 0.0
    %v2078 = vmax.f32 %v2062, 0.0
    %v2079 = vmax.f32 %v2063, 0.0
    %v2080 = vmax.f32 %v2064, 0.0
    %v2081 = vmax.f32 %v2065, 0.0
    %v2082 = vmax.f32 %v2066, 0.0
    %v2083 = vmax.f32 %v2067, 0.0
    %v2084 = vmax.f32 %v2068, 0.0
    %v2085 = vmax.f32 %v2069, 0.0
    %v2086 = vmax.f32 %v2070, 0.0
    %v2087 = vmax.f32 %v2071, 0.0
    %v2088 = vmax.f32 %v2072, 0.0
    %2089 = vst [vmem:[%s3] sm:$0xff] %v2073
    %2090 = vst [vmem:[%s3 + $0x8] sm:$0xff] %v2074
    %2091 = vst [vmem:[%s3 + $0x10] sm:$0xff] %v2075
    %2092 = vst [vmem:[%s3 + $0x18] sm:$0xff] %v2076
    %2093 = vst [vmem:[%s3 + $0x20] sm:$0xff] %v2077
    %2094 = vst [vmem:[%s3 + $0x28] sm:$0xff] %v2078
    %2095 = vst [vmem:[%s3 + $0x30] sm:$0xff] %v2079
    %2096 = vst [vmem:[%s3 + $0x38] sm:$0xff] %v2080
    %2097 = vst [vmem:[%s3 + $0x40] sm:$0xff] %v2081
    %2098 = vst [vmem:[%s3 + $0x48] sm:$0xff] %v2082
    %2099 = vst [vmem:[%s3 + $0x50] sm:$0xff] %v2083
    %2100 = vst [vmem:[%s3 + $0x58] sm:$0xff] %v2084
    %2101 = vst [vmem:[%s3 + $0x60] sm:$0xff] %v2085
    %2102 = vst [vmem:[%s3 + $0x68] sm:$0xff] %v2086
    %2103 = vst [vmem:[%s3 + $0x70] sm:$0xff] %v2087
    %2104 = vst [vmem:[%s3 + $0x78] sm:$0xff] %v2088
  $region21: #{backbone_forward.20} parent=0 // pred_fallthru
    _
  // Predicated region
  $region22: #{backbone_forward.20} parent=0 // pred_check
    _
  $region23: #{backbone_forward.20} parent=0 // pred_check_branch
    %2106 = sbr.rel (0) target = $region25
  $region24: #{backbone_forward.20} parent=0 // pred_region
    _
  $region25: #{backbone_forward.20} parent=0 // pred_fallthru
    _
  // Predicated region
  $region26: #{backbone_forward.20} parent=0 // pred_check
    _
  $region27: #{backbone_forward.20} parent=0 // pred_check_branch
    %2108 = sbr.rel (0) target = $region29
  $region28: #{backbone_forward.20} parent=0 // pred_region
    _
  $region29: #{backbone_forward.20} parent=0 // pred_fallthru
    _

// kernel: backbone_forward.17
$region0: #{backbone_forward.17}
  #allocation0 [shape = 'u32[]', space=smem, size = 0x4, offset = 0x4, fixed_abs, tag = 'smem constant byte address 0x4 - core index']
  #allocation1 [shape = 'u32[144,128]{1,0:T(1,128)}', space=vmem, size = 0x12000, scoped, tag = 'internal scratch']
  %s0 = inlined_call_operand.vmem [shape: bf16[32,128], index: 0, kind: input, shape index: {}]
  %s1 = inlined_call_operand.vmem [shape: bf16[128,512], index: 1, kind: input, shape index: {}]
  %s2 = inlined_call_operand.vmem [shape: f32[1,512], index: 2, kind: input, shape index: {}]
  %s3 = inlined_call_operand.vmem [shape: f32[32,512], index: 3, kind: output, shape index: {}]
  %s4 = sld [smem:[#allocation0]]
  $region30: #{backbone_forward.17} parent=0
    _
  %s6 = ssub.s32 1, %s4
  %s7 = scalar_select 0, %s6, %s4
  // Predicated region
  $region2: #{backbone_forward.17} parent=0 // pred_check
    _
  $region3: #{backbone_forward.17} parent=0 // pred_check_branch
    %9 = sbr.rel (0) target = $region5
  $region4: #{backbone_forward.17} parent=0 // pred_region
    _
  $region5: #{backbone_forward.17} parent=0 // pred_fallthru
    _
  // Predicated region
  $region6: #{backbone_forward.17} parent=0 // pred_check
    _
  $region7: #{backbone_forward.17} parent=0 // pred_check_branch
    %11 = sbr.rel (0) target = $region9
  $region8: #{backbone_forward.17} parent=0 // pred_region
    _
  $region9: #{backbone_forward.17} parent=0 // pred_fallthru
    _
  // Predicated region
  $region10: #{backbone_forward.17} parent=0 // pred_check
    _
  $region11: #{backbone_forward.17} parent=0 // pred_check_branch
    %13 = sbr.rel (0) target = $region13
  $region12: #{backbone_forward.17} parent=0 // pred_region
    _
  $region13: #{backbone_forward.17} parent=0 // pred_fallthru
    _
  %p15 = scmp.eq.s32.totalorder 0, 0
  // Predicated region
  $region14: #{backbone_forward.17} parent=0 // pred_check
    %p16 = pneg %p15
  $region15: #{backbone_forward.17} parent=0 // pred_check_branch
    %18 = sbr.rel (%p16) target = $region17
  $region16: #{backbone_forward.17} parent=0 // pred_region
    %19 = vst [vmem:[%s3] sm:$0xff] 0.0
    %20 = vst [vmem:[%s3 + $0x8] sm:$0xff] 0.0
    %21 = vst [vmem:[%s3 + $0x10] sm:$0xff] 0.0
    %22 = vst [vmem:[%s3 + $0x18] sm:$0xff] 0.0
    %23 = vst [vmem:[%s3 + $0x20] sm:$0xff] 0.0
    %24 = vst [vmem:[%s3 + $0x28] sm:$0xff] 0.0
    %25 = vst [vmem:[%s3 + $0x30] sm:$0xff] 0.0
    %26 = vst [vmem:[%s3 + $0x38] sm:$0xff] 0.0
    %27 = vst [vmem:[%s3 + $0x40] sm:$0xff] 0.0
    %28 = vst [vmem:[%s3 + $0x48] sm:$0xff] 0.0
    %29 = vst [vmem:[%s3 + $0x50] sm:$0xff] 0.0
    %30 = vst [vmem:[%s3 + $0x58] sm:$0xff] 0.0
    %31 = vst [vmem:[%s3 + $0x60] sm:$0xff] 0.0
    %32 = vst [vmem:[%s3 + $0x68] sm:$0xff] 0.0
    %33 = vst [vmem:[%s3 + $0x70] sm:$0xff] 0.0
    %34 = vst [vmem:[%s3 + $0x78] sm:$0xff] 0.0
  $region17: #{backbone_forward.17} parent=0 // pred_fallthru
    _
  %v35 = vld [vmem:[%s3] sm:$0xff]
  %v36 = vld [vmem:[%s3 + $0x8] sm:$0xff]
  %v37 = vld [vmem:[%s3 + $0x10] sm:$0xff]
  %v38 = vld [vmem:[%s3 + $0x18] sm:$0xff]
  %v39 = vld [vmem:[%s3 + $0x20] sm:$0xff]
  %v40 = vld [vmem:[%s3 + $0x28] sm:$0xff]
  %v41 = vld [vmem:[%s3 + $0x30] sm:$0xff]
  %v42 = vld [vmem:[%s3 + $0x38] sm:$0xff]
  %v43 = vld [vmem:[%s3 + $0x40] sm:$0xff]
  %v44 = vld [vmem:[%s3 + $0x48] sm:$0xff]
  %v45 = vld [vmem:[%s3 + $0x50] sm:$0xff]
  %v46 = vld [vmem:[%s3 + $0x58] sm:$0xff]
  %v47 = vld [vmem:[%s3 + $0x60] sm:$0xff]
  %v48 = vld [vmem:[%s3 + $0x68] sm:$0xff]
  %v49 = vld [vmem:[%s3 + $0x70] sm:$0xff]
  %v50 = vld [vmem:[%s3 + $0x78] sm:$0xff]
  %v51 = vld [vmem:[%s0] sm:$0xf]
  %v52 = vld [vmem:[%s0 + $0x4] sm:$0xf]
  %v53 = vld [vmem:[%s0 + $0x8] sm:$0xf]
  %v54 = vld [vmem:[%s0 + $0xc] sm:$0xf]
  %v55 = vld [vmem:[%s1] sm:$0xff]
  %v56 = vld [vmem:[%s1 + $0x8] sm:$0xff]
  %v57 = vld [vmem:[%s1 + $0x10] sm:$0xff]
  %v58 = vld [vmem:[%s1 + $0x18] sm:$0xff]
  %v59 = vld [vmem:[%s1 + $0x20] sm:$0xff]
  %v60 = vld [vmem:[%s1 + $0x28] sm:$0xff]
  %v61 = vld [vmem:[%s1 + $0x30] sm:$0xff]
  %v62 = vld [vmem:[%s1 + $0x38] sm:$0xff]
  %v63 = vld [vmem:[%s1 + $0x40] sm:$0xff]
  %v64 = vld [vmem:[%s1 + $0x48] sm:$0xff]
  %v65 = vld [vmem:[%s1 + $0x50] sm:$0xff]
  %v66 = vld [vmem:[%s1 + $0x58] sm:$0xff]
  %v67 = vld [vmem:[%s1 + $0x60] sm:$0xff]
  %v68 = vld [vmem:[%s1 + $0x68] sm:$0xff]
  %v69 = vld [vmem:[%s1 + $0x70] sm:$0xff]
  %v70 = vld [vmem:[%s1 + $0x78] sm:$0xff]
  %v71 = vld [vmem:[%s1 + $0x80] sm:$0xff]
  %v72 = vld [vmem:[%s1 + $0x88] sm:$0xff]
  %v73 = vld [vmem:[%s1 + $0x90] sm:$0xff]
  %v74 = vld [vmem:[%s1 + $0x98] sm:$0xff]
  %v75 = vld [vmem:[%s1 + $0xa0] sm:$0xff]
  %v76 = vld [vmem:[%s1 + $0xa8] sm:$0xff]
  %v77 = vld [vmem:[%s1 + $0xb0] sm:$0xff]
  %v78 = vld [vmem:[%s1 + $0xb8] sm:$0xff]
  %v79 = vld [vmem:[%s1 + $0xc0] sm:$0xff]
  %v80 = vld [vmem:[%s1 + $0xc8] sm:$0xff]
  %v81 = vld [vmem:[%s1 + $0xd0] sm:$0xff]
  %v82 = vld [vmem:[%s1 + $0xd8] sm:$0xff]
  %v83 = vld [vmem:[%s1 + $0xe0] sm:$0xff]
  %v84 = vld [vmem:[%s1 + $0xe8] sm:$0xff]
  %v85 = vld [vmem:[%s1 + $0xf0] sm:$0xff]
  %v86 = vld [vmem:[%s1 + $0xf8] sm:$0xff]
  %v91 = vunpack.c.l.b16 %v51
  %v92 = vunpack.c.l.b16 %v52
  %v93 = vunpack.c.l.b16 %v53
  %v94 = vunpack.c.l.b16 %v54
  %v95 = vpack.c.b16 %v92, %v91
  %v96 = vpack.c.b16 %v94, %v93
  %v131 = vunpack.c.l.b16 %v55
  %v132 = vunpack.c.h.b16 %v55
  %v133 = vunpack.c.l.b16 %v56
  %v134 = vunpack.c.h.b16 %v56
  %v135 = vunpack.c.l.b16 %v57
  %v136 = vunpack.c.h.b16 %v57
  %v137 = vunpack.c.l.b16 %v58
  %v138 = vunpack.c.h.b16 %v58
  %v139 = vunpack.c.l.b16 %v59
  %v140 = vunpack.c.h.b16 %v59
  %v141 = vunpack.c.l.b16 %v60
  %v142 = vunpack.c.h.b16 %v60
  %v143 = vunpack.c.l.b16 %v61
  %v144 = vunpack.c.h.b16 %v61
  %v145 = vunpack.c.l.b16 %v62
  %v146 = vunpack.c.h.b16 %v62
  %v147 = vunpack.c.l.b16 %v63
  %v148 = vunpack.c.h.b16 %v63
  %v149 = vunpack.c.l.b16 %v64
  %v150 = vunpack.c.h.b16 %v64
  %v151 = vunpack.c.l.b16 %v65
  %v152 = vunpack.c.h.b16 %v65
  %v153 = vunpack.c.l.b16 %v66
  %v154 = vunpack.c.h.b16 %v66
  %v155 = vunpack.c.l.b16 %v67
  %v156 = vunpack.c.h.b16 %v67
  %v157 = vunpack.c.l.b16 %v68
  %v158 = vunpack.c.h.b16 %v68
  %v159 = vunpack.c.l.b16 %v69
  %v160 = vunpack.c.h.b16 %v69
  %v161 = vunpack.c.l.b16 %v70
  %v162 = vunpack.c.h.b16 %v70
  %v163 = vunpack.c.l.b16 %v71
  %v164 = vunpack.c.h.b16 %v71
  %v165 = vunpack.c.l.b16 %v72
  %v166 = vunpack.c.h.b16 %v72
  %v167 = vunpack.c.l.b16 %v73
  %v168 = vunpack.c.h.b16 %v73
  %v169 = vunpack.c.l.b16 %v74
  %v170 = vunpack.c.h.b16 %v74
  %v171 = vunpack.c.l.b16 %v75
  %v172 = vunpack.c.h.b16 %v75
  %v173 = vunpack.c.l.b16 %v76
  %v174 = vunpack.c.h.b16 %v76
  %v175 = vunpack.c.l.b16 %v77
  %v176 = vunpack.c.h.b16 %v77
  %v177 = vunpack.c.l.b16 %v78
  %v178 = vunpack.c.h.b16 %v78
  %v179 = vunpack.c.l.b16 %v79
  %v180 = vunpack.c.h.b16 %v79
  %v181 = vunpack.c.l.b16 %v80
  %v182 = vunpack.c.h.b16 %v80
  %v183 = vunpack.c.l.b16 %v81
  %v184 = vunpack.c.h.b16 %v81
  %v185 = vunpack.c.l.b16 %v82
  %v186 = vunpack.c.h.b16 %v82
  %v187 = vunpack.c.l.b16 %v83
  %v188 = vunpack.c.h.b16 %v83
  %v189 = vunpack.c.l.b16 %v84
  %v190 = vunpack.c.h.b16 %v84
  %v191 = vunpack.c.l.b16 %v85
  %v192 = vunpack.c.h.b16 %v85
  %v193 = vunpack.c.l.b16 %v86
  %v194 = vunpack.c.h.b16 %v86
  %v195 = vpack.c.b16 %v135, %v131
  %v196 = vpack.c.b16 %v136, %v132
  %v197 = vpack.c.b16 %v137, %v133
  %v198 = vpack.c.b16 %v138, %v134
  %v199 = vpack.c.b16 %v143, %v139
  %v200 = vpack.c.b16 %v144, %v140
  %v201 = vpack.c.b16 %v145, %v141
  %v202 = vpack.c.b16 %v146, %v142
  %v203 = vpack.c.b16 %v151, %v147
  %v204 = vpack.c.b16 %v152, %v148
  %v205 = vpack.c.b16 %v153, %v149
  %v206 = vpack.c.b16 %v154, %v150
  %v207 = vpack.c.b16 %v159, %v155
  %v208 = vpack.c.b16 %v160, %v156
  %v209 = vpack.c.b16 %v161, %v157
  %v210 = vpack.c.b16 %v162, %v158
  %v211 = vpack.c.b16 %v167, %v163
  %v212 = vpack.c.b16 %v168, %v164
  %v213 = vpack.c.b16 %v169, %v165
  %v214 = vpack.c.b16 %v170, %v166
  %v215 = vpack.c.b16 %v175, %v171
  %v216 = vpack.c.b16 %v176, %v172
  %v217 = vpack.c.b16 %v177, %v173
  %v218 = vpack.c.b16 %v178, %v174
  %v219 = vpack.c.b16 %v183, %v179
  %v220 = vpack.c.b16 %v184, %v180
  %v221 = vpack.c.b16 %v185, %v181
  %v222 = vpack.c.b16 %v186, %v182
  %v223 = vpack.c.b16 %v191, %v187
  %v224 = vpack.c.b16 %v192, %v188
  %v225 = vpack.c.b16 %v193, %v189
  %v226 = vpack.c.b16 %v194, %v190
  %259 = vmatprep.subr.bf16.mxu0 %v196
  %260 = vmatpush1.bf16.msra.mxu0 %v195
  %261 = vmatprep.subr.bf16.mxu0 %v200
  %262 = vmatpush1.bf16.msra.mxu0 %v199
  %263 = vmatprep.subr.bf16.mxu0 %v204
  %264 = vmatpush1.bf16.msra.mxu0 %v203
  %265 = vmatprep.subr.bf16.mxu0 %v208
  %266 = vmatpush1.bf16.msra.mxu0 %v207
  %267 = vmatprep.subr.bf16.mxu0 %v212
  %268 = vmatpush1.bf16.msra.mxu0 %v211
  %269 = vmatprep.subr.bf16.mxu0 %v216
  %270 = vmatpush1.bf16.msra.mxu0 %v215
  %271 = vmatprep.subr.bf16.mxu0 %v220
  %272 = vmatpush1.bf16.msra.mxu0 %v219
  %273 = vmatprep.subr.bf16.mxu0 %v224
  %274 = vmatpush1.bf16.msra.mxu0 %v223
  %275 = vmatprep.subr.bf16.mxu0 0
  %276 = vmatpush1.bf16.msra.mxu0 0
  %277 = vmatprep.subr.bf16.mxu0 0
  %278 = vmatpush1.bf16.msra.mxu0 0
  %279 = vmatprep.subr.bf16.mxu0 0
  %280 = vmatpush1.bf16.msra.mxu0 0
  %281 = vmatprep.subr.bf16.mxu0 0
  %282 = vmatpush1.bf16.msra.mxu0 0
  %283 = vmatprep.subr.bf16.mxu0 0
  %284 = vmatpush1.bf16.msra.mxu0 0
  %285 = vmatprep.subr.bf16.mxu0 0
  %286 = vmatpush1.bf16.msra.mxu0 0
  %287 = vmatprep.subr.bf16.mxu0 0
  %288 = vmatpush1.bf16.msra.mxu0 0
  %289 = vmatprep.subr.bf16.mxu0 0
  %290 = vmatpush1.bf16.msra.mxu0 0
  %291 = vmatprep.mubr.bf16.mxu0 0
  %292 = vmatmul.mubr.bf16.gmra.mrb[0].mxu0 %v95
  %v293 = vpop.f32.mrb[0].mxu0
  %v294 = vadd.f32 0.0, %v293
  %v295 = vpop.f32.mrb[0].mxu0
  %v296 = vadd.f32 0.0, %v295
  %v297 = vpop.f32.mrb[0].mxu0
  %v298 = vadd.f32 0.0, %v297
  %v299 = vpop.f32.mrb[0].mxu0
  %v300 = vadd.f32 0.0, %v299
  %301 = vmatprep.mubr.bf16.mxu0 0
  %302 = vmatmul.mubr.bf16.gmra.mrb[0].mxu0 %v96
  %v303 = vpop.f32.mrb[0].mxu0
  %v304 = vadd.f32 0.0, %v303
  %v305 = vpop.f32.mrb[0].mxu0
  %v306 = vadd.f32 0.0, %v305
  %v307 = vpop.f32.mrb[0].mxu0
  %v308 = vadd.f32 0.0, %v307
  %v309 = vpop.f32.mrb[0].mxu0
  %v310 = vadd.f32 0.0, %v309
  %311 = vdwg.mxu0
  %312 = vmatprep.subr.bf16.mxu0 %v198
  %313 = vmatpush1.bf16.msra.mxu0 %v197
  %314 = vmatprep.subr.bf16.mxu0 %v202
  %315 = vmatpush1.bf16.msra.mxu0 %v201
  %316 = vmatprep.subr.bf16.mxu0 %v206
  %317 = vmatpush1.bf16.msra.mxu0 %v205
  %318 = vmatprep.subr.bf16.mxu0 %v210
  %319 = vmatpush1.bf16.msra.mxu0 %v209
  %320 = vmatprep.subr.bf16.mxu0 %v214
  %321 = vmatpush1.bf16.msra.mxu0 %v213
  %322 = vmatprep.subr.bf16.mxu0 %v218
  %323 = vmatpush1.bf16.msra.mxu0 %v217
  %324 = vmatprep.subr.bf16.mxu0 %v222
  %325 = vmatpush1.bf16.msra.mxu0 %v221
  %326 = vmatprep.subr.bf16.mxu0 %v226
  %327 = vmatpush1.bf16.msra.mxu0 %v225
  %328 = vmatprep.subr.bf16.mxu0 0
  %329 = vmatpush1.bf16.msra.mxu0 0
  %330 = vmatprep.subr.bf16.mxu0 0
  %331 = vmatpush1.bf16.msra.mxu0 0
  %332 = vmatprep.subr.bf16.mxu0 0
  %333 = vmatpush1.bf16.msra.mxu0 0
  %334 = vmatprep.subr.bf16.mxu0 0
  %335 = vmatpush1.bf16.msra.mxu0 0
  %336 = vmatprep.subr.bf16.mxu0 0
  %337 = vmatpush1.bf16.msra.mxu0 0
  %338 = vmatprep.subr.bf16.mxu0 0
  %339 = vmatpush1.bf16.msra.mxu0 0
  %340 = vmatprep.subr.bf16.mxu0 0
  %341 = vmatpush1.bf16.msra.mxu0 0
  %342 = vmatprep.subr.bf16.mxu0 0
  %343 = vmatpush1.bf16.msra.mxu0 0
  %344 = vmatprep.mubr.bf16.mxu0 0
  %345 = vmatmul.mubr.bf16.gmra.mrb[0].mxu0 %v95
  %v346 = vpop.f32.mrb[0].mxu0
  %v347 = vadd.f32 0.0, %v346
  %v348 = vpop.f32.mrb[0].mxu0
  %v349 = vadd.f32 0.0, %v348
  %v350 = vpop.f32.mrb[0].mxu0
  %v351 = vadd.f32 0.0, %v350
  %v352 = vpop.f32.mrb[0].mxu0
  %v353 = vadd.f32 0.0, %v352
  %354 = vmatprep.mubr.bf16.mxu0 0
  %355 = vmatmul.mubr.bf16.gmra.mrb[0].mxu0 %v96
  %v356 = vpop.f32.mrb[0].mxu0
  %v357 = vadd.f32 0.0, %v356
  %v358 = vpop.f32.mrb[0].mxu0
  %v359 = vadd.f32 0.0, %v358
  %v360 = vpop.f32.mrb[0].mxu0
  %v361 = vadd.f32 0.0, %v360
  %v362 = vpop.f32.mrb[0].mxu0
  %v363 = vadd.f32 0.0, %v362
  %364 = vdwg.mxu0
  %v365 = vadd.f32 %v35, %v294
  %v366 = vadd.f32 %v36, %v296
  %v367 = vadd.f32 %v37, %v347
  %v368 = vadd.f32 %v38, %v349
  %v369 = vadd.f32 %v39, %v298
  %v370 = vadd.f32 %v40, %v300
  %v371 = vadd.f32 %v41, %v351
  %v372 = vadd.f32 %v42, %v353
  %v373 = vadd.f32 %v43, %v304
  %v374 = vadd.f32 %v44, %v306
  %v375 = vadd.f32 %v45, %v357
  %v376 = vadd.f32 %v46, %v359
  %v377 = vadd.f32 %v47, %v308
  %v378 = vadd.f32 %v48, %v310
  %v379 = vadd.f32 %v49, %v361
  %v380 = vadd.f32 %v50, %v363
  %381 = vst [vmem:[%s3] sm:$0xff] %v365
  %382 = vst [vmem:[%s3 + $0x8] sm:$0xff] %v366
  %383 = vst [vmem:[%s3 + $0x10] sm:$0xff] %v367
  %384 = vst [vmem:[%s3 + $0x18] sm:$0xff] %v368
  %385 = vst [vmem:[%s3 + $0x20] sm:$0xff] %v369
  %386 = vst [vmem:[%s3 + $0x28] sm:$0xff] %v370
  %387 = vst [vmem:[%s3 + $0x30] sm:$0xff] %v371
  %388 = vst [vmem:[%s3 + $0x38] sm:$0xff] %v372
  %389 = vst [vmem:[%s3 + $0x40] sm:$0xff] %v373
  %390 = vst [vmem:[%s3 + $0x48] sm:$0xff] %v374
  %391 = vst [vmem:[%s3 + $0x50] sm:$0xff] %v375
  %392 = vst [vmem:[%s3 + $0x58] sm:$0xff] %v376
  %393 = vst [vmem:[%s3 + $0x60] sm:$0xff] %v377
  %394 = vst [vmem:[%s3 + $0x68] sm:$0xff] %v378
  %395 = vst [vmem:[%s3 + $0x70] sm:$0xff] %v379
  %396 = vst [vmem:[%s3 + $0x78] sm:$0xff] %v380
  // Predicated region
  $region18: #{backbone_forward.17} parent=0 // pred_check
    %p397 = pneg %p15
  $region19: #{backbone_forward.17} parent=0 // pred_check_branch
    %399 = sbr.rel (%p397) target = $region21
  $region20: #{backbone_forward.17} parent=0 // pred_region
    %v400 = vld [vmem:[%s3] sm:$0xff]
    %v401 = vld [vmem:[%s3 + $0x8] sm:$0xff]
    %v402 = vld [vmem:[%s3 + $0x10] sm:$0xff]
    %v403 = vld [vmem:[%s3 + $0x18] sm:$0xff]
    %v404 = vld [vmem:[%s3 + $0x20] sm:$0xff]
    %v405 = vld [vmem:[%s3 + $0x28] sm:$0xff]
    %v406 = vld [vmem:[%s3 + $0x30] sm:$0xff]
    %v407 = vld [vmem:[%s3 + $0x38] sm:$0xff]
    %v408 = vld [vmem:[%s3 + $0x40] sm:$0xff]
    %v409 = vld [vmem:[%s3 + $0x48] sm:$0xff]
    %v410 = vld [vmem:[%s3 + $0x50] sm:$0xff]
    %v411 = vld [vmem:[%s3 + $0x58] sm:$0xff]
    %v412 = vld [vmem:[%s3 + $0x60] sm:$0xff]
    %v413 = vld [vmem:[%s3 + $0x68] sm:$0xff]
    %v414 = vld [vmem:[%s3 + $0x70] sm:$0xff]
    %v415 = vld [vmem:[%s3 + $0x78] sm:$0xff]
    %v416 = vld [vmem:[%s2] sm:$0xf]
    %v418 = vlaneseq
    %v419 = vshrl.u32 %v418, 7
    %v420 = vsub.s32 0, %v419
    %v421 = vrot.slane %v416, %v420
    %v422 = vlaneseq
    %v423 = vshrl.u32 %v422, 7
    %v424 = vsub.s32 1, %v423
    %v425 = vrot.slane %v416, %v424
    %v426 = vlaneseq
    %v427 = vshrl.u32 %v426, 7
    %v428 = vsub.s32 2, %v427
    %v429 = vrot.slane %v416, %v428
    %v430 = vlaneseq
    %v431 = vshrl.u32 %v430, 7
    %v432 = vsub.s32 3, %v431
    %v433 = vrot.slane %v416, %v432
    %v438 = vadd.f32 %v400, %v421
    %v439 = vadd.f32 %v401, %v425
    %v440 = vadd.f32 %v402, %v429
    %v441 = vadd.f32 %v403, %v433
    %v442 = vadd.f32 %v404, %v421
    %v443 = vadd.f32 %v405, %v425
    %v444 = vadd.f32 %v406, %v429
    %v445 = vadd.f32 %v407, %v433
    %v446 = vadd.f32 %v408, %v421
    %v447 = vadd.f32 %v409, %v425
    %v448 = vadd.f32 %v410, %v429
    %v449 = vadd.f32 %v411, %v433
    %v450 = vadd.f32 %v412, %v421
    %v451 = vadd.f32 %v413, %v425
    %v452 = vadd.f32 %v414, %v429
    %v453 = vadd.f32 %v415, %v433
    %v454 = vmax.f32 %v438, 0.0
    %v455 = vmax.f32 %v439, 0.0
    %v456 = vmax.f32 %v440, 0.0
    %v457 = vmax.f32 %v441, 0.0
    %v458 = vmax.f32 %v442, 0.0
    %v459 = vmax.f32 %v443, 0.0
    %v460 = vmax.f32 %v444, 0.0
    %v461 = vmax.f32 %v445, 0.0
    %v462 = vmax.f32 %v446, 0.0
    %v463 = vmax.f32 %v447, 0.0
    %v464 = vmax.f32 %v448, 0.0
    %v465 = vmax.f32 %v449, 0.0
    %v466 = vmax.f32 %v450, 0.0
    %v467 = vmax.f32 %v451, 0.0
    %v468 = vmax.f32 %v452, 0.0
    %v469 = vmax.f32 %v453, 0.0
    %470 = vst [vmem:[%s3] sm:$0xff] %v454
    %471 = vst [vmem:[%s3 + $0x8] sm:$0xff] %v455
    %472 = vst [vmem:[%s3 + $0x10] sm:$0xff] %v456
    %473 = vst [vmem:[%s3 + $0x18] sm:$0xff] %v457
    %474 = vst [vmem:[%s3 + $0x20] sm:$0xff] %v458
    %475 = vst [vmem:[%s3 + $0x28] sm:$0xff] %v459
    %476 = vst [vmem:[%s3 + $0x30] sm:$0xff] %v460
    %477 = vst [vmem:[%s3 + $0x38] sm:$0xff] %v461
    %478 = vst [vmem:[%s3 + $0x40] sm:$0xff] %v462
    %479 = vst [vmem:[%s3 + $0x48] sm:$0xff] %v463
    %480 = vst [vmem:[%s3 + $0x50] sm:$0xff] %v464
    %481 = vst [vmem:[%s3 + $0x58] sm:$0xff] %v465
    %482 = vst [vmem:[%s3 + $0x60] sm:$0xff] %v466
    %483 = vst [vmem:[%s3 + $0x68] sm:$0xff] %v467
    %484 = vst [vmem:[%s3 + $0x70] sm:$0xff] %v468
    %485 = vst [vmem:[%s3 + $0x78] sm:$0xff] %v469
  $region21: #{backbone_forward.17} parent=0 // pred_fallthru
    _
  // Predicated region
  $region22: #{backbone_forward.17} parent=0 // pred_check
    _
  $region23: #{backbone_forward.17} parent=0 // pred_check_branch
    %487 = sbr.rel (0) target = $region25
  $region24: #{backbone_forward.17} parent=0 // pred_region
    _
  $region25: #{backbone_forward.17} parent=0 // pred_fallthru
    _
  // Predicated region
  $region26: #{backbone_forward.17} parent=0 // pred_check
    _
  $region27: #{backbone_forward.17} parent=0 // pred_check_branch
    %489 = sbr.rel (0) target = $region29
  $region28: #{backbone_forward.17} parent=0 // pred_region
    _
  $region29: #{backbone_forward.17} parent=0 // pred_fallthru
    _

// kernel: backbone_forward.14
$region0: #{backbone_forward.14}
  #allocation0 [shape = 'u32[]', space=smem, size = 0x4, offset = 0x4, fixed_abs, tag = 'smem constant byte address 0x4 - core index']
  #allocation1 [shape = 'u32[144,128]{1,0:T(1,128)}', space=vmem, size = 0x12000, scoped, tag = 'internal scratch']
  %s0 = inlined_call_operand.vmem [shape: bf16[128,128], index: 0, kind: input, shape index: {}]
  %s1 = inlined_call_operand.vmem [shape: bf16[128,128], index: 1, kind: input, shape index: {}]
  %s2 = inlined_call_operand.vmem [shape: f32[1,128], index: 2, kind: input, shape index: {}]
  %s3 = inlined_call_operand.vmem [shape: f32[128,128], index: 3, kind: output, shape index: {}]
  %s4 = sld [smem:[#allocation0]]
  $region30: #{backbone_forward.14} parent=0
    _
  %s6 = ssub.s32 1, %s4
  %s7 = scalar_select 0, %s6, %s4
  // Predicated region
  $region2: #{backbone_forward.14} parent=0 // pred_check
    _
  $region3: #{backbone_forward.14} parent=0 // pred_check_branch
    %9 = sbr.rel (0) target = $region5
  $region4: #{backbone_forward.14} parent=0 // pred_region
    _
  $region5: #{backbone_forward.14} parent=0 // pred_fallthru
    _
  // Predicated region
  $region6: #{backbone_forward.14} parent=0 // pred_check
    _
  $region7: #{backbone_forward.14} parent=0 // pred_check_branch
    %11 = sbr.rel (0) target = $region9
  $region8: #{backbone_forward.14} parent=0 // pred_region
    _
  $region9: #{backbone_forward.14} parent=0 // pred_fallthru
    _
  // Predicated region
  $region10: #{backbone_forward.14} parent=0 // pred_check
    _
  $region11: #{backbone_forward.14} parent=0 // pred_check_branch
    %13 = sbr.rel (0) target = $region13
  $region12: #{backbone_forward.14} parent=0 // pred_region
    _
  $region13: #{backbone_forward.14} parent=0 // pred_fallthru
    _
  %p15 = scmp.eq.s32.totalorder 0, 0
  // Predicated region
  $region14: #{backbone_forward.14} parent=0 // pred_check
    %p16 = pneg %p15
  $region15: #{backbone_forward.14} parent=0 // pred_check_branch
    %18 = sbr.rel (%p16) target = $region17
  $region16: #{backbone_forward.14} parent=0 // pred_region
    %19 = vst [vmem:[%s3] sm:$0xff] 0.0
    %20 = vst [vmem:[%s3 + $0x8] sm:$0xff] 0.0
    %21 = vst [vmem:[%s3 + $0x10] sm:$0xff] 0.0
    %22 = vst [vmem:[%s3 + $0x18] sm:$0xff] 0.0
    %23 = vst [vmem:[%s3 + $0x20] sm:$0xff] 0.0
    %24 = vst [vmem:[%s3 + $0x28] sm:$0xff] 0.0
    %25 = vst [vmem:[%s3 + $0x30] sm:$0xff] 0.0
    %26 = vst [vmem:[%s3 + $0x38] sm:$0xff] 0.0
    %27 = vst [vmem:[%s3 + $0x40] sm:$0xff] 0.0
    %28 = vst [vmem:[%s3 + $0x48] sm:$0xff] 0.0
    %29 = vst [vmem:[%s3 + $0x50] sm:$0xff] 0.0
    %30 = vst [vmem:[%s3 + $0x58] sm:$0xff] 0.0
    %31 = vst [vmem:[%s3 + $0x60] sm:$0xff] 0.0
    %32 = vst [vmem:[%s3 + $0x68] sm:$0xff] 0.0
    %33 = vst [vmem:[%s3 + $0x70] sm:$0xff] 0.0
    %34 = vst [vmem:[%s3 + $0x78] sm:$0xff] 0.0
  $region17: #{backbone_forward.14} parent=0 // pred_fallthru
    _
  %v35 = vld [vmem:[%s3] sm:$0xff]
  %v36 = vld [vmem:[%s3 + $0x8] sm:$0xff]
  %v37 = vld [vmem:[%s3 + $0x10] sm:$0xff]
  %v38 = vld [vmem:[%s3 + $0x18] sm:$0xff]
  %v39 = vld [vmem:[%s3 + $0x20] sm:$0xff]
  %v40 = vld [vmem:[%s3 + $0x28] sm:$0xff]
  %v41 = vld [vmem:[%s3 + $0x30] sm:$0xff]
  %v42 = vld [vmem:[%s3 + $0x38] sm:$0xff]
  %v43 = vld [vmem:[%s3 + $0x40] sm:$0xff]
  %v44 = vld [vmem:[%s3 + $0x48] sm:$0xff]
  %v45 = vld [vmem:[%s3 + $0x50] sm:$0xff]
  %v46 = vld [vmem:[%s3 + $0x58] sm:$0xff]
  %v47 = vld [vmem:[%s3 + $0x60] sm:$0xff]
  %v48 = vld [vmem:[%s3 + $0x68] sm:$0xff]
  %v49 = vld [vmem:[%s3 + $0x70] sm:$0xff]
  %v50 = vld [vmem:[%s3 + $0x78] sm:$0xff]
  %v51 = vld [vmem:[%s0] sm:$0xf]
  %v52 = vld [vmem:[%s0 + $0x4] sm:$0xf]
  %v53 = vld [vmem:[%s0 + $0x8] sm:$0xf]
  %v54 = vld [vmem:[%s0 + $0xc] sm:$0xf]
  %v55 = vld [vmem:[%s0 + $0x10] sm:$0xf]
  %v56 = vld [vmem:[%s0 + $0x14] sm:$0xf]
  %v57 = vld [vmem:[%s0 + $0x18] sm:$0xf]
  %v58 = vld [vmem:[%s0 + $0x1c] sm:$0xf]
  %v59 = vld [vmem:[%s0 + $0x20] sm:$0xf]
  %v60 = vld [vmem:[%s0 + $0x24] sm:$0xf]
  %v61 = vld [vmem:[%s0 + $0x28] sm:$0xf]
  %v62 = vld [vmem:[%s0 + $0x2c] sm:$0xf]
  %v63 = vld [vmem:[%s0 + $0x30] sm:$0xf]
  %v64 = vld [vmem:[%s0 + $0x34] sm:$0xf]
  %v65 = vld [vmem:[%s0 + $0x38] sm:$0xf]
  %v66 = vld [vmem:[%s0 + $0x3c] sm:$0xf]
  %v67 = vld [vmem:[%s1] sm:$0xf]
  %v68 = vld [vmem:[%s1 + $0x4] sm:$0xf]
  %v69 = vld [vmem:[%s1 + $0x8] sm:$0xf]
  %v70 = vld [vmem:[%s1 + $0xc] sm:$0xf]
  %v71 = vld [vmem:[%s1 + $0x10] sm:$0xf]
  %v72 = vld [vmem:[%s1 + $0x14] sm:$0xf]
  %v73 = vld [vmem:[%s1 + $0x18] sm:$0xf]
  %v74 = vld [vmem:[%s1 + $0x1c] sm:$0xf]
  %v75 = vld [vmem:[%s1 + $0x20] sm:$0xf]
  %v76 = vld [vmem:[%s1 + $0x24] sm:$0xf]
  %v77 = vld [vmem:[%s1 + $0x28] sm:$0xf]
  %v78 = vld [vmem:[%s1 + $0x2c] sm:$0xf]
  %v79 = vld [vmem:[%s1 + $0x30] sm:$0xf]
  %v80 = vld [vmem:[%s1 + $0x34] sm:$0xf]
  %v81 = vld [vmem:[%s1 + $0x38] sm:$0xf]
  %v82 = vld [vmem:[%s1 + $0x3c] sm:$0xf]
  %v99 = vunpack.c.l.b16 %v51
  %v100 = vunpack.c.l.b16 %v52
  %v101 = vunpack.c.l.b16 %v53
  %v102 = vunpack.c.l.b16 %v54
  %v103 = vunpack.c.l.b16 %v55
  %v104 = vunpack.c.l.b16 %v56
  %v105 = vunpack.c.l.b16 %v57
  %v106 = vunpack.c.l.b16 %v58
  %v107 = vunpack.c.l.b16 %v59
  %v108 = vunpack.c.l.b16 %v60
  %v109 = vunpack.c.l.b16 %v61
  %v110 = vunpack.c.l.b16 %v62
  %v111 = vunpack.c.l.b16 %v63
  %v112 = vunpack.c.l.b16 %v64
  %v113 = vunpack.c.l.b16 %v65
  %v114 = vunpack.c.l.b16 %v66
  %v115 = vpack.c.b16 %v100, %v99
  %v116 = vpack.c.b16 %v102, %v101
  %v117 = vpack.c.b16 %v104, %v103
  %v118 = vpack.c.b16 %v106, %v105
  %v119 = vpack.c.b16 %v108, %v107
  %v120 = vpack.c.b16 %v110, %v109
  %v121 = vpack.c.b16 %v112, %v111
  %v122 = vpack.c.b16 %v114, %v113
  %v147 = vunpack.c.l.b16 %v67
  %v148 = vunpack.c.l.b16 %v68
  %v149 = vunpack.c.l.b16 %v69
  %v150 = vunpack.c.l.b16 %v70
  %v151 = vunpack.c.l.b16 %v71
  %v152 = vunpack.c.l.b16 %v72
  %v153 = vunpack.c.l.b16 %v73
  %v154 = vunpack.c.l.b16 %v74
  %v155 = vunpack.c.l.b16 %v75
  %v156 = vunpack.c.l.b16 %v76
  %v157 = vunpack.c.l.b16 %v77
  %v158 = vunpack.c.l.b16 %v78
  %v159 = vunpack.c.l.b16 %v79
  %v160 = vunpack.c.l.b16 %v80
  %v161 = vunpack.c.l.b16 %v81
  %v162 = vunpack.c.l.b16 %v82
  %v163 = vpack.c.b16 %v148, %v147
  %v164 = vpack.c.b16 %v150, %v149
  %v165 = vpack.c.b16 %v152, %v151
  %v166 = vpack.c.b16 %v154, %v153
  %v167 = vpack.c.b16 %v156, %v155
  %v168 = vpack.c.b16 %v158, %v157
  %v169 = vpack.c.b16 %v160, %v159
  %v170 = vpack.c.b16 %v162, %v161
  %179 = vmatprep.subr.bf16.mxu0 0
  %180 = vmatpush1.bf16.msra.mxu0 %v163
  %181 = vmatprep.subr.bf16.mxu0 0
  %182 = vmatpush1.bf16.msra.mxu0 %v164
  %183 = vmatprep.subr.bf16.mxu0 0
  %184 = vmatpush1.bf16.msra.mxu0 %v165
  %185 = vmatprep.subr.bf16.mxu0 0
  %186 = vmatpush1.bf16.msra.mxu0 %v166
  %187 = vmatprep.subr.bf16.mxu0 0
  %188 = vmatpush1.bf16.msra.mxu0 %v167
  %189 = vmatprep.subr.bf16.mxu0 0
  %190 = vmatpush1.bf16.msra.mxu0 %v168
  %191 = vmatprep.subr.bf16.mxu0 0
  %192 = vmatpush1.bf16.msra.mxu0 %v169
  %193 = vmatprep.subr.bf16.mxu0 0
  %194 = vmatpush1.bf16.msra.mxu0 %v170
  %195 = vmatprep.subr.bf16.mxu0 0
  %196 = vmatpush1.bf16.msra.mxu0 0
  %197 = vmatprep.subr.bf16.mxu0 0
  %198 = vmatpush1.bf16.msra.mxu0 0
  %199 = vmatprep.subr.bf16.mxu0 0
  %200 = vmatpush1.bf16.msra.mxu0 0
  %201 = vmatprep.subr.bf16.mxu0 0
  %202 = vmatpush1.bf16.msra.mxu0 0
  %203 = vmatprep.subr.bf16.mxu0 0
  %204 = vmatpush1.bf16.msra.mxu0 0
  %205 = vmatprep.subr.bf16.mxu0 0
  %206 = vmatpush1.bf16.msra.mxu0 0
  %207 = vmatprep.subr.bf16.mxu0 0
  %208 = vmatpush1.bf16.msra.mxu0 0
  %209 = vmatprep.subr.bf16.mxu0 0
  %210 = vmatpush1.bf16.msra.mxu0 0
  %211 = vmatprep.mubr.bf16.mxu0 0
  %212 = vmatmul.mubr.bf16.gmra.mrb[0].mxu0 %v115
  %v213 = vpop.f32.mrb[0].mxu0
  %v214 = vadd.f32 0.0, %v213
  %v215 = vpop.f32.mrb[0].mxu0
  %v216 = vpop.f32.mrb[0].mxu0
  %v217 = vadd.f32 0.0, %v216
  %v218 = vpop.f32.mrb[0].mxu0
  %219 = vmatprep.mubr.bf16.mxu0 0
  %220 = vmatmul.mubr.bf16.gmra.mrb[0].mxu0 %v116
  %v221 = vpop.f32.mrb[0].mxu0
  %v222 = vadd.f32 0.0, %v221
  %v223 = vpop.f32.mrb[0].mxu0
  %v224 = vpop.f32.mrb[0].mxu0
  %v225 = vadd.f32 0.0, %v224
  %v226 = vpop.f32.mrb[0].mxu0
  %227 = vmatprep.mubr.bf16.mxu0 0
  %228 = vmatmul.mubr.bf16.gmra.mrb[0].mxu0 %v117
  %v229 = vpop.f32.mrb[0].mxu0
  %v230 = vadd.f32 0.0, %v229
  %v231 = vpop.f32.mrb[0].mxu0
  %v232 = vpop.f32.mrb[0].mxu0
  %v233 = vadd.f32 0.0, %v232
  %v234 = vpop.f32.mrb[0].mxu0
  %235 = vmatprep.mubr.bf16.mxu0 0
  %236 = vmatmul.mubr.bf16.gmra.mrb[0].mxu0 %v118
  %v237 = vpop.f32.mrb[0].mxu0
  %v238 = vadd.f32 0.0, %v237
  %v239 = vpop.f32.mrb[0].mxu0
  %v240 = vpop.f32.mrb[0].mxu0
  %v241 = vadd.f32 0.0, %v240
  %v242 = vpop.f32.mrb[0].mxu0
  %243 = vmatprep.mubr.bf16.mxu0 0
  %244 = vmatmul.mubr.bf16.gmra.mrb[0].mxu0 %v119
  %v245 = vpop.f32.mrb[0].mxu0
  %v246 = vadd.f32 0.0, %v245
  %v247 = vpop.f32.mrb[0].mxu0
  %v248 = vpop.f32.mrb[0].mxu0
  %v249 = vadd.f32 0.0, %v248
  %v250 = vpop.f32.mrb[0].mxu0
  %251 = vmatprep.mubr.bf16.mxu0 0
  %252 = vmatmul.mubr.bf16.gmra.mrb[0].mxu0 %v120
  %v253 = vpop.f32.mrb[0].mxu0
  %v254 = vadd.f32 0.0, %v253
  %v255 = vpop.f32.mrb[0].mxu0
  %v256 = vpop.f32.mrb[0].mxu0
  %v257 = vadd.f32 0.0, %v256
  %v258 = vpop.f32.mrb[0].mxu0
  %259 = vmatprep.mubr.bf16.mxu0 0
  %260 = vmatmul.mubr.bf16.gmra.mrb[0].mxu0 %v121
  %v261 = vpop.f32.mrb[0].mxu0
  %v262 = vadd.f32 0.0, %v261
  %v263 = vpop.f32.mrb[0].mxu0
  %v264 = vpop.f32.mrb[0].mxu0
  %v265 = vadd.f32 0.0, %v264
  %v266 = vpop.f32.mrb[0].mxu0
  %267 = vmatprep.mubr.bf16.mxu0 0
  %268 = vmatmul.mubr.bf16.gmra.mrb[0].mxu0 %v122
  %v269 = vpop.f32.mrb[0].mxu0
  %v270 = vadd.f32 0.0, %v269
  %v271 = vpop.f32.mrb[0].mxu0
  %v272 = vpop.f32.mrb[0].mxu0
  %v273 = vadd.f32 0.0, %v272
  %v274 = vpop.f32.mrb[0].mxu0
  %275 = vdwg.mxu0
  %v276 = vadd.f32 %v35, %v214
  %v277 = vadd.f32 %v36, %v217
  %v278 = vadd.f32 %v37, %v222
  %v279 = vadd.f32 %v38, %v225
  %v280 = vadd.f32 %v39, %v230
  %v281 = vadd.f32 %v40, %v233
  %v282 = vadd.f32 %v41, %v238
  %v283 = vadd.f32 %v42, %v241
  %v284 = vadd.f32 %v43, %v246
  %v285 = vadd.f32 %v44, %v249
  %v286 = vadd.f32 %v45, %v254
  %v287 = vadd.f32 %v46, %v257
  %v288 = vadd.f32 %v47, %v262
  %v289 = vadd.f32 %v48, %v265
  %v290 = vadd.f32 %v49, %v270
  %v291 = vadd.f32 %v50, %v273
  %292 = vst [vmem:[%s3] sm:$0xff] %v276
  %293 = vst [vmem:[%s3 + $0x8] sm:$0xff] %v277
  %294 = vst [vmem:[%s3 + $0x10] sm:$0xff] %v278
  %295 = vst [vmem:[%s3 + $0x18] sm:$0xff] %v279
  %296 = vst [vmem:[%s3 + $0x20] sm:$0xff] %v280
  %297 = vst [vmem:[%s3 + $0x28] sm:$0xff] %v281
  %298 = vst [vmem:[%s3 + $0x30] sm:$0xff] %v282
  %299 = vst [vmem:[%s3 + $0x38] sm:$0xff] %v283
  %300 = vst [vmem:[%s3 + $0x40] sm:$0xff] %v284
  %301 = vst [vmem:[%s3 + $0x48] sm:$0xff] %v285
  %302 = vst [vmem:[%s3 + $0x50] sm:$0xff] %v286
  %303 = vst [vmem:[%s3 + $0x58] sm:$0xff] %v287
  %304 = vst [vmem:[%s3 + $0x60] sm:$0xff] %v288
  %305 = vst [vmem:[%s3 + $0x68] sm:$0xff] %v289
  %306 = vst [vmem:[%s3 + $0x70] sm:$0xff] %v290
  %307 = vst [vmem:[%s3 + $0x78] sm:$0xff] %v291
  // Predicated region
  $region18: #{backbone_forward.14} parent=0 // pred_check
    %p308 = pneg %p15
  $region19: #{backbone_forward.14} parent=0 // pred_check_branch
    %310 = sbr.rel (%p308) target = $region21
  $region20: #{backbone_forward.14} parent=0 // pred_region
    %v311 = vld [vmem:[%s3] sm:$0xff]
    %v312 = vld [vmem:[%s3 + $0x8] sm:$0xff]
    %v313 = vld [vmem:[%s3 + $0x10] sm:$0xff]
    %v314 = vld [vmem:[%s3 + $0x18] sm:$0xff]
    %v315 = vld [vmem:[%s3 + $0x20] sm:$0xff]
    %v316 = vld [vmem:[%s3 + $0x28] sm:$0xff]
    %v317 = vld [vmem:[%s3 + $0x30] sm:$0xff]
    %v318 = vld [vmem:[%s3 + $0x38] sm:$0xff]
    %v319 = vld [vmem:[%s3 + $0x40] sm:$0xff]
    %v320 = vld [vmem:[%s3 + $0x48] sm:$0xff]
    %v321 = vld [vmem:[%s3 + $0x50] sm:$0xff]
    %v322 = vld [vmem:[%s3 + $0x58] sm:$0xff]
    %v323 = vld [vmem:[%s3 + $0x60] sm:$0xff]
    %v324 = vld [vmem:[%s3 + $0x68] sm:$0xff]
    %v325 = vld [vmem:[%s3 + $0x70] sm:$0xff]
    %v326 = vld [vmem:[%s3 + $0x78] sm:$0xff]
    %v327 = vld [vmem:[%s2] sm:$0x1]
    %v329 = vlaneseq
    %v330 = vshrl.u32 %v329, 7
    %v331 = vsub.s32 0, %v330
    %v332 = vrot.slane %v327, %v331
    %v334 = vadd.f32 %v311, %v332
    %v335 = vadd.f32 %v312, %v332
    %v336 = vadd.f32 %v313, %v332
    %v337 = vadd.f32 %v314, %v332
    %v338 = vadd.f32 %v315, %v332
    %v339 = vadd.f32 %v316, %v332
    %v340 = vadd.f32 %v317, %v332
    %v341 = vadd.f32 %v318, %v332
    %v342 = vadd.f32 %v319, %v332
    %v343 = vadd.f32 %v320, %v332
    %v344 = vadd.f32 %v321, %v332
    %v345 = vadd.f32 %v322, %v332
    %v346 = vadd.f32 %v323, %v332
    %v347 = vadd.f32 %v324, %v332
    %v348 = vadd.f32 %v325, %v332
    %v349 = vadd.f32 %v326, %v332
    %v350 = vmax.f32 %v334, 0.0
    %v351 = vmax.f32 %v335, 0.0
    %v352 = vmax.f32 %v336, 0.0
    %v353 = vmax.f32 %v337, 0.0
    %v354 = vmax.f32 %v338, 0.0
    %v355 = vmax.f32 %v339, 0.0
    %v356 = vmax.f32 %v340, 0.0
    %v357 = vmax.f32 %v341, 0.0
    %v358 = vmax.f32 %v342, 0.0
    %v359 = vmax.f32 %v343, 0.0
    %v360 = vmax.f32 %v344, 0.0
    %v361 = vmax.f32 %v345, 0.0
    %v362 = vmax.f32 %v346, 0.0
    %v363 = vmax.f32 %v347, 0.0
    %v364 = vmax.f32 %v348, 0.0
    %v365 = vmax.f32 %v349, 0.0
    %366 = vst [vmem:[%s3] sm:$0xff] %v350
    %367 = vst [vmem:[%s3 + $0x8] sm:$0xff] %v351
    %368 = vst [vmem:[%s3 + $0x10] sm:$0xff] %v352
    %369 = vst [vmem:[%s3 + $0x18] sm:$0xff] %v353
    %370 = vst [vmem:[%s3 + $0x20] sm:$0xff] %v354
    %371 = vst [vmem:[%s3 + $0x28] sm:$0xff] %v355
    %372 = vst [vmem:[%s3 + $0x30] sm:$0xff] %v356
    %373 = vst [vmem:[%s3 + $0x38] sm:$0xff] %v357
    %374 = vst [vmem:[%s3 + $0x40] sm:$0xff] %v358
    %375 = vst [vmem:[%s3 + $0x48] sm:$0xff] %v359
    %376 = vst [vmem:[%s3 + $0x50] sm:$0xff] %v360
    %377 = vst [vmem:[%s3 + $0x58] sm:$0xff] %v361
    %378 = vst [vmem:[%s3 + $0x60] sm:$0xff] %v362
    %379 = vst [vmem:[%s3 + $0x68] sm:$0xff] %v363
    %380 = vst [vmem:[%s3 + $0x70] sm:$0xff] %v364
    %381 = vst [vmem:[%s3 + $0x78] sm:$0xff] %v365
  $region21: #{backbone_forward.14} parent=0 // pred_fallthru
    _
  // Predicated region
  $region22: #{backbone_forward.14} parent=0 // pred_check
    _
  $region23: #{backbone_forward.14} parent=0 // pred_check_branch
    %383 = sbr.rel (0) target = $region25
  $region24: #{backbone_forward.14} parent=0 // pred_region
    _
  $region25: #{backbone_forward.14} parent=0 // pred_fallthru
    _
  // Predicated region
  $region26: #{backbone_forward.14} parent=0 // pred_check
    _
  $region27: #{backbone_forward.14} parent=0 // pred_check_branch
    %385 = sbr.rel (0) target = $region29
  $region28: #{backbone_forward.14} parent=0 // pred_region
    _
  $region29: #{backbone_forward.14} parent=0 // pred_fallthru
    _

// kernel: backbone_forward.22
$region0: #{backbone_forward.22}
  #allocation0 [shape = 'u32[]', space=smem, size = 0x4, offset = 0x4, fixed_abs, tag = 'smem constant byte address 0x4 - core index']
  #allocation1 [shape = 'u32[144,128]{1,0:T(1,128)}', space=vmem, size = 0x12000, scoped, tag = 'internal scratch']
  %s0 = inlined_call_operand.vmem [shape: bf16[128,128], index: 0, kind: input, shape index: {}]
  %s1 = inlined_call_operand.vmem [shape: bf16[128,128], index: 1, kind: input, shape index: {}]
  %s2 = inlined_call_operand.vmem [shape: f32[1,128], index: 2, kind: input, shape index: {}]
  %s3 = inlined_call_operand.vmem [shape: f32[128,128], index: 3, kind: output, shape index: {}]
  %s4 = sld [smem:[#allocation0]]
  $region30: #{backbone_forward.22} parent=0
    _
  %s6 = ssub.s32 1, %s4
  %s7 = scalar_select 0, %s6, %s4
  // Predicated region
  $region2: #{backbone_forward.22} parent=0 // pred_check
    _
  $region3: #{backbone_forward.22} parent=0 // pred_check_branch
    %9 = sbr.rel (0) target = $region5
  $region4: #{backbone_forward.22} parent=0 // pred_region
    _
  $region5: #{backbone_forward.22} parent=0 // pred_fallthru
    _
  // Predicated region
  $region6: #{backbone_forward.22} parent=0 // pred_check
    _
  $region7: #{backbone_forward.22} parent=0 // pred_check_branch
    %11 = sbr.rel (0) target = $region9
  $region8: #{backbone_forward.22} parent=0 // pred_region
    _
  $region9: #{backbone_forward.22} parent=0 // pred_fallthru
    _
  // Predicated region
  $region10: #{backbone_forward.22} parent=0 // pred_check
    _
  $region11: #{backbone_forward.22} parent=0 // pred_check_branch
    %13 = sbr.rel (0) target = $region13
  $region12: #{backbone_forward.22} parent=0 // pred_region
    _
  $region13: #{backbone_forward.22} parent=0 // pred_fallthru
    _
  %p15 = scmp.eq.s32.totalorder 0, 0
  // Predicated region
  $region14: #{backbone_forward.22} parent=0 // pred_check
    %p16 = pneg %p15
  $region15: #{backbone_forward.22} parent=0 // pred_check_branch
    %18 = sbr.rel (%p16) target = $region17
  $region16: #{backbone_forward.22} parent=0 // pred_region
    %19 = vst [vmem:[%s3] sm:$0xff] 0.0
    %20 = vst [vmem:[%s3 + $0x8] sm:$0xff] 0.0
    %21 = vst [vmem:[%s3 + $0x10] sm:$0xff] 0.0
    %22 = vst [vmem:[%s3 + $0x18] sm:$0xff] 0.0
    %23 = vst [vmem:[%s3 + $0x20] sm:$0xff] 0.0
    %24 = vst [vmem:[%s3 + $0x28] sm:$0xff] 0.0
    %25 = vst [vmem:[%s3 + $0x30] sm:$0xff] 0.0
    %26 = vst [vmem:[%s3 + $0x38] sm:$0xff] 0.0
    %27 = vst [vmem:[%s3 + $0x40] sm:$0xff] 0.0
    %28 = vst [vmem:[%s3 + $0x48] sm:$0xff] 0.0
    %29 = vst [vmem:[%s3 + $0x50] sm:$0xff] 0.0
    %30 = vst [vmem:[%s3 + $0x58] sm:$0xff] 0.0
    %31 = vst [vmem:[%s3 + $0x60] sm:$0xff] 0.0
    %32 = vst [vmem:[%s3 + $0x68] sm:$0xff] 0.0
    %33 = vst [vmem:[%s3 + $0x70] sm:$0xff] 0.0
    %34 = vst [vmem:[%s3 + $0x78] sm:$0xff] 0.0
  $region17: #{backbone_forward.22} parent=0 // pred_fallthru
    _
  %v35 = vld [vmem:[%s3] sm:$0xff]
  %v36 = vld [vmem:[%s3 + $0x8] sm:$0xff]
  %v37 = vld [vmem:[%s3 + $0x10] sm:$0xff]
  %v38 = vld [vmem:[%s3 + $0x18] sm:$0xff]
  %v39 = vld [vmem:[%s3 + $0x20] sm:$0xff]
  %v40 = vld [vmem:[%s3 + $0x28] sm:$0xff]
  %v41 = vld [vmem:[%s3 + $0x30] sm:$0xff]
  %v42 = vld [vmem:[%s3 + $0x38] sm:$0xff]
  %v43 = vld [vmem:[%s3 + $0x40] sm:$0xff]
  %v44 = vld [vmem:[%s3 + $0x48] sm:$0xff]
  %v45 = vld [vmem:[%s3 + $0x50] sm:$0xff]
  %v46 = vld [vmem:[%s3 + $0x58] sm:$0xff]
  %v47 = vld [vmem:[%s3 + $0x60] sm:$0xff]
  %v48 = vld [vmem:[%s3 + $0x68] sm:$0xff]
  %v49 = vld [vmem:[%s3 + $0x70] sm:$0xff]
  %v50 = vld [vmem:[%s3 + $0x78] sm:$0xff]
  %v51 = vld [vmem:[%s0] sm:$0xf]
  %v52 = vld [vmem:[%s0 + $0x4] sm:$0xf]
  %v53 = vld [vmem:[%s0 + $0x8] sm:$0xf]
  %v54 = vld [vmem:[%s0 + $0xc] sm:$0xf]
  %v55 = vld [vmem:[%s0 + $0x10] sm:$0xf]
  %v56 = vld [vmem:[%s0 + $0x14] sm:$0xf]
  %v57 = vld [vmem:[%s0 + $0x18] sm:$0xf]
  %v58 = vld [vmem:[%s0 + $0x1c] sm:$0xf]
  %v59 = vld [vmem:[%s0 + $0x20] sm:$0xf]
  %v60 = vld [vmem:[%s0 + $0x24] sm:$0xf]
  %v61 = vld [vmem:[%s0 + $0x28] sm:$0xf]
  %v62 = vld [vmem:[%s0 + $0x2c] sm:$0xf]
  %v63 = vld [vmem:[%s0 + $0x30] sm:$0xf]
  %v64 = vld [vmem:[%s0 + $0x34] sm:$0xf]
  %v65 = vld [vmem:[%s0 + $0x38] sm:$0xf]
  %v66 = vld [vmem:[%s0 + $0x3c] sm:$0xf]
  %v67 = vld [vmem:[%s1] sm:$0xf]
  %v68 = vld [vmem:[%s1 + $0x4] sm:$0xf]
  %v69 = vld [vmem:[%s1 + $0x8] sm:$0xf]
  %v70 = vld [vmem:[%s1 + $0xc] sm:$0xf]
  %v71 = vld [vmem:[%s1 + $0x10] sm:$0xf]
  %v72 = vld [vmem:[%s1 + $0x14] sm:$0xf]
  %v73 = vld [vmem:[%s1 + $0x18] sm:$0xf]
  %v74 = vld [vmem:[%s1 + $0x1c] sm:$0xf]
  %v75 = vld [vmem:[%s1 + $0x20] sm:$0xf]
  %v76 = vld [vmem:[%s1 + $0x24] sm:$0xf]
  %v77 = vld [vmem:[%s1 + $0x28] sm:$0xf]
  %v78 = vld [vmem:[%s1 + $0x2c] sm:$0xf]
  %v79 = vld [vmem:[%s1 + $0x30] sm:$0xf]
  %v80 = vld [vmem:[%s1 + $0x34] sm:$0xf]
  %v81 = vld [vmem:[%s1 + $0x38] sm:$0xf]
  %v82 = vld [vmem:[%s1 + $0x3c] sm:$0xf]
  %v99 = vunpack.c.l.b16 %v51
  %v100 = vunpack.c.l.b16 %v52
  %v101 = vunpack.c.l.b16 %v53
  %v102 = vunpack.c.l.b16 %v54
  %v103 = vunpack.c.l.b16 %v55
  %v104 = vunpack.c.l.b16 %v56
  %v105 = vunpack.c.l.b16 %v57
  %v106 = vunpack.c.l.b16 %v58
  %v107 = vunpack.c.l.b16 %v59
  %v108 = vunpack.c.l.b16 %v60
  %v109 = vunpack.c.l.b16 %v61
  %v110 = vunpack.c.l.b16 %v62
  %v111 = vunpack.c.l.b16 %v63
  %v112 = vunpack.c.l.b16 %v64
  %v113 = vunpack.c.l.b16 %v65
  %v114 = vunpack.c.l.b16 %v66
  %v115 = vpack.c.b16 %v100, %v99
  %v116 = vpack.c.b16 %v102, %v101
  %v117 = vpack.c.b16 %v104, %v103
  %v118 = vpack.c.b16 %v106, %v105
  %v119 = vpack.c.b16 %v108, %v107
  %v120 = vpack.c.b16 %v110, %v109
  %v121 = vpack.c.b16 %v112, %v111
  %v122 = vpack.c.b16 %v114, %v113
  %v147 = vunpack.c.l.b16 %v67
  %v148 = vunpack.c.l.b16 %v68
  %v149 = vunpack.c.l.b16 %v69
  %v150 = vunpack.c.l.b16 %v70
  %v151 = vunpack.c.l.b16 %v71
  %v152 = vunpack.c.l.b16 %v72
  %v153 = vunpack.c.l.b16 %v73
  %v154 = vunpack.c.l.b16 %v74
  %v155 = vunpack.c.l.b16 %v75
  %v156 = vunpack.c.l.b16 %v76
  %v157 = vunpack.c.l.b16 %v77
  %v158 = vunpack.c.l.b16 %v78
  %v159 = vunpack.c.l.b16 %v79
  %v160 = vunpack.c.l.b16 %v80
  %v161 = vunpack.c.l.b16 %v81
  %v162 = vunpack.c.l.b16 %v82
  %v163 = vpack.c.b16 %v148, %v147
  %v164 = vpack.c.b16 %v150, %v149
  %v165 = vpack.c.b16 %v152, %v151
  %v166 = vpack.c.b16 %v154, %v153
  %v167 = vpack.c.b16 %v156, %v155
  %v168 = vpack.c.b16 %v158, %v157
  %v169 = vpack.c.b16 %v160, %v159
  %v170 = vpack.c.b16 %v162, %v161
  %179 = vmatprep.subr.bf16.mxu0 0
  %180 = vmatpush1.bf16.msra.mxu0 %v163
  %181 = vmatprep.subr.bf16.mxu0 0
  %182 = vmatpush1.bf16.msra.mxu0 %v164
  %183 = vmatprep.subr.bf16.mxu0 0
  %184 = vmatpush1.bf16.msra.mxu0 %v165
  %185 = vmatprep.subr.bf16.mxu0 0
  %186 = vmatpush1.bf16.msra.mxu0 %v166
  %187 = vmatprep.subr.bf16.mxu0 0
  %188 = vmatpush1.bf16.msra.mxu0 %v167
  %189 = vmatprep.subr.bf16.mxu0 0
  %190 = vmatpush1.bf16.msra.mxu0 %v168
  %191 = vmatprep.subr.bf16.mxu0 0
  %192 = vmatpush1.bf16.msra.mxu0 %v169
  %193 = vmatprep.subr.bf16.mxu0 0
  %194 = vmatpush1.bf16.msra.mxu0 %v170
  %195 = vmatprep.subr.bf16.mxu0 0
  %196 = vmatpush1.bf16.msra.mxu0 0
  %197 = vmatprep.subr.bf16.mxu0 0
  %198 = vmatpush1.bf16.msra.mxu0 0
  %199 = vmatprep.subr.bf16.mxu0 0
  %200 = vmatpush1.bf16.msra.mxu0 0
  %201 = vmatprep.subr.bf16.mxu0 0
  %202 = vmatpush1.bf16.msra.mxu0 0
  %203 = vmatprep.subr.bf16.mxu0 0
  %204 = vmatpush1.bf16.msra.mxu0 0
  %205 = vmatprep.subr.bf16.mxu0 0
  %206 = vmatpush1.bf16.msra.mxu0 0
  %207 = vmatprep.subr.bf16.mxu0 0
  %208 = vmatpush1.bf16.msra.mxu0 0
  %209 = vmatprep.subr.bf16.mxu0 0
  %210 = vmatpush1.bf16.msra.mxu0 0
  %211 = vmatprep.mubr.bf16.mxu0 0
  %212 = vmatmul.mubr.bf16.gmra.mrb[0].mxu0 %v115
  %v213 = vpop.f32.mrb[0].mxu0
  %v214 = vadd.f32 0.0, %v213
  %v215 = vpop.f32.mrb[0].mxu0
  %v216 = vpop.f32.mrb[0].mxu0
  %v217 = vadd.f32 0.0, %v216
  %v218 = vpop.f32.mrb[0].mxu0
  %219 = vmatprep.mubr.bf16.mxu0 0
  %220 = vmatmul.mubr.bf16.gmra.mrb[0].mxu0 %v116
  %v221 = vpop.f32.mrb[0].mxu0
  %v222 = vadd.f32 0.0, %v221
  %v223 = vpop.f32.mrb[0].mxu0
  %v224 = vpop.f32.mrb[0].mxu0
  %v225 = vadd.f32 0.0, %v224
  %v226 = vpop.f32.mrb[0].mxu0
  %227 = vmatprep.mubr.bf16.mxu0 0
  %228 = vmatmul.mubr.bf16.gmra.mrb[0].mxu0 %v117
  %v229 = vpop.f32.mrb[0].mxu0
  %v230 = vadd.f32 0.0, %v229
  %v231 = vpop.f32.mrb[0].mxu0
  %v232 = vpop.f32.mrb[0].mxu0
  %v233 = vadd.f32 0.0, %v232
  %v234 = vpop.f32.mrb[0].mxu0
  %235 = vmatprep.mubr.bf16.mxu0 0
  %236 = vmatmul.mubr.bf16.gmra.mrb[0].mxu0 %v118
  %v237 = vpop.f32.mrb[0].mxu0
  %v238 = vadd.f32 0.0, %v237
  %v239 = vpop.f32.mrb[0].mxu0
  %v240 = vpop.f32.mrb[0].mxu0
  %v241 = vadd.f32 0.0, %v240
  %v242 = vpop.f32.mrb[0].mxu0
  %243 = vmatprep.mubr.bf16.mxu0 0
  %244 = vmatmul.mubr.bf16.gmra.mrb[0].mxu0 %v119
  %v245 = vpop.f32.mrb[0].mxu0
  %v246 = vadd.f32 0.0, %v245
  %v247 = vpop.f32.mrb[0].mxu0
  %v248 = vpop.f32.mrb[0].mxu0
  %v249 = vadd.f32 0.0, %v248
  %v250 = vpop.f32.mrb[0].mxu0
  %251 = vmatprep.mubr.bf16.mxu0 0
  %252 = vmatmul.mubr.bf16.gmra.mrb[0].mxu0 %v120
  %v253 = vpop.f32.mrb[0].mxu0
  %v254 = vadd.f32 0.0, %v253
  %v255 = vpop.f32.mrb[0].mxu0
  %v256 = vpop.f32.mrb[0].mxu0
  %v257 = vadd.f32 0.0, %v256
  %v258 = vpop.f32.mrb[0].mxu0
  %259 = vmatprep.mubr.bf16.mxu0 0
  %260 = vmatmul.mubr.bf16.gmra.mrb[0].mxu0 %v121
  %v261 = vpop.f32.mrb[0].mxu0
  %v262 = vadd.f32 0.0, %v261
  %v263 = vpop.f32.mrb[0].mxu0
  %v264 = vpop.f32.mrb[0].mxu0
  %v265 = vadd.f32 0.0, %v264
  %v266 = vpop.f32.mrb[0].mxu0
  %267 = vmatprep.mubr.bf16.mxu0 0
  %268 = vmatmul.mubr.bf16.gmra.mrb[0].mxu0 %v122
  %v269 = vpop.f32.mrb[0].mxu0
  %v270 = vadd.f32 0.0, %v269
  %v271 = vpop.f32.mrb[0].mxu0
  %v272 = vpop.f32.mrb[0].mxu0
  %v273 = vadd.f32 0.0, %v272
  %v274 = vpop.f32.mrb[0].mxu0
  %275 = vdwg.mxu0
  %v276 = vadd.f32 %v35, %v214
  %v277 = vadd.f32 %v36, %v217
  %v278 = vadd.f32 %v37, %v222
  %v279 = vadd.f32 %v38, %v225
  %v280 = vadd.f32 %v39, %v230
  %v281 = vadd.f32 %v40, %v233
  %v282 = vadd.f32 %v41, %v238
  %v283 = vadd.f32 %v42, %v241
  %v284 = vadd.f32 %v43, %v246
  %v285 = vadd.f32 %v44, %v249
  %v286 = vadd.f32 %v45, %v254
  %v287 = vadd.f32 %v46, %v257
  %v288 = vadd.f32 %v47, %v262
  %v289 = vadd.f32 %v48, %v265
  %v290 = vadd.f32 %v49, %v270
  %v291 = vadd.f32 %v50, %v273
  %292 = vst [vmem:[%s3] sm:$0xff] %v276
  %293 = vst [vmem:[%s3 + $0x8] sm:$0xff] %v277
  %294 = vst [vmem:[%s3 + $0x10] sm:$0xff] %v278
  %295 = vst [vmem:[%s3 + $0x18] sm:$0xff] %v279
  %296 = vst [vmem:[%s3 + $0x20] sm:$0xff] %v280
  %297 = vst [vmem:[%s3 + $0x28] sm:$0xff] %v281
  %298 = vst [vmem:[%s3 + $0x30] sm:$0xff] %v282
  %299 = vst [vmem:[%s3 + $0x38] sm:$0xff] %v283
  %300 = vst [vmem:[%s3 + $0x40] sm:$0xff] %v284
  %301 = vst [vmem:[%s3 + $0x48] sm:$0xff] %v285
  %302 = vst [vmem:[%s3 + $0x50] sm:$0xff] %v286
  %303 = vst [vmem:[%s3 + $0x58] sm:$0xff] %v287
  %304 = vst [vmem:[%s3 + $0x60] sm:$0xff] %v288
  %305 = vst [vmem:[%s3 + $0x68] sm:$0xff] %v289
  %306 = vst [vmem:[%s3 + $0x70] sm:$0xff] %v290
  %307 = vst [vmem:[%s3 + $0x78] sm:$0xff] %v291
  // Predicated region
  $region18: #{backbone_forward.22} parent=0 // pred_check
    %p308 = pneg %p15
  $region19: #{backbone_forward.22} parent=0 // pred_check_branch
    %310 = sbr.rel (%p308) target = $region21
  $region20: #{backbone_forward.22} parent=0 // pred_region
    %v311 = vld [vmem:[%s3] sm:$0xff]
    %v312 = vld [vmem:[%s3 + $0x8] sm:$0xff]
    %v313 = vld [vmem:[%s3 + $0x10] sm:$0xff]
    %v314 = vld [vmem:[%s3 + $0x18] sm:$0xff]
    %v315 = vld [vmem:[%s3 + $0x20] sm:$0xff]
    %v316 = vld [vmem:[%s3 + $0x28] sm:$0xff]
    %v317 = vld [vmem:[%s3 + $0x30] sm:$0xff]
    %v318 = vld [vmem:[%s3 + $0x38] sm:$0xff]
    %v319 = vld [vmem:[%s3 + $0x40] sm:$0xff]
    %v320 = vld [vmem:[%s3 + $0x48] sm:$0xff]
    %v321 = vld [vmem:[%s3 + $0x50] sm:$0xff]
    %v322 = vld [vmem:[%s3 + $0x58] sm:$0xff]
    %v323 = vld [vmem:[%s3 + $0x60] sm:$0xff]
    %v324 = vld [vmem:[%s3 + $0x68] sm:$0xff]
    %v325 = vld [vmem:[%s3 + $0x70] sm:$0xff]
    %v326 = vld [vmem:[%s3 + $0x78] sm:$0xff]
    %v327 = vld [vmem:[%s2] sm:$0x1]
    %v329 = vlaneseq
    %v330 = vshrl.u32 %v329, 7
    %v331 = vsub.s32 0, %v330
    %v332 = vrot.slane %v327, %v331
    %v334 = vadd.f32 %v311, %v332
    %v335 = vadd.f32 %v312, %v332
    %v336 = vadd.f32 %v313, %v332
    %v337 = vadd.f32 %v314, %v332
    %v338 = vadd.f32 %v315, %v332
    %v339 = vadd.f32 %v316, %v332
    %v340 = vadd.f32 %v317, %v332
    %v341 = vadd.f32 %v318, %v332
    %v342 = vadd.f32 %v319, %v332
    %v343 = vadd.f32 %v320, %v332
    %v344 = vadd.f32 %v321, %v332
    %v345 = vadd.f32 %v322, %v332
    %v346 = vadd.f32 %v323, %v332
    %v347 = vadd.f32 %v324, %v332
    %v348 = vadd.f32 %v325, %v332
    %v349 = vadd.f32 %v326, %v332
    %350 = vst [vmem:[%s3] sm:$0xff] %v334
    %351 = vst [vmem:[%s3 + $0x8] sm:$0xff] %v335
    %352 = vst [vmem:[%s3 + $0x10] sm:$0xff] %v336
    %353 = vst [vmem:[%s3 + $0x18] sm:$0xff] %v337
    %354 = vst [vmem:[%s3 + $0x20] sm:$0xff] %v338
    %355 = vst [vmem:[%s3 + $0x28] sm:$0xff] %v339
    %356 = vst [vmem:[%s3 + $0x30] sm:$0xff] %v340
    %357 = vst [vmem:[%s3 + $0x38] sm:$0xff] %v341
    %358 = vst [vmem:[%s3 + $0x40] sm:$0xff] %v342
    %359 = vst [vmem:[%s3 + $0x48] sm:$0xff] %v343
    %360 = vst [vmem:[%s3 + $0x50] sm:$0xff] %v344
    %361 = vst [vmem:[%s3 + $0x58] sm:$0xff] %v345
    %362 = vst [vmem:[%s3 + $0x60] sm:$0xff] %v346
    %363 = vst [vmem:[%s3 + $0x68] sm:$0xff] %v347
    %364 = vst [vmem:[%s3 + $0x70] sm:$0xff] %v348
    %365 = vst [vmem:[%s3 + $0x78] sm:$0xff] %v349
  $region21: #{backbone_forward.22} parent=0 // pred_fallthru
    _
  // Predicated region
  $region22: #{backbone_forward.22} parent=0 // pred_check
    _
  $region23: #{backbone_forward.22} parent=0 // pred_check_branch
    %367 = sbr.rel (0) target = $region25
  $region24: #{backbone_forward.22} parent=0 // pred_region
    _
  $region25: #{backbone_forward.22} parent=0 // pred_fallthru
    _
  // Predicated region
  $region26: #{backbone_forward.22} parent=0 // pred_check
    _
  $region27: #{backbone_forward.22} parent=0 // pred_check_branch
    %369 = sbr.rel (0) target = $region29
  $region28: #{backbone_forward.22} parent=0 // pred_region
    _
  $region29: #{backbone_forward.22} parent=0 // pred_fallthru
    _

// kernel: backbone_forward.23
$region0: #{backbone_forward.23}
  #allocation0 [shape = 'u32[]', space=smem, size = 0x4, offset = 0x4, fixed_abs, tag = 'smem constant byte address 0x4 - core index']
  #allocation1 [shape = 'u32[144,128]{1,0:T(1,128)}', space=vmem, size = 0x12000, scoped, tag = 'internal scratch']
  %s0 = inlined_call_operand.vmem [shape: f32[7,768], index: 0, kind: input, shape index: {}]
  %s1 = inlined_call_operand.vmem [shape: f32[7,768], index: 1, kind: input, shape index: {}]
  %s2 = inlined_call_operand.vmem [shape: f32[7,768], index: 2, kind: output, shape index: {}]
  %s3 = sld [smem:[#allocation0]]
  $region18: #{backbone_forward.23} parent=0
    _
  %s5 = ssub.s32 1, %s3
  %s6 = scalar_select 0, %s5, %s3
  // Predicated region
  $region2: #{backbone_forward.23} parent=0 // pred_check
    _
  $region3: #{backbone_forward.23} parent=0 // pred_check_branch
    %8 = sbr.rel (0) target = $region5
  $region4: #{backbone_forward.23} parent=0 // pred_region
    _
  $region5: #{backbone_forward.23} parent=0 // pred_fallthru
    _
  // Predicated region
  $region6: #{backbone_forward.23} parent=0 // pred_check
    _
  $region7: #{backbone_forward.23} parent=0 // pred_check_branch
    %10 = sbr.rel (0) target = $region9
  $region8: #{backbone_forward.23} parent=0 // pred_region
    _
  $region9: #{backbone_forward.23} parent=0 // pred_fallthru
    _
  %v11 = vld [vmem:[%s0] sm:$0x7f]
  %v12 = vld [vmem:[%s0 + $0x8] sm:$0x7f]
  %v13 = vld [vmem:[%s0 + $0x10] sm:$0x7f]
  %v14 = vld [vmem:[%s0 + $0x18] sm:$0x7f]
  %v15 = vld [vmem:[%s0 + $0x20] sm:$0x7f]
  %v16 = vld [vmem:[%s0 + $0x28] sm:$0x7f]
  %v17 = vld [vmem:[%s1] sm:$0x7f]
  %v18 = vld [vmem:[%s1 + $0x8] sm:$0x7f]
  %v19 = vld [vmem:[%s1 + $0x10] sm:$0x7f]
  %v20 = vld [vmem:[%s1 + $0x18] sm:$0x7f]
  %v21 = vld [vmem:[%s1 + $0x20] sm:$0x7f]
  %v22 = vld [vmem:[%s1 + $0x28] sm:$0x7f]
  %v23 = vmul.f32 %v17, %v17
  %v24 = vmul.f32 %v18, %v18
  %v25 = vmul.f32 %v19, %v19
  %v26 = vmul.f32 %v20, %v20
  %v27 = vmul.f32 %v21, %v21
  %v28 = vmul.f32 %v22, %v22
  %v35 = vrot.slane %v23, 1
  %v36 = vrot.slane %v24, 1
  %v37 = vrot.slane %v25, 1
  %v38 = vrot.slane %v26, 1
  %v39 = vrot.slane %v27, 1
  %v40 = vrot.slane %v28, 1
  %v47 = vadd.f32 %v23, %v35
  %v48 = vadd.f32 %v24, %v36
  %v49 = vadd.f32 %v25, %v37
  %v50 = vadd.f32 %v26, %v38
  %v51 = vadd.f32 %v27, %v39
  %v52 = vadd.f32 %v28, %v40
  %v53 = vrsqrt.pop %v47
  %v54 = vmul.f32 %v47, %v53
  %vm55 = vcmp.eq.f32.partialorder %v47, inf
  %v56 = vsel %vm55, %v47, %v54
  %vm57 = vcmp.eq.f32.partialorder %v47, 0.0
  %v58 = vand.u32 %v47, 2147483648
  %v59 = vsel %vm57, %v58, %v56
  %v60 = vrsqrt.pop %v48
  %v61 = vmul.f32 %v48, %v60
  %vm62 = vcmp.eq.f32.partialorder %v48, inf
  %v63 = vsel %vm62, %v48, %v61
  %vm64 = vcmp.eq.f32.partialorder %v48, 0.0
  %v65 = vand.u32 %v48, 2147483648
  %v66 = vsel %vm64, %v65, %v63
  %v67 = vrsqrt.pop %v49
  %v68 = vmul.f32 %v49, %v67
  %vm69 = vcmp.eq.f32.partialorder %v49, inf
  %v70 = vsel %vm69, %v49, %v68
  %vm71 = vcmp.eq.f32.partialorder %v49, 0.0
  %v72 = vand.u32 %v49, 2147483648
  %v73 = vsel %vm71, %v72, %v70
  %v74 = vrsqrt.pop %v50
  %v75 = vmul.f32 %v50, %v74
  %vm76 = vcmp.eq.f32.partialorder %v50, inf
  %v77 = vsel %vm76, %v50, %v75
  %vm78 = vcmp.eq.f32.partialorder %v50, 0.0
  %v79 = vand.u32 %v50, 2147483648
  %v80 = vsel %vm78, %v79, %v77
  %v81 = vrsqrt.pop %v51
  %v82 = vmul.f32 %v51, %v81
  %vm83 = vcmp.eq.f32.partialorder %v51, inf
  %v84 = vsel %vm83, %v51, %v82
  %vm85 = vcmp.eq.f32.partialorder %v51, 0.0
  %v86 = vand.u32 %v51, 2147483648
  %v87 = vsel %vm85, %v86, %v84
  %v88 = vrsqrt.pop %v52
  %v89 = vmul.f32 %v52, %v88
  %vm90 = vcmp.eq.f32.partialorder %v52, inf
  %v91 = vsel %vm90, %v52, %v89
  %vm92 = vcmp.eq.f32.partialorder %v52, 0.0
  %v93 = vand.u32 %v52, 2147483648
  %v94 = vsel %vm92, %v93, %v91
  %v101 = vrot.slane %v59, 3
  %v102 = vrot.slane %v66, 3
  %v103 = vrot.slane %v73, 3
  %v104 = vrot.slane %v80, 3
  %v105 = vrot.slane %v87, 3
  %v106 = vrot.slane %v94, 3
  %v113 = vmul.f32 %v11, %v101
  %v114 = vmul.f32 %v12, %v102
  %v115 = vmul.f32 %v13, %v103
  %v116 = vmul.f32 %v14, %v104
  %v117 = vmul.f32 %v15, %v105
  %v118 = vmul.f32 %v16, %v106
  %v119 = vadd.f32 %v113, %v17
  %v120 = vadd.f32 %v114, %v18
  %v121 = vadd.f32 %v115, %v19
  %v122 = vadd.f32 %v116, %v20
  %v123 = vadd.f32 %v117, %v21
  %v124 = vadd.f32 %v118, %v22
  %v131 = vcombine.low %v119, %v120
  %v132 = vcombine.low %v121, %v122
  %v133 = vcombine.low %v123, %v124
  %v135 = vunpack.c.l.s4 1966171168
  %v136 = vunpack.c.0.s8 %v135
  %v137 = vlaneseq
  %v138 = vshrl.u32 %v137, 7
  %v139 = vsub.s32 %v136, %v138
  %v140 = vrot.slane %v131, %v139
  %v142 = vunpack.c.l.s4 1966171168
  %v143 = vunpack.c.0.s8 %v142
  %v144 = vlaneseq
  %v145 = vshrl.u32 %v144, 7
  %v146 = vsub.s32 %v143, %v145
  %v147 = vrot.slane %v132, %v146
  %v149 = vunpack.c.l.s4 1966171168
  %v150 = vunpack.c.0.s8 %v149
  %v151 = vlaneseq
  %v152 = vshrl.u32 %v151, 7
  %v153 = vsub.s32 %v150, %v152
  %v154 = vrot.slane %v133, %v153
  %v155 = vcombine.low %v140, %v147
  %v157 = vunpack.c.l.s4 1966171168
  %v158 = vunpack.c.0.s8 %v157
  %v159 = vlaneseq
  %v160 = vshrl.u32 %v159, 7
  %v161 = vsub.s32 %v158, %v160
  %v162 = vrot.slane %v155, %v161
  %v164 = vunpack.c.l.s4 1966171168
  %v165 = vunpack.c.0.s8 %v164
  %v166 = vlaneseq
  %v167 = vshrl.u32 %v166, 7
  %v168 = vsub.s32 %v165, %v167
  %v169 = vrot.slane %v154, %v168
  %v170 = vcombine.low %v162, %v169
  %v172 = vlaneseq
  %vm173 = vcmp.ge.s32.totalorder %v172, 0
  %vm174 = vcmp.lt.s32.totalorder %v172, 768
  %vm175 = vmand %vm173, %vm174
  %176 = vst.msk [vmem:[%s2] ss:$8 sm:$0xf] %vm175, %v170
  %177 = vst.msk [vmem:[%s2] ss:$8 sm:$0x30] %vm175, %v170
  %v178 = vrot.slane %v59, 2
  %v179 = vrot.slane %v66, 2
  %v180 = vrot.slane %v73, 2
  %v181 = vrot.slane %v80, 2
  %v182 = vrot.slane %v87, 2
  %v183 = vrot.slane %v94, 2
  %v190 = vmul.f32 %v11, %v178
  %v191 = vmul.f32 %v12, %v179
  %v192 = vmul.f32 %v13, %v180
  %v193 = vmul.f32 %v14, %v181
  %v194 = vmul.f32 %v15, %v182
  %v195 = vmul.f32 %v16, %v183
  %v196 = vadd.f32 %v190, %v17
  %v197 = vadd.f32 %v191, %v18
  %v198 = vadd.f32 %v192, %v19
  %v199 = vadd.f32 %v193, %v20
  %v200 = vadd.f32 %v194, %v21
  %v201 = vadd.f32 %v195, %v22
  %v208 = vcombine.low %v196, %v197
  %v209 = vcombine.low %v198, %v199
  %v210 = vcombine.low %v200, %v201
  %v212 = vunpack.c.l.s4 1966171168
  %v213 = vunpack.c.0.s8 %v212
  %v214 = vlaneseq
  %v215 = vshrl.u32 %v214, 7
  %v216 = vsub.s32 %v213, %v215
  %v217 = vrot.slane %v208, %v216
  %v219 = vunpack.c.l.s4 1966171168
  %v220 = vunpack.c.0.s8 %v219
  %v221 = vlaneseq
  %v222 = vshrl.u32 %v221, 7
  %v223 = vsub.s32 %v220, %v222
  %v224 = vrot.slane %v209, %v223
  %v226 = vunpack.c.l.s4 1966171168
  %v227 = vunpack.c.0.s8 %v226
  %v228 = vlaneseq
  %v229 = vshrl.u32 %v228, 7
  %v230 = vsub.s32 %v227, %v229
  %v231 = vrot.slane %v210, %v230
  %v232 = vcombine.high %v217, %v224
  %v233 = vcombine.high %v231, %v231
  %v235 = vunpack.c.l.s4 1966171168
  %v236 = vunpack.c.0.s8 %v235
  %v237 = vlaneseq
  %v238 = vshrl.u32 %v237, 7
  %v239 = vsub.s32 %v236, %v238
  %v240 = vrot.slane %v232, %v239
  %v242 = vunpack.c.l.s4 1966171168
  %v243 = vunpack.c.0.s8 %v242
  %v244 = vlaneseq
  %v245 = vshrl.u32 %v244, 7
  %v246 = vsub.s32 %v243, %v245
  %v247 = vrot.slane %v233, %v246
  %v248 = vcombine.low %v240, %v247
  %s250 = scalar_lea.vmem %s2, 1
  %251 = vst.msk [vmem:[%s250] ss:$8 sm:$0xf] %vm175, %v248
  %252 = vst.msk [vmem:[%s250] ss:$8 sm:$0x30] %vm175, %v248
  %v259 = vrot.slane %v17, 3
  %v260 = vrot.slane %v18, 3
  %v261 = vrot.slane %v19, 3
  %v262 = vrot.slane %v20, 3
  %v263 = vrot.slane %v21, 3
  %v264 = vrot.slane %v22, 3
  %v271 = vmul.f32 %v11, %v259
  %v272 = vmul.f32 %v12, %v260
  %v273 = vmul.f32 %v13, %v261
  %v274 = vmul.f32 %v14, %v262
  %v275 = vmul.f32 %v15, %v263
  %v276 = vmul.f32 %v16, %v264
  %v277 = vadd.f32 %v271, %v17
  %v278 = vadd.f32 %v272, %v18
  %v279 = vadd.f32 %v273, %v19
  %v280 = vadd.f32 %v274, %v20
  %v281 = vadd.f32 %v275, %v21
  %v282 = vadd.f32 %v276, %v22
  %v289 = vcombine.low %v277, %v278
  %v290 = vcombine.low %v279, %v280
  %v291 = vcombine.low %v281, %v282
  %v293 = vunpack.c.l.s4 1966171168
  %v294 = vunpack.c.0.s8 %v293
  %v295 = vlaneseq
  %v296 = vshrl.u32 %v295, 7
  %v297 = vsub.s32 %v294, %v296
  %v298 = vrot.slane %v289, %v297
  %v300 = vunpack.c.l.s4 1966171168
  %v301 = vunpack.c.0.s8 %v300
  %v302 = vlaneseq
  %v303 = vshrl.u32 %v302, 7
  %v304 = vsub.s32 %v301, %v303
  %v305 = vrot.slane %v290, %v304
  %v307 = vunpack.c.l.s4 1966171168
  %v308 = vunpack.c.0.s8 %v307
  %v309 = vlaneseq
  %v310 = vshrl.u32 %v309, 7
  %v311 = vsub.s32 %v308, %v310
  %v312 = vrot.slane %v291, %v311
  %v313 = vcombine.low %v298, %v305
  %v315 = vunpack.c.l.s4 1966171168
  %v316 = vunpack.c.0.s8 %v315
  %v317 = vlaneseq
  %v318 = vshrl.u32 %v317, 7
  %v319 = vsub.s32 %v316, %v318
  %v320 = vrot.slane %v313, %v319
  %v322 = vunpack.c.l.s4 1966171168
  %v323 = vunpack.c.0.s8 %v322
  %v324 = vlaneseq
  %v325 = vshrl.u32 %v324, 7
  %v326 = vsub.s32 %v323, %v325
  %v327 = vrot.slane %v312, %v326
  %v328 = vcombine.high %v320, %v327
  %s330 = scalar_lea.vmem %s2, 2
  %331 = vst.msk [vmem:[%s330] ss:$8 sm:$0xf] %vm175, %v328
  %332 = vst.msk [vmem:[%s330] ss:$8 sm:$0x30] %vm175, %v328
  %v333 = vmul.f32 %v11, 1.442695
  %v334 = vpow.pop %v333
  %v335 = vmul.f32 %v12, 1.442695
  %v336 = vpow.pop %v335
  %v337 = vmul.f32 %v13, 1.442695
  %v338 = vpow.pop %v337
  %v339 = vmul.f32 %v14, 1.442695
  %v340 = vpow.pop %v339
  %v341 = vmul.f32 %v15, 1.442695
  %v342 = vpow.pop %v341
  %v343 = vmul.f32 %v16, 1.442695
  %v344 = vpow.pop %v343
  %v345 = vmul.f32 %v334, %v17
  %v346 = vmul.f32 %v336, %v18
  %v347 = vmul.f32 %v338, %v19
  %v348 = vmul.f32 %v340, %v20
  %v349 = vmul.f32 %v342, %v21
  %v350 = vmul.f32 %v344, %v22
  %v357 = vcombine.low %v345, %v346
  %v358 = vcombine.low %v347, %v348
  %v359 = vcombine.low %v349, %v350
  %v361 = vunpack.c.l.s4 1966171168
  %v362 = vunpack.c.0.s8 %v361
  %v363 = vlaneseq
  %v364 = vshrl.u32 %v363, 7
  %v365 = vsub.s32 %v362, %v364
  %v366 = vrot.slane %v357, %v365
  %v368 = vunpack.c.l.s4 1966171168
  %v369 = vunpack.c.0.s8 %v368
  %v370 = vlaneseq
  %v371 = vshrl.u32 %v370, 7
  %v372 = vsub.s32 %v369, %v371
  %v373 = vrot.slane %v358, %v372
  %v375 = vunpack.c.l.s4 1966171168
  %v376 = vunpack.c.0.s8 %v375
  %v377 = vlaneseq
  %v378 = vshrl.u32 %v377, 7
  %v379 = vsub.s32 %v376, %v378
  %v380 = vrot.slane %v359, %v379
  %v381 = vcombine.high %v366, %v373
  %v382 = vcombine.high %v380, %v380
  %v384 = vunpack.c.l.s4 1966171168
  %v385 = vunpack.c.0.s8 %v384
  %v386 = vlaneseq
  %v387 = vshrl.u32 %v386, 7
  %v388 = vsub.s32 %v385, %v387
  %v389 = vrot.slane %v381, %v388
  %v391 = vunpack.c.l.s4 1966171168
  %v392 = vunpack.c.0.s8 %v391
  %v393 = vlaneseq
  %v394 = vshrl.u32 %v393, 7
  %v395 = vsub.s32 %v392, %v394
  %v396 = vrot.slane %v382, %v395
  %v397 = vcombine.high %v389, %v396
  %s399 = scalar_lea.vmem %s2, 3
  %400 = vst.msk [vmem:[%s399] ss:$8 sm:$0xf] %vm175, %v397
  %401 = vst.msk [vmem:[%s399] ss:$8 sm:$0x30] %vm175, %v397
  %v402 = vcombine.high %v345, %v346
  %v403 = vcombine.high %v347, %v348
  %v404 = vcombine.high %v349, %v350
  %v406 = vunpack.c.l.s4 1966171168
  %v407 = vunpack.c.0.s8 %v406
  %v408 = vlaneseq
  %v409 = vshrl.u32 %v408, 7
  %v410 = vsub.s32 %v407, %v409
  %v411 = vrot.slane %v402, %v410
  %v413 = vunpack.c.l.s4 1966171168
  %v414 = vunpack.c.0.s8 %v413
  %v415 = vlaneseq
  %v416 = vshrl.u32 %v415, 7
  %v417 = vsub.s32 %v414, %v416
  %v418 = vrot.slane %v403, %v417
  %v420 = vunpack.c.l.s4 1966171168
  %v421 = vunpack.c.0.s8 %v420
  %v422 = vlaneseq
  %v423 = vshrl.u32 %v422, 7
  %v424 = vsub.s32 %v421, %v423
  %v425 = vrot.slane %v404, %v424
  %v426 = vcombine.low %v411, %v418
  %v428 = vunpack.c.l.s4 1966171168
  %v429 = vunpack.c.0.s8 %v428
  %v430 = vlaneseq
  %v431 = vshrl.u32 %v430, 7
  %v432 = vsub.s32 %v429, %v431
  %v433 = vrot.slane %v426, %v432
  %v435 = vunpack.c.l.s4 1966171168
  %v436 = vunpack.c.0.s8 %v435
  %v437 = vlaneseq
  %v438 = vshrl.u32 %v437, 7
  %v439 = vsub.s32 %v436, %v438
  %v440 = vrot.slane %v425, %v439
  %v441 = vcombine.low %v433, %v440
  %s443 = scalar_lea.vmem %s2, 4
  %444 = vst.msk [vmem:[%s443] ss:$8 sm:$0xf] %vm175, %v441
  %445 = vst.msk [vmem:[%s443] ss:$8 sm:$0x30] %vm175, %v441
  %v446 = vcombine.high %v411, %v418
  %v447 = vcombine.high %v425, %v425
  %v449 = vunpack.c.l.s4 1966171168
  %v450 = vunpack.c.0.s8 %v449
  %v451 = vlaneseq
  %v452 = vshrl.u32 %v451, 7
  %v453 = vsub.s32 %v450, %v452
  %v454 = vrot.slane %v446, %v453
  %v456 = vunpack.c.l.s4 1966171168
  %v457 = vunpack.c.0.s8 %v456
  %v458 = vlaneseq
  %v459 = vshrl.u32 %v458, 7
  %v460 = vsub.s32 %v457, %v459
  %v461 = vrot.slane %v447, %v460
  %v462 = vcombine.low %v454, %v461
  %s464 = scalar_lea.vmem %s2, 5
  %465 = vst.msk [vmem:[%s464] ss:$8 sm:$0xf] %vm175, %v462
  %466 = vst.msk [vmem:[%s464] ss:$8 sm:$0x30] %vm175, %v462
  %v467 = vadd.f32 %v11, %v17
  %v468 = vadd.f32 %v12, %v18
  %v469 = vadd.f32 %v13, %v19
  %v470 = vadd.f32 %v14, %v20
  %v471 = vadd.f32 %v15, %v21
  %v472 = vadd.f32 %v16, %v22
  %v479 = vcombine.high %v467, %v468
  %v480 = vcombine.high %v469, %v470
  %v481 = vcombine.high %v471, %v472
  %v483 = vunpack.c.l.s4 1966171168
  %v484 = vunpack.c.0.s8 %v483
  %v485 = vlaneseq
  %v486 = vshrl.u32 %v485, 7
  %v487 = vsub.s32 %v484, %v486
  %v488 = vrot.slane %v479, %v487
  %v490 = vunpack.c.l.s4 1966171168
  %v491 = vunpack.c.0.s8 %v490
  %v492 = vlaneseq
  %v493 = vshrl.u32 %v492, 7
  %v494 = vsub.s32 %v491, %v493
  %v495 = vrot.slane %v480, %v494
  %v497 = vunpack.c.l.s4 1966171168
  %v498 = vunpack.c.0.s8 %v497
  %v499 = vlaneseq
  %v500 = vshrl.u32 %v499, 7
  %v501 = vsub.s32 %v498, %v500
  %v502 = vrot.slane %v481, %v501
  %v503 = vcombine.low %v488, %v495
  %v505 = vunpack.c.l.s4 1966171168
  %v506 = vunpack.c.0.s8 %v505
  %v507 = vlaneseq
  %v508 = vshrl.u32 %v507, 7
  %v509 = vsub.s32 %v506, %v508
  %v510 = vrot.slane %v503, %v509
  %v512 = vunpack.c.l.s4 1966171168
  %v513 = vunpack.c.0.s8 %v512
  %v514 = vlaneseq
  %v515 = vshrl.u32 %v514, 7
  %v516 = vsub.s32 %v513, %v515
  %v517 = vrot.slane %v502, %v516
  %v518 = vcombine.high %v510, %v517
  %s520 = scalar_lea.vmem %s2, 6
  %521 = vst.msk [vmem:[%s520] ss:$8 sm:$0xf] %vm175, %v518
  %522 = vst.msk [vmem:[%s520] ss:$8 sm:$0x30] %vm175, %v518
  // Predicated region
  $region10: #{backbone_forward.23} parent=0 // pred_check
    _
  $region11: #{backbone_forward.23} parent=0 // pred_check_branch
    %524 = sbr.rel (0) target = $region13
  $region12: #{backbone_forward.23} parent=0 // pred_region
    _
  $region13: #{backbone_forward.23} parent=0 // pred_fallthru
    _
  // Predicated region
  $region14: #{backbone_forward.23} parent=0 // pred_check
    _
  $region15: #{backbone_forward.23} parent=0 // pred_check_branch
    %526 = sbr.rel (0) target = $region17
  $region16: #{backbone_forward.23} parent=0 // pred_region
    _
  $region17: #{backbone_forward.23} parent=0 // pred_fallthru
    _

// kernel: backbone_forward.21
$region0: #{backbone_forward.21}
  #allocation0 [shape = 'u32[]', space=smem, size = 0x4, offset = 0x4, fixed_abs, tag = 'smem constant byte address 0x4 - core index']
  #allocation1 [shape = 'u32[144,128]{1,0:T(1,128)}', space=vmem, size = 0x12000, scoped, tag = 'internal scratch']
  %s0 = inlined_call_operand.vmem [shape: bf16[128,3584], index: 0, kind: input, shape index: {}]
  %s1 = inlined_call_operand.vmem [shape: bf16[3584,128], index: 1, kind: input, shape index: {}]
  %s2 = inlined_call_operand.vmem [shape: f32[1,128], index: 2, kind: input, shape index: {}]
  %s3 = inlined_call_operand.vmem [shape: f32[128,128], index: 3, kind: output, shape index: {}]
  %s4 = sld [smem:[#allocation0]]
  $region76: #{backbone_forward.21} parent=0
    _
  %s6 = ssub.s32 1, %s4
  %s7 = scalar_select 0, %s6, %s4
  $region1: #{backbone_forward.21} parent=0
    #allocation2 [shape = 'u8[917504]{0}', space=vmem, size = 0xe0000, scoped, tag = 'input window, operand 0']
    loop: start=0, step=1, limit=4
    $region2: #{backbone_forward.21} parent=1 // loop_pre_header
      _
    $region3: #{backbone_forward.21} parent=1 // loop_header
      %s9 = sphi 0, %s13
      %p10 = scmp.ge.s32.totalorder %s9, 4
      %s16 = sphi 0, %s28
      %s17 = sphi 0, %s24
      %s18 = sphi 0, %s16
      %s19 = sphi 0, %s17
      %s20 = sphi 0, %s18
      %s21 = sphi 0, %s19
      %s33 = sphi 0, %s35
      %s36 = sphi 0, %s33
      %s37 = sphi 0, %s36
      %s53 = sphi 0, %s37
      %s59 = sphi 0, %s61
      %s62 = sphi 0, %s59
      %s63 = sphi 0, %s62
      %s79 = sphi 0, %s63
      %s83 = sphi 0, %s83
      %s85 = sphi 0, %s83
      %s86 = sphi 0, %s85
      %s100 = sphi 0, %s86
      %s106 = sphi 0, %s108
      %s109 = sphi 0, %s106
      %s110 = sphi 0, %s109
      %s126 = sphi 0, %s110
    $region4: #{backbone_forward.21} parent=1 // loop_header_branch
      %12 = sbr.rel (%p10) target = $region8
    $region5: #{backbone_forward.21} parent=1 // loop_body
      %s14 = ssub.s32 %s9, 1
      %s15 = ssub.s32 %s9, 2
      %s22 = sadd.s32 1, %s17
      %p23 = scmp.ge.s32.totalorder %s22, 2
      %s24 = scalar_select %p23, 0, %s22
      %s25 = sadd.s32 1, %s16
      %s26 = scalar_select %p23, %s25, %s16
      %p27 = scmp.ge.s32.totalorder %s26, 1
      %s28 = scalar_select %p27, 0, %s26
      %s29 = ssub.s32 %s16, %s28
      %s30 = ssub.s32 %s17, %s24
      %s31 = sor.u32 %s29, %s30
      %p32 = scmp.eq.s32.totalorder %s31, 0
      %s34 = sadd.s32 %s33, 1
      %s35 = scalar_select %p32, %s33, %s34
      %p38 = pneg %p32
      %p39 = scmp.eq.s32.totalorder %s9, 1
      %p40 = por %p38, %p39
      %p41 = scmp.ne.s32.totalorder %s33, %s36
      %p42 = scmp.eq.s32.totalorder %s9, 0
      %p43 = por %p41, %p42
      %p44 = scmp.ne.s32.totalorder %s33, %s36
      %p45 = scmp.eq.s32.totalorder %s14, 1
      %p46 = por %p44, %p45
      %p47 = scmp.ne.s32.totalorder %s36, %s37
      %p48 = scmp.eq.s32.totalorder %s14, 0
      %p49 = por %p47, %p48
      %p50 = scmp.ne.s32.totalorder %s36, %s37
      %p51 = scmp.eq.s32.totalorder %s15, 1
      %p52 = por %p50, %p51
      %p54 = scmp.ne.s32.totalorder %s37, %s53
      %p55 = scmp.eq.s32.totalorder %s15, 0
      %p56 = por %p54, %p55
      %s57 = ssub.s32 %s17, %s24
      %p58 = scmp.eq.s32.totalorder %s57, 0
      %s60 = sadd.s32 %s59, 1
      %s61 = scalar_select %p58, %s59, %s60
      %p64 = pneg %p58
      %p65 = scmp.eq.s32.totalorder %s9, 1
      %p66 = por %p64, %p65
      %p67 = scmp.ne.s32.totalorder %s59, %s62
      %p68 = scmp.eq.s32.totalorder %s9, 0
      %p69 = por %p67, %p68
      %p70 = scmp.ne.s32.totalorder %s59, %s62
      %p71 = scmp.eq.s32.totalorder %s14, 1
      %p72 = por %p70, %p71
      %p73 = scmp.ne.s32.totalorder %s62, %s63
      %p74 = scmp.eq.s32.totalorder %s14, 0
      %p75 = por %p73, %p74
      %p76 = scmp.ne.s32.totalorder %s62, %s63
      %p77 = scmp.eq.s32.totalorder %s15, 1
      %p78 = por %p76, %p77
      %p80 = scmp.ne.s32.totalorder %s63, %s79
      %p81 = scmp.eq.s32.totalorder %s15, 0
      %p82 = por %p80, %p81
      %s84 = sadd.s32 %s83, 1
      %p87 = scmp.eq.s32.totalorder %s9, 1
      %p88 = scmp.ne.s32.totalorder %s83, %s85
      %p89 = scmp.eq.s32.totalorder %s9, 0
      %p90 = por %p88, %p89
      %p91 = scmp.ne.s32.totalorder %s83, %s85
      %p92 = scmp.eq.s32.totalorder %s14, 1
      %p93 = por %p91, %p92
      %p94 = scmp.ne.s32.totalorder %s85, %s86
      %p95 = scmp.eq.s32.totalorder %s14, 0
      %p96 = por %p94, %p95
      %p97 = scmp.ne.s32.totalorder %s85, %s86
      %p98 = scmp.eq.s32.totalorder %s15, 1
      %p99 = por %p97, %p98
      %p101 = scmp.ne.s32.totalorder %s86, %s100
      %p102 = scmp.eq.s32.totalorder %s15, 0
      %p103 = por %p101, %p102
      %s104 = ssub.s32 %s16, %s28
      %p105 = scmp.eq.s32.totalorder %s104, 0
      %s107 = sadd.s32 %s106, 1
      %s108 = scalar_select %p105, %s106, %s107
      %p111 = pneg %p105
      %p112 = scmp.eq.s32.totalorder %s9, 1
      %p113 = por %p111, %p112
      %p114 = scmp.ne.s32.totalorder %s106, %s109
      %p115 = scmp.eq.s32.totalorder %s9, 0
      %p116 = por %p114, %p115
      %p117 = scmp.ne.s32.totalorder %s106, %s109
      %p118 = scmp.eq.s32.totalorder %s14, 1
      %p119 = por %p117, %p118
      %p120 = scmp.ne.s32.totalorder %s109, %s110
      %p121 = scmp.eq.s32.totalorder %s14, 0
      %p122 = por %p120, %p121
      %p123 = scmp.ne.s32.totalorder %s109, %s110
      %p124 = scmp.eq.s32.totalorder %s15, 1
      %p125 = por %p123, %p124
      %p127 = scmp.ne.s32.totalorder %s110, %s126
      %p128 = scmp.eq.s32.totalorder %s15, 0
      %p129 = por %p127, %p128
      %p130 = scmp.le.s32.totalorder 1, %s9
      %p131 = scmp.lt.s32.totalorder %s9, 3
      %p132 = pnand %p130, %p131
      %p133 = pneg %p132
      // Predicated region
      $region9: #{backbone_forward.21} parent=5 // pred_check
        _
      $region10: #{backbone_forward.21} parent=5 // pred_check_branch
        %135 = sbr.rel (%p132) target = $region12
      $region11: #{backbone_forward.21} parent=5 // pred_region
        %s136 = ssub.s32 %s9, 1
        // Predicated region
        $region13: #{backbone_forward.21} parent=11 // pred_check
          %p137 = pneg %p96
        $region14: #{backbone_forward.21} parent=11 // pred_check_branch
          %139 = sbr.rel (%p137) target = $region16
        $region15: #{backbone_forward.21} parent=11 // pred_region
          _
        $region16: #{backbone_forward.21} parent=11 // pred_fallthru
          _
      $region12: #{backbone_forward.21} parent=5 // pred_fallthru
        _
      %p140 = scmp.lt.s32.totalorder %s9, 2
      // Predicated region
      $region17: #{backbone_forward.21} parent=5 // pred_check
        %p141 = pneg %p140
      $region18: #{backbone_forward.21} parent=5 // pred_check_branch
        %143 = sbr.rel (%p141) target = $region20
      $region19: #{backbone_forward.21} parent=5 // pred_region
        // Predicated region
        $region21: #{backbone_forward.21} parent=19 // pred_check
          %p144 = pneg %p43
        $region22: #{backbone_forward.21} parent=19 // pred_check_branch
          %146 = sbr.rel (%p144) target = $region24
        $region23: #{backbone_forward.21} parent=19 // pred_region
          %s147 = sand.u32 %s33, 1
          %s148 = sand.u32 %s33, 1
          %s149 = smul.addr %s148, 896
          %s150 = scalar_lea.vmem [#allocation2], %s149
          %s151 = smul.u32 16, %s16
          %s152 = smul.u32 14, %s17
          %s153 = smul.addr %s151, 28
          %s154 = sadd.s32 %s152, %s153
          %s155 = smul.addr %s154, 4
          %s156 = scalar_lea.vmem %s0, %s155
          // Predicated region
          $region25: #{backbone_forward.21} parent=23 // pred_check
            _
          $region26: #{backbone_forward.21} parent=23 // pred_check_branch
            %158 = sbr.rel (0) target = $region28
          $region27: #{backbone_forward.21} parent=23 // pred_region
            // Predicated region
            $region29: #{backbone_forward.21} parent=27 // pred_check
              _
            $region30: #{backbone_forward.21} parent=27 // pred_check_branch
              %160 = sbr.rel (0) target = $region32
            $region31: #{backbone_forward.21} parent=27 // pred_region
              loop: start=0, step=1, limit=1
              $region33: #{backbone_forward.21} parent=31 // loop_pre_header
                _
              $region34: #{backbone_forward.21} parent=31 // loop_header
                %s162 = sphi 0, %s166
                %p163 = scmp.ge.s32.totalorder %s162, 1
                %s167 = sphi %s156, %s156
                %s168 = sphi %s150, %s150
              $region35: #{backbone_forward.21} parent=31 // loop_header_branch
                %165 = sbr.rel (%p163) target = $region39
              $region36: #{backbone_forward.21} parent=31 // loop_body
                %v169 = vld [vmem:[%s167] sm:$0xff]
                %170 = vst [vmem:[%s168] sm:$0xff] %v169
                %v171 = vld [vmem:[%s167 + $0x8] sm:$0xff]
                %172 = vst [vmem:[%s168 + $0x8] sm:$0xff] %v171
                %v173 = vld [vmem:[%s167 + $0x10] sm:$0xff]
                %174 = vst [vmem:[%s168 + $0x10] sm:$0xff] %v173
                %v175 = vld [vmem:[%s167 + $0x18] sm:$0xff]
                %176 = vst [vmem:[%s168 + $0x18] sm:$0xff] %v175
                %v177 = vld [vmem:[%s167 + $0x20] sm:$0xff]
                %178 = vst [vmem:[%s168 + $0x20] sm:$0xff] %v177
                %v179 = vld [vmem:[%s167 + $0x28] sm:$0xff]
                %180 = vst [vmem:[%s168 + $0x28] sm:$0xff] %v179
                %v181 = vld [vmem:[%s167 + $0x30] sm:$0xff]
                %182 = vst [vmem:[%s168 + $0x30] sm:$0xff] %v181
                %v183 = vld [vmem:[%s167 + $0x70] sm:$0xff]
                %184 = vst [vmem:[%s168 + $0x38] sm:$0xff] %v183
                %v185 = vld [vmem:[%s167 + $0x78] sm:$0xff]
                %186 = vst [vmem:[%s168 + $0x40] sm:$0xff] %v185
                %v187 = vld [vmem:[%s167 + $0x80] sm:$0xff]
                %188 = vst [vmem:[%s168 + $0x48] sm:$0xff] %v187
                %v189 = vld [vmem:[%s167 + $0x88] sm:$0xff]
                %190 = vst [vmem:[%s168 + $0x50] sm:$0xff] %v189
                %v191 = vld [vmem:[%s167 + $0x90] sm:$0xff]
                %192 = vst [vmem:[%s168 + $0x58] sm:$0xff] %v191
                %v193 = vld [vmem:[%s167 + $0x98] sm:$0xff]
                %194 = vst [vmem:[%s168 + $0x60] sm:$0xff] %v193
                %v195 = vld [vmem:[%s167 + $0xa0] sm:$0xff]
                %196 = vst [vmem:[%s168 + $0x68] sm:$0xff] %v195
                %v197 = vld [vmem:[%s167 + $0xe0] sm:$0xff]
                %198 = vst [vmem:[%s168 + $0x70] sm:$0xff] %v197
                %v199 = vld [vmem:[%s167 + $0xe8] sm:$0xff]
                %200 = vst [vmem:[%s168 + $0x78] sm:$0xff] %v199
                %v201 = vld [vmem:[%s167 + $0xf0] sm:$0xff]
                %202 = vst [vmem:[%s168 + $0x80] sm:$0xff] %v201
                %v203 = vld [vmem:[%s167 + $0xf8] sm:$0xff]
                %204 = vst [vmem:[%s168 + $0x88] sm:$0xff] %v203
                %v205 = vld [vmem:[%s167 + $0x100] sm:$0xff]
                %206 = vst [vmem:[%s168 + $0x90] sm:$0xff] %v205
                %v207 = vld [vmem:[%s167 + $0x108] sm:$0xff]
                %208 = vst [vmem:[%s168 + $0x98] sm:$0xff] %v207
                %v209 = vld [vmem:[%s167 + $0x110] sm:$0xff]
                %210 = vst [vmem:[%s168 + $0xa0] sm:$0xff] %v209
                %v211 = vld [vmem:[%s167 + $0x150] sm:$0xff]
                %212 = vst [vmem:[%s168 + $0xa8] sm:$0xff] %v211
                %v213 = vld [vmem:[%s167 + $0x158] sm:$0xff]
                %214 = vst [vmem:[%s168 + $0xb0] sm:$0xff] %v213
                %v215 = vld [vmem:[%s167 + $0x160] sm:$0xff]
                %216 = vst [vmem:[%s168 + $0xb8] sm:$0xff] %v215
                %v217 = vld [vmem:[%s167 + $0x168] sm:$0xff]
                %218 = vst [vmem:[%s168 + $0xc0] sm:$0xff] %v217
                %v219 = vld [vmem:[%s167 + $0x170] sm:$0xff]
                %220 = vst [vmem:[%s168 + $0xc8] sm:$0xff] %v219
                %v221 = vld [vmem:[%s167 + $0x178] sm:$0xff]
                %222 = vst [vmem:[%s168 + $0xd0] sm:$0xff] %v221
                %v223 = vld [vmem:[%s167 + $0x180] sm:$0xff]
                %224 = vst [vmem:[%s168 + $0xd8] sm:$0xff] %v223
                %v225 = vld [vmem:[%s167 + $0x1c0] sm:$0xff]
                %226 = vst [vmem:[%s168 + $0xe0] sm:$0xff] %v225
                %v227 = vld [vmem:[%s167 + $0x1c8] sm:$0xff]
                %228 = vst [vmem:[%s168 + $0xe8] sm:$0xff] %v227
                %v229 = vld [vmem:[%s167 + $0x1d0] sm:$0xff]
                %230 = vst [vmem:[%s168 + $0xf0] sm:$0xff] %v229
                %v231 = vld [vmem:[%s167 + $0x1d8] sm:$0xff]
                %232 = vst [vmem:[%s168 + $0xf8] sm:$0xff] %v231
                %v233 = vld [vmem:[%s167 + $0x1e0] sm:$0xff]
                %234 = vst [vmem:[%s168 + $0x100] sm:$0xff] %v233
                %v235 = vld [vmem:[%s167 + $0x1e8] sm:$0xff]
                %236 = vst [vmem:[%s168 + $0x108] sm:$0xff] %v235
                %v237 = vld [vmem:[%s167 + $0x1f0] sm:$0xff]
                %238 = vst [vmem:[%s168 + $0x110] sm:$0xff] %v237
                %v239 = vld [vmem:[%s167 + $0x230] sm:$0xff]
                %240 = vst [vmem:[%s168 + $0x118] sm:$0xff] %v239
                %v241 = vld [vmem:[%s167 + $0x238] sm:$0xff]
                %242 = vst [vmem:[%s168 + $0x120] sm:$0xff] %v241
                %v243 = vld [vmem:[%s167 + $0x240] sm:$0xff]
                %244 = vst [vmem:[%s168 + $0x128] sm:$0xff] %v243
                %v245 = vld [vmem:[%s167 + $0x248] sm:$0xff]
                %246 = vst [vmem:[%s168 + $0x130] sm:$0xff] %v245
                %v247 = vld [vmem:[%s167 + $0x250] sm:$0xff]
                %248 = vst [vmem:[%s168 + $0x138] sm:$0xff] %v247
                %v249 = vld [vmem:[%s167 + $0x258] sm:$0xff]
                %250 = vst [vmem:[%s168 + $0x140] sm:$0xff] %v249
                %v251 = vld [vmem:[%s167 + $0x260] sm:$0xff]
                %252 = vst [vmem:[%s168 + $0x148] sm:$0xff] %v251
                %v253 = vld [vmem:[%s167 + $0x2a0] sm:$0xff]
                %254 = vst [vmem:[%s168 + $0x150] sm:$0xff] %v253
                %v255 = vld [vmem:[%s167 + $0x2a8] sm:$0xff]
                %256 = vst [vmem:[%s168 + $0x158] sm:$0xff] %v255
                %v257 = vld [vmem:[%s167 + $0x2b0] sm:$0xff]
                %258 = vst [vmem:[%s168 + $0x160] sm:$0xff] %v257
                %v259 = vld [vmem:[%s167 + $0x2b8] sm:$0xff]
                %260 = vst [vmem:[%s168 + $0x168] sm:$0xff] %v259
                %v261 = vld [vmem:[%s167 + $0x2c0] sm:$0xff]
                %262 = vst [vmem:[%s168 + $0x170] sm:$0xff] %v261
                %v263 = vld [vmem:[%s167 + $0x2c8] sm:$0xff]
                %264 = vst [vmem:[%s168 + $0x178] sm:$0xff] %v263
                %v265 = vld [vmem:[%s167 + $0x2d0] sm:$0xff]
                %266 = vst [vmem:[%s168 + $0x180] sm:$0xff] %v265
                %v267 = vld [vmem:[%s167 + $0x310] sm:$0xff]
                %268 = vst [vmem:[%s168 + $0x188] sm:$0xff] %v267
                %v269 = vld [vmem:[%s167 + $0x318] sm:$0xff]
                %270 = vst [vmem:[%s168 + $0x190] sm:$0xff] %v269
                %v271 = vld [vmem:[%s167 + $0x320] sm:$0xff]
                %272 = vst [vmem:[%s168 + $0x198] sm:$0xff] %v271
                %v273 = vld [vmem:[%s167 + $0x328] sm:$0xff]
                %274 = vst [vmem:[%s168 + $0x1a0] sm:$0xff] %v273
                %v275 = vld [vmem:[%s167 + $0x330] sm:$0xff]
                %276 = vst [vmem:[%s168 + $0x1a8] sm:$0xff] %v275
                %v277 = vld [vmem:[%s167 + $0x338] sm:$0xff]
                %278 = vst [vmem:[%s168 + $0x1b0] sm:$0xff] %v277
                %v279 = vld [vmem:[%s167 + $0x340] sm:$0xff]
                %280 = vst [vmem:[%s168 + $0x1b8] sm:$0xff] %v279
                %v281 = vld [vmem:[%s167 + $0x380] sm:$0xff]
                %282 = vst [vmem:[%s168 + $0x1c0] sm:$0xff] %v281
                %v283 = vld [vmem:[%s167 + $0x388] sm:$0xff]
                %284 = vst [vmem:[%s168 + $0x1c8] sm:$0xff] %v283
                %v285 = vld [vmem:[%s167 + $0x390] sm:$0xff]
                %286 = vst [vmem:[%s168 + $0x1d0] sm:$0xff] %v285
                %v287 = vld [vmem:[%s167 + $0x398] sm:$0xff]
                %288 = vst [vmem:[%s168 + $0x1d8] sm:$0xff] %v287
                %v289 = vld [vmem:[%s167 + $0x3a0] sm:$0xff]
                %290 = vst [vmem:[%s168 + $0x1e0] sm:$0xff] %v289
                %v291 = vld [vmem:[%s167 + $0x3a8] sm:$0xff]
                %292 = vst [vmem:[%s168 + $0x1e8] sm:$0xff] %v291
                %v293 = vld [vmem:[%s167 + $0x3b0] sm:$0xff]
                %294 = vst [vmem:[%s168 + $0x1f0] sm:$0xff] %v293
                %v295 = vld [vmem:[%s167 + $0x3f0] sm:$0xff]
                %296 = vst [vmem:[%s168 + $0x1f8] sm:$0xff] %v295
                %v297 = vld [vmem:[%s167 + $0x3f8] sm:$0xff]
                %298 = vst [vmem:[%s168 + $0x200] sm:$0xff] %v297
                %v299 = vld [vmem:[%s167 + $0x400] sm:$0xff]
                %300 = vst [vmem:[%s168 + $0x208] sm:$0xff] %v299
                %v301 = vld [vmem:[%s167 + $0x408] sm:$0xff]
                %302 = vst [vmem:[%s168 + $0x210] sm:$0xff] %v301
                %v303 = vld [vmem:[%s167 + $0x410] sm:$0xff]
                %304 = vst [vmem:[%s168 + $0x218] sm:$0xff] %v303
                %v305 = vld [vmem:[%s167 + $0x418] sm:$0xff]
                %306 = vst [vmem:[%s168 + $0x220] sm:$0xff] %v305
                %v307 = vld [vmem:[%s167 + $0x420] sm:$0xff]
                %308 = vst [vmem:[%s168 + $0x228] sm:$0xff] %v307
                %v309 = vld [vmem:[%s167 + $0x460] sm:$0xff]
                %310 = vst [vmem:[%s168 + $0x230] sm:$0xff] %v309
                %v311 = vld [vmem:[%s167 + $0x468] sm:$0xff]
                %312 = vst [vmem:[%s168 + $0x238] sm:$0xff] %v311
                %v313 = vld [vmem:[%s167 + $0x470] sm:$0xff]
                %314 = vst [vmem:[%s168 + $0x240] sm:$0xff] %v313
                %v315 = vld [vmem:[%s167 + $0x478] sm:$0xff]
                %316 = vst [vmem:[%s168 + $0x248] sm:$0xff] %v315
                %v317 = vld [vmem:[%s167 + $0x480] sm:$0xff]
                %318 = vst [vmem:[%s168 + $0x250] sm:$0xff] %v317
                %v319 = vld [vmem:[%s167 + $0x488] sm:$0xff]
                %320 = vst [vmem:[%s168 + $0x258] sm:$0xff] %v319
                %v321 = vld [vmem:[%s167 + $0x490] sm:$0xff]
                %322 = vst [vmem:[%s168 + $0x260] sm:$0xff] %v321
                %v323 = vld [vmem:[%s167 + $0x4d0] sm:$0xff]
                %324 = vst [vmem:[%s168 + $0x268] sm:$0xff] %v323
                %v325 = vld [vmem:[%s167 + $0x4d8] sm:$0xff]
                %326 = vst [vmem:[%s168 + $0x270] sm:$0xff] %v325
                %v327 = vld [vmem:[%s167 + $0x4e0] sm:$0xff]
                %328 = vst [vmem:[%s168 + $0x278] sm:$0xff] %v327
                %v329 = vld [vmem:[%s167 + $0x4e8] sm:$0xff]
                %330 = vst [vmem:[%s168 + $0x280] sm:$0xff] %v329
                %v331 = vld [vmem:[%s167 + $0x4f0] sm:$0xff]
                %332 = vst [vmem:[%s168 + $0x288] sm:$0xff] %v331
                %v333 = vld [vmem:[%s167 + $0x4f8] sm:$0xff]
                %334 = vst [vmem:[%s168 + $0x290] sm:$0xff] %v333
                %v335 = vld [vmem:[%s167 + $0x500] sm:$0xff]
                %336 = vst [vmem:[%s168 + $0x298] sm:$0xff] %v335
                %v337 = vld [vmem:[%s167 + $0x540] sm:$0xff]
                %338 = vst [vmem:[%s168 + $0x2a0] sm:$0xff] %v337
                %v339 = vld [vmem:[%s167 + $0x548] sm:$0xff]
                %340 = vst [vmem:[%s168 + $0x2a8] sm:$0xff] %v339
                %v341 = vld [vmem:[%s167 + $0x550] sm:$0xff]
                %342 = vst [vmem:[%s168 + $0x2b0] sm:$0xff] %v341
                %v343 = vld [vmem:[%s167 + $0x558] sm:$0xff]
                %344 = vst [vmem:[%s168 + $0x2b8] sm:$0xff] %v343
                %v345 = vld [vmem:[%s167 + $0x560] sm:$0xff]
                %346 = vst [vmem:[%s168 + $0x2c0] sm:$0xff] %v345
                %v347 = vld [vmem:[%s167 + $0x568] sm:$0xff]
                %348 = vst [vmem:[%s168 + $0x2c8] sm:$0xff] %v347
                %v349 = vld [vmem:[%s167 + $0x570] sm:$0xff]
                %350 = vst [vmem:[%s168 + $0x2d0] sm:$0xff] %v349
                %v351 = vld [vmem:[%s167 + $0x5b0] sm:$0xff]
                %352 = vst [vmem:[%s168 + $0x2d8] sm:$0xff] %v351
                %v353 = vld [vmem:[%s167 + $0x5b8] sm:$0xff]
                %354 = vst [vmem:[%s168 + $0x2e0] sm:$0xff] %v353
                %v355 = vld [vmem:[%s167 + $0x5c0] sm:$0xff]
                %356 = vst [vmem:[%s168 + $0x2e8] sm:$0xff] %v355
                %v357 = vld [vmem:[%s167 + $0x5c8] sm:$0xff]
                %358 = vst [vmem:[%s168 + $0x2f0] sm:$0xff] %v357
                %v359 = vld [vmem:[%s167 + $0x5d0] sm:$0xff]
                %360 = vst [vmem:[%s168 + $0x2f8] sm:$0xff] %v359
                %v361 = vld [vmem:[%s167 + $0x5d8] sm:$0xff]
                %362 = vst [vmem:[%s168 + $0x300] sm:$0xff] %v361
                %v363 = vld [vmem:[%s167 + $0x5e0] sm:$0xff]
                %364 = vst [vmem:[%s168 + $0x308] sm:$0xff] %v363
                %v365 = vld [vmem:[%s167 + $0x620] sm:$0xff]
                %366 = vst [vmem:[%s168 + $0x310] sm:$0xff] %v365
                %v367 = vld [vmem:[%s167 + $0x628] sm:$0xff]
                %368 = vst [vmem:[%s168 + $0x318] sm:$0xff] %v367
                %v369 = vld [vmem:[%s167 + $0x630] sm:$0xff]
                %370 = vst [vmem:[%s168 + $0x320] sm:$0xff] %v369
                %v371 = vld [vmem:[%s167 + $0x638] sm:$0xff]
                %372 = vst [vmem:[%s168 + $0x328] sm:$0xff] %v371
                %v373 = vld [vmem:[%s167 + $0x640] sm:$0xff]
                %374 = vst [vmem:[%s168 + $0x330] sm:$0xff] %v373
                %v375 = vld [vmem:[%s167 + $0x648] sm:$0xff]
                %376 = vst [vmem:[%s168 + $0x338] sm:$0xff] %v375
                %v377 = vld [vmem:[%s167 + $0x650] sm:$0xff]
                %378 = vst [vmem:[%s168 + $0x340] sm:$0xff] %v377
                %v379 = vld [vmem:[%s167 + $0x690] sm:$0xff]
                %380 = vst [vmem:[%s168 + $0x348] sm:$0xff] %v379
                %v381 = vld [vmem:[%s167 + $0x698] sm:$0xff]
                %382 = vst [vmem:[%s168 + $0x350] sm:$0xff] %v381
                %v383 = vld [vmem:[%s167 + $0x6a0] sm:$0xff]
                %384 = vst [vmem:[%s168 + $0x358] sm:$0xff] %v383
                %v385 = vld [vmem:[%s167 + $0x6a8] sm:$0xff]
                %386 = vst [vmem:[%s168 + $0x360] sm:$0xff] %v385
                %v387 = vld [vmem:[%s167 + $0x6b0] sm:$0xff]
                %388 = vst [vmem:[%s168 + $0x368] sm:$0xff] %v387
                %v389 = vld [vmem:[%s167 + $0x6b8] sm:$0xff]
                %390 = vst [vmem:[%s168 + $0x370] sm:$0xff] %v389
                %v391 = vld [vmem:[%s167 + $0x6c0] sm:$0xff]
                %392 = vst [vmem:[%s168 + $0x378] sm:$0xff] %v391
              $region37: #{backbone_forward.21} parent=31 // loop_footer
                %s166 = sadd.s32 1, %s162
              $region38: #{backbone_forward.21} parent=31 // loop_footer_branch
                %161 = sbr.rel target = $region34
              $region39: #{backbone_forward.21} parent=31 // loop_exit
                _
            $region32: #{backbone_forward.21} parent=27 // pred_fallthru
              _
            // Predicated region
            $region40: #{backbone_forward.21} parent=27 // pred_check
              _
            $region41: #{backbone_forward.21} parent=27 // pred_check_branch
              %394 = sbr.rel target = $region43
            $region42: #{backbone_forward.21} parent=27 // pred_region
              _
            $region43: #{backbone_forward.21} parent=27 // pred_fallthru
              _
          $region28: #{backbone_forward.21} parent=23 // pred_fallthru
            _
          %395 = vnop
        $region24: #{backbone_forward.21} parent=19 // pred_fallthru
          _
        // Predicated region
        $region44: #{backbone_forward.21} parent=19 // pred_check
          %p396 = pneg %p69
        $region45: #{backbone_forward.21} parent=19 // pred_check_branch
          %398 = sbr.rel (%p396) target = $region47
        $region46: #{backbone_forward.21} parent=19 // pred_region
          %s399 = smul.u32 224, %s17
          %p400 = scmp.lt.s32.totalorder %s399, 447
          %s401 = scalar_select %p400, %s399, 447
          %s402 = smul.addr %s401, 4
          %s403 = scalar_lea.vmem %s1, %s402
          %s404 = smul.u32 224, %s17
        $region47: #{backbone_forward.21} parent=19 // pred_fallthru
          _
      $region20: #{backbone_forward.21} parent=5 // pred_fallthru
        _
      %p405 = scmp.le.s32.totalorder 1, %s9
      %p406 = scmp.lt.s32.totalorder %s9, 3
      %p407 = pnand %p405, %p406
      %p408 = pneg %p407
      // Predicated region
      $region48: #{backbone_forward.21} parent=5 // pred_check
        _
      $region49: #{backbone_forward.21} parent=5 // pred_check_branch
        %410 = sbr.rel (%p407) target = $region51
      $region50: #{backbone_forward.21} parent=5 // pred_region
        %s411 = ssub.s32 %s9, 1
        %s412 = sand.u32 %s36, 1
        %s413 = sand.u32 %s36, 1
        %s414 = smul.addr %s413, 896
        %s415 = scalar_lea.vmem [#allocation2], %s414
        // Predicated region
        $region52: #{backbone_forward.21} parent=50 // pred_check
          %p416 = pneg %p49
        $region53: #{backbone_forward.21} parent=50 // pred_check_branch
          %418 = sbr.rel (%p416) target = $region55
        $region54: #{backbone_forward.21} parent=50 // pred_region
          _
        $region55: #{backbone_forward.21} parent=50 // pred_fallthru
          _
        %s419 = sand.u32 %s36, 1
        %s420 = sand.u32 %s36, 1
        %s421 = smul.addr %s420, 896
        %s422 = scalar_lea.vmem [#allocation2], %s421
        %p423 = pneg %p49
        %p424 = pneg %p46
        %s425 = smul.u32 224, %s19
        %p426 = scmp.lt.s32.totalorder %s425, 447
        %s427 = scalar_select %p426, %s425, 447
        %s428 = smul.addr %s427, 4
        %s429 = scalar_lea.vmem %s1, %s428
        %p430 = pneg %p75
        %p431 = pneg %p72
        %p432 = pneg %p96
        %p433 = pneg %p93
        %p434 = pneg %p122
        %p435 = pneg %p119
        %s436 = smul.u32 16, %s18
        %p437 = scmp.lt.s32.totalorder %s436, 15
        %s438 = scalar_select %p437, %s436, 15
        %s439 = smul.addr %s438, 8
        %s440 = scalar_lea.vmem %s3, %s439
        %s441 = smul.u32 16, %s18
        %s442 = smul.u32 14, %s19
        %s443 = smul.u32 224, %s19
        %p444 = scmp.lt.s32.totalorder %s443, 447
        %s445 = scalar_select %p444, %s443, 447
        %s446 = smul.addr %s445, 4
        %s447 = scalar_lea.vmem %s1, %s446
        %s448 = smul.u32 224, %s19
        %s449 = smul.u32 16, %s18
        %p450 = scmp.lt.s32.totalorder %s449, 15
        %s451 = scalar_select %p450, %s449, 15
        %s452 = smul.addr %s451, 8
        %s453 = scalar_lea.vmem %s3, %s452
        %s454 = smul.u32 16, %s18
        %p456 = scmp.eq.s32.totalorder %s19, 0
        // Predicated region
        $region56: #{backbone_forward.21} parent=50 // pred_check
          %p457 = pneg %p456
        $region57: #{backbone_forward.21} parent=50 // pred_check_branch
          %459 = sbr.rel (%p457) target = $region59
        $region58: #{backbone_forward.21} parent=50 // pred_region
          %460 = vst [vmem:[%s453] sm:$0xff] 0.0
          %461 = vst [vmem:[%s453 + $0x8] sm:$0xff] 0.0
          %462 = vst [vmem:[%s453 + $0x10] sm:$0xff] 0.0
          %463 = vst [vmem:[%s453 + $0x18] sm:$0xff] 0.0
          %464 = vst [vmem:[%s453 + $0x20] sm:$0xff] 0.0
          %465 = vst [vmem:[%s453 + $0x28] sm:$0xff] 0.0
          %466 = vst [vmem:[%s453 + $0x30] sm:$0xff] 0.0
          %467 = vst [vmem:[%s453 + $0x38] sm:$0xff] 0.0
          %468 = vst [vmem:[%s453 + $0x40] sm:$0xff] 0.0
          %469 = vst [vmem:[%s453 + $0x48] sm:$0xff] 0.0
          %470 = vst [vmem:[%s453 + $0x50] sm:$0xff] 0.0
          %471 = vst [vmem:[%s453 + $0x58] sm:$0xff] 0.0
          %472 = vst [vmem:[%s453 + $0x60] sm:$0xff] 0.0
          %473 = vst [vmem:[%s453 + $0x68] sm:$0xff] 0.0
          %474 = vst [vmem:[%s453 + $0x70] sm:$0xff] 0.0
          %475 = vst [vmem:[%s453 + $0x78] sm:$0xff] 0.0
        $region59: #{backbone_forward.21} parent=50 // pred_fallthru
          _
        %v476 = vld [vmem:[%s453] sm:$0xff]
        %v477 = vld [vmem:[%s453 + $0x8] sm:$0xff]
        %v478 = vld [vmem:[%s453 + $0x10] sm:$0xff]
        %v479 = vld [vmem:[%s453 + $0x18] sm:$0xff]
        %v480 = vld [vmem:[%s453 + $0x20] sm:$0xff]
        %v481 = vld [vmem:[%s453 + $0x28] sm:$0xff]
        %v482 = vld [vmem:[%s453 + $0x30] sm:$0xff]
        %v483 = vld [vmem:[%s453 + $0x38] sm:$0xff]
        %v484 = vld [vmem:[%s453 + $0x40] sm:$0xff]
        %v485 = vld [vmem:[%s453 + $0x48] sm:$0xff]
        %v486 = vld [vmem:[%s453 + $0x50] sm:$0xff]
        %v487 = vld [vmem:[%s453 + $0x58] sm:$0xff]
        %v488 = vld [vmem:[%s453 + $0x60] sm:$0xff]
        %v489 = vld [vmem:[%s453 + $0x68] sm:$0xff]
        %v490 = vld [vmem:[%s453 + $0x70] sm:$0xff]
        %v491 = vld [vmem:[%s453 + $0x78] sm:$0xff]
        %v492 = vld [vmem:[%s415] sm:$0xff]
        %v493 = vld [vmem:[%s415 + $0x8] sm:$0xff]
        %v494 = vld [vmem:[%s415 + $0x10] sm:$0xff]
        %v495 = vld [vmem:[%s415 + $0x18] sm:$0xff]
        %v496 = vld [vmem:[%s415 + $0x20] sm:$0xff]
        %v497 = vld [vmem:[%s415 + $0x28] sm:$0xff]
        %v498 = vld [vmem:[%s415 + $0x30] sm:$0xff]
        %v499 = vld [vmem:[%s415 + $0x38] sm:$0xff]
        %v500 = vld [vmem:[%s415 + $0x40] sm:$0xff]
        %v501 = vld [vmem:[%s415 + $0x48] sm:$0xff]
        %v502 = vld [vmem:[%s415 + $0x50] sm:$0xff]
        %v503 = vld [vmem:[%s415 + $0x58] sm:$0xff]
        %v504 = vld [vmem:[%s415 + $0x60] sm:$0xff]
        %v505 = vld [vmem:[%s415 + $0x68] sm:$0xff]
        %v506 = vld [vmem:[%s415 + $0x70] sm:$0xff]
        %v507 = vld [vmem:[%s415 + $0x78] sm:$0xff]
        %v508 = vld [vmem:[%s415 + $0x80] sm:$0xff]
        %v509 = vld [vmem:[%s415 + $0x88] sm:$0xff]
        %v510 = vld [vmem:[%s415 + $0x90] sm:$0xff]
        %v511 = vld [vmem:[%s415 + $0x98] sm:$0xff]
        %v512 = vld [vmem:[%s415 + $0xa0] sm:$0xff]
        %v513 = vld [vmem:[%s415 + $0xa8] sm:$0xff]
        %v514 = vld [vmem:[%s415 + $0xb0] sm:$0xff]
        %v515 = vld [vmem:[%s415 + $0xb8] sm:$0xff]
        %v516 = vld [vmem:[%s415 + $0xc0] sm:$0xff]
        %v517 = vld [vmem:[%s415 + $0xc8] sm:$0xff]
        %v518 = vld [vmem:[%s415 + $0xd0] sm:$0xff]
        %v519 = vld [vmem:[%s415 + $0xd8] sm:$0xff]
        %v520 = vld [vmem:[%s415 + $0xe0] sm:$0xff]
        %v521 = vld [vmem:[%s415 + $0xe8] sm:$0xff]
        %v522 = vld [vmem:[%s415 + $0xf0] sm:$0xff]
        %v523 = vld [vmem:[%s415 + $0xf8] sm:$0xff]
        %v524 = vld [vmem:[%s415 + $0x100] sm:$0xff]
        %v525 = vld [vmem:[%s415 + $0x108] sm:$0xff]
        %v526 = vld [vmem:[%s415 + $0x110] sm:$0xff]
        %v527 = vld [vmem:[%s415 + $0x118] sm:$0xff]
        %v528 = vld [vmem:[%s415 + $0x120] sm:$0xff]
        %v529 = vld [vmem:[%s415 + $0x128] sm:$0xff]
        %v530 = vld [vmem:[%s415 + $0x130] sm:$0xff]
        %v531 = vld [vmem:[%s415 + $0x138] sm:$0xff]
        %v532 = vld [vmem:[%s415 + $0x140] sm:$0xff]
        %v533 = vld [vmem:[%s415 + $0x148] sm:$0xff]
        %v534 = vld [vmem:[%s415 + $0x150] sm:$0xff]
        %v535 = vld [vmem:[%s415 + $0x158] sm:$0xff]
        %v536 = vld [vmem:[%s415 + $0x160] sm:$0xff]
        %v537 = vld [vmem:[%s415 + $0x168] sm:$0xff]
        %v538 = vld [vmem:[%s415 + $0x170] sm:$0xff]
        %v539 = vld [vmem:[%s415 + $0x178] sm:$0xff]
        %v540 = vld [vmem:[%s415 + $0x180] sm:$0xff]
        %v541 = vld [vmem:[%s415 + $0x188] sm:$0xff]
        %v542 = vld [vmem:[%s415 + $0x190] sm:$0xff]
        %v543 = vld [vmem:[%s415 + $0x198] sm:$0xff]
        %v544 = vld [vmem:[%s415 + $0x1a0] sm:$0xff]
        %v545 = vld [vmem:[%s415 + $0x1a8] sm:$0xff]
        %v546 = vld [vmem:[%s415 + $0x1b0] sm:$0xff]
        %v547 = vld [vmem:[%s415 + $0x1b8] sm:$0xff]
        %v548 = vld [vmem:[%s415 + $0x1c0] sm:$0xff]
        %v549 = vld [vmem:[%s415 + $0x1c8] sm:$0xff]
        %v550 = vld [vmem:[%s415 + $0x1d0] sm:$0xff]
        %v551 = vld [vmem:[%s415 + $0x1d8] sm:$0xff]
        %v552 = vld [vmem:[%s415 + $0x1e0] sm:$0xff]
        %v553 = vld [vmem:[%s415 + $0x1e8] sm:$0xff]
        %v554 = vld [vmem:[%s415 + $0x1f0] sm:$0xff]
        %v555 = vld [vmem:[%s415 + $0x1f8] sm:$0xff]
        %v556 = vld [vmem:[%s415 + $0x200] sm:$0xff]
        %v557 = vld [vmem:[%s415 + $0x208] sm:$0xff]
        %v558 = vld [vmem:[%s415 + $0x210] sm:$0xff]
        %v559 = vld [vmem:[%s415 + $0x218] sm:$0xff]
        %v560 = vld [vmem:[%s415 + $0x220] sm:$0xff]
        %v561 = vld [vmem:[%s415 + $0x228] sm:$0xff]
        %v562 = vld [vmem:[%s415 + $0x230] sm:$0xff]
        %v563 = vld [vmem:[%s415 + $0x238] sm:$0xff]
        %v564 = vld [vmem:[%s415 + $0x240] sm:$0xff]
        %v565 = vld [vmem:[%s415 + $0x248] sm:$0xff]
        %v566 = vld [vmem:[%s415 + $0x250] sm:$0xff]
        %v567 = vld [vmem:[%s415 + $0x258] sm:$0xff]
        %v568 = vld [vmem:[%s415 + $0x260] sm:$0xff]
        %v569 = vld [vmem:[%s415 + $0x268] sm:$0xff]
        %v570 = vld [vmem:[%s415 + $0x270] sm:$0xff]
        %v571 = vld [vmem:[%s415 + $0x278] sm:$0xff]
        %v572 = vld [vmem:[%s415 + $0x280] sm:$0xff]
        %v573 = vld [vmem:[%s415 + $0x288] sm:$0xff]
        %v574 = vld [vmem:[%s415 + $0x290] sm:$0xff]
        %v575 = vld [vmem:[%s415 + $0x298] sm:$0xff]
        %v576 = vld [vmem:[%s415 + $0x2a0] sm:$0xff]
        %v577 = vld [vmem:[%s415 + $0x2a8] sm:$0xff]
        %v578 = vld [vmem:[%s415 + $0x2b0] sm:$0xff]
        %v579 = vld [vmem:[%s415 + $0x2b8] sm:$0xff]
        %v580 = vld [vmem:[%s415 + $0x2c0] sm:$0xff]
        %v581 = vld [vmem:[%s415 + $0x2c8] sm:$0xff]
        %v582 = vld [vmem:[%s415 + $0x2d0] sm:$0xff]
        %v583 = vld [vmem:[%s415 + $0x2d8] sm:$0xff]
        %v584 = vld [vmem:[%s415 + $0x2e0] sm:$0xff]
        %v585 = vld [vmem:[%s415 + $0x2e8] sm:$0xff]
        %v586 = vld [vmem:[%s415 + $0x2f0] sm:$0xff]
        %v587 = vld [vmem:[%s415 + $0x2f8] sm:$0xff]
        %v588 = vld [vmem:[%s415 + $0x300] sm:$0xff]
        %v589 = vld [vmem:[%s415 + $0x308] sm:$0xff]
        %v590 = vld [vmem:[%s415 + $0x310] sm:$0xff]
        %v591 = vld [vmem:[%s415 + $0x318] sm:$0xff]
        %v592 = vld [vmem:[%s415 + $0x320] sm:$0xff]
        %v593 = vld [vmem:[%s415 + $0x328] sm:$0xff]
        %v594 = vld [vmem:[%s415 + $0x330] sm:$0xff]
        %v595 = vld [vmem:[%s415 + $0x338] sm:$0xff]
        %v596 = vld [vmem:[%s415 + $0x340] sm:$0xff]
        %v597 = vld [vmem:[%s415 + $0x348] sm:$0xff]
        %v598 = vld [vmem:[%s415 + $0x350] sm:$0xff]
        %v599 = vld [vmem:[%s415 + $0x358] sm:$0xff]
        %v600 = vld [vmem:[%s415 + $0x360] sm:$0xff]
        %v601 = vld [vmem:[%s415 + $0x368] sm:$0xff]
        %v602 = vld [vmem:[%s415 + $0x370] sm:$0xff]
        %v603 = vld [vmem:[%s415 + $0x378] sm:$0xff]
        %v604 = vld [vmem:[%s447] sm:$0xf]
        %v605 = vld [vmem:[%s447 + $0x4] sm:$0xf]
        %v606 = vld [vmem:[%s447 + $0x8] sm:$0xf]
        %v607 = vld [vmem:[%s447 + $0xc] sm:$0xf]
        %v608 = vld [vmem:[%s447 + $0x10] sm:$0xf]
        %v609 = vld [vmem:[%s447 + $0x14] sm:$0xf]
        %v610 = vld [vmem:[%s447 + $0x18] sm:$0xf]
        %v611 = vld [vmem:[%s447 + $0x1c] sm:$0xf]
        %v612 = vld [vmem:[%s447 + $0x20] sm:$0xf]
        %v613 = vld [vmem:[%s447 + $0x24] sm:$0xf]
        %v614 = vld [vmem:[%s447 + $0x28] sm:$0xf]
        %v615 = vld [vmem:[%s447 + $0x2c] sm:$0xf]
        %v616 = vld [vmem:[%s447 + $0x30] sm:$0xf]
        %v617 = vld [vmem:[%s447 + $0x34] sm:$0xf]
        %v618 = vld [vmem:[%s447 + $0x38] sm:$0xf]
        %v619 = vld [vmem:[%s447 + $0x3c] sm:$0xf]
        %v620 = vld [vmem:[%s447 + $0x40] sm:$0xf]
        %v621 = vld [vmem:[%s447 + $0x44] sm:$0xf]
        %v622 = vld [vmem:[%s447 + $0x48] sm:$0xf]
        %v623 = vld [vmem:[%s447 + $0x4c] sm:$0xf]
        %v624 = vld [vmem:[%s447 + $0x50] sm:$0xf]
        %v625 = vld [vmem:[%s447 + $0x54] sm:$0xf]
        %v626 = vld [vmem:[%s447 + $0x58] sm:$0xf]
        %v627 = vld [vmem:[%s447 + $0x5c] sm:$0xf]
        %v628 = vld [vmem:[%s447 + $0x60] sm:$0xf]
        %v629 = vld [vmem:[%s447 + $0x64] sm:$0xf]
        %v630 = vld [vmem:[%s447 + $0x68] sm:$0xf]
        %v631 = vld [vmem:[%s447 + $0x6c] sm:$0xf]
        %v632 = vld [vmem:[%s447 + $0x70] sm:$0xf]
        %v633 = vld [vmem:[%s447 + $0x74] sm:$0xf]
        %v634 = vld [vmem:[%s447 + $0x78] sm:$0xf]
        %v635 = vld [vmem:[%s447 + $0x7c] sm:$0xf]
        %v636 = vld [vmem:[%s447 + $0x80] sm:$0xf]
        %v637 = vld [vmem:[%s447 + $0x84] sm:$0xf]
        %v638 = vld [vmem:[%s447 + $0x88] sm:$0xf]
        %v639 = vld [vmem:[%s447 + $0x8c] sm:$0xf]
        %v640 = vld [vmem:[%s447 + $0x90] sm:$0xf]
        %v641 = vld [vmem:[%s447 + $0x94] sm:$0xf]
        %v642 = vld [vmem:[%s447 + $0x98] sm:$0xf]
        %v643 = vld [vmem:[%s447 + $0x9c] sm:$0xf]
        %v644 = vld [vmem:[%s447 + $0xa0] sm:$0xf]
        %v645 = vld [vmem:[%s447 + $0xa4] sm:$0xf]
        %v646 = vld [vmem:[%s447 + $0xa8] sm:$0xf]
        %v647 = vld [vmem:[%s447 + $0xac] sm:$0xf]
        %v648 = vld [vmem:[%s447 + $0xb0] sm:$0xf]
        %v649 = vld [vmem:[%s447 + $0xb4] sm:$0xf]
        %v650 = vld [vmem:[%s447 + $0xb8] sm:$0xf]
        %v651 = vld [vmem:[%s447 + $0xbc] sm:$0xf]
        %v652 = vld [vmem:[%s447 + $0xc0] sm:$0xf]
        %v653 = vld [vmem:[%s447 + $0xc4] sm:$0xf]
        %v654 = vld [vmem:[%s447 + $0xc8] sm:$0xf]
        %v655 = vld [vmem:[%s447 + $0xcc] sm:$0xf]
        %v656 = vld [vmem:[%s447 + $0xd0] sm:$0xf]
        %v657 = vld [vmem:[%s447 + $0xd4] sm:$0xf]
        %v658 = vld [vmem:[%s447 + $0xd8] sm:$0xf]
        %v659 = vld [vmem:[%s447 + $0xdc] sm:$0xf]
        %v660 = vld [vmem:[%s447 + $0xe0] sm:$0xf]
        %v661 = vld [vmem:[%s447 + $0xe4] sm:$0xf]
        %v662 = vld [vmem:[%s447 + $0xe8] sm:$0xf]
        %v663 = vld [vmem:[%s447 + $0xec] sm:$0xf]
        %v664 = vld [vmem:[%s447 + $0xf0] sm:$0xf]
        %v665 = vld [vmem:[%s447 + $0xf4] sm:$0xf]
        %v666 = vld [vmem:[%s447 + $0xf8] sm:$0xf]
        %v667 = vld [vmem:[%s447 + $0xfc] sm:$0xf]
        %v668 = vld [vmem:[%s447 + $0x100] sm:$0xf]
        %v669 = vld [vmem:[%s447 + $0x104] sm:$0xf]
        %v670 = vld [vmem:[%s447 + $0x108] sm:$0xf]
        %v671 = vld [vmem:[%s447 + $0x10c] sm:$0xf]
        %v672 = vld [vmem:[%s447 + $0x110] sm:$0xf]
        %v673 = vld [vmem:[%s447 + $0x114] sm:$0xf]
        %v674 = vld [vmem:[%s447 + $0x118] sm:$0xf]
        %v675 = vld [vmem:[%s447 + $0x11c] sm:$0xf]
        %v676 = vld [vmem:[%s447 + $0x120] sm:$0xf]
        %v677 = vld [vmem:[%s447 + $0x124] sm:$0xf]
        %v678 = vld [vmem:[%s447 + $0x128] sm:$0xf]
        %v679 = vld [vmem:[%s447 + $0x12c] sm:$0xf]
        %v680 = vld [vmem:[%s447 + $0x130] sm:$0xf]
        %v681 = vld [vmem:[%s447 + $0x134] sm:$0xf]
        %v682 = vld [vmem:[%s447 + $0x138] sm:$0xf]
        %v683 = vld [vmem:[%s447 + $0x13c] sm:$0xf]
        %v684 = vld [vmem:[%s447 + $0x140] sm:$0xf]
        %v685 = vld [vmem:[%s447 + $0x144] sm:$0xf]
        %v686 = vld [vmem:[%s447 + $0x148] sm:$0xf]
        %v687 = vld [vmem:[%s447 + $0x14c] sm:$0xf]
        %v688 = vld [vmem:[%s447 + $0x150] sm:$0xf]
        %v689 = vld [vmem:[%s447 + $0x154] sm:$0xf]
        %v690 = vld [vmem:[%s447 + $0x158] sm:$0xf]
        %v691 = vld [vmem:[%s447 + $0x15c] sm:$0xf]
        %v692 = vld [vmem:[%s447 + $0x160] sm:$0xf]
        %v693 = vld [vmem:[%s447 + $0x164] sm:$0xf]
        %v694 = vld [vmem:[%s447 + $0x168] sm:$0xf]
        %v695 = vld [vmem:[%s447 + $0x16c] sm:$0xf]
        %v696 = vld [vmem:[%s447 + $0x170] sm:$0xf]
        %v697 = vld [vmem:[%s447 + $0x174] sm:$0xf]
        %v698 = vld [vmem:[%s447 + $0x178] sm:$0xf]
        %v699 = vld [vmem:[%s447 + $0x17c] sm:$0xf]
        %v700 = vld [vmem:[%s447 + $0x180] sm:$0xf]
        %v701 = vld [vmem:[%s447 + $0x184] sm:$0xf]
        %v702 = vld [vmem:[%s447 + $0x188] sm:$0xf]
        %v703 = vld [vmem:[%s447 + $0x18c] sm:$0xf]
        %v704 = vld [vmem:[%s447 + $0x190] sm:$0xf]
        %v705 = vld [vmem:[%s447 + $0x194] sm:$0xf]
        %v706 = vld [vmem:[%s447 + $0x198] sm:$0xf]
        %v707 = vld [vmem:[%s447 + $0x19c] sm:$0xf]
        %v708 = vld [vmem:[%s447 + $0x1a0] sm:$0xf]
        %v709 = vld [vmem:[%s447 + $0x1a4] sm:$0xf]
        %v710 = vld [vmem:[%s447 + $0x1a8] sm:$0xf]
        %v711 = vld [vmem:[%s447 + $0x1ac] sm:$0xf]
        %v712 = vld [vmem:[%s447 + $0x1b0] sm:$0xf]
        %v713 = vld [vmem:[%s447 + $0x1b4] sm:$0xf]
        %v714 = vld [vmem:[%s447 + $0x1b8] sm:$0xf]
        %v715 = vld [vmem:[%s447 + $0x1bc] sm:$0xf]
        %v716 = vld [vmem:[%s447 + $0x1c0] sm:$0xf]
        %v717 = vld [vmem:[%s447 + $0x1c4] sm:$0xf]
        %v718 = vld [vmem:[%s447 + $0x1c8] sm:$0xf]
        %v719 = vld [vmem:[%s447 + $0x1cc] sm:$0xf]
        %v720 = vld [vmem:[%s447 + $0x1d0] sm:$0xf]
        %v721 = vld [vmem:[%s447 + $0x1d4] sm:$0xf]
        %v722 = vld [vmem:[%s447 + $0x1d8] sm:$0xf]
        %v723 = vld [vmem:[%s447 + $0x1dc] sm:$0xf]
        %v724 = vld [vmem:[%s447 + $0x1e0] sm:$0xf]
        %v725 = vld [vmem:[%s447 + $0x1e4] sm:$0xf]
        %v726 = vld [vmem:[%s447 + $0x1e8] sm:$0xf]
        %v727 = vld [vmem:[%s447 + $0x1ec] sm:$0xf]
        %v728 = vld [vmem:[%s447 + $0x1f0] sm:$0xf]
        %v729 = vld [vmem:[%s447 + $0x1f4] sm:$0xf]
        %v730 = vld [vmem:[%s447 + $0x1f8] sm:$0xf]
        %v731 = vld [vmem:[%s447 + $0x1fc] sm:$0xf]
        %v732 = vld [vmem:[%s447 + $0x200] sm:$0xf]
        %v733 = vld [vmem:[%s447 + $0x204] sm:$0xf]
        %v734 = vld [vmem:[%s447 + $0x208] sm:$0xf]
        %v735 = vld [vmem:[%s447 + $0x20c] sm:$0xf]
        %v736 = vld [vmem:[%s447 + $0x210] sm:$0xf]
        %v737 = vld [vmem:[%s447 + $0x214] sm:$0xf]
        %v738 = vld [vmem:[%s447 + $0x218] sm:$0xf]
        %v739 = vld [vmem:[%s447 + $0x21c] sm:$0xf]
        %v740 = vld [vmem:[%s447 + $0x220] sm:$0xf]
        %v741 = vld [vmem:[%s447 + $0x224] sm:$0xf]
        %v742 = vld [vmem:[%s447 + $0x228] sm:$0xf]
        %v743 = vld [vmem:[%s447 + $0x22c] sm:$0xf]
        %v744 = vld [vmem:[%s447 + $0x230] sm:$0xf]
        %v745 = vld [vmem:[%s447 + $0x234] sm:$0xf]
        %v746 = vld [vmem:[%s447 + $0x238] sm:$0xf]
        %v747 = vld [vmem:[%s447 + $0x23c] sm:$0xf]
        %v748 = vld [vmem:[%s447 + $0x240] sm:$0xf]
        %v749 = vld [vmem:[%s447 + $0x244] sm:$0xf]
        %v750 = vld [vmem:[%s447 + $0x248] sm:$0xf]
        %v751 = vld [vmem:[%s447 + $0x24c] sm:$0xf]
        %v752 = vld [vmem:[%s447 + $0x250] sm:$0xf]
        %v753 = vld [vmem:[%s447 + $0x254] sm:$0xf]
        %v754 = vld [vmem:[%s447 + $0x258] sm:$0xf]
        %v755 = vld [vmem:[%s447 + $0x25c] sm:$0xf]
        %v756 = vld [vmem:[%s447 + $0x260] sm:$0xf]
        %v757 = vld [vmem:[%s447 + $0x264] sm:$0xf]
        %v758 = vld [vmem:[%s447 + $0x268] sm:$0xf]
        %v759 = vld [vmem:[%s447 + $0x26c] sm:$0xf]
        %v760 = vld [vmem:[%s447 + $0x270] sm:$0xf]
        %v761 = vld [vmem:[%s447 + $0x274] sm:$0xf]
        %v762 = vld [vmem:[%s447 + $0x278] sm:$0xf]
        %v763 = vld [vmem:[%s447 + $0x27c] sm:$0xf]
        %v764 = vld [vmem:[%s447 + $0x280] sm:$0xf]
        %v765 = vld [vmem:[%s447 + $0x284] sm:$0xf]
        %v766 = vld [vmem:[%s447 + $0x288] sm:$0xf]
        %v767 = vld [vmem:[%s447 + $0x28c] sm:$0xf]
        %v768 = vld [vmem:[%s447 + $0x290] sm:$0xf]
        %v769 = vld [vmem:[%s447 + $0x294] sm:$0xf]
        %v770 = vld [vmem:[%s447 + $0x298] sm:$0xf]
        %v771 = vld [vmem:[%s447 + $0x29c] sm:$0xf]
        %v772 = vld [vmem:[%s447 + $0x2a0] sm:$0xf]
        %v773 = vld [vmem:[%s447 + $0x2a4] sm:$0xf]
        %v774 = vld [vmem:[%s447 + $0x2a8] sm:$0xf]
        %v775 = vld [vmem:[%s447 + $0x2ac] sm:$0xf]
        %v776 = vld [vmem:[%s447 + $0x2b0] sm:$0xf]
        %v777 = vld [vmem:[%s447 + $0x2b4] sm:$0xf]
        %v778 = vld [vmem:[%s447 + $0x2b8] sm:$0xf]
        %v779 = vld [vmem:[%s447 + $0x2bc] sm:$0xf]
        %v780 = vld [vmem:[%s447 + $0x2c0] sm:$0xf]
        %v781 = vld [vmem:[%s447 + $0x2c4] sm:$0xf]
        %v782 = vld [vmem:[%s447 + $0x2c8] sm:$0xf]
        %v783 = vld [vmem:[%s447 + $0x2cc] sm:$0xf]
        %v784 = vld [vmem:[%s447 + $0x2d0] sm:$0xf]
        %v785 = vld [vmem:[%s447 + $0x2d4] sm:$0xf]
        %v786 = vld [vmem:[%s447 + $0x2d8] sm:$0xf]
        %v787 = vld [vmem:[%s447 + $0x2dc] sm:$0xf]
        %v788 = vld [vmem:[%s447 + $0x2e0] sm:$0xf]
        %v789 = vld [vmem:[%s447 + $0x2e4] sm:$0xf]
        %v790 = vld [vmem:[%s447 + $0x2e8] sm:$0xf]
        %v791 = vld [vmem:[%s447 + $0x2ec] sm:$0xf]
        %v792 = vld [vmem:[%s447 + $0x2f0] sm:$0xf]
        %v793 = vld [vmem:[%s447 + $0x2f4] sm:$0xf]
        %v794 = vld [vmem:[%s447 + $0x2f8] sm:$0xf]
        %v795 = vld [vmem:[%s447 + $0x2fc] sm:$0xf]
        %v796 = vld [vmem:[%s447 + $0x300] sm:$0xf]
        %v797 = vld [vmem:[%s447 + $0x304] sm:$0xf]
        %v798 = vld [vmem:[%s447 + $0x308] sm:$0xf]
        %v799 = vld [vmem:[%s447 + $0x30c] sm:$0xf]
        %v800 = vld [vmem:[%s447 + $0x310] sm:$0xf]
        %v801 = vld [vmem:[%s447 + $0x314] sm:$0xf]
        %v802 = vld [vmem:[%s447 + $0x318] sm:$0xf]
        %v803 = vld [vmem:[%s447 + $0x31c] sm:$0xf]
        %v804 = vld [vmem:[%s447 + $0x320] sm:$0xf]
        %v805 = vld [vmem:[%s447 + $0x324] sm:$0xf]
        %v806 = vld [vmem:[%s447 + $0x328] sm:$0xf]
        %v807 = vld [vmem:[%s447 + $0x32c] sm:$0xf]
        %v808 = vld [vmem:[%s447 + $0x330] sm:$0xf]
        %v809 = vld [vmem:[%s447 + $0x334] sm:$0xf]
        %v810 = vld [vmem:[%s447 + $0x338] sm:$0xf]
        %v811 = vld [vmem:[%s447 + $0x33c] sm:$0xf]
        %v812 = vld [vmem:[%s447 + $0x340] sm:$0xf]
        %v813 = vld [vmem:[%s447 + $0x344] sm:$0xf]
        %v814 = vld [vmem:[%s447 + $0x348] sm:$0xf]
        %v815 = vld [vmem:[%s447 + $0x34c] sm:$0xf]
        %v816 = vld [vmem:[%s447 + $0x350] sm:$0xf]
        %v817 = vld [vmem:[%s447 + $0x354] sm:$0xf]
        %v818 = vld [vmem:[%s447 + $0x358] sm:$0xf]
        %v819 = vld [vmem:[%s447 + $0x35c] sm:$0xf]
        %v820 = vld [vmem:[%s447 + $0x360] sm:$0xf]
        %v821 = vld [vmem:[%s447 + $0x364] sm:$0xf]
        %v822 = vld [vmem:[%s447 + $0x368] sm:$0xf]
        %v823 = vld [vmem:[%s447 + $0x36c] sm:$0xf]
        %v824 = vld [vmem:[%s447 + $0x370] sm:$0xf]
        %v825 = vld [vmem:[%s447 + $0x374] sm:$0xf]
        %v826 = vld [vmem:[%s447 + $0x378] sm:$0xf]
        %v827 = vld [vmem:[%s447 + $0x37c] sm:$0xf]
        %v940 = vunpack.c.l.b16 %v492
        %v941 = vunpack.c.h.b16 %v492
        %v942 = vunpack.c.l.b16 %v493
        %v943 = vunpack.c.h.b16 %v493
        %v944 = vunpack.c.l.b16 %v494
        %v945 = vunpack.c.h.b16 %v494
        %v946 = vunpack.c.l.b16 %v495
        %v947 = vunpack.c.h.b16 %v495
        %v948 = vunpack.c.l.b16 %v496
        %v949 = vunpack.c.h.b16 %v496
        %v950 = vunpack.c.l.b16 %v497
        %v951 = vunpack.c.h.b16 %v497
        %v952 = vunpack.c.l.b16 %v498
        %v953 = vunpack.c.h.b16 %v498
        %v954 = vunpack.c.l.b16 %v499
        %v955 = vunpack.c.h.b16 %v499
        %v956 = vunpack.c.l.b16 %v500
        %v957 = vunpack.c.h.b16 %v500
        %v958 = vunpack.c.l.b16 %v501
        %v959 = vunpack.c.h.b16 %v501
        %v960 = vunpack.c.l.b16 %v502
        %v961 = vunpack.c.h.b16 %v502
        %v962 = vunpack.c.l.b16 %v503
        %v963 = vunpack.c.h.b16 %v503
        %v964 = vunpack.c.l.b16 %v504
        %v965 = vunpack.c.h.b16 %v504
        %v966 = vunpack.c.l.b16 %v505
        %v967 = vunpack.c.h.b16 %v505
        %v968 = vunpack.c.l.b16 %v506
        %v969 = vunpack.c.h.b16 %v506
        %v970 = vunpack.c.l.b16 %v507
        %v971 = vunpack.c.h.b16 %v507
        %v972 = vunpack.c.l.b16 %v508
        %v973 = vunpack.c.h.b16 %v508
        %v974 = vunpack.c.l.b16 %v509
        %v975 = vunpack.c.h.b16 %v509
        %v976 = vunpack.c.l.b16 %v510
        %v977 = vunpack.c.h.b16 %v510
        %v978 = vunpack.c.l.b16 %v511
        %v979 = vunpack.c.h.b16 %v511
        %v980 = vunpack.c.l.b16 %v512
        %v981 = vunpack.c.h.b16 %v512
        %v982 = vunpack.c.l.b16 %v513
        %v983 = vunpack.c.h.b16 %v513
        %v984 = vunpack.c.l.b16 %v514
        %v985 = vunpack.c.h.b16 %v514
        %v986 = vunpack.c.l.b16 %v515
        %v987 = vunpack.c.h.b16 %v515
        %v988 = vunpack.c.l.b16 %v516
        %v989 = vunpack.c.h.b16 %v516
        %v990 = vunpack.c.l.b16 %v517
        %v991 = vunpack.c.h.b16 %v517
        %v992 = vunpack.c.l.b16 %v518
        %v993 = vunpack.c.h.b16 %v518
        %v994 = vunpack.c.l.b16 %v519
        %v995 = vunpack.c.h.b16 %v519
        %v996 = vunpack.c.l.b16 %v520
        %v997 = vunpack.c.h.b16 %v520
        %v998 = vunpack.c.l.b16 %v521
        %v999 = vunpack.c.h.b16 %v521
        %v1000 = vunpack.c.l.b16 %v522
        %v1001 = vunpack.c.h.b16 %v522
        %v1002 = vunpack.c.l.b16 %v523
        %v1003 = vunpack.c.h.b16 %v523
        %v1004 = vunpack.c.l.b16 %v524
        %v1005 = vunpack.c.h.b16 %v524
        %v1006 = vunpack.c.l.b16 %v525
        %v1007 = vunpack.c.h.b16 %v525
        %v1008 = vunpack.c.l.b16 %v526
        %v1009 = vunpack.c.h.b16 %v526
        %v1010 = vunpack.c.l.b16 %v527
        %v1011 = vunpack.c.h.b16 %v527
        %v1012 = vunpack.c.l.b16 %v528
        %v1013 = vunpack.c.h.b16 %v528
        %v1014 = vunpack.c.l.b16 %v529
        %v1015 = vunpack.c.h.b16 %v529
        %v1016 = vunpack.c.l.b16 %v530
        %v1017 = vunpack.c.h.b16 %v530
        %v1018 = vunpack.c.l.b16 %v531
        %v1019 = vunpack.c.h.b16 %v531
        %v1020 = vunpack.c.l.b16 %v532
        %v1021 = vunpack.c.h.b16 %v532
        %v1022 = vunpack.c.l.b16 %v533
        %v1023 = vunpack.c.h.b16 %v533
        %v1024 = vunpack.c.l.b16 %v534
        %v1025 = vunpack.c.h.b16 %v534
        %v1026 = vunpack.c.l.b16 %v535
        %v1027 = vunpack.c.h.b16 %v535
        %v1028 = vunpack.c.l.b16 %v536
        %v1029 = vunpack.c.h.b16 %v536
        %v1030 = vunpack.c.l.b16 %v537
        %v1031 = vunpack.c.h.b16 %v537
        %v1032 = vunpack.c.l.b16 %v538
        %v1033 = vunpack.c.h.b16 %v538
        %v1034 = vunpack.c.l.b16 %v539
        %v1035 = vunpack.c.h.b16 %v539
        %v1036 = vunpack.c.l.b16 %v540
        %v1037 = vunpack.c.h.b16 %v540
        %v1038 = vunpack.c.l.b16 %v541
        %v1039 = vunpack.c.h.b16 %v541
        %v1040 = vunpack.c.l.b16 %v542
        %v1041 = vunpack.c.h.b16 %v542
        %v1042 = vunpack.c.l.b16 %v543
        %v1043 = vunpack.c.h.b16 %v543
        %v1044 = vunpack.c.l.b16 %v544
        %v1045 = vunpack.c.h.b16 %v544
        %v1046 = vunpack.c.l.b16 %v545
        %v1047 = vunpack.c.h.b16 %v545
        %v1048 = vunpack.c.l.b16 %v546
        %v1049 = vunpack.c.h.b16 %v546
        %v1050 = vunpack.c.l.b16 %v547
        %v1051 = vunpack.c.h.b16 %v547
        %v1052 = vunpack.c.l.b16 %v548
        %v1053 = vunpack.c.h.b16 %v548
        %v1054 = vunpack.c.l.b16 %v549
        %v1055 = vunpack.c.h.b16 %v549
        %v1056 = vunpack.c.l.b16 %v550
        %v1057 = vunpack.c.h.b16 %v550
        %v1058 = vunpack.c.l.b16 %v551
        %v1059 = vunpack.c.h.b16 %v551
        %v1060 = vunpack.c.l.b16 %v552
        %v1061 = vunpack.c.h.b16 %v552
        %v1062 = vunpack.c.l.b16 %v553
        %v1063 = vunpack.c.h.b16 %v553
        %v1064 = vunpack.c.l.b16 %v554
        %v1065 = vunpack.c.h.b16 %v554
        %v1066 = vunpack.c.l.b16 %v555
        %v1067 = vunpack.c.h.b16 %v555
        %v1068 = vunpack.c.l.b16 %v556
        %v1069 = vunpack.c.h.b16 %v556
        %v1070 = vunpack.c.l.b16 %v557
        %v1071 = vunpack.c.h.b16 %v557
        %v1072 = vunpack.c.l.b16 %v558
        %v1073 = vunpack.c.h.b16 %v558
        %v1074 = vunpack.c.l.b16 %v559
        %v1075 = vunpack.c.h.b16 %v559
        %v1076 = vunpack.c.l.b16 %v560
        %v1077 = vunpack.c.h.b16 %v560
        %v1078 = vunpack.c.l.b16 %v561
        %v1079 = vunpack.c.h.b16 %v561
        %v1080 = vunpack.c.l.b16 %v562
        %v1081 = vunpack.c.h.b16 %v562
        %v1082 = vunpack.c.l.b16 %v563
        %v1083 = vunpack.c.h.b16 %v563
        %v1084 = vunpack.c.l.b16 %v564
        %v1085 = vunpack.c.h.b16 %v564
        %v1086 = vunpack.c.l.b16 %v565
        %v1087 = vunpack.c.h.b16 %v565
        %v1088 = vunpack.c.l.b16 %v566
        %v1089 = vunpack.c.h.b16 %v566
        %v1090 = vunpack.c.l.b16 %v567
        %v1091 = vunpack.c.h.b16 %v567
        %v1092 = vunpack.c.l.b16 %v568
        %v1093 = vunpack.c.h.b16 %v568
        %v1094 = vunpack.c.l.b16 %v569
        %v1095 = vunpack.c.h.b16 %v569
        %v1096 = vunpack.c.l.b16 %v570
        %v1097 = vunpack.c.h.b16 %v570
        %v1098 = vunpack.c.l.b16 %v571
        %v1099 = vunpack.c.h.b16 %v571
        %v1100 = vunpack.c.l.b16 %v572
        %v1101 = vunpack.c.h.b16 %v572
        %v1102 = vunpack.c.l.b16 %v573
        %v1103 = vunpack.c.h.b16 %v573
        %v1104 = vunpack.c.l.b16 %v574
        %v1105 = vunpack.c.h.b16 %v574
        %v1106 = vunpack.c.l.b16 %v575
        %v1107 = vunpack.c.h.b16 %v575
        %v1108 = vunpack.c.l.b16 %v576
        %v1109 = vunpack.c.h.b16 %v576
        %v1110 = vunpack.c.l.b16 %v577
        %v1111 = vunpack.c.h.b16 %v577
        %v1112 = vunpack.c.l.b16 %v578
        %v1113 = vunpack.c.h.b16 %v578
        %v1114 = vunpack.c.l.b16 %v579
        %v1115 = vunpack.c.h.b16 %v579
        %v1116 = vunpack.c.l.b16 %v580
        %v1117 = vunpack.c.h.b16 %v580
        %v1118 = vunpack.c.l.b16 %v581
        %v1119 = vunpack.c.h.b16 %v581
        %v1120 = vunpack.c.l.b16 %v582
        %v1121 = vunpack.c.h.b16 %v582
        %v1122 = vunpack.c.l.b16 %v583
        %v1123 = vunpack.c.h.b16 %v583
        %v1124 = vunpack.c.l.b16 %v584
        %v1125 = vunpack.c.h.b16 %v584
        %v1126 = vunpack.c.l.b16 %v585
        %v1127 = vunpack.c.h.b16 %v585
        %v1128 = vunpack.c.l.b16 %v586
        %v1129 = vunpack.c.h.b16 %v586
        %v1130 = vunpack.c.l.b16 %v587
        %v1131 = vunpack.c.h.b16 %v587
        %v1132 = vunpack.c.l.b16 %v588
        %v1133 = vunpack.c.h.b16 %v588
        %v1134 = vunpack.c.l.b16 %v589
        %v1135 = vunpack.c.h.b16 %v589
        %v1136 = vunpack.c.l.b16 %v590
        %v1137 = vunpack.c.h.b16 %v590
        %v1138 = vunpack.c.l.b16 %v591
        %v1139 = vunpack.c.h.b16 %v591
        %v1140 = vunpack.c.l.b16 %v592
        %v1141 = vunpack.c.h.b16 %v592
        %v1142 = vunpack.c.l.b16 %v593
        %v1143 = vunpack.c.h.b16 %v593
        %v1144 = vunpack.c.l.b16 %v594
        %v1145 = vunpack.c.h.b16 %v594
        %v1146 = vunpack.c.l.b16 %v595
        %v1147 = vunpack.c.h.b16 %v595
        %v1148 = vunpack.c.l.b16 %v596
        %v1149 = vunpack.c.h.b16 %v596
        %v1150 = vunpack.c.l.b16 %v597
        %v1151 = vunpack.c.h.b16 %v597
        %v1152 = vunpack.c.l.b16 %v598
        %v1153 = vunpack.c.h.b16 %v598
        %v1154 = vunpack.c.l.b16 %v599
        %v1155 = vunpack.c.h.b16 %v599
        %v1156 = vunpack.c.l.b16 %v600
        %v1157 = vunpack.c.h.b16 %v600
        %v1158 = vunpack.c.l.b16 %v601
        %v1159 = vunpack.c.h.b16 %v601
        %v1160 = vunpack.c.l.b16 %v602
        %v1161 = vunpack.c.h.b16 %v602
        %v1162 = vunpack.c.l.b16 %v603
        %v1163 = vunpack.c.h.b16 %v603
        %v1164 = vpack.c.b16 %v954, %v940
        %v1165 = vpack.c.b16 %v955, %v941
        %v1166 = vpack.c.b16 %v956, %v942
        %v1167 = vpack.c.b16 %v957, %v943
        %v1168 = vpack.c.b16 %v958, %v944
        %v1169 = vpack.c.b16 %v959, %v945
        %v1170 = vpack.c.b16 %v960, %v946
        %v1171 = vpack.c.b16 %v961, %v947
        %v1172 = vpack.c.b16 %v962, %v948
        %v1173 = vpack.c.b16 %v963, %v949
        %v1174 = vpack.c.b16 %v964, %v950
        %v1175 = vpack.c.b16 %v965, %v951
        %v1176 = vpack.c.b16 %v966, %v952
        %v1177 = vpack.c.b16 %v967, %v953
        %v1178 = vpack.c.b16 %v982, %v968
        %v1179 = vpack.c.b16 %v983, %v969
        %v1180 = vpack.c.b16 %v984, %v970
        %v1181 = vpack.c.b16 %v985, %v971
        %v1182 = vpack.c.b16 %v986, %v972
        %v1183 = vpack.c.b16 %v987, %v973
        %v1184 = vpack.c.b16 %v988, %v974
        %v1185 = vpack.c.b16 %v989, %v975
        %v1186 = vpack.c.b16 %v990, %v976
        %v1187 = vpack.c.b16 %v991, %v977
        %v1188 = vpack.c.b16 %v992, %v978
        %v1189 = vpack.c.b16 %v993, %v979
        %v1190 = vpack.c.b16 %v994, %v980
        %v1191 = vpack.c.b16 %v995, %v981
        %v1192 = vpack.c.b16 %v1010, %v996
        %v1193 = vpack.c.b16 %v1011, %v997
        %v1194 = vpack.c.b16 %v1012, %v998
        %v1195 = vpack.c.b16 %v1013, %v999
        %v1196 = vpack.c.b16 %v1014, %v1000
        %v1197 = vpack.c.b16 %v1015, %v1001
        %v1198 = vpack.c.b16 %v1016, %v1002
        %v1199 = vpack.c.b16 %v1017, %v1003
        %v1200 = vpack.c.b16 %v1018, %v1004
        %v1201 = vpack.c.b16 %v1019, %v1005
        %v1202 = vpack.c.b16 %v1020, %v1006
        %v1203 = vpack.c.b16 %v1021, %v1007
        %v1204 = vpack.c.b16 %v1022, %v1008
        %v1205 = vpack.c.b16 %v1023, %v1009
        %v1206 = vpack.c.b16 %v1038, %v1024
        %v1207 = vpack.c.b16 %v1039, %v1025
        %v1208 = vpack.c.b16 %v1040, %v1026
        %v1209 = vpack.c.b16 %v1041, %v1027
        %v1210 = vpack.c.b16 %v1042, %v1028
        %v1211 = vpack.c.b16 %v1043, %v1029
        %v1212 = vpack.c.b16 %v1044, %v1030
        %v1213 = vpack.c.b16 %v1045, %v1031
        %v1214 = vpack.c.b16 %v1046, %v1032
        %v1215 = vpack.c.b16 %v1047, %v1033
        %v1216 = vpack.c.b16 %v1048, %v1034
        %v1217 = vpack.c.b16 %v1049, %v1035
        %v1218 = vpack.c.b16 %v1050, %v1036
        %v1219 = vpack.c.b16 %v1051, %v1037
        %v1220 = vpack.c.b16 %v1066, %v1052
        %v1221 = vpack.c.b16 %v1067, %v1053
        %v1222 = vpack.c.b16 %v1068, %v1054
        %v1223 = vpack.c.b16 %v1069, %v1055
        %v1224 = vpack.c.b16 %v1070, %v1056
        %v1225 = vpack.c.b16 %v1071, %v1057
        %v1226 = vpack.c.b16 %v1072, %v1058
        %v1227 = vpack.c.b16 %v1073, %v1059
        %v1228 = vpack.c.b16 %v1074, %v1060
        %v1229 = vpack.c.b16 %v1075, %v1061
        %v1230 = vpack.c.b16 %v1076, %v1062
        %v1231 = vpack.c.b16 %v1077, %v1063
        %v1232 = vpack.c.b16 %v1078, %v1064
        %v1233 = vpack.c.b16 %v1079, %v1065
        %v1234 = vpack.c.b16 %v1094, %v1080
        %v1235 = vpack.c.b16 %v1095, %v1081
        %v1236 = vpack.c.b16 %v1096, %v1082
        %v1237 = vpack.c.b16 %v1097, %v1083
        %v1238 = vpack.c.b16 %v1098, %v1084
        %v1239 = vpack.c.b16 %v1099, %v1085
        %v1240 = vpack.c.b16 %v1100, %v1086
        %v1241 = vpack.c.b16 %v1101, %v1087
        %v1242 = vpack.c.b16 %v1102, %v1088
        %v1243 = vpack.c.b16 %v1103, %v1089
        %v1244 = vpack.c.b16 %v1104, %v1090
        %v1245 = vpack.c.b16 %v1105, %v1091
        %v1246 = vpack.c.b16 %v1106, %v1092
        %v1247 = vpack.c.b16 %v1107, %v1093
        %v1248 = vpack.c.b16 %v1122, %v1108
        %v1249 = vpack.c.b16 %v1123, %v1109
        %v1250 = vpack.c.b16 %v1124, %v1110
        %v1251 = vpack.c.b16 %v1125, %v1111
        %v1252 = vpack.c.b16 %v1126, %v1112
        %v1253 = vpack.c.b16 %v1127, %v1113
        %v1254 = vpack.c.b16 %v1128, %v1114
        %v1255 = vpack.c.b16 %v1129, %v1115
        %v1256 = vpack.c.b16 %v1130, %v1116
        %v1257 = vpack.c.b16 %v1131, %v1117
        %v1258 = vpack.c.b16 %v1132, %v1118
        %v1259 = vpack.c.b16 %v1133, %v1119
        %v1260 = vpack.c.b16 %v1134, %v1120
        %v1261 = vpack.c.b16 %v1135, %v1121
        %v1262 = vpack.c.b16 %v1150, %v1136
        %v1263 = vpack.c.b16 %v1151, %v1137
        %v1264 = vpack.c.b16 %v1152, %v1138
        %v1265 = vpack.c.b16 %v1153, %v1139
        %v1266 = vpack.c.b16 %v1154, %v1140
        %v1267 = vpack.c.b16 %v1155, %v1141
        %v1268 = vpack.c.b16 %v1156, %v1142
        %v1269 = vpack.c.b16 %v1157, %v1143
        %v1270 = vpack.c.b16 %v1158, %v1144
        %v1271 = vpack.c.b16 %v1159, %v1145
        %v1272 = vpack.c.b16 %v1160, %v1146
        %v1273 = vpack.c.b16 %v1161, %v1147
        %v1274 = vpack.c.b16 %v1162, %v1148
        %v1275 = vpack.c.b16 %v1163, %v1149
        %v1612 = vunpack.c.l.b16 %v604
        %v1613 = vunpack.c.l.b16 %v605
        %v1614 = vunpack.c.l.b16 %v606
        %v1615 = vunpack.c.l.b16 %v607
        %v1616 = vunpack.c.l.b16 %v608
        %v1617 = vunpack.c.l.b16 %v609
        %v1618 = vunpack.c.l.b16 %v610
        %v1619 = vunpack.c.l.b16 %v611
        %v1620 = vunpack.c.l.b16 %v612
        %v1621 = vunpack.c.l.b16 %v613
        %v1622 = vunpack.c.l.b16 %v614
        %v1623 = vunpack.c.l.b16 %v615
        %v1624 = vunpack.c.l.b16 %v616
        %v1625 = vunpack.c.l.b16 %v617
        %v1626 = vunpack.c.l.b16 %v618
        %v1627 = vunpack.c.l.b16 %v619
        %v1628 = vunpack.c.l.b16 %v620
        %v1629 = vunpack.c.l.b16 %v621
        %v1630 = vunpack.c.l.b16 %v622
        %v1631 = vunpack.c.l.b16 %v623
        %v1632 = vunpack.c.l.b16 %v624
        %v1633 = vunpack.c.l.b16 %v625
        %v1634 = vunpack.c.l.b16 %v626
        %v1635 = vunpack.c.l.b16 %v627
        %v1636 = vunpack.c.l.b16 %v628
        %v1637 = vunpack.c.l.b16 %v629
        %v1638 = vunpack.c.l.b16 %v630
        %v1639 = vunpack.c.l.b16 %v631
        %v1640 = vunpack.c.l.b16 %v632
        %v1641 = vunpack.c.l.b16 %v633
        %v1642 = vunpack.c.l.b16 %v634
        %v1643 = vunpack.c.l.b16 %v635
        %v1644 = vunpack.c.l.b16 %v636
        %v1645 = vunpack.c.l.b16 %v637
        %v1646 = vunpack.c.l.b16 %v638
        %v1647 = vunpack.c.l.b16 %v639
        %v1648 = vunpack.c.l.b16 %v640
        %v1649 = vunpack.c.l.b16 %v641
        %v1650 = vunpack.c.l.b16 %v642
        %v1651 = vunpack.c.l.b16 %v643
        %v1652 = vunpack.c.l.b16 %v644
        %v1653 = vunpack.c.l.b16 %v645
        %v1654 = vunpack.c.l.b16 %v646
        %v1655 = vunpack.c.l.b16 %v647
        %v1656 = vunpack.c.l.b16 %v648
        %v1657 = vunpack.c.l.b16 %v649
        %v1658 = vunpack.c.l.b16 %v650
        %v1659 = vunpack.c.l.b16 %v651
        %v1660 = vunpack.c.l.b16 %v652
        %v1661 = vunpack.c.l.b16 %v653
        %v1662 = vunpack.c.l.b16 %v654
        %v1663 = vunpack.c.l.b16 %v655
        %v1664 = vunpack.c.l.b16 %v656
        %v1665 = vunpack.c.l.b16 %v657
        %v1666 = vunpack.c.l.b16 %v658
        %v1667 = vunpack.c.l.b16 %v659
        %v1668 = vunpack.c.l.b16 %v660
        %v1669 = vunpack.c.l.b16 %v661
        %v1670 = vunpack.c.l.b16 %v662
        %v1671 = vunpack.c.l.b16 %v663
        %v1672 = vunpack.c.l.b16 %v664
        %v1673 = vunpack.c.l.b16 %v665
        %v1674 = vunpack.c.l.b16 %v666
        %v1675 = vunpack.c.l.b16 %v667
        %v1676 = vunpack.c.l.b16 %v668
        %v1677 = vunpack.c.l.b16 %v669
        %v1678 = vunpack.c.l.b16 %v670
        %v1679 = vunpack.c.l.b16 %v671
        %v1680 = vunpack.c.l.b16 %v672
        %v1681 = vunpack.c.l.b16 %v673
        %v1682 = vunpack.c.l.b16 %v674
        %v1683 = vunpack.c.l.b16 %v675
        %v1684 = vunpack.c.l.b16 %v676
        %v1685 = vunpack.c.l.b16 %v677
        %v1686 = vunpack.c.l.b16 %v678
        %v1687 = vunpack.c.l.b16 %v679
        %v1688 = vunpack.c.l.b16 %v680
        %v1689 = vunpack.c.l.b16 %v681
        %v1690 = vunpack.c.l.b16 %v682
        %v1691 = vunpack.c.l.b16 %v683
        %v1692 = vunpack.c.l.b16 %v684
        %v1693 = vunpack.c.l.b16 %v685
        %v1694 = vunpack.c.l.b16 %v686
        %v1695 = vunpack.c.l.b16 %v687
        %v1696 = vunpack.c.l.b16 %v688
        %v1697 = vunpack.c.l.b16 %v689
        %v1698 = vunpack.c.l.b16 %v690
        %v1699 = vunpack.c.l.b16 %v691
        %v1700 = vunpack.c.l.b16 %v692
        %v1701 = vunpack.c.l.b16 %v693
        %v1702 = vunpack.c.l.b16 %v694
        %v1703 = vunpack.c.l.b16 %v695
        %v1704 = vunpack.c.l.b16 %v696
        %v1705 = vunpack.c.l.b16 %v697
        %v1706 = vunpack.c.l.b16 %v698
        %v1707 = vunpack.c.l.b16 %v699
        %v1708 = vunpack.c.l.b16 %v700
        %v1709 = vunpack.c.l.b16 %v701
        %v1710 = vunpack.c.l.b16 %v702
        %v1711 = vunpack.c.l.b16 %v703
        %v1712 = vunpack.c.l.b16 %v704
        %v1713 = vunpack.c.l.b16 %v705
        %v1714 = vunpack.c.l.b16 %v706
        %v1715 = vunpack.c.l.b16 %v707
        %v1716 = vunpack.c.l.b16 %v708
        %v1717 = vunpack.c.l.b16 %v709
        %v1718 = vunpack.c.l.b16 %v710
        %v1719 = vunpack.c.l.b16 %v711
        %v1720 = vunpack.c.l.b16 %v712
        %v1721 = vunpack.c.l.b16 %v713
        %v1722 = vunpack.c.l.b16 %v714
        %v1723 = vunpack.c.l.b16 %v715
        %v1724 = vunpack.c.l.b16 %v716
        %v1725 = vunpack.c.l.b16 %v717
        %v1726 = vunpack.c.l.b16 %v718
        %v1727 = vunpack.c.l.b16 %v719
        %v1728 = vunpack.c.l.b16 %v720
        %v1729 = vunpack.c.l.b16 %v721
        %v1730 = vunpack.c.l.b16 %v722
        %v1731 = vunpack.c.l.b16 %v723
        %v1732 = vunpack.c.l.b16 %v724
        %v1733 = vunpack.c.l.b16 %v725
        %v1734 = vunpack.c.l.b16 %v726
        %v1735 = vunpack.c.l.b16 %v727
        %v1736 = vunpack.c.l.b16 %v728
        %v1737 = vunpack.c.l.b16 %v729
        %v1738 = vunpack.c.l.b16 %v730
        %v1739 = vunpack.c.l.b16 %v731
        %v1740 = vunpack.c.l.b16 %v732
        %v1741 = vunpack.c.l.b16 %v733
        %v1742 = vunpack.c.l.b16 %v734
        %v1743 = vunpack.c.l.b16 %v735
        %v1744 = vunpack.c.l.b16 %v736
        %v1745 = vunpack.c.l.b16 %v737
        %v1746 = vunpack.c.l.b16 %v738
        %v1747 = vunpack.c.l.b16 %v739
        %v1748 = vunpack.c.l.b16 %v740
        %v1749 = vunpack.c.l.b16 %v741
        %v1750 = vunpack.c.l.b16 %v742
        %v1751 = vunpack.c.l.b16 %v743
        %v1752 = vunpack.c.l.b16 %v744
        %v1753 = vunpack.c.l.b16 %v745
        %v1754 = vunpack.c.l.b16 %v746
        %v1755 = vunpack.c.l.b16 %v747
        %v1756 = vunpack.c.l.b16 %v748
        %v1757 = vunpack.c.l.b16 %v749
        %v1758 = vunpack.c.l.b16 %v750
        %v1759 = vunpack.c.l.b16 %v751
        %v1760 = vunpack.c.l.b16 %v752
        %v1761 = vunpack.c.l.b16 %v753
        %v1762 = vunpack.c.l.b16 %v754
        %v1763 = vunpack.c.l.b16 %v755
        %v1764 = vunpack.c.l.b16 %v756
        %v1765 = vunpack.c.l.b16 %v757
        %v1766 = vunpack.c.l.b16 %v758
        %v1767 = vunpack.c.l.b16 %v759
        %v1768 = vunpack.c.l.b16 %v760
        %v1769 = vunpack.c.l.b16 %v761
        %v1770 = vunpack.c.l.b16 %v762
        %v1771 = vunpack.c.l.b16 %v763
        %v1772 = vunpack.c.l.b16 %v764
        %v1773 = vunpack.c.l.b16 %v765
        %v1774 = vunpack.c.l.b16 %v766
        %v1775 = vunpack.c.l.b16 %v767
        %v1776 = vunpack.c.l.b16 %v768
        %v1777 = vunpack.c.l.b16 %v769
        %v1778 = vunpack.c.l.b16 %v770
        %v1779 = vunpack.c.l.b16 %v771
        %v1780 = vunpack.c.l.b16 %v772
        %v1781 = vunpack.c.l.b16 %v773
        %v1782 = vunpack.c.l.b16 %v774
        %v1783 = vunpack.c.l.b16 %v775
        %v1784 = vunpack.c.l.b16 %v776
        %v1785 = vunpack.c.l.b16 %v777
        %v1786 = vunpack.c.l.b16 %v778
        %v1787 = vunpack.c.l.b16 %v779
        %v1788 = vunpack.c.l.b16 %v780
        %v1789 = vunpack.c.l.b16 %v781
        %v1790 = vunpack.c.l.b16 %v782
        %v1791 = vunpack.c.l.b16 %v783
        %v1792 = vunpack.c.l.b16 %v784
        %v1793 = vunpack.c.l.b16 %v785
        %v1794 = vunpack.c.l.b16 %v786
        %v1795 = vunpack.c.l.b16 %v787
        %v1796 = vunpack.c.l.b16 %v788
        %v1797 = vunpack.c.l.b16 %v789
        %v1798 = vunpack.c.l.b16 %v790
        %v1799 = vunpack.c.l.b16 %v791
        %v1800 = vunpack.c.l.b16 %v792
        %v1801 = vunpack.c.l.b16 %v793
        %v1802 = vunpack.c.l.b16 %v794
        %v1803 = vunpack.c.l.b16 %v795
        %v1804 = vunpack.c.l.b16 %v796
        %v1805 = vunpack.c.l.b16 %v797
        %v1806 = vunpack.c.l.b16 %v798
        %v1807 = vunpack.c.l.b16 %v799
        %v1808 = vunpack.c.l.b16 %v800
        %v1809 = vunpack.c.l.b16 %v801
        %v1810 = vunpack.c.l.b16 %v802
        %v1811 = vunpack.c.l.b16 %v803
        %v1812 = vunpack.c.l.b16 %v804
        %v1813 = vunpack.c.l.b16 %v805
        %v1814 = vunpack.c.l.b16 %v806
        %v1815 = vunpack.c.l.b16 %v807
        %v1816 = vunpack.c.l.b16 %v808
        %v1817 = vunpack.c.l.b16 %v809
        %v1818 = vunpack.c.l.b16 %v810
        %v1819 = vunpack.c.l.b16 %v811
        %v1820 = vunpack.c.l.b16 %v812
        %v1821 = vunpack.c.l.b16 %v813
        %v1822 = vunpack.c.l.b16 %v814
        %v1823 = vunpack.c.l.b16 %v815
        %v1824 = vunpack.c.l.b16 %v816
        %v1825 = vunpack.c.l.b16 %v817
        %v1826 = vunpack.c.l.b16 %v818
        %v1827 = vunpack.c.l.b16 %v819
        %v1828 = vunpack.c.l.b16 %v820
        %v1829 = vunpack.c.l.b16 %v821
        %v1830 = vunpack.c.l.b16 %v822
        %v1831 = vunpack.c.l.b16 %v823
        %v1832 = vunpack.c.l.b16 %v824
        %v1833 = vunpack.c.l.b16 %v825
        %v1834 = vunpack.c.l.b16 %v826
        %v1835 = vunpack.c.l.b16 %v827
        %v1836 = vpack.c.b16 %v1613, %v1612
        %v1837 = vpack.c.b16 %v1615, %v1614
        %v1838 = vpack.c.b16 %v1617, %v1616
        %v1839 = vpack.c.b16 %v1619, %v1618
        %v1840 = vpack.c.b16 %v1621, %v1620
        %v1841 = vpack.c.b16 %v1623, %v1622
        %v1842 = vpack.c.b16 %v1625, %v1624
        %v1843 = vpack.c.b16 %v1627, %v1626
        %v1844 = vpack.c.b16 %v1629, %v1628
        %v1845 = vpack.c.b16 %v1631, %v1630
        %v1846 = vpack.c.b16 %v1633, %v1632
        %v1847 = vpack.c.b16 %v1635, %v1634
        %v1848 = vpack.c.b16 %v1637, %v1636
        %v1849 = vpack.c.b16 %v1639, %v1638
        %v1850 = vpack.c.b16 %v1641, %v1640
        %v1851 = vpack.c.b16 %v1643, %v1642
        %v1852 = vpack.c.b16 %v1645, %v1644
        %v1853 = vpack.c.b16 %v1647, %v1646
        %v1854 = vpack.c.b16 %v1649, %v1648
        %v1855 = vpack.c.b16 %v1651, %v1650
        %v1856 = vpack.c.b16 %v1653, %v1652
        %v1857 = vpack.c.b16 %v1655, %v1654
        %v1858 = vpack.c.b16 %v1657, %v1656
        %v1859 = vpack.c.b16 %v1659, %v1658
        %v1860 = vpack.c.b16 %v1661, %v1660
        %v1861 = vpack.c.b16 %v1663, %v1662
        %v1862 = vpack.c.b16 %v1665, %v1664
        %v1863 = vpack.c.b16 %v1667, %v1666
        %v1864 = vpack.c.b16 %v1669, %v1668
        %v1865 = vpack.c.b16 %v1671, %v1670
        %v1866 = vpack.c.b16 %v1673, %v1672
        %v1867 = vpack.c.b16 %v1675, %v1674
        %v1868 = vpack.c.b16 %v1677, %v1676
        %v1869 = vpack.c.b16 %v1679, %v1678
        %v1870 = vpack.c.b16 %v1681, %v1680
        %v1871 = vpack.c.b16 %v1683, %v1682
        %v1872 = vpack.c.b16 %v1685, %v1684
        %v1873 = vpack.c.b16 %v1687, %v1686
        %v1874 = vpack.c.b16 %v1689, %v1688
        %v1875 = vpack.c.b16 %v1691, %v1690
        %v1876 = vpack.c.b16 %v1693, %v1692
        %v1877 = vpack.c.b16 %v1695, %v1694
        %v1878 = vpack.c.b16 %v1697, %v1696
        %v1879 = vpack.c.b16 %v1699, %v1698
        %v1880 = vpack.c.b16 %v1701, %v1700
        %v1881 = vpack.c.b16 %v1703, %v1702
        %v1882 = vpack.c.b16 %v1705, %v1704
        %v1883 = vpack.c.b16 %v1707, %v1706
        %v1884 = vpack.c.b16 %v1709, %v1708
        %v1885 = vpack.c.b16 %v1711, %v1710
        %v1886 = vpack.c.b16 %v1713, %v1712
        %v1887 = vpack.c.b16 %v1715, %v1714
        %v1888 = vpack.c.b16 %v1717, %v1716
        %v1889 = vpack.c.b16 %v1719, %v1718
        %v1890 = vpack.c.b16 %v1721, %v1720
        %v1891 = vpack.c.b16 %v1723, %v1722
        %v1892 = vpack.c.b16 %v1725, %v1724
        %v1893 = vpack.c.b16 %v1727, %v1726
        %v1894 = vpack.c.b16 %v1729, %v1728
        %v1895 = vpack.c.b16 %v1731, %v1730
        %v1896 = vpack.c.b16 %v1733, %v1732
        %v1897 = vpack.c.b16 %v1735, %v1734
        %v1898 = vpack.c.b16 %v1737, %v1736
        %v1899 = vpack.c.b16 %v1739, %v1738
        %v1900 = vpack.c.b16 %v1741, %v1740
        %v1901 = vpack.c.b16 %v1743, %v1742
        %v1902 = vpack.c.b16 %v1745, %v1744
        %v1903 = vpack.c.b16 %v1747, %v1746
        %v1904 = vpack.c.b16 %v1749, %v1748
        %v1905 = vpack.c.b16 %v1751, %v1750
        %v1906 = vpack.c.b16 %v1753, %v1752
        %v1907 = vpack.c.b16 %v1755, %v1754
        %v1908 = vpack.c.b16 %v1757, %v1756
        %v1909 = vpack.c.b16 %v1759, %v1758
        %v1910 = vpack.c.b16 %v1761, %v1760
        %v1911 = vpack.c.b16 %v1763, %v1762
        %v1912 = vpack.c.b16 %v1765, %v1764
        %v1913 = vpack.c.b16 %v1767, %v1766
        %v1914 = vpack.c.b16 %v1769, %v1768
        %v1915 = vpack.c.b16 %v1771, %v1770
        %v1916 = vpack.c.b16 %v1773, %v1772
        %v1917 = vpack.c.b16 %v1775, %v1774
        %v1918 = vpack.c.b16 %v1777, %v1776
        %v1919 = vpack.c.b16 %v1779, %v1778
        %v1920 = vpack.c.b16 %v1781, %v1780
        %v1921 = vpack.c.b16 %v1783, %v1782
        %v1922 = vpack.c.b16 %v1785, %v1784
        %v1923 = vpack.c.b16 %v1787, %v1786
        %v1924 = vpack.c.b16 %v1789, %v1788
        %v1925 = vpack.c.b16 %v1791, %v1790
        %v1926 = vpack.c.b16 %v1793, %v1792
        %v1927 = vpack.c.b16 %v1795, %v1794
        %v1928 = vpack.c.b16 %v1797, %v1796
        %v1929 = vpack.c.b16 %v1799, %v1798
        %v1930 = vpack.c.b16 %v1801, %v1800
        %v1931 = vpack.c.b16 %v1803, %v1802
        %v1932 = vpack.c.b16 %v1805, %v1804
        %v1933 = vpack.c.b16 %v1807, %v1806
        %v1934 = vpack.c.b16 %v1809, %v1808
        %v1935 = vpack.c.b16 %v1811, %v1810
        %v1936 = vpack.c.b16 %v1813, %v1812
        %v1937 = vpack.c.b16 %v1815, %v1814
        %v1938 = vpack.c.b16 %v1817, %v1816
        %v1939 = vpack.c.b16 %v1819, %v1818
        %v1940 = vpack.c.b16 %v1821, %v1820
        %v1941 = vpack.c.b16 %v1823, %v1822
        %v1942 = vpack.c.b16 %v1825, %v1824
        %v1943 = vpack.c.b16 %v1827, %v1826
        %v1944 = vpack.c.b16 %v1829, %v1828
        %v1945 = vpack.c.b16 %v1831, %v1830
        %v1946 = vpack.c.b16 %v1833, %v1832
        %v1947 = vpack.c.b16 %v1835, %v1834
        %2060 = vmatprep.subr.bf16.mxu0 0
        %2061 = vmatpush1.bf16.msra.mxu0 %v1836
        %2062 = vmatprep.subr.bf16.mxu0 0
        %2063 = vmatpush1.bf16.msra.mxu0 %v1837
        %2064 = vmatprep.subr.bf16.mxu0 0
        %2065 = vmatpush1.bf16.msra.mxu0 %v1838
        %2066 = vmatprep.subr.bf16.mxu0 0
        %2067 = vmatpush1.bf16.msra.mxu0 %v1839
        %2068 = vmatprep.subr.bf16.mxu0 0
        %2069 = vmatpush1.bf16.msra.mxu0 %v1840
        %2070 = vmatprep.subr.bf16.mxu0 0
        %2071 = vmatpush1.bf16.msra.mxu0 %v1841
        %2072 = vmatprep.subr.bf16.mxu0 0
        %2073 = vmatpush1.bf16.msra.mxu0 %v1842
        %2074 = vmatprep.subr.bf16.mxu0 0
        %2075 = vmatpush1.bf16.msra.mxu0 %v1843
        %2076 = vmatprep.subr.bf16.mxu0 0
        %2077 = vmatpush1.bf16.msra.mxu0 %v1844
        %2078 = vmatprep.subr.bf16.mxu0 0
        %2079 = vmatpush1.bf16.msra.mxu0 %v1845
        %2080 = vmatprep.subr.bf16.mxu0 0
        %2081 = vmatpush1.bf16.msra.mxu0 %v1846
        %2082 = vmatprep.subr.bf16.mxu0 0
        %2083 = vmatpush1.bf16.msra.mxu0 %v1847
        %2084 = vmatprep.subr.bf16.mxu0 0
        %2085 = vmatpush1.bf16.msra.mxu0 %v1848
        %2086 = vmatprep.subr.bf16.mxu0 0
        %2087 = vmatpush1.bf16.msra.mxu0 %v1849
        %2088 = vmatprep.subr.bf16.mxu0 0
        %2089 = vmatpush1.bf16.msra.mxu0 %v1850
        %2090 = vmatprep.subr.bf16.mxu0 0
        %2091 = vmatpush1.bf16.msra.mxu0 %v1851
        %2092 = vmatprep.mubr.bf16.mxu0 %v1165
        %2093 = vmatmul.mubr.bf16.gmra.mrb[0].mxu0 %v1164
        %v2094 = vpop.f32.mrb[0].mxu0
        %v2095 = vadd.f32 0.0, %v2094
        %v2096 = vpop.f32.mrb[0].mxu0
        %v2097 = vpop.f32.mrb[0].mxu0
        %v2098 = vadd.f32 0.0, %v2097
        %v2099 = vpop.f32.mrb[0].mxu0
        %2100 = vmatprep.mubr.bf16.mxu0 %v1179
        %2101 = vmatmul.mubr.bf16.gmra.mrb[0].mxu0 %v1178
        %v2102 = vpop.f32.mrb[0].mxu0
        %v2103 = vadd.f32 0.0, %v2102
        %v2104 = vpop.f32.mrb[0].mxu0
        %v2105 = vpop.f32.mrb[0].mxu0
        %v2106 = vadd.f32 0.0, %v2105
        %v2107 = vpop.f32.mrb[0].mxu0
        %2108 = vmatprep.mubr.bf16.mxu0 %v1193
        %2109 = vmatmul.mubr.bf16.gmra.mrb[0].mxu0 %v1192
        %v2110 = vpop.f32.mrb[0].mxu0
        %v2111 = vadd.f32 0.0, %v2110
        %v2112 = vpop.f32.mrb[0].mxu0
        %v2113 = vpop.f32.mrb[0].mxu0
        %v2114 = vadd.f32 0.0, %v2113
        %v2115 = vpop.f32.mrb[0].mxu0
        %2116 = vmatprep.mubr.bf16.mxu0 %v1207
        %2117 = vmatmul.mubr.bf16.gmra.mrb[0].mxu0 %v1206
        %v2118 = vpop.f32.mrb[0].mxu0
        %v2119 = vadd.f32 0.0, %v2118
        %v2120 = vpop.f32.mrb[0].mxu0
        %v2121 = vpop.f32.mrb[0].mxu0
        %v2122 = vadd.f32 0.0, %v2121
        %v2123 = vpop.f32.mrb[0].mxu0
        %2124 = vmatprep.mubr.bf16.mxu0 %v1221
        %2125 = vmatmul.mubr.bf16.gmra.mrb[0].mxu0 %v1220
        %v2126 = vpop.f32.mrb[0].mxu0
        %v2127 = vadd.f32 0.0, %v2126
        %v2128 = vpop.f32.mrb[0].mxu0
        %v2129 = vpop.f32.mrb[0].mxu0
        %v2130 = vadd.f32 0.0, %v2129
        %v2131 = vpop.f32.mrb[0].mxu0
        %2132 = vmatprep.mubr.bf16.mxu0 %v1235
        %2133 = vmatmul.mubr.bf16.gmra.mrb[0].mxu0 %v1234
        %v2134 = vpop.f32.mrb[0].mxu0
        %v2135 = vadd.f32 0.0, %v2134
        %v2136 = vpop.f32.mrb[0].mxu0
        %v2137 = vpop.f32.mrb[0].mxu0
        %v2138 = vadd.f32 0.0, %v2137
        %v2139 = vpop.f32.mrb[0].mxu0
        %2140 = vmatprep.mubr.bf16.mxu0 %v1249
        %2141 = vmatmul.mubr.bf16.gmra.mrb[0].mxu0 %v1248
        %v2142 = vpop.f32.mrb[0].mxu0
        %v2143 = vadd.f32 0.0, %v2142
        %v2144 = vpop.f32.mrb[0].mxu0
        %v2145 = vpop.f32.mrb[0].mxu0
        %v2146 = vadd.f32 0.0, %v2145
        %v2147 = vpop.f32.mrb[0].mxu0
        %2148 = vmatprep.mubr.bf16.mxu0 %v1263
        %2149 = vmatmul.mubr.bf16.gmra.mrb[0].mxu0 %v1262
        %v2150 = vpop.f32.mrb[0].mxu0
        %v2151 = vadd.f32 0.0, %v2150
        %v2152 = vpop.f32.mrb[0].mxu0
        %v2153 = vpop.f32.mrb[0].mxu0
        %v2154 = vadd.f32 0.0, %v2153
        %v2155 = vpop.f32.mrb[0].mxu0
        %2156 = vdwg.mxu0
        %2157 = vmatprep.subr.bf16.mxu0 0
        %2158 = vmatpush1.bf16.msra.mxu0 %v1852
        %2159 = vmatprep.subr.bf16.mxu0 0
        %2160 = vmatpush1.bf16.msra.mxu0 %v1853
        %2161 = vmatprep.subr.bf16.mxu0 0
        %2162 = vmatpush1.bf16.msra.mxu0 %v1854
        %2163 = vmatprep.subr.bf16.mxu0 0
        %2164 = vmatpush1.bf16.msra.mxu0 %v1855
        %2165 = vmatprep.subr.bf16.mxu0 0
        %2166 = vmatpush1.bf16.msra.mxu0 %v1856
        %2167 = vmatprep.subr.bf16.mxu0 0
        %2168 = vmatpush1.bf16.msra.mxu0 %v1857
        %2169 = vmatprep.subr.bf16.mxu0 0
        %2170 = vmatpush1.bf16.msra.mxu0 %v1858
        %2171 = vmatprep.subr.bf16.mxu0 0
        %2172 = vmatpush1.bf16.msra.mxu0 %v1859
        %2173 = vmatprep.subr.bf16.mxu0 0
        %2174 = vmatpush1.bf16.msra.mxu0 %v1860
        %2175 = vmatprep.subr.bf16.mxu0 0
        %2176 = vmatpush1.bf16.msra.mxu0 %v1861
        %2177 = vmatprep.subr.bf16.mxu0 0
        %2178 = vmatpush1.bf16.msra.mxu0 %v1862
        %2179 = vmatprep.subr.bf16.mxu0 0
        %2180 = vmatpush1.bf16.msra.mxu0 %v1863
        %2181 = vmatprep.subr.bf16.mxu0 0
        %2182 = vmatpush1.bf16.msra.mxu0 %v1864
        %2183 = vmatprep.subr.bf16.mxu0 0
        %2184 = vmatpush1.bf16.msra.mxu0 %v1865
        %2185 = vmatprep.subr.bf16.mxu0 0
        %2186 = vmatpush1.bf16.msra.mxu0 %v1866
        %2187 = vmatprep.subr.bf16.mxu0 0
        %2188 = vmatpush1.bf16.msra.mxu0 %v1867
        %2189 = vmatprep.mubr.bf16.mxu0 %v1167
        %2190 = vmatmul.mubr.bf16.gmra.mrb[0].mxu0 %v1166
        %v2191 = vpop.f32.mrb[0].mxu0
        %v2192 = vadd.f32 %v2095, %v2191
        %v2193 = vpop.f32.mrb[0].mxu0
        %v2194 = vpop.f32.mrb[0].mxu0
        %v2195 = vadd.f32 %v2098, %v2194
        %v2196 = vpop.f32.mrb[0].mxu0
        %2197 = vmatprep.mubr.bf16.mxu0 %v1181
        %2198 = vmatmul.mubr.bf16.gmra.mrb[0].mxu0 %v1180
        %v2199 = vpop.f32.mrb[0].mxu0
        %v2200 = vadd.f32 %v2103, %v2199
        %v2201 = vpop.f32.mrb[0].mxu0
        %v2202 = vpop.f32.mrb[0].mxu0
        %v2203 = vadd.f32 %v2106, %v2202
        %v2204 = vpop.f32.mrb[0].mxu0
        %2205 = vmatprep.mubr.bf16.mxu0 %v1195
        %2206 = vmatmul.mubr.bf16.gmra.mrb[0].mxu0 %v1194
        %v2207 = vpop.f32.mrb[0].mxu0
        %v2208 = vadd.f32 %v2111, %v2207
        %v2209 = vpop.f32.mrb[0].mxu0
        %v2210 = vpop.f32.mrb[0].mxu0
        %v2211 = vadd.f32 %v2114, %v2210
        %v2212 = vpop.f32.mrb[0].mxu0
        %2213 = vmatprep.mubr.bf16.mxu0 %v1209
        %2214 = vmatmul.mubr.bf16.gmra.mrb[0].mxu0 %v1208
        %v2215 = vpop.f32.mrb[0].mxu0
        %v2216 = vadd.f32 %v2119, %v2215
        %v2217 = vpop.f32.mrb[0].mxu0
        %v2218 = vpop.f32.mrb[0].mxu0
        %v2219 = vadd.f32 %v2122, %v2218
        %v2220 = vpop.f32.mrb[0].mxu0
        %2221 = vmatprep.mubr.bf16.mxu0 %v1223
        %2222 = vmatmul.mubr.bf16.gmra.mrb[0].mxu0 %v1222
        %v2223 = vpop.f32.mrb[0].mxu0
        %v2224 = vadd.f32 %v2127, %v2223
        %v2225 = vpop.f32.mrb[0].mxu0
        %v2226 = vpop.f32.mrb[0].mxu0
        %v2227 = vadd.f32 %v2130, %v2226
        %v2228 = vpop.f32.mrb[0].mxu0
        %2229 = vmatprep.mubr.bf16.mxu0 %v1237
        %2230 = vmatmul.mubr.bf16.gmra.mrb[0].mxu0 %v1236
        %v2231 = vpop.f32.mrb[0].mxu0
        %v2232 = vadd.f32 %v2135, %v2231
        %v2233 = vpop.f32.mrb[0].mxu0
        %v2234 = vpop.f32.mrb[0].mxu0
        %v2235 = vadd.f32 %v2138, %v2234
        %v2236 = vpop.f32.mrb[0].mxu0
        %2237 = vmatprep.mubr.bf16.mxu0 %v1251
        %2238 = vmatmul.mubr.bf16.gmra.mrb[0].mxu0 %v1250
        %v2239 = vpop.f32.mrb[0].mxu0
        %v2240 = vadd.f32 %v2143, %v2239
        %v2241 = vpop.f32.mrb[0].mxu0
        %v2242 = vpop.f32.mrb[0].mxu0
        %v2243 = vadd.f32 %v2146, %v2242
        %v2244 = vpop.f32.mrb[0].mxu0
        %2245 = vmatprep.mubr.bf16.mxu0 %v1265
        %2246 = vmatmul.mubr.bf16.gmra.mrb[0].mxu0 %v1264
        %v2247 = vpop.f32.mrb[0].mxu0
        %v2248 = vadd.f32 %v2151, %v2247
        %v2249 = vpop.f32.mrb[0].mxu0
        %v2250 = vpop.f32.mrb[0].mxu0
        %v2251 = vadd.f32 %v2154, %v2250
        %v2252 = vpop.f32.mrb[0].mxu0
        %2253 = vdwg.mxu0
        %2254 = vmatprep.subr.bf16.mxu0 0
        %2255 = vmatpush1.bf16.msra.mxu0 %v1868
        %2256 = vmatprep.subr.bf16.mxu0 0
        %2257 = vmatpush1.bf16.msra.mxu0 %v1869
        %2258 = vmatprep.subr.bf16.mxu0 0
        %2259 = vmatpush1.bf16.msra.mxu0 %v1870
        %2260 = vmatprep.subr.bf16.mxu0 0
        %2261 = vmatpush1.bf16.msra.mxu0 %v1871
        %2262 = vmatprep.subr.bf16.mxu0 0
        %2263 = vmatpush1.bf16.msra.mxu0 %v1872
        %2264 = vmatprep.subr.bf16.mxu0 0
        %2265 = vmatpush1.bf16.msra.mxu0 %v1873
        %2266 = vmatprep.subr.bf16.mxu0 0
        %2267 = vmatpush1.bf16.msra.mxu0 %v1874
        %2268 = vmatprep.subr.bf16.mxu0 0
        %2269 = vmatpush1.bf16.msra.mxu0 %v1875
        %2270 = vmatprep.subr.bf16.mxu0 0
        %2271 = vmatpush1.bf16.msra.mxu0 %v1876
        %2272 = vmatprep.subr.bf16.mxu0 0
        %2273 = vmatpush1.bf16.msra.mxu0 %v1877
        %2274 = vmatprep.subr.bf16.mxu0 0
        %2275 = vmatpush1.bf16.msra.mxu0 %v1878
        %2276 = vmatprep.subr.bf16.mxu0 0
        %2277 = vmatpush1.bf16.msra.mxu0 %v1879
        %2278 = vmatprep.subr.bf16.mxu0 0
        %2279 = vmatpush1.bf16.msra.mxu0 %v1880
        %2280 = vmatprep.subr.bf16.mxu0 0
        %2281 = vmatpush1.bf16.msra.mxu0 %v1881
        %2282 = vmatprep.subr.bf16.mxu0 0
        %2283 = vmatpush1.bf16.msra.mxu0 %v1882
        %2284 = vmatprep.subr.bf16.mxu0 0
        %2285 = vmatpush1.bf16.msra.mxu0 %v1883
        %2286 = vmatprep.mubr.bf16.mxu0 %v1169
        %2287 = vmatmul.mubr.bf16.gmra.mrb[0].mxu0 %v1168
        %v2288 = vpop.f32.mrb[0].mxu0
        %v2289 = vadd.f32 %v2192, %v2288
        %v2290 = vpop.f32.mrb[0].mxu0
        %v2291 = vpop.f32.mrb[0].mxu0
        %v2292 = vadd.f32 %v2195, %v2291
        %v2293 = vpop.f32.mrb[0].mxu0
        %2294 = vmatprep.mubr.bf16.mxu0 %v1183
        %2295 = vmatmul.mubr.bf16.gmra.mrb[0].mxu0 %v1182
        %v2296 = vpop.f32.mrb[0].mxu0
        %v2297 = vadd.f32 %v2200, %v2296
        %v2298 = vpop.f32.mrb[0].mxu0
        %v2299 = vpop.f32.mrb[0].mxu0
        %v2300 = vadd.f32 %v2203, %v2299
        %v2301 = vpop.f32.mrb[0].mxu0
        %2302 = vmatprep.mubr.bf16.mxu0 %v1197
        %2303 = vmatmul.mubr.bf16.gmra.mrb[0].mxu0 %v1196
        %v2304 = vpop.f32.mrb[0].mxu0
        %v2305 = vadd.f32 %v2208, %v2304
        %v2306 = vpop.f32.mrb[0].mxu0
        %v2307 = vpop.f32.mrb[0].mxu0
        %v2308 = vadd.f32 %v2211, %v2307
        %v2309 = vpop.f32.mrb[0].mxu0
        %2310 = vmatprep.mubr.bf16.mxu0 %v1211
        %2311 = vmatmul.mubr.bf16.gmra.mrb[0].mxu0 %v1210
        %v2312 = vpop.f32.mrb[0].mxu0
        %v2313 = vadd.f32 %v2216, %v2312
        %v2314 = vpop.f32.mrb[0].mxu0
        %v2315 = vpop.f32.mrb[0].mxu0
        %v2316 = vadd.f32 %v2219, %v2315
        %v2317 = vpop.f32.mrb[0].mxu0
        %2318 = vmatprep.mubr.bf16.mxu0 %v1225
        %2319 = vmatmul.mubr.bf16.gmra.mrb[0].mxu0 %v1224
        %v2320 = vpop.f32.mrb[0].mxu0
        %v2321 = vadd.f32 %v2224, %v2320
        %v2322 = vpop.f32.mrb[0].mxu0
        %v2323 = vpop.f32.mrb[0].mxu0
        %v2324 = vadd.f32 %v2227, %v2323
        %v2325 = vpop.f32.mrb[0].mxu0
        %2326 = vmatprep.mubr.bf16.mxu0 %v1239
        %2327 = vmatmul.mubr.bf16.gmra.mrb[0].mxu0 %v1238
        %v2328 = vpop.f32.mrb[0].mxu0
        %v2329 = vadd.f32 %v2232, %v2328
        %v2330 = vpop.f32.mrb[0].mxu0
        %v2331 = vpop.f32.mrb[0].mxu0
        %v2332 = vadd.f32 %v2235, %v2331
        %v2333 = vpop.f32.mrb[0].mxu0
        %2334 = vmatprep.mubr.bf16.mxu0 %v1253
        %2335 = vmatmul.mubr.bf16.gmra.mrb[0].mxu0 %v1252
        %v2336 = vpop.f32.mrb[0].mxu0
        %v2337 = vadd.f32 %v2240, %v2336
        %v2338 = vpop.f32.mrb[0].mxu0
        %v2339 = vpop.f32.mrb[0].mxu0
        %v2340 = vadd.f32 %v2243, %v2339
        %v2341 = vpop.f32.mrb[0].mxu0
        %2342 = vmatprep.mubr.bf16.mxu0 %v1267
        %2343 = vmatmul.mubr.bf16.gmra.mrb[0].mxu0 %v1266
        %v2344 = vpop.f32.mrb[0].mxu0
        %v2345 = vadd.f32 %v2248, %v2344
        %v2346 = vpop.f32.mrb[0].mxu0
        %v2347 = vpop.f32.mrb[0].mxu0
        %v2348 = vadd.f32 %v2251, %v2347
        %v2349 = vpop.f32.mrb[0].mxu0
        %2350 = vdwg.mxu0
        %2351 = vmatprep.subr.bf16.mxu0 0
        %2352 = vmatpush1.bf16.msra.mxu0 %v1884
        %2353 = vmatprep.subr.bf16.mxu0 0
        %2354 = vmatpush1.bf16.msra.mxu0 %v1885
        %2355 = vmatprep.subr.bf16.mxu0 0
        %2356 = vmatpush1.bf16.msra.mxu0 %v1886
        %2357 = vmatprep.subr.bf16.mxu0 0
        %2358 = vmatpush1.bf16.msra.mxu0 %v1887
        %2359 = vmatprep.subr.bf16.mxu0 0
        %2360 = vmatpush1.bf16.msra.mxu0 %v1888
        %2361 = vmatprep.subr.bf16.mxu0 0
        %2362 = vmatpush1.bf16.msra.mxu0 %v1889
        %2363 = vmatprep.subr.bf16.mxu0 0
        %2364 = vmatpush1.bf16.msra.mxu0 %v1890
        %2365 = vmatprep.subr.bf16.mxu0 0
        %2366 = vmatpush1.bf16.msra.mxu0 %v1891
        %2367 = vmatprep.subr.bf16.mxu0 0
        %2368 = vmatpush1.bf16.msra.mxu0 %v1892
        %2369 = vmatprep.subr.bf16.mxu0 0
        %2370 = vmatpush1.bf16.msra.mxu0 %v1893
        %2371 = vmatprep.subr.bf16.mxu0 0
        %2372 = vmatpush1.bf16.msra.mxu0 %v1894
        %2373 = vmatprep.subr.bf16.mxu0 0
        %2374 = vmatpush1.bf16.msra.mxu0 %v1895
        %2375 = vmatprep.subr.bf16.mxu0 0
        %2376 = vmatpush1.bf16.msra.mxu0 %v1896
        %2377 = vmatprep.subr.bf16.mxu0 0
        %2378 = vmatpush1.bf16.msra.mxu0 %v1897
        %2379 = vmatprep.subr.bf16.mxu0 0
        %2380 = vmatpush1.bf16.msra.mxu0 %v1898
        %2381 = vmatprep.subr.bf16.mxu0 0
        %2382 = vmatpush1.bf16.msra.mxu0 %v1899
        %2383 = vmatprep.mubr.bf16.mxu0 %v1171
        %2384 = vmatmul.mubr.bf16.gmra.mrb[0].mxu0 %v1170
        %v2385 = vpop.f32.mrb[0].mxu0
        %v2386 = vadd.f32 %v2289, %v2385
        %v2387 = vpop.f32.mrb[0].mxu0
        %v2388 = vpop.f32.mrb[0].mxu0
        %v2389 = vadd.f32 %v2292, %v2388
        %v2390 = vpop.f32.mrb[0].mxu0
        %2391 = vmatprep.mubr.bf16.mxu0 %v1185
        %2392 = vmatmul.mubr.bf16.gmra.mrb[0].mxu0 %v1184
        %v2393 = vpop.f32.mrb[0].mxu0
        %v2394 = vadd.f32 %v2297, %v2393
        %v2395 = vpop.f32.mrb[0].mxu0
        %v2396 = vpop.f32.mrb[0].mxu0
        %v2397 = vadd.f32 %v2300, %v2396
        %v2398 = vpop.f32.mrb[0].mxu0
        %2399 = vmatprep.mubr.bf16.mxu0 %v1199
        %2400 = vmatmul.mubr.bf16.gmra.mrb[0].mxu0 %v1198
        %v2401 = vpop.f32.mrb[0].mxu0
        %v2402 = vadd.f32 %v2305, %v2401
        %v2403 = vpop.f32.mrb[0].mxu0
        %v2404 = vpop.f32.mrb[0].mxu0
        %v2405 = vadd.f32 %v2308, %v2404
        %v2406 = vpop.f32.mrb[0].mxu0
        %2407 = vmatprep.mubr.bf16.mxu0 %v1213
        %2408 = vmatmul.mubr.bf16.gmra.mrb[0].mxu0 %v1212
        %v2409 = vpop.f32.mrb[0].mxu0
        %v2410 = vadd.f32 %v2313, %v2409
        %v2411 = vpop.f32.mrb[0].mxu0
        %v2412 = vpop.f32.mrb[0].mxu0
        %v2413 = vadd.f32 %v2316, %v2412
        %v2414 = vpop.f32.mrb[0].mxu0
        %2415 = vmatprep.mubr.bf16.mxu0 %v1227
        %2416 = vmatmul.mubr.bf16.gmra.mrb[0].mxu0 %v1226
        %v2417 = vpop.f32.mrb[0].mxu0
        %v2418 = vadd.f32 %v2321, %v2417
        %v2419 = vpop.f32.mrb[0].mxu0
        %v2420 = vpop.f32.mrb[0].mxu0
        %v2421 = vadd.f32 %v2324, %v2420
        %v2422 = vpop.f32.mrb[0].mxu0
        %2423 = vmatprep.mubr.bf16.mxu0 %v1241
        %2424 = vmatmul.mubr.bf16.gmra.mrb[0].mxu0 %v1240
        %v2425 = vpop.f32.mrb[0].mxu0
        %v2426 = vadd.f32 %v2329, %v2425
        %v2427 = vpop.f32.mrb[0].mxu0
        %v2428 = vpop.f32.mrb[0].mxu0
        %v2429 = vadd.f32 %v2332, %v2428
        %v2430 = vpop.f32.mrb[0].mxu0
        %2431 = vmatprep.mubr.bf16.mxu0 %v1255
        %2432 = vmatmul.mubr.bf16.gmra.mrb[0].mxu0 %v1254
        %v2433 = vpop.f32.mrb[0].mxu0
        %v2434 = vadd.f32 %v2337, %v2433
        %v2435 = vpop.f32.mrb[0].mxu0
        %v2436 = vpop.f32.mrb[0].mxu0
        %v2437 = vadd.f32 %v2340, %v2436
        %v2438 = vpop.f32.mrb[0].mxu0
        %2439 = vmatprep.mubr.bf16.mxu0 %v1269
        %2440 = vmatmul.mubr.bf16.gmra.mrb[0].mxu0 %v1268
        %v2441 = vpop.f32.mrb[0].mxu0
        %v2442 = vadd.f32 %v2345, %v2441
        %v2443 = vpop.f32.mrb[0].mxu0
        %v2444 = vpop.f32.mrb[0].mxu0
        %v2445 = vadd.f32 %v2348, %v2444
        %v2446 = vpop.f32.mrb[0].mxu0
        %2447 = vdwg.mxu0
        %2448 = vmatprep.subr.bf16.mxu0 0
        %2449 = vmatpush1.bf16.msra.mxu0 %v1900
        %2450 = vmatprep.subr.bf16.mxu0 0
        %2451 = vmatpush1.bf16.msra.mxu0 %v1901
        %2452 = vmatprep.subr.bf16.mxu0 0
        %2453 = vmatpush1.bf16.msra.mxu0 %v1902
        %2454 = vmatprep.subr.bf16.mxu0 0
        %2455 = vmatpush1.bf16.msra.mxu0 %v1903
        %2456 = vmatprep.subr.bf16.mxu0 0
        %2457 = vmatpush1.bf16.msra.mxu0 %v1904
        %2458 = vmatprep.subr.bf16.mxu0 0
        %2459 = vmatpush1.bf16.msra.mxu0 %v1905
        %2460 = vmatprep.subr.bf16.mxu0 0
        %2461 = vmatpush1.bf16.msra.mxu0 %v1906
        %2462 = vmatprep.subr.bf16.mxu0 0
        %2463 = vmatpush1.bf16.msra.mxu0 %v1907
        %2464 = vmatprep.subr.bf16.mxu0 0
        %2465 = vmatpush1.bf16.msra.mxu0 %v1908
        %2466 = vmatprep.subr.bf16.mxu0 0
        %2467 = vmatpush1.bf16.msra.mxu0 %v1909
        %2468 = vmatprep.subr.bf16.mxu0 0
        %2469 = vmatpush1.bf16.msra.mxu0 %v1910
        %2470 = vmatprep.subr.bf16.mxu0 0
        %2471 = vmatpush1.bf16.msra.mxu0 %v1911
        %2472 = vmatprep.subr.bf16.mxu0 0
        %2473 = vmatpush1.bf16.msra.mxu0 %v1912
        %2474 = vmatprep.subr.bf16.mxu0 0
        %2475 = vmatpush1.bf16.msra.mxu0 %v1913
        %2476 = vmatprep.subr.bf16.mxu0 0
        %2477 = vmatpush1.bf16.msra.mxu0 %v1914
        %2478 = vmatprep.subr.bf16.mxu0 0
        %2479 = vmatpush1.bf16.msra.mxu0 %v1915
        %2480 = vmatprep.mubr.bf16.mxu0 %v1173
        %2481 = vmatmul.mubr.bf16.gmra.mrb[0].mxu0 %v1172
        %v2482 = vpop.f32.mrb[0].mxu0
        %v2483 = vadd.f32 %v2386, %v2482
        %v2484 = vpop.f32.mrb[0].mxu0
        %v2485 = vpop.f32.mrb[0].mxu0
        %v2486 = vadd.f32 %v2389, %v2485
        %v2487 = vpop.f32.mrb[0].mxu0
        %2488 = vmatprep.mubr.bf16.mxu0 %v1187
        %2489 = vmatmul.mubr.bf16.gmra.mrb[0].mxu0 %v1186
        %v2490 = vpop.f32.mrb[0].mxu0
        %v2491 = vadd.f32 %v2394, %v2490
        %v2492 = vpop.f32.mrb[0].mxu0
        %v2493 = vpop.f32.mrb[0].mxu0
        %v2494 = vadd.f32 %v2397, %v2493
        %v2495 = vpop.f32.mrb[0].mxu0
        %2496 = vmatprep.mubr.bf16.mxu0 %v1201
        %2497 = vmatmul.mubr.bf16.gmra.mrb[0].mxu0 %v1200
        %v2498 = vpop.f32.mrb[0].mxu0
        %v2499 = vadd.f32 %v2402, %v2498
        %v2500 = vpop.f32.mrb[0].mxu0
        %v2501 = vpop.f32.mrb[0].mxu0
        %v2502 = vadd.f32 %v2405, %v2501
        %v2503 = vpop.f32.mrb[0].mxu0
        %2504 = vmatprep.mubr.bf16.mxu0 %v1215
        %2505 = vmatmul.mubr.bf16.gmra.mrb[0].mxu0 %v1214
        %v2506 = vpop.f32.mrb[0].mxu0
        %v2507 = vadd.f32 %v2410, %v2506
        %v2508 = vpop.f32.mrb[0].mxu0
        %v2509 = vpop.f32.mrb[0].mxu0
        %v2510 = vadd.f32 %v2413, %v2509
        %v2511 = vpop.f32.mrb[0].mxu0
        %2512 = vmatprep.mubr.bf16.mxu0 %v1229
        %2513 = vmatmul.mubr.bf16.gmra.mrb[0].mxu0 %v1228
        %v2514 = vpop.f32.mrb[0].mxu0
        %v2515 = vadd.f32 %v2418, %v2514
        %v2516 = vpop.f32.mrb[0].mxu0
        %v2517 = vpop.f32.mrb[0].mxu0
        %v2518 = vadd.f32 %v2421, %v2517
        %v2519 = vpop.f32.mrb[0].mxu0
        %2520 = vmatprep.mubr.bf16.mxu0 %v1243
        %2521 = vmatmul.mubr.bf16.gmra.mrb[0].mxu0 %v1242
        %v2522 = vpop.f32.mrb[0].mxu0
        %v2523 = vadd.f32 %v2426, %v2522
        %v2524 = vpop.f32.mrb[0].mxu0
        %v2525 = vpop.f32.mrb[0].mxu0
        %v2526 = vadd.f32 %v2429, %v2525
        %v2527 = vpop.f32.mrb[0].mxu0
        %2528 = vmatprep.mubr.bf16.mxu0 %v1257
        %2529 = vmatmul.mubr.bf16.gmra.mrb[0].mxu0 %v1256
        %v2530 = vpop.f32.mrb[0].mxu0
        %v2531 = vadd.f32 %v2434, %v2530
        %v2532 = vpop.f32.mrb[0].mxu0
        %v2533 = vpop.f32.mrb[0].mxu0
        %v2534 = vadd.f32 %v2437, %v2533
        %v2535 = vpop.f32.mrb[0].mxu0
        %2536 = vmatprep.mubr.bf16.mxu0 %v1271
        %2537 = vmatmul.mubr.bf16.gmra.mrb[0].mxu0 %v1270
        %v2538 = vpop.f32.mrb[0].mxu0
        %v2539 = vadd.f32 %v2442, %v2538
        %v2540 = vpop.f32.mrb[0].mxu0
        %v2541 = vpop.f32.mrb[0].mxu0
        %v2542 = vadd.f32 %v2445, %v2541
        %v2543 = vpop.f32.mrb[0].mxu0
        %2544 = vdwg.mxu0
        %2545 = vmatprep.subr.bf16.mxu0 0
        %2546 = vmatpush1.bf16.msra.mxu0 %v1916
        %2547 = vmatprep.subr.bf16.mxu0 0
        %2548 = vmatpush1.bf16.msra.mxu0 %v1917
        %2549 = vmatprep.subr.bf16.mxu0 0
        %2550 = vmatpush1.bf16.msra.mxu0 %v1918
        %2551 = vmatprep.subr.bf16.mxu0 0
        %2552 = vmatpush1.bf16.msra.mxu0 %v1919
        %2553 = vmatprep.subr.bf16.mxu0 0
        %2554 = vmatpush1.bf16.msra.mxu0 %v1920
        %2555 = vmatprep.subr.bf16.mxu0 0
        %2556 = vmatpush1.bf16.msra.mxu0 %v1921
        %2557 = vmatprep.subr.bf16.mxu0 0
        %2558 = vmatpush1.bf16.msra.mxu0 %v1922
        %2559 = vmatprep.subr.bf16.mxu0 0
        %2560 = vmatpush1.bf16.msra.mxu0 %v1923
        %2561 = vmatprep.subr.bf16.mxu0 0
        %2562 = vmatpush1.bf16.msra.mxu0 %v1924
        %2563 = vmatprep.subr.bf16.mxu0 0
        %2564 = vmatpush1.bf16.msra.mxu0 %v1925
        %2565 = vmatprep.subr.bf16.mxu0 0
        %2566 = vmatpush1.bf16.msra.mxu0 %v1926
        %2567 = vmatprep.subr.bf16.mxu0 0
        %2568 = vmatpush1.bf16.msra.mxu0 %v1927
        %2569 = vmatprep.subr.bf16.mxu0 0
        %2570 = vmatpush1.bf16.msra.mxu0 %v1928
        %2571 = vmatprep.subr.bf16.mxu0 0
        %2572 = vmatpush1.bf16.msra.mxu0 %v1929
        %2573 = vmatprep.subr.bf16.mxu0 0
        %2574 = vmatpush1.bf16.msra.mxu0 %v1930
        %2575 = vmatprep.subr.bf16.mxu0 0
        %2576 = vmatpush1.bf16.msra.mxu0 %v1931
        %2577 = vmatprep.mubr.bf16.mxu0 %v1175
        %2578 = vmatmul.mubr.bf16.gmra.mrb[0].mxu0 %v1174
        %v2579 = vpop.f32.mrb[0].mxu0
        %v2580 = vadd.f32 %v2483, %v2579
        %v2581 = vpop.f32.mrb[0].mxu0
        %v2582 = vpop.f32.mrb[0].mxu0
        %v2583 = vadd.f32 %v2486, %v2582
        %v2584 = vpop.f32.mrb[0].mxu0
        %2585 = vmatprep.mubr.bf16.mxu0 %v1189
        %2586 = vmatmul.mubr.bf16.gmra.mrb[0].mxu0 %v1188
        %v2587 = vpop.f32.mrb[0].mxu0
        %v2588 = vadd.f32 %v2491, %v2587
        %v2589 = vpop.f32.mrb[0].mxu0
        %v2590 = vpop.f32.mrb[0].mxu0
        %v2591 = vadd.f32 %v2494, %v2590
        %v2592 = vpop.f32.mrb[0].mxu0
        %2593 = vmatprep.mubr.bf16.mxu0 %v1203
        %2594 = vmatmul.mubr.bf16.gmra.mrb[0].mxu0 %v1202
        %v2595 = vpop.f32.mrb[0].mxu0
        %v2596 = vadd.f32 %v2499, %v2595
        %v2597 = vpop.f32.mrb[0].mxu0
        %v2598 = vpop.f32.mrb[0].mxu0
        %v2599 = vadd.f32 %v2502, %v2598
        %v2600 = vpop.f32.mrb[0].mxu0
        %2601 = vmatprep.mubr.bf16.mxu0 %v1217
        %2602 = vmatmul.mubr.bf16.gmra.mrb[0].mxu0 %v1216
        %v2603 = vpop.f32.mrb[0].mxu0
        %v2604 = vadd.f32 %v2507, %v2603
        %v2605 = vpop.f32.mrb[0].mxu0
        %v2606 = vpop.f32.mrb[0].mxu0
        %v2607 = vadd.f32 %v2510, %v2606
        %v2608 = vpop.f32.mrb[0].mxu0
        %2609 = vmatprep.mubr.bf16.mxu0 %v1231
        %2610 = vmatmul.mubr.bf16.gmra.mrb[0].mxu0 %v1230
        %v2611 = vpop.f32.mrb[0].mxu0
        %v2612 = vadd.f32 %v2515, %v2611
        %v2613 = vpop.f32.mrb[0].mxu0
        %v2614 = vpop.f32.mrb[0].mxu0
        %v2615 = vadd.f32 %v2518, %v2614
        %v2616 = vpop.f32.mrb[0].mxu0
        %2617 = vmatprep.mubr.bf16.mxu0 %v1245
        %2618 = vmatmul.mubr.bf16.gmra.mrb[0].mxu0 %v1244
        %v2619 = vpop.f32.mrb[0].mxu0
        %v2620 = vadd.f32 %v2523, %v2619
        %v2621 = vpop.f32.mrb[0].mxu0
        %v2622 = vpop.f32.mrb[0].mxu0
        %v2623 = vadd.f32 %v2526, %v2622
        %v2624 = vpop.f32.mrb[0].mxu0
        %2625 = vmatprep.mubr.bf16.mxu0 %v1259
        %2626 = vmatmul.mubr.bf16.gmra.mrb[0].mxu0 %v1258
        %v2627 = vpop.f32.mrb[0].mxu0
        %v2628 = vadd.f32 %v2531, %v2627
        %v2629 = vpop.f32.mrb[0].mxu0
        %v2630 = vpop.f32.mrb[0].mxu0
        %v2631 = vadd.f32 %v2534, %v2630
        %v2632 = vpop.f32.mrb[0].mxu0
        %2633 = vmatprep.mubr.bf16.mxu0 %v1273
        %2634 = vmatmul.mubr.bf16.gmra.mrb[0].mxu0 %v1272
        %v2635 = vpop.f32.mrb[0].mxu0
        %v2636 = vadd.f32 %v2539, %v2635
        %v2637 = vpop.f32.mrb[0].mxu0
        %v2638 = vpop.f32.mrb[0].mxu0
        %v2639 = vadd.f32 %v2542, %v2638
        %v2640 = vpop.f32.mrb[0].mxu0
        %2641 = vdwg.mxu0
        %2642 = vmatprep.subr.bf16.mxu0 0
        %2643 = vmatpush1.bf16.msra.mxu0 %v1932
        %2644 = vmatprep.subr.bf16.mxu0 0
        %2645 = vmatpush1.bf16.msra.mxu0 %v1933
        %2646 = vmatprep.subr.bf16.mxu0 0
        %2647 = vmatpush1.bf16.msra.mxu0 %v1934
        %2648 = vmatprep.subr.bf16.mxu0 0
        %2649 = vmatpush1.bf16.msra.mxu0 %v1935
        %2650 = vmatprep.subr.bf16.mxu0 0
        %2651 = vmatpush1.bf16.msra.mxu0 %v1936
        %2652 = vmatprep.subr.bf16.mxu0 0
        %2653 = vmatpush1.bf16.msra.mxu0 %v1937
        %2654 = vmatprep.subr.bf16.mxu0 0
        %2655 = vmatpush1.bf16.msra.mxu0 %v1938
        %2656 = vmatprep.subr.bf16.mxu0 0
        %2657 = vmatpush1.bf16.msra.mxu0 %v1939
        %2658 = vmatprep.subr.bf16.mxu0 0
        %2659 = vmatpush1.bf16.msra.mxu0 %v1940
        %2660 = vmatprep.subr.bf16.mxu0 0
        %2661 = vmatpush1.bf16.msra.mxu0 %v1941
        %2662 = vmatprep.subr.bf16.mxu0 0
        %2663 = vmatpush1.bf16.msra.mxu0 %v1942
        %2664 = vmatprep.subr.bf16.mxu0 0
        %2665 = vmatpush1.bf16.msra.mxu0 %v1943
        %2666 = vmatprep.subr.bf16.mxu0 0
        %2667 = vmatpush1.bf16.msra.mxu0 %v1944
        %2668 = vmatprep.subr.bf16.mxu0 0
        %2669 = vmatpush1.bf16.msra.mxu0 %v1945
        %2670 = vmatprep.subr.bf16.mxu0 0
        %2671 = vmatpush1.bf16.msra.mxu0 %v1946
        %2672 = vmatprep.subr.bf16.mxu0 0
        %2673 = vmatpush1.bf16.msra.mxu0 %v1947
        %2674 = vmatprep.mubr.bf16.mxu0 %v1177
        %2675 = vmatmul.mubr.bf16.gmra.mrb[0].mxu0 %v1176
        %v2676 = vpop.f32.mrb[0].mxu0
        %v2677 = vadd.f32 %v2580, %v2676
        %v2678 = vpop.f32.mrb[0].mxu0
        %v2679 = vpop.f32.mrb[0].mxu0
        %v2680 = vadd.f32 %v2583, %v2679
        %v2681 = vpop.f32.mrb[0].mxu0
        %2682 = vmatprep.mubr.bf16.mxu0 %v1191
        %2683 = vmatmul.mubr.bf16.gmra.mrb[0].mxu0 %v1190
        %v2684 = vpop.f32.mrb[0].mxu0
        %v2685 = vadd.f32 %v2588, %v2684
        %v2686 = vpop.f32.mrb[0].mxu0
        %v2687 = vpop.f32.mrb[0].mxu0
        %v2688 = vadd.f32 %v2591, %v2687
        %v2689 = vpop.f32.mrb[0].mxu0
        %2690 = vmatprep.mubr.bf16.mxu0 %v1205
        %2691 = vmatmul.mubr.bf16.gmra.mrb[0].mxu0 %v1204
        %v2692 = vpop.f32.mrb[0].mxu0
        %v2693 = vadd.f32 %v2596, %v2692
        %v2694 = vpop.f32.mrb[0].mxu0
        %v2695 = vpop.f32.mrb[0].mxu0
        %v2696 = vadd.f32 %v2599, %v2695
        %v2697 = vpop.f32.mrb[0].mxu0
        %2698 = vmatprep.mubr.bf16.mxu0 %v1219
        %2699 = vmatmul.mubr.bf16.gmra.mrb[0].mxu0 %v1218
        %v2700 = vpop.f32.mrb[0].mxu0
        %v2701 = vadd.f32 %v2604, %v2700
        %v2702 = vpop.f32.mrb[0].mxu0
        %v2703 = vpop.f32.mrb[0].mxu0
        %v2704 = vadd.f32 %v2607, %v2703
        %v2705 = vpop.f32.mrb[0].mxu0
        %2706 = vmatprep.mubr.bf16.mxu0 %v1233
        %2707 = vmatmul.mubr.bf16.gmra.mrb[0].mxu0 %v1232
        %v2708 = vpop.f32.mrb[0].mxu0
        %v2709 = vadd.f32 %v2612, %v2708
        %v2710 = vpop.f32.mrb[0].mxu0
        %v2711 = vpop.f32.mrb[0].mxu0
        %v2712 = vadd.f32 %v2615, %v2711
        %v2713 = vpop.f32.mrb[0].mxu0
        %2714 = vmatprep.mubr.bf16.mxu0 %v1247
        %2715 = vmatmul.mubr.bf16.gmra.mrb[0].mxu0 %v1246
        %v2716 = vpop.f32.mrb[0].mxu0
        %v2717 = vadd.f32 %v2620, %v2716
        %v2718 = vpop.f32.mrb[0].mxu0
        %v2719 = vpop.f32.mrb[0].mxu0
        %v2720 = vadd.f32 %v2623, %v2719
        %v2721 = vpop.f32.mrb[0].mxu0
        %2722 = vmatprep.mubr.bf16.mxu0 %v1261
        %2723 = vmatmul.mubr.bf16.gmra.mrb[0].mxu0 %v1260
        %v2724 = vpop.f32.mrb[0].mxu0
        %v2725 = vadd.f32 %v2628, %v2724
        %v2726 = vpop.f32.mrb[0].mxu0
        %v2727 = vpop.f32.mrb[0].mxu0
        %v2728 = vadd.f32 %v2631, %v2727
        %v2729 = vpop.f32.mrb[0].mxu0
        %2730 = vmatprep.mubr.bf16.mxu0 %v1275
        %2731 = vmatmul.mubr.bf16.gmra.mrb[0].mxu0 %v1274
        %v2732 = vpop.f32.mrb[0].mxu0
        %v2733 = vadd.f32 %v2636, %v2732
        %v2734 = vpop.f32.mrb[0].mxu0
        %v2735 = vpop.f32.mrb[0].mxu0
        %v2736 = vadd.f32 %v2639, %v2735
        %v2737 = vpop.f32.mrb[0].mxu0
        %2738 = vdwg.mxu0
        %v2739 = vadd.f32 %v476, %v2677
        %v2740 = vadd.f32 %v477, %v2680
        %v2741 = vadd.f32 %v478, %v2685
        %v2742 = vadd.f32 %v479, %v2688
        %v2743 = vadd.f32 %v480, %v2693
        %v2744 = vadd.f32 %v481, %v2696
        %v2745 = vadd.f32 %v482, %v2701
        %v2746 = vadd.f32 %v483, %v2704
        %v2747 = vadd.f32 %v484, %v2709
        %v2748 = vadd.f32 %v485, %v2712
        %v2749 = vadd.f32 %v486, %v2717
        %v2750 = vadd.f32 %v487, %v2720
        %v2751 = vadd.f32 %v488, %v2725
        %v2752 = vadd.f32 %v489, %v2728
        %v2753 = vadd.f32 %v490, %v2733
        %v2754 = vadd.f32 %v491, %v2736
        %2755 = vst [vmem:[%s453] sm:$0xff] %v2739
        %2756 = vst [vmem:[%s453 + $0x8] sm:$0xff] %v2740
        %2757 = vst [vmem:[%s453 + $0x10] sm:$0xff] %v2741
        %2758 = vst [vmem:[%s453 + $0x18] sm:$0xff] %v2742
        %2759 = vst [vmem:[%s453 + $0x20] sm:$0xff] %v2743
        %2760 = vst [vmem:[%s453 + $0x28] sm:$0xff] %v2744
        %2761 = vst [vmem:[%s453 + $0x30] sm:$0xff] %v2745
        %2762 = vst [vmem:[%s453 + $0x38] sm:$0xff] %v2746
        %2763 = vst [vmem:[%s453 + $0x40] sm:$0xff] %v2747
        %2764 = vst [vmem:[%s453 + $0x48] sm:$0xff] %v2748
        %2765 = vst [vmem:[%s453 + $0x50] sm:$0xff] %v2749
        %2766 = vst [vmem:[%s453 + $0x58] sm:$0xff] %v2750
        %2767 = vst [vmem:[%s453 + $0x60] sm:$0xff] %v2751
        %2768 = vst [vmem:[%s453 + $0x68] sm:$0xff] %v2752
        %2769 = vst [vmem:[%s453 + $0x70] sm:$0xff] %v2753
        %2770 = vst [vmem:[%s453 + $0x78] sm:$0xff] %v2754
        %p2771 = scmp.eq.s32.totalorder %s19, 1
        // Predicated region
        $region60: #{backbone_forward.21} parent=50 // pred_check
          %p2772 = pneg %p2771
        $region61: #{backbone_forward.21} parent=50 // pred_check_branch
          %2774 = sbr.rel (%p2772) target = $region63
        $region62: #{backbone_forward.21} parent=50 // pred_region
          %v2775 = vld [vmem:[%s453] sm:$0xff]
          %v2776 = vld [vmem:[%s453 + $0x8] sm:$0xff]
          %v2777 = vld [vmem:[%s453 + $0x10] sm:$0xff]
          %v2778 = vld [vmem:[%s453 + $0x18] sm:$0xff]
          %v2779 = vld [vmem:[%s453 + $0x20] sm:$0xff]
          %v2780 = vld [vmem:[%s453 + $0x28] sm:$0xff]
          %v2781 = vld [vmem:[%s453 + $0x30] sm:$0xff]
          %v2782 = vld [vmem:[%s453 + $0x38] sm:$0xff]
          %v2783 = vld [vmem:[%s453 + $0x40] sm:$0xff]
          %v2784 = vld [vmem:[%s453 + $0x48] sm:$0xff]
          %v2785 = vld [vmem:[%s453 + $0x50] sm:$0xff]
          %v2786 = vld [vmem:[%s453 + $0x58] sm:$0xff]
          %v2787 = vld [vmem:[%s453 + $0x60] sm:$0xff]
          %v2788 = vld [vmem:[%s453 + $0x68] sm:$0xff]
          %v2789 = vld [vmem:[%s453 + $0x70] sm:$0xff]
          %v2790 = vld [vmem:[%s453 + $0x78] sm:$0xff]
          %v2791 = vld [vmem:[%s2] sm:$0x1]
          %v2793 = vlaneseq
          %v2794 = vshrl.u32 %v2793, 7
          %v2795 = vsub.s32 0, %v2794
          %v2796 = vrot.slane %v2791, %v2795
          %v2798 = vadd.f32 %v2775, %v2796
          %v2799 = vadd.f32 %v2776, %v2796
          %v2800 = vadd.f32 %v2777, %v2796
          %v2801 = vadd.f32 %v2778, %v2796
          %v2802 = vadd.f32 %v2779, %v2796
          %v2803 = vadd.f32 %v2780, %v2796
          %v2804 = vadd.f32 %v2781, %v2796
          %v2805 = vadd.f32 %v2782, %v2796
          %v2806 = vadd.f32 %v2783, %v2796
          %v2807 = vadd.f32 %v2784, %v2796
          %v2808 = vadd.f32 %v2785, %v2796
          %v2809 = vadd.f32 %v2786, %v2796
          %v2810 = vadd.f32 %v2787, %v2796
          %v2811 = vadd.f32 %v2788, %v2796
          %v2812 = vadd.f32 %v2789, %v2796
          %v2813 = vadd.f32 %v2790, %v2796
          %v2814 = vmax.f32 %v2798, 0.0
          %v2815 = vmax.f32 %v2799, 0.0
          %v2816 = vmax.f32 %v2800, 0.0
          %v2817 = vmax.f32 %v2801, 0.0
          %v2818 = vmax.f32 %v2802, 0.0
          %v2819 = vmax.f32 %v2803, 0.0
          %v2820 = vmax.f32 %v2804, 0.0
          %v2821 = vmax.f32 %v2805, 0.0
          %v2822 = vmax.f32 %v2806, 0.0
          %v2823 = vmax.f32 %v2807, 0.0
          %v2824 = vmax.f32 %v2808, 0.0
          %v2825 = vmax.f32 %v2809, 0.0
          %v2826 = vmax.f32 %v2810, 0.0
          %v2827 = vmax.f32 %v2811, 0.0
          %v2828 = vmax.f32 %v2812, 0.0
          %v2829 = vmax.f32 %v2813, 0.0
          %2830 = vst [vmem:[%s453] sm:$0xff] %v2814
          %2831 = vst [vmem:[%s453 + $0x8] sm:$0xff] %v2815
          %2832 = vst [vmem:[%s453 + $0x10] sm:$0xff] %v2816
          %2833 = vst [vmem:[%s453 + $0x18] sm:$0xff] %v2817
          %2834 = vst [vmem:[%s453 + $0x20] sm:$0xff] %v2818
          %2835 = vst [vmem:[%s453 + $0x28] sm:$0xff] %v2819
          %2836 = vst [vmem:[%s453 + $0x30] sm:$0xff] %v2820
          %2837 = vst [vmem:[%s453 + $0x38] sm:$0xff] %v2821
          %2838 = vst [vmem:[%s453 + $0x40] sm:$0xff] %v2822
          %2839 = vst [vmem:[%s453 + $0x48] sm:$0xff] %v2823
          %2840 = vst [vmem:[%s453 + $0x50] sm:$0xff] %v2824
          %2841 = vst [vmem:[%s453 + $0x58] sm:$0xff] %v2825
          %2842 = vst [vmem:[%s453 + $0x60] sm:$0xff] %v2826
          %2843 = vst [vmem:[%s453 + $0x68] sm:$0xff] %v2827
          %2844 = vst [vmem:[%s453 + $0x70] sm:$0xff] %v2828
          %2845 = vst [vmem:[%s453 + $0x78] sm:$0xff] %v2829
        $region63: #{backbone_forward.21} parent=50 // pred_fallthru
          _
        %s2846 = smul.u32 16, %s18
        %p2847 = scmp.lt.s32.totalorder %s2846, 15
        %s2848 = scalar_select %p2847, %s2846, 15
        %s2849 = smul.addr %s2848, 8
        %s2850 = scalar_lea.vmem %s3, %s2849
        // Predicated region
        $region64: #{backbone_forward.21} parent=50 // pred_check
          %p2851 = pneg %p119
        $region65: #{backbone_forward.21} parent=50 // pred_check_branch
          %2853 = sbr.rel (%p2851) target = $region67
        $region66: #{backbone_forward.21} parent=50 // pred_region
          %s2854 = smul.u32 16, %s18
        $region67: #{backbone_forward.21} parent=50 // pred_fallthru
          _
        // Predicated region
        $region68: #{backbone_forward.21} parent=50 // pred_check
          %p2855 = pneg %p119
        $region69: #{backbone_forward.21} parent=50 // pred_check_branch
          %2857 = sbr.rel (%p2855) target = $region71
        $region70: #{backbone_forward.21} parent=50 // pred_region
          %s2858 = smul.u32 16, %s18
          %p2859 = scmp.lt.s32.totalorder %s2858, 15
          %s2860 = scalar_select %p2859, %s2858, 15
          %s2861 = smul.addr %s2860, 8
          %s2862 = scalar_lea.vmem %s3, %s2861
        $region71: #{backbone_forward.21} parent=50 // pred_fallthru
          _
      $region51: #{backbone_forward.21} parent=5 // pred_fallthru
        _
      %p2863 = scmp.le.s32.totalorder 2, %s9
      // Predicated region
      $region72: #{backbone_forward.21} parent=5 // pred_check
        %p2864 = pneg %p2863
      $region73: #{backbone_forward.21} parent=5 // pred_check_branch
        %2866 = sbr.rel (%p2864) target = $region75
      $region74: #{backbone_forward.21} parent=5 // pred_region
        %s2867 = ssub.s32 %s9, 2
      $region75: #{backbone_forward.21} parent=5 // pred_fallthru
        _
    $region6: #{backbone_forward.21} parent=1 // loop_footer
      %s13 = sadd.s32 1, %s9
    $region7: #{backbone_forward.21} parent=1 // loop_footer_branch
      %8 = sbr.rel target = $region3
    $region8: #{backbone_forward.21} parent=1 // loop_exit
      _

</llo_original>
